<compile_context>
chip_gen: v7x
topology: tpu7x:2x2x1
jax: 0.10.0
libtpu: 0.0.40
codegen_flags: <defaults>
</compile_context>

<pallas_src>
import functools

import jax
import jax.numpy as jnp
from jax.experimental import pallas as pl
from jax.experimental.pallas import tpu as pltpu


_HI = jax.lax.Precision.HIGHEST


# ----------------------------------------------------------------------------
# Fused Pallas kernel: all RNN layers + classifier in one invocation
# ----------------------------------------------------------------------------
def make_fused_rnn_kernel(seq_len, batch_pad, num_layers, num_clf):
    """Builds the fused kernel for fixed (static) model dimensions.

    Input-ref layout (positional):
      x_all,
      W_hx0, b_in0 (= b_hh0 + b_hx0),
      [h0, W_hh]                         * num_layers,
      [W_fused, b_fused]                 * (num_layers - 1),
      W_xh_last, b_xh_last,
      [W_clf, b_clf]                     * num_clf
    then out_ref, then (num_layers - 1) VMEM scratch slabs.
    """
    n_in = 1 + 2 + 2 * num_layers + 2 * (num_layers - 1) + 2 + 2 * num_clf

    def kernel(*refs):
        in_refs = refs[:n_in]
        out_ref = refs[n_in]
        hbuf_refs = refs[n_in + 1:]                     # per-layer (S*Bp, H) slabs

        pos = 0
        x_ref = in_refs[pos]; pos += 1
        whx0_ref = in_refs[pos]; bin0_ref = in_refs[pos + 1]; pos += 2
        h0_refs, whh_refs = [], []
        for _ in range(num_layers):
            h0_refs.append(in_refs[pos]); whh_refs.append(in_refs[pos + 1]); pos += 2
        wf_refs, bf_refs = [], []
        for _ in range(num_layers - 1):
            wf_refs.append(in_refs[pos]); bf_refs.append(in_refs[pos + 1]); pos += 2
        wxh_ref = in_refs[pos]; bxh_ref = in_refs[pos + 1]; pos += 2
        clf_refs = [(in_refs[pos + 2 * i], in_refs[pos + 2 * i + 1])
                    for i in range(num_clf)]

        # Layer-0 input projection hoisted over all timesteps (one MXU op,
        # M = S * B_pad).  Biases b_hh0 + b_hx0 were pre-summed in the wrapper.
        xp = (jnp.dot(x_ref[...], whx0_ref[...],
                      preferred_element_type=jnp.float32, precision=_HI)
              + bin0_ref[...])                           # (S*Bp, H0)

        h = None
        for li in range(num_layers):
            whh = whh_refs[li][...]                      # hoisted weight load
            h = h0_refs[li][...]                         # (Bp, H)
            # Statically unrolled time loop: per step only h @ W_hh + add + tanh
            # is on the serial critical path; all slices/stores are whole
            # (8, lane) tiles because B_pad is a sublane multiple.
            for t in range(seq_len):
                row = t * batch_pad
                pre = (jnp.dot(h, whh, preferred_element_type=jnp.float32,
                               precision=_HI)
                       + xp[row:row + batch_pad, :])
                h = jnp.tanh(pre)
                if li < num_layers - 1:
                    hbuf_refs[li][row:row + batch_pad, :] = h   # tile-aligned store
            if li < num_layers - 1:
                # Fused (output-proj of layer li) o (input-proj of layer li+1):
                # one (S*Bp, H_li) x (H_li, H_{li+1}) matmul from the scratch slab.
                xp = (jnp.dot(hbuf_refs[li][...], wf_refs[li][...],
                              preferred_element_type=jnp.float32, precision=_HI)
                      + bf_refs[li][...])

        # Last layer: only y at t = S-1 is consumed downstream (out = y[:, -1]).
        out = (jnp.dot(h, wxh_ref[...], preferred_element_type=jnp.float32,
                       precision=_HI)
               + bxh_ref[...])                           # (Bp, x_dims[-1])

        # Classifier MLP (ReLU on all but the last linear).
        for ci, (w_ref, b_ref) in enumerate(clf_refs):
            out = (jnp.dot(out, w_ref[...], preferred_element_type=jnp.float32,
                           precision=_HI)
                   + b_ref[...])
            if ci < num_clf - 1:
                out = jnp.maximum(out, 0.0)

        out_ref[...] = out.astype(out_ref.dtype)

    return kernel, n_in


# ----------------------------------------------------------------------------
# Parameter init (deterministic, mimics the PyTorch module's shapes)
# ----------------------------------------------------------------------------
def init_linear_params(key, in_dim, out_dim):
    """nn.Linear-style uniform init; weight stored already transposed (in, out)."""
    kw, kb = jax.random.split(key)
    bound = 1.0 / jnp.sqrt(jnp.float32(in_dim))
    w = jax.random.uniform(kw, (in_dim, out_dim), jnp.float32, -bound, bound)
    b = jax.random.uniform(kb, (1, out_dim), jnp.float32, -bound, bound)
    return w, b


def build_params(key, config):
    num_vocab = 2 + config["dataset"]["num_vocab"]
    embed_dim = config["model"]["embed_dim"]
    h_dims = config["model"]["h_dim"]
    x_dims = config["model"]["x_dim"]
    clf_dims = config["model"]["clf_dim"]
    num_classes = config["dataset"]["num_classes"]
    num_layers = config["model"]["num_layers"]

    keys = jax.random.split(key, 2 + num_layers * 3 + len(clf_dims))
    ki = iter(range(len(keys)))

    params = {}
    params["embed"] = jax.random.normal(keys[next(ki)], (num_vocab, embed_dim),
                                        jnp.float32) * 0.1

    cells = []
    for i in range(num_layers):
        h_dim = h_dims[i]
        inp_x_dim, out_x_dim = x_dims[i], x_dims[i + 1]
        whh, bhh = init_linear_params(keys[next(ki)], h_dim, h_dim)
        whx, bhx = init_linear_params(keys[next(ki)], inp_x_dim, h_dim)
        wxh, bxh = init_linear_params(keys[next(ki)], h_dim, out_x_dim)
        cells.append(dict(whh=whh, bhh=bhh, whx=whx, bhx=bhx, wxh=wxh, bxh=bxh))
    params["cells"] = cells

    clf = []
    dims = list(clf_dims) + [num_classes]
    for i in range(len(dims) - 1):
        w, b = init_linear_params(keys[next(ki)], dims[i], dims[i + 1])
        clf.append((w, b))
    params["clf"] = clf
    return params


def init_hidden(key, batch, h_dims):
    """Mirrors kaiming_uniform_ on torch.empty(B, dim): bound = sqrt(6 / dim)."""
    hts = []
    for i, dim in enumerate(h_dims):
        bound = jnp.sqrt(6.0 / jnp.float32(dim))
        hts.append(jax.random.uniform(jax.random.fold_in(key, i),
                                      (batch, dim), jnp.float32, -bound, bound))
    return hts


# ----------------------------------------------------------------------------
# Full model forward (one pallas_call)
# ----------------------------------------------------------------------------
def rnn_model_forward(params, X, hts, config=None):
    num_layers = config["model"]["num_layers"]
    h_dims = config["model"]["h_dim"]
    x_dims = config["model"]["x_dim"]
    B, S = X.shape
    num_classes = params["clf"][-1][0].shape[1]
    num_clf = len(params["clf"])

    # Pad batch up to a sublane multiple so every per-step slice / store inside
    # the kernel is a whole (8, lane) tile.  Padded rows never mix with real
    # rows (all ops are row-wise) and are sliced away at the end.
    B_pad = max(8, ((B + 7) // 8) * 8)

    # Embedding lookup (gather) — plain-JAX glue outside the kernel.
    x_embed = jnp.take(params["embed"], X.astype(jnp.int32), axis=0)      # (B, S, E)
    x_seq = jnp.transpose(x_embed, (1, 0, 2))                              # (S, B, E)
    x_seq = jnp.pad(x_seq, ((0, 0), (0, B_pad - B), (0, 0)))               # (S, Bp, E)
    x_all = x_seq.reshape(S * B_pad, x_dims[0])                            # row t*Bp + b

    cells = params["cells"]

    # Pack kernel operands.  Inter-layer projections are algebraically fused
    # once here (parameter-only work): W_fused = W_xh[l] @ W_hx[l+1], etc.
    args = [x_all, cells[0]["whx"], cells[0]["bhh"] + cells[0]["bhx"]]
    for i in range(num_layers):
        args += [jnp.pad(hts[i], ((0, B_pad - B), (0, 0))), cells[i]["whh"]]
    for i in range(num_layers - 1):
        w_fused = jnp.dot(cells[i]["wxh"], cells[i + 1]["whx"], precision=_HI)
        b_fused = (jnp.dot(cells[i]["bxh"], cells[i + 1]["whx"], precision=_HI)
                   + cells[i + 1]["bhh"] + cells[i + 1]["bhx"])
        args += [w_fused, b_fused]
    args += [cells[-1]["wxh"], cells[-1]["bxh"]]
    for w, b in params["clf"]:
        args += [w, b]

    kernel, n_in = make_fused_rnn_kernel(S, B_pad, num_layers, num_clf)
    assert len(args) == n_in, (len(args), n_in)

    # Advisory cost estimate for XLA's scheduler around the custom call.
    flops = 2 * S * B_pad * x_dims[0] * h_dims[0]
    transcendentals = 0
    for h in h_dims:
        flops += 2 * S * B_pad * h * h
        transcendentals += S * B_pad * h
    for i in range(num_layers - 1):
        flops += 2 * S * B_pad * h_dims[i] * h_dims[i + 1]
    flops += 2 * B_pad * h_dims[-1] * x_dims[-1]
    for w, _ in params["clf"]:
        flops += 2 * B_pad * w.shape[0] * w.shape[1]
    bytes_accessed = B_pad * num_classes * 4 + sum(
        int(a.size) * a.dtype.itemsize for a in args)
    cost = pl.CostEstimate(flops=int(flops),
                           transcendentals=int(transcendentals),
                           bytes_accessed=int(bytes_accessed))

    # Every operand whole-array resident in VMEM (explicit, no accidental
    # ANY/HBM placement).  No grid: single invocation, no pipeline overhead.
    vmem_spec = pl.BlockSpec(memory_space=pltpu.MemorySpace.VMEM)

    out_pad = pl.pallas_call(
        kernel,
        out_shape=jax.ShapeDtypeStruct((B_pad, num_classes), jnp.float32),
        in_specs=[vmem_spec] * len(args),
        out_specs=vmem_spec,
        scratch_shapes=[pltpu.VMEM((S * B_pad, h_dims[i]), jnp.float32)
                        for i in range(num_layers - 1)],
        cost_estimate=cost,
    )(*args)

    return out_pad[:B]


# ----------------------------------------------------------------------------
# Pure-JAX reference (mirrors the PyTorch forward, no fusion) for validation
# ----------------------------------------------------------------------------
def reference_forward(params, X, hts, config):
    num_layers = config["model"]["num_layers"]
    S = X.shape[1]
    x_embed = jnp.take(params["embed"], X.astype(jnp.int32), axis=0)      # (B, S, E)
    y = x_embed
    for i in range(num_layers):
        c = params["cells"][i]
        h = hts[i]
        ys = []
        for t in range(S):
            xt = y[:, t, :]
            h = jnp.tanh(jnp.dot(h, c["whh"], precision=_HI) + c["bhh"]
                         + jnp.dot(xt, c["whx"], precision=_HI) + c["bhx"])
            ys.append(jnp.dot(h, c["wxh"], precision=_HI) + c["bxh"])
        y = jnp.stack(ys, axis=1)                                           # (B, S, Dout)
    out = y[:, -1, :]
    for ci, (w, b) in enumerate(params["clf"]):
        out = jnp.dot(out, w, precision=_HI) + b
        if ci < len(params["clf"]) - 1:
            out = jnp.maximum(out, 0.0)
    return out


# ----------------------------------------------------------------------------
# Main
# ----------------------------------------------------------------------------
if __name__ == "__main__":
    config = {
        "dataset": {"seq_len": 8, "num_classes": 4, "num_vocab": 18},
        "model": {
            "num_layers": 2,
            "h_dim": [32, 32],
            "x_dim": [16, 24, 16],      # x_dim[0] == embed_dim
            "clf_dim": [16, 32],        # clf_dim[0] == x_dim[-1]
            "embed_dim": 16,
        },
    }

    batch = 2
    seq_len = config["dataset"]["seq_len"]
    num_vocab = 2 + config["dataset"]["num_vocab"]

    key = jax.random.PRNGKey(0)
    k_param, k_x, k_h = jax.random.split(key, 3)

    params = build_params(k_param, config)
    X = jax.random.randint(k_x, (batch, seq_len), 0, num_vocab, dtype=jnp.int32)
    hts = init_hidden(k_h, batch, config["model"]["h_dim"])

    forward = jax.jit(functools.partial(rnn_model_forward, params, config=config))
    out = forward(X, hts)
    out = jax.block_until_ready(out)

    assert out.shape == (batch, config["dataset"]["num_classes"]), out.shape
    assert bool(jnp.all(jnp.isfinite(out)))

    # Validate the fused-kernel math (incl. inter-layer weight fusion) against
    # the straightforward pure-JAX reference.
    ref = jax.block_until_ready(reference_forward(params, X, hts, config))
    assert jnp.allclose(out, ref, rtol=1e-4, atol=1e-4), (out, ref)

    print("KERNEL_OK")
</pallas_src>

<mosaic_0001>
module attributes {stable_mosaic.version = 11 : i64} {
  func.func @kernel(%arg0: memref<64x16xf32, #tpu.memory_space<vmem>>, %arg1: memref<16x32xf32, #tpu.memory_space<vmem>>, %arg2: memref<1x32xf32, #tpu.memory_space<vmem>>, %arg3: memref<8x32xf32, #tpu.memory_space<vmem>>, %arg4: memref<32x32xf32, #tpu.memory_space<vmem>>, %arg5: memref<8x32xf32, #tpu.memory_space<vmem>>, %arg6: memref<32x32xf32, #tpu.memory_space<vmem>>, %arg7: memref<32x32xf32, #tpu.memory_space<vmem>>, %arg8: memref<1x32xf32, #tpu.memory_space<vmem>>, %arg9: memref<32x16xf32, #tpu.memory_space<vmem>>, %arg10: memref<1x16xf32, #tpu.memory_space<vmem>>, %arg11: memref<16x32xf32, #tpu.memory_space<vmem>>, %arg12: memref<1x32xf32, #tpu.memory_space<vmem>>, %arg13: memref<32x4xf32, #tpu.memory_space<vmem>>, %arg14: memref<1x4xf32, #tpu.memory_space<vmem>>, %arg15: memref<8x4xf32, #tpu.memory_space<vmem>>, %arg16: memref<64x32xf32, #tpu.memory_space<vmem>>) attributes {dimension_semantics = [], scalar_prefetch = 0 : i64, scratch_operands = 1 : i64, tpu.core_type = #tpu.core_type<tc>} {
    %c0 = arith.constant 0 : index
    %c0_0 = arith.constant 0 : index
    %0 = vector.load %arg0[%c0, %c0_0] : memref<64x16xf32, #tpu.memory_space<vmem>>, vector<64x16xf32>
    %c0_1 = arith.constant 0 : index
    %c0_2 = arith.constant 0 : index
    %1 = vector.load %arg1[%c0_1, %c0_2] : memref<16x32xf32, #tpu.memory_space<vmem>>, vector<16x32xf32>
    %cst = arith.constant dense<0.000000e+00> : vector<64x32xf32>
    %2 = tpu.matmul %0, %1, %cst {dimension_numbers = #tpu.dot_dimension_numbers<[1], [0], [0], [1], [0, 0, 1, 1], [], []>, precision = #tpu.contract_precision<fp32>} : vector<64x16xf32>, vector<16x32xf32>, vector<64x32xf32> -> vector<64x32xf32>
    %c0_3 = arith.constant 0 : index
    %c0_4 = arith.constant 0 : index
    %3 = vector.load %arg2[%c0_3, %c0_4] : memref<1x32xf32, #tpu.memory_space<vmem>>, vector<1x32xf32>
    %4 = vector.broadcast %3 : vector<1x32xf32> to vector<64x32xf32>
    %5 = arith.addf %2, %4 : vector<64x32xf32>
    %c0_5 = arith.constant 0 : index
    %c0_6 = arith.constant 0 : index
    %6 = vector.load %arg4[%c0_5, %c0_6] : memref<32x32xf32, #tpu.memory_space<vmem>>, vector<32x32xf32>
    %c0_7 = arith.constant 0 : index
    %c0_8 = arith.constant 0 : index
    %7 = vector.load %arg3[%c0_7, %c0_8] : memref<8x32xf32, #tpu.memory_space<vmem>>, vector<8x32xf32>
    %cst_9 = arith.constant dense<0.000000e+00> : vector<8x32xf32>
    %8 = tpu.matmul %7, %6, %cst_9 {dimension_numbers = #tpu.dot_dimension_numbers<[1], [0], [0], [1], [0, 0, 1, 1], [], []>, precision = #tpu.contract_precision<fp32>} : vector<8x32xf32>, vector<32x32xf32>, vector<8x32xf32> -> vector<8x32xf32>
    %9 = vector.extract_strided_slice %5 {offsets = [0, 0], sizes = [8, 32], strides = [1, 1]} : vector<64x32xf32> to vector<8x32xf32>
    %10 = arith.addf %8, %9 : vector<8x32xf32>
    %11 = math.tanh %10 : vector<8x32xf32>
    %c0_10 = arith.constant 0 : index
    %c0_11 = arith.constant 0 : index
    %12 = vector.load %arg16[%c0_10, %c0_11] : memref<64x32xf32, #tpu.memory_space<vmem>>, vector<8x32xf32>
    tpu.vector_store %arg16[%c0_10, %c0_11], %11 {strides = array<i32>} : memref<64x32xf32, #tpu.memory_space<vmem>>, vector<8x32xf32>,
    %cst_12 = arith.constant dense<0.000000e+00> : vector<8x32xf32>
    %13 = tpu.matmul %11, %6, %cst_12 {dimension_numbers = #tpu.dot_dimension_numbers<[1], [0], [0], [1], [0, 0, 1, 1], [], []>, precision = #tpu.contract_precision<fp32>} : vector<8x32xf32>, vector<32x32xf32>, vector<8x32xf32> -> vector<8x32xf32>
    %14 = vector.extract_strided_slice %5 {offsets = [8, 0], sizes = [8, 32], strides = [1, 1]} : vector<64x32xf32> to vector<8x32xf32>
    %15 = arith.addf %13, %14 : vector<8x32xf32>
    %16 = math.tanh %15 : vector<8x32xf32>
    %c8 = arith.constant 8 : index
    %c0_13 = arith.constant 0 : index
    %17 = vector.load %arg16[%c8, %c0_13] : memref<64x32xf32, #tpu.memory_space<vmem>>, vector<8x32xf32>
    tpu.vector_store %arg16[%c8, %c0_13], %16 {strides = array<i32>} : memref<64x32xf32, #tpu.memory_space<vmem>>, vector<8x32xf32>,
    %cst_14 = arith.constant dense<0.000000e+00> : vector<8x32xf32>
    %18 = tpu.matmul %16, %6, %cst_14 {dimension_numbers = #tpu.dot_dimension_numbers<[1], [0], [0], [1], [0, 0, 1, 1], [], []>, precision = #tpu.contract_precision<fp32>} : vector<8x32xf32>, vector<32x32xf32>, vector<8x32xf32> -> vector<8x32xf32>
    %19 = vector.extract_strided_slice %5 {offsets = [16, 0], sizes = [8, 32], strides = [1, 1]} : vector<64x32xf32> to vector<8x32xf32>
    %20 = arith.addf %18, %19 : vector<8x32xf32>
    %21 = math.tanh %20 : vector<8x32xf32>
    %c16 = arith.constant 16 : index
    %c0_15 = arith.constant 0 : index
    %22 = vector.load %arg16[%c16, %c0_15] : memref<64x32xf32, #tpu.memory_space<vmem>>, vector<8x32xf32>
    tpu.vector_store %arg16[%c16, %c0_15], %21 {strides = array<i32>} : memref<64x32xf32, #tpu.memory_space<vmem>>, vector<8x32xf32>,
    %cst_16 = arith.constant dense<0.000000e+00> : vector<8x32xf32>
    %23 = tpu.matmul %21, %6, %cst_16 {dimension_numbers = #tpu.dot_dimension_numbers<[1], [0], [0], [1], [0, 0, 1, 1], [], []>, precision = #tpu.contract_precision<fp32>} : vector<8x32xf32>, vector<32x32xf32>, vector<8x32xf32> -> vector<8x32xf32>
    %24 = vector.extract_strided_slice %5 {offsets = [24, 0], sizes = [8, 32], strides = [1, 1]} : vector<64x32xf32> to vector<8x32xf32>
    %25 = arith.addf %23, %24 : vector<8x32xf32>
    %26 = math.tanh %25 : vector<8x32xf32>
    %c24 = arith.constant 24 : index
    %c0_17 = arith.constant 0 : index
    %27 = vector.load %arg16[%c24, %c0_17] : memref<64x32xf32, #tpu.memory_space<vmem>>, vector<8x32xf32>
    tpu.vector_store %arg16[%c24, %c0_17], %26 {strides = array<i32>} : memref<64x32xf32, #tpu.memory_space<vmem>>, vector<8x32xf32>,
    %cst_18 = arith.constant dense<0.000000e+00> : vector<8x32xf32>
    %28 = tpu.matmul %26, %6, %cst_18 {dimension_numbers = #tpu.dot_dimension_numbers<[1], [0], [0], [1], [0, 0, 1, 1], [], []>, precision = #tpu.contract_precision<fp32>} : vector<8x32xf32>, vector<32x32xf32>, vector<8x32xf32> -> vector<8x32xf32>
    %29 = vector.extract_strided_slice %5 {offsets = [32, 0], sizes = [8, 32], strides = [1, 1]} : vector<64x32xf32> to vector<8x32xf32>
    %30 = arith.addf %28, %29 : vector<8x32xf32>
    %31 = math.tanh %30 : vector<8x32xf32>
    %c32 = arith.constant 32 : index
    %c0_19 = arith.constant 0 : index
    %32 = vector.load %arg16[%c32, %c0_19] : memref<64x32xf32, #tpu.memory_space<vmem>>, vector<8x32xf32>
    tpu.vector_store %arg16[%c32, %c0_19], %31 {strides = array<i32>} : memref<64x32xf32, #tpu.memory_space<vmem>>, vector<8x32xf32>,
    %cst_20 = arith.constant dense<0.000000e+00> : vector<8x32xf32>
    %33 = tpu.matmul %31, %6, %cst_20 {dimension_numbers = #tpu.dot_dimension_numbers<[1], [0], [0], [1], [0, 0, 1, 1], [], []>, precision = #tpu.contract_precision<fp32>} : vector<8x32xf32>, vector<32x32xf32>, vector<8x32xf32> -> vector<8x32xf32>
    %34 = vector.extract_strided_slice %5 {offsets = [40, 0], sizes = [8, 32], strides = [1, 1]} : vector<64x32xf32> to vector<8x32xf32>
    %35 = arith.addf %33, %34 : vector<8x32xf32>
    %36 = math.tanh %35 : vector<8x32xf32>
    %c40 = arith.constant 40 : index
    %c0_21 = arith.constant 0 : index
    %37 = vector.load %arg16[%c40, %c0_21] : memref<64x32xf32, #tpu.memory_space<vmem>>, vector<8x32xf32>
    tpu.vector_store %arg16[%c40, %c0_21], %36 {strides = array<i32>} : memref<64x32xf32, #tpu.memory_space<vmem>>, vector<8x32xf32>,
    %cst_22 = arith.constant dense<0.000000e+00> : vector<8x32xf32>
    %38 = tpu.matmul %36, %6, %cst_22 {dimension_numbers = #tpu.dot_dimension_numbers<[1], [0], [0], [1], [0, 0, 1, 1], [], []>, precision = #tpu.contract_precision<fp32>} : vector<8x32xf32>, vector<32x32xf32>, vector<8x32xf32> -> vector<8x32xf32>
    %39 = vector.extract_strided_slice %5 {offsets = [48, 0], sizes = [8, 32], strides = [1, 1]} : vector<64x32xf32> to vector<8x32xf32>
    %40 = arith.addf %38, %39 : vector<8x32xf32>
    %41 = math.tanh %40 : vector<8x32xf32>
    %c48 = arith.constant 48 : index
    %c0_23 = arith.constant 0 : index
    %42 = vector.load %arg16[%c48, %c0_23] : memref<64x32xf32, #tpu.memory_space<vmem>>, vector<8x32xf32>
    tpu.vector_store %arg16[%c48, %c0_23], %41 {strides = array<i32>} : memref<64x32xf32, #tpu.memory_space<vmem>>, vector<8x32xf32>,
    %cst_24 = arith.constant dense<0.000000e+00> : vector<8x32xf32>
    %43 = tpu.matmul %41, %6, %cst_24 {dimension_numbers = #tpu.dot_dimension_numbers<[1], [0], [0], [1], [0, 0, 1, 1], [], []>, precision = #tpu.contract_precision<fp32>} : vector<8x32xf32>, vector<32x32xf32>, vector<8x32xf32> -> vector<8x32xf32>
    %44 = vector.extract_strided_slice %5 {offsets = [56, 0], sizes = [8, 32], strides = [1, 1]} : vector<64x32xf32> to vector<8x32xf32>
    %45 = arith.addf %43, %44 : vector<8x32xf32>
    %46 = math.tanh %45 : vector<8x32xf32>
    %c56 = arith.constant 56 : index
    %c0_25 = arith.constant 0 : index
    %47 = vector.load %arg16[%c56, %c0_25] : memref<64x32xf32, #tpu.memory_space<vmem>>, vector<8x32xf32>
    tpu.vector_store %arg16[%c56, %c0_25], %46 {strides = array<i32>} : memref<64x32xf32, #tpu.memory_space<vmem>>, vector<8x32xf32>,
    %c0_26 = arith.constant 0 : index
    %c0_27 = arith.constant 0 : index
    %48 = vector.load %arg16[%c0_26, %c0_27] : memref<64x32xf32, #tpu.memory_space<vmem>>, vector<64x32xf32>
    %c0_28 = arith.constant 0 : index
    %c0_29 = arith.constant 0 : index
    %49 = vector.load %arg7[%c0_28, %c0_29] : memref<32x32xf32, #tpu.memory_space<vmem>>, vector<32x32xf32>
    %cst_30 = arith.constant dense<0.000000e+00> : vector<64x32xf32>
    %50 = tpu.matmul %48, %49, %cst_30 {dimension_numbers = #tpu.dot_dimension_numbers<[1], [0], [0], [1], [0, 0, 1, 1], [], []>, precision = #tpu.contract_precision<fp32>} : vector<64x32xf32>, vector<32x32xf32>, vector<64x32xf32> -> vector<64x32xf32>
    %c0_31 = arith.constant 0 : index
    %c0_32 = arith.constant 0 : index
    %51 = vector.load %arg8[%c0_31, %c0_32] : memref<1x32xf32, #tpu.memory_space<vmem>>, vector<1x32xf32>
    %52 = vector.broadcast %51 : vector<1x32xf32> to vector<64x32xf32>
    %53 = arith.addf %50, %52 : vector<64x32xf32>
    %c0_33 = arith.constant 0 : index
    %c0_34 = arith.constant 0 : index
    %54 = vector.load %arg6[%c0_33, %c0_34] : memref<32x32xf32, #tpu.memory_space<vmem>>, vector<32x32xf32>
    %c0_35 = arith.constant 0 : index
    %c0_36 = arith.constant 0 : index
    %55 = vector.load %arg5[%c0_35, %c0_36] : memref<8x32xf32, #tpu.memory_space<vmem>>, vector<8x32xf32>
    %cst_37 = arith.constant dense<0.000000e+00> : vector<8x32xf32>
    %56 = tpu.matmul %55, %54, %cst_37 {dimension_numbers = #tpu.dot_dimension_numbers<[1], [0], [0], [1], [0, 0, 1, 1], [], []>, precision = #tpu.contract_precision<fp32>} : vector<8x32xf32>, vector<32x32xf32>, vector<8x32xf32> -> vector<8x32xf32>
    %57 = vector.extract_strided_slice %53 {offsets = [0, 0], sizes = [8, 32], strides = [1, 1]} : vector<64x32xf32> to vector<8x32xf32>
    %58 = arith.addf %56, %57 : vector<8x32xf32>
    %59 = math.tanh %58 : vector<8x32xf32>
    %cst_38 = arith.constant dense<0.000000e+00> : vector<8x32xf32>
    %60 = tpu.matmul %59, %54, %cst_38 {dimension_numbers = #tpu.dot_dimension_numbers<[1], [0], [0], [1], [0, 0, 1, 1], [], []>, precision = #tpu.contract_precision<fp32>} : vector<8x32xf32>, vector<32x32xf32>, vector<8x32xf32> -> vector<8x32xf32>
    %61 = vector.extract_strided_slice %53 {offsets = [8, 0], sizes = [8, 32], strides = [1, 1]} : vector<64x32xf32> to vector<8x32xf32>
    %62 = arith.addf %60, %61 : vector<8x32xf32>
    %63 = math.tanh %62 : vector<8x32xf32>
    %cst_39 = arith.constant dense<0.000000e+00> : vector<8x32xf32>
    %64 = tpu.matmul %63, %54, %cst_39 {dimension_numbers = #tpu.dot_dimension_numbers<[1], [0], [0], [1], [0, 0, 1, 1], [], []>, precision = #tpu.contract_precision<fp32>} : vector<8x32xf32>, vector<32x32xf32>, vector<8x32xf32> -> vector<8x32xf32>
    %65 = vector.extract_strided_slice %53 {offsets = [16, 0], sizes = [8, 32], strides = [1, 1]} : vector<64x32xf32> to vector<8x32xf32>
    %66 = arith.addf %64, %65 : vector<8x32xf32>
    %67 = math.tanh %66 : vector<8x32xf32>
    %cst_40 = arith.constant dense<0.000000e+00> : vector<8x32xf32>
    %68 = tpu.matmul %67, %54, %cst_40 {dimension_numbers = #tpu.dot_dimension_numbers<[1], [0], [0], [1], [0, 0, 1, 1], [], []>, precision = #tpu.contract_precision<fp32>} : vector<8x32xf32>, vector<32x32xf32>, vector<8x32xf32> -> vector<8x32xf32>
    %69 = vector.extract_strided_slice %53 {offsets = [24, 0], sizes = [8, 32], strides = [1, 1]} : vector<64x32xf32> to vector<8x32xf32>
    %70 = arith.addf %68, %69 : vector<8x32xf32>
    %71 = math.tanh %70 : vector<8x32xf32>
    %cst_41 = arith.constant dense<0.000000e+00> : vector<8x32xf32>
    %72 = tpu.matmul %71, %54, %cst_41 {dimension_numbers = #tpu.dot_dimension_numbers<[1], [0], [0], [1], [0, 0, 1, 1], [], []>, precision = #tpu.contract_precision<fp32>} : vector<8x32xf32>, vector<32x32xf32>, vector<8x32xf32> -> vector<8x32xf32>
    %73 = vector.extract_strided_slice %53 {offsets = [32, 0], sizes = [8, 32], strides = [1, 1]} : vector<64x32xf32> to vector<8x32xf32>
    %74 = arith.addf %72, %73 : vector<8x32xf32>
    %75 = math.tanh %74 : vector<8x32xf32>
    %cst_42 = arith.constant dense<0.000000e+00> : vector<8x32xf32>
    %76 = tpu.matmul %75, %54, %cst_42 {dimension_numbers = #tpu.dot_dimension_numbers<[1], [0], [0], [1], [0, 0, 1, 1], [], []>, precision = #tpu.contract_precision<fp32>} : vector<8x32xf32>, vector<32x32xf32>, vector<8x32xf32> -> vector<8x32xf32>
    %77 = vector.extract_strided_slice %53 {offsets = [40, 0], sizes = [8, 32], strides = [1, 1]} : vector<64x32xf32> to vector<8x32xf32>
    %78 = arith.addf %76, %77 : vector<8x32xf32>
    %79 = math.tanh %78 : vector<8x32xf32>
    %cst_43 = arith.constant dense<0.000000e+00> : vector<8x32xf32>
    %80 = tpu.matmul %79, %54, %cst_43 {dimension_numbers = #tpu.dot_dimension_numbers<[1], [0], [0], [1], [0, 0, 1, 1], [], []>, precision = #tpu.contract_precision<fp32>} : vector<8x32xf32>, vector<32x32xf32>, vector<8x32xf32> -> vector<8x32xf32>
    %81 = vector.extract_strided_slice %53 {offsets = [48, 0], sizes = [8, 32], strides = [1, 1]} : vector<64x32xf32> to vector<8x32xf32>
    %82 = arith.addf %80, %81 : vector<8x32xf32>
    %83 = math.tanh %82 : vector<8x32xf32>
    %cst_44 = arith.constant dense<0.000000e+00> : vector<8x32xf32>
    %84 = tpu.matmul %83, %54, %cst_44 {dimension_numbers = #tpu.dot_dimension_numbers<[1], [0], [0], [1], [0, 0, 1, 1], [], []>, precision = #tpu.contract_precision<fp32>} : vector<8x32xf32>, vector<32x32xf32>, vector<8x32xf32> -> vector<8x32xf32>
    %85 = vector.extract_strided_slice %53 {offsets = [56, 0], sizes = [8, 32], strides = [1, 1]} : vector<64x32xf32> to vector<8x32xf32>
    %86 = arith.addf %84, %85 : vector<8x32xf32>
    %87 = math.tanh %86 : vector<8x32xf32>
    %c0_45 = arith.constant 0 : index
    %c0_46 = arith.constant 0 : index
    %88 = vector.load %arg9[%c0_45, %c0_46] : memref<32x16xf32, #tpu.memory_space<vmem>>, vector<32x16xf32>
    %cst_47 = arith.constant dense<0.000000e+00> : vector<8x16xf32>
    %89 = tpu.matmul %87, %88, %cst_47 {dimension_numbers = #tpu.dot_dimension_numbers<[1], [0], [0], [1], [0, 0, 1, 1], [], []>, precision = #tpu.contract_precision<fp32>} : vector<8x32xf32>, vector<32x16xf32>, vector<8x16xf32> -> vector<8x16xf32>
    %c0_48 = arith.constant 0 : index
    %c0_49 = arith.constant 0 : index
    %90 = vector.load %arg10[%c0_48, %c0_49] : memref<1x16xf32, #tpu.memory_space<vmem>>, vector<1x16xf32>
    %91 = vector.broadcast %90 : vector<1x16xf32> to vector<8x16xf32>
    %92 = arith.addf %89, %91 : vector<8x16xf32>
    %c0_50 = arith.constant 0 : index
    %c0_51 = arith.constant 0 : index
    %93 = vector.load %arg11[%c0_50, %c0_51] : memref<16x32xf32, #tpu.memory_space<vmem>>, vector<16x32xf32>
    %cst_52 = arith.constant dense<0.000000e+00> : vector<8x32xf32>
    %94 = tpu.matmul %92, %93, %cst_52 {dimension_numbers = #tpu.dot_dimension_numbers<[1], [0], [0], [1], [0, 0, 1, 1], [], []>, precision = #tpu.contract_precision<fp32>} : vector<8x16xf32>, vector<16x32xf32>, vector<8x32xf32> -> vector<8x32xf32>
    %c0_53 = arith.constant 0 : index
    %c0_54 = arith.constant 0 : index
    %95 = vector.load %arg12[%c0_53, %c0_54] : memref<1x32xf32, #tpu.memory_space<vmem>>, vector<1x32xf32>
    %96 = vector.broadcast %95 : vector<1x32xf32> to vector<8x32xf32>
    %97 = arith.addf %94, %96 : vector<8x32xf32>
    %cst_55 = arith.constant 0.000000e+00 : f32
    %98 = vector.broadcast %cst_55 : f32 to vector<8x32xf32>
    %99 = arith.maximumf %97, %98 : vector<8x32xf32>
    %c0_56 = arith.constant 0 : index
    %c0_57 = arith.constant 0 : index
    %100 = vector.load %arg13[%c0_56, %c0_57] : memref<32x4xf32, #tpu.memory_space<vmem>>, vector<32x4xf32>
    %cst_58 = arith.constant dense<0.000000e+00> : vector<8x4xf32>
    %101 = tpu.matmul %99, %100, %cst_58 {dimension_numbers = #tpu.dot_dimension_numbers<[1], [0], [0], [1], [0, 0, 1, 1], [], []>, precision = #tpu.contract_precision<fp32>} : vector<8x32xf32>, vector<32x4xf32>, vector<8x4xf32> -> vector<8x4xf32>
    %c0_59 = arith.constant 0 : index
    %c0_60 = arith.constant 0 : index
    %102 = vector.load %arg14[%c0_59, %c0_60] : memref<1x4xf32, #tpu.memory_space<vmem>>, vector<1x4xf32>
    %103 = vector.broadcast %102 : vector<1x4xf32> to vector<8x4xf32>
    %104 = arith.addf %101, %103 : vector<8x4xf32>
    %c0_61 = arith.constant 0 : index
    %c0_62 = arith.constant 0 : index
    %105 = vector.load %arg15[%c0_61, %c0_62] : memref<8x4xf32, #tpu.memory_space<vmem>>, vector<8x4xf32>
    tpu.vector_store %arg15[%c0_61, %c0_62], %104 {strides = array<i32>} : memref<8x4xf32, #tpu.memory_space<vmem>>, vector<8x4xf32>,
    return
  }
}

</mosaic_0001>

<llo_original>
// kernel: rnn_model_forward.1
$region0: #{rnn_model_forward.1}
  #allocation0 [shape = 'u32[]', space=smem, size = 0x4, offset = 0x4, fixed_abs, tag = 'smem constant byte address 0x4 - core index']
  #allocation1 [shape = 'u32[144,128]{1,0:T(1,128)}', space=vmem, size = 0x12000, scoped, tag = 'internal scratch']
  #allocation2 [shape = 'f32[64,32]{1,0:T(8,128)}', space=vmem, size = 0x8000, scoped, tag = 'scratch operand']
  %s0 = inlined_call_operand.vmem [shape: f32[64,16], index: 0, kind: input, shape index: {}]
  %s1 = inlined_call_operand.vmem [shape: f32[16,32], index: 1, kind: input, shape index: {}]
  %s2 = inlined_call_operand.vmem [shape: f32[1,32], index: 2, kind: input, shape index: {}]
  %s3 = inlined_call_operand.vmem [shape: f32[8,32], index: 3, kind: input, shape index: {}]
  %s4 = inlined_call_operand.vmem [shape: f32[32,32], index: 4, kind: input, shape index: {}]
  %s5 = inlined_call_operand.vmem [shape: f32[8,32], index: 5, kind: input, shape index: {}]
  %s6 = inlined_call_operand.vmem [shape: f32[32,32], index: 6, kind: input, shape index: {}]
  %s7 = inlined_call_operand.vmem [shape: f32[32,32], index: 7, kind: input, shape index: {}]
  %s8 = inlined_call_operand.vmem [shape: f32[1,32], index: 8, kind: input, shape index: {}]
  %s9 = inlined_call_operand.vmem [shape: f32[32,16], index: 9, kind: input, shape index: {}]
  %s10 = inlined_call_operand.vmem [shape: f32[1,16], index: 10, kind: input, shape index: {}]
  %s11 = inlined_call_operand.vmem [shape: f32[16,32], index: 11, kind: input, shape index: {}]
  %s12 = inlined_call_operand.vmem [shape: f32[1,32], index: 12, kind: input, shape index: {}]
  %s13 = inlined_call_operand.vmem [shape: f32[32,4], index: 13, kind: input, shape index: {}]
  %s14 = inlined_call_operand.vmem [shape: f32[1,4], index: 14, kind: input, shape index: {}]
  %s15 = inlined_call_operand.vmem [shape: f32[8,4], index: 15, kind: output, shape index: {}]
  %s16 = sld [smem:[#allocation0]]
  $region70: #{rnn_model_forward.1} parent=0
    _
  %s18 = ssub.s32 1, %s16
  %s19 = scalar_select 0, %s18, %s16
  // Predicated region
  $region2: #{rnn_model_forward.1} parent=0 // pred_check
    _
  $region3: #{rnn_model_forward.1} parent=0 // pred_check_branch
    %21 = sbr.rel (0) target = $region5
  $region4: #{rnn_model_forward.1} parent=0 // pred_region
    _
  $region5: #{rnn_model_forward.1} parent=0 // pred_fallthru
    _
  // Predicated region
  $region6: #{rnn_model_forward.1} parent=0 // pred_check
    _
  $region7: #{rnn_model_forward.1} parent=0 // pred_check_branch
    %23 = sbr.rel (0) target = $region9
  $region8: #{rnn_model_forward.1} parent=0 // pred_region
    _
  $region9: #{rnn_model_forward.1} parent=0 // pred_fallthru
    _
  // Predicated region
  $region10: #{rnn_model_forward.1} parent=0 // pred_check
    _
  $region11: #{rnn_model_forward.1} parent=0 // pred_check_branch
    %25 = sbr.rel (0) target = $region13
  $region12: #{rnn_model_forward.1} parent=0 // pred_region
    _
  $region13: #{rnn_model_forward.1} parent=0 // pred_fallthru
    _
  // Predicated region
  $region14: #{rnn_model_forward.1} parent=0 // pred_check
    _
  $region15: #{rnn_model_forward.1} parent=0 // pred_check_branch
    %27 = sbr.rel (0) target = $region17
  $region16: #{rnn_model_forward.1} parent=0 // pred_region
    _
  $region17: #{rnn_model_forward.1} parent=0 // pred_fallthru
    _
  // Predicated region
  $region18: #{rnn_model_forward.1} parent=0 // pred_check
    _
  $region19: #{rnn_model_forward.1} parent=0 // pred_check_branch
    %29 = sbr.rel (0) target = $region21
  $region20: #{rnn_model_forward.1} parent=0 // pred_region
    _
  $region21: #{rnn_model_forward.1} parent=0 // pred_fallthru
    _
  // Predicated region
  $region22: #{rnn_model_forward.1} parent=0 // pred_check
    _
  $region23: #{rnn_model_forward.1} parent=0 // pred_check_branch
    %31 = sbr.rel (0) target = $region25
  $region24: #{rnn_model_forward.1} parent=0 // pred_region
    _
  $region25: #{rnn_model_forward.1} parent=0 // pred_fallthru
    _
  // Predicated region
  $region26: #{rnn_model_forward.1} parent=0 // pred_check
    _
  $region27: #{rnn_model_forward.1} parent=0 // pred_check_branch
    %33 = sbr.rel (0) target = $region29
  $region28: #{rnn_model_forward.1} parent=0 // pred_region
    _
  $region29: #{rnn_model_forward.1} parent=0 // pred_fallthru
    _
  // Predicated region
  $region30: #{rnn_model_forward.1} parent=0 // pred_check
    _
  $region31: #{rnn_model_forward.1} parent=0 // pred_check_branch
    %35 = sbr.rel (0) target = $region33
  $region32: #{rnn_model_forward.1} parent=0 // pred_region
    _
  $region33: #{rnn_model_forward.1} parent=0 // pred_fallthru
    _
  // Predicated region
  $region34: #{rnn_model_forward.1} parent=0 // pred_check
    _
  $region35: #{rnn_model_forward.1} parent=0 // pred_check_branch
    %37 = sbr.rel (0) target = $region37
  $region36: #{rnn_model_forward.1} parent=0 // pred_region
    _
  $region37: #{rnn_model_forward.1} parent=0 // pred_fallthru
    _
  // Predicated region
  $region38: #{rnn_model_forward.1} parent=0 // pred_check
    _
  $region39: #{rnn_model_forward.1} parent=0 // pred_check_branch
    %39 = sbr.rel (0) target = $region41
  $region40: #{rnn_model_forward.1} parent=0 // pred_region
    _
  $region41: #{rnn_model_forward.1} parent=0 // pred_fallthru
    _
  // Predicated region
  $region42: #{rnn_model_forward.1} parent=0 // pred_check
    _
  $region43: #{rnn_model_forward.1} parent=0 // pred_check_branch
    %41 = sbr.rel (0) target = $region45
  $region44: #{rnn_model_forward.1} parent=0 // pred_region
    _
  $region45: #{rnn_model_forward.1} parent=0 // pred_fallthru
    _
  // Predicated region
  $region46: #{rnn_model_forward.1} parent=0 // pred_check
    _
  $region47: #{rnn_model_forward.1} parent=0 // pred_check_branch
    %43 = sbr.rel (0) target = $region49
  $region48: #{rnn_model_forward.1} parent=0 // pred_region
    _
  $region49: #{rnn_model_forward.1} parent=0 // pred_fallthru
    _
  // Predicated region
  $region50: #{rnn_model_forward.1} parent=0 // pred_check
    _
  $region51: #{rnn_model_forward.1} parent=0 // pred_check_branch
    %45 = sbr.rel (0) target = $region53
  $region52: #{rnn_model_forward.1} parent=0 // pred_region
    _
  $region53: #{rnn_model_forward.1} parent=0 // pred_fallthru
    _
  // Predicated region
  $region54: #{rnn_model_forward.1} parent=0 // pred_check
    _
  $region55: #{rnn_model_forward.1} parent=0 // pred_check_branch
    %47 = sbr.rel (0) target = $region57
  $region56: #{rnn_model_forward.1} parent=0 // pred_region
    _
  $region57: #{rnn_model_forward.1} parent=0 // pred_fallthru
    _
  // Predicated region
  $region58: #{rnn_model_forward.1} parent=0 // pred_check
    _
  $region59: #{rnn_model_forward.1} parent=0 // pred_check_branch
    %49 = sbr.rel (0) target = $region61
  $region60: #{rnn_model_forward.1} parent=0 // pred_region
    _
  $region61: #{rnn_model_forward.1} parent=0 // pred_fallthru
    _
  %v50 = vld [vmem:[%s0] sm:$0xff]
  %v51 = vld [vmem:[%s0 + $0x8] sm:$0xff]
  %v52 = vld [vmem:[%s0 + $0x10] sm:$0xff]
  %v53 = vld [vmem:[%s0 + $0x18] sm:$0xff]
  %v54 = vld [vmem:[%s0 + $0x20] sm:$0xff]
  %v55 = vld [vmem:[%s0 + $0x28] sm:$0xff]
  %v56 = vld [vmem:[%s0 + $0x30] sm:$0xff]
  %v57 = vld [vmem:[%s0 + $0x38] sm:$0xff]
  %v58 = vld [vmem:[%s1] sm:$0xff]
  %v59 = vld [vmem:[%s1 + $0x8] sm:$0xff]
  %v60 = vld [vmem:[%s2] sm:$0x1]
  %v62 = vlaneseq
  %v63 = vshrl.u32 %v62, 7
  %v64 = vsub.s32 0, %v63
  %v65 = vrot.slane %v60, %v64
  %vm67 = vcmask 130048
  %v69 = vsel %vm67, %v50, 0
  %v72 = vsel %vm67, %v51, 0
  %v75 = vsel %vm67, %v52, 0
  %v78 = vsel %vm67, %v53, 0
  %v81 = vsel %vm67, %v54, 0
  %v84 = vsel %vm67, %v55, 0
  %v87 = vsel %vm67, %v56, 0
  %v90 = vsel %vm67, %v57, 0
  %92 = vmatprep.subr.mxu0 0.0
  %v93 = vand.u32 %v58, 4294901760
  %94 = vmatpush1.msra.mxu0 %v93
  %95 = vmatprep.subr.mxu0 0.0
  %v96 = vand.u32 %v59, 4294901760
  %97 = vmatpush1.msra.mxu0 %v96
  %98 = vmatprep.subr.mxu0 0.0
  %99 = vmatpush1.msra.mxu0 0.0
  %100 = vmatprep.subr.mxu0 0.0
  %101 = vmatpush1.msra.mxu0 0.0
  %102 = vmatprep.subr.mxu0 0.0
  %103 = vmatpush1.msra.mxu0 0.0
  %104 = vmatprep.subr.mxu0 0.0
  %105 = vmatpush1.msra.mxu0 0.0
  %106 = vmatprep.subr.mxu0 0.0
  %107 = vmatpush1.msra.mxu0 0.0
  %108 = vmatprep.subr.mxu0 0.0
  %109 = vmatpush1.msra.mxu0 0.0
  %110 = vmatprep.subr.mxu0 0.0
  %111 = vmatpush1.msra.mxu0 0.0
  %112 = vmatprep.subr.mxu0 0.0
  %113 = vmatpush1.msra.mxu0 0.0
  %114 = vmatprep.subr.mxu0 0.0
  %115 = vmatpush1.msra.mxu0 0.0
  %116 = vmatprep.subr.mxu0 0.0
  %117 = vmatpush1.msra.mxu0 0.0
  %118 = vmatprep.subr.mxu0 0.0
  %119 = vmatpush1.msra.mxu0 0.0
  %120 = vmatprep.subr.mxu0 0.0
  %121 = vmatpush1.msra.mxu0 0.0
  %122 = vmatprep.subr.mxu0 0.0
  %123 = vmatpush1.msra.mxu0 0.0
  %124 = vmatprep.subr.mxu0 0.0
  %125 = vmatpush1.msra.mxu0 0.0
  %126 = vmatprep.subr.mxu0 0.0
  %127 = vmatpush1.msra.mxu0 0.0
  %128 = vmatprep.subr.mxu0 0.0
  %129 = vmatpush1.msra.mxu0 0.0
  %130 = vmatprep.subr.mxu0 0.0
  %131 = vmatpush1.msra.mxu0 0.0
  %132 = vmatprep.subr.mxu0 0.0
  %133 = vmatpush1.msra.mxu0 0.0
  %134 = vmatprep.subr.mxu0 0.0
  %135 = vmatpush1.msra.mxu0 0.0
  %136 = vmatprep.subr.mxu0 0.0
  %137 = vmatpush1.msra.mxu0 0.0
  %138 = vmatprep.subr.mxu0 0.0
  %139 = vmatpush1.msra.mxu0 0.0
  %140 = vmatprep.subr.mxu0 0.0
  %141 = vmatpush1.msra.mxu0 0.0
  %142 = vmatprep.subr.mxu0 0.0
  %143 = vmatpush1.msra.mxu0 0.0
  %144 = vmatprep.subr.mxu0 0.0
  %145 = vmatpush1.msra.mxu0 0.0
  %146 = vmatprep.subr.mxu0 0.0
  %147 = vmatpush1.msra.mxu0 0.0
  %148 = vmatprep.subr.mxu0 0.0
  %149 = vmatpush1.msra.mxu0 0.0
  %150 = vmatprep.subr.mxu0 0.0
  %151 = vmatpush1.msra.mxu0 0.0
  %152 = vmatprep.subr.mxu0 0.0
  %153 = vmatpush1.msra.mxu0 0.0
  %154 = vmatprep.subr.mxu0 0.0
  %155 = vmatpush1.msra.mxu0 0.0
  %156 = vmatprep.subr.mxu0 0.0
  %157 = vmatpush1.msra.mxu0 0.0
  %158 = vmatprep.mubr.f32.mxu0 0.0
  %v159 = vand.u32 %v69, 4294901760
  %v160 = vsub.f32 %v69, %v159
  %v161 = vand.u32 %v160, 4294901760
  %v162 = vsub.f32 %v160, %v161
  %v163 = vand.u32 %v162, 4294901760
  %164 = vmatmul.mubr.f32.gmra.mrb[0].mxu0 %v163
  %v165 = vpop.f32.mrb[0].mxu0
  %v166 = vadd.f32 %v65, %v165
  %v167 = vpop.f32.mrb[0].mxu0
  %168 = vmatprep.mubr.f32.mxu0 0.0
  %v169 = vand.u32 %v72, 4294901760
  %v170 = vsub.f32 %v72, %v169
  %v171 = vand.u32 %v170, 4294901760
  %v172 = vsub.f32 %v170, %v171
  %v173 = vand.u32 %v172, 4294901760
  %174 = vmatmul.mubr.f32.gmra.mrb[0].mxu0 %v173
  %v175 = vpop.f32.mrb[0].mxu0
  %v176 = vadd.f32 %v65, %v175
  %v177 = vpop.f32.mrb[0].mxu0
  %178 = vmatprep.mubr.f32.mxu0 0.0
  %v179 = vand.u32 %v75, 4294901760
  %v180 = vsub.f32 %v75, %v179
  %v181 = vand.u32 %v180, 4294901760
  %v182 = vsub.f32 %v180, %v181
  %v183 = vand.u32 %v182, 4294901760
  %184 = vmatmul.mubr.f32.gmra.mrb[0].mxu0 %v183
  %v185 = vpop.f32.mrb[0].mxu0
  %v186 = vadd.f32 %v65, %v185
  %v187 = vpop.f32.mrb[0].mxu0
  %188 = vmatprep.mubr.f32.mxu0 0.0
  %v189 = vand.u32 %v78, 4294901760
  %v190 = vsub.f32 %v78, %v189
  %v191 = vand.u32 %v190, 4294901760
  %v192 = vsub.f32 %v190, %v191
  %v193 = vand.u32 %v192, 4294901760
  %194 = vmatmul.mubr.f32.gmra.mrb[0].mxu0 %v193
  %v195 = vpop.f32.mrb[0].mxu0
  %v196 = vadd.f32 %v65, %v195
  %v197 = vpop.f32.mrb[0].mxu0
  %198 = vmatprep.mubr.f32.mxu0 0.0
  %v199 = vand.u32 %v81, 4294901760
  %v200 = vsub.f32 %v81, %v199
  %v201 = vand.u32 %v200, 4294901760
  %v202 = vsub.f32 %v200, %v201
  %v203 = vand.u32 %v202, 4294901760
  %204 = vmatmul.mubr.f32.gmra.mrb[0].mxu0 %v203
  %v205 = vpop.f32.mrb[0].mxu0
  %v206 = vadd.f32 %v65, %v205
  %v207 = vpop.f32.mrb[0].mxu0
  %208 = vmatprep.mubr.f32.mxu0 0.0
  %v209 = vand.u32 %v84, 4294901760
  %v210 = vsub.f32 %v84, %v209
  %v211 = vand.u32 %v210, 4294901760
  %v212 = vsub.f32 %v210, %v211
  %v213 = vand.u32 %v212, 4294901760
  %214 = vmatmul.mubr.f32.gmra.mrb[0].mxu0 %v213
  %v215 = vpop.f32.mrb[0].mxu0
  %v216 = vadd.f32 %v65, %v215
  %v217 = vpop.f32.mrb[0].mxu0
  %218 = vmatprep.mubr.f32.mxu0 0.0
  %v219 = vand.u32 %v87, 4294901760
  %v220 = vsub.f32 %v87, %v219
  %v221 = vand.u32 %v220, 4294901760
  %v222 = vsub.f32 %v220, %v221
  %v223 = vand.u32 %v222, 4294901760
  %224 = vmatmul.mubr.f32.gmra.mrb[0].mxu0 %v223
  %v225 = vpop.f32.mrb[0].mxu0
  %v226 = vadd.f32 %v65, %v225
  %v227 = vpop.f32.mrb[0].mxu0
  %228 = vmatprep.mubr.f32.mxu0 0.0
  %v229 = vand.u32 %v90, 4294901760
  %v230 = vsub.f32 %v90, %v229
  %v231 = vand.u32 %v230, 4294901760
  %v232 = vsub.f32 %v230, %v231
  %v233 = vand.u32 %v232, 4294901760
  %234 = vmatmul.mubr.f32.gmra.mrb[0].mxu0 %v233
  %v235 = vpop.f32.mrb[0].mxu0
  %v236 = vadd.f32 %v65, %v235
  %v237 = vpop.f32.mrb[0].mxu0
  %238 = vdwg.mxu0
  %239 = vmatprep.subr.mxu0 0.0
  %v240 = vand.u32 %v58, 4294901760
  %v241 = vsub.f32 %v58, %v240
  %v242 = vand.u32 %v241, 4294901760
  %v243 = vsub.f32 %v241, %v242
  %v244 = vand.u32 %v243, 4294901760
  %245 = vmatpush1.msra.mxu0 %v244
  %246 = vmatprep.subr.mxu0 0.0
  %v247 = vand.u32 %v59, 4294901760
  %v248 = vsub.f32 %v59, %v247
  %v249 = vand.u32 %v248, 4294901760
  %v250 = vsub.f32 %v248, %v249
  %v251 = vand.u32 %v250, 4294901760
  %252 = vmatpush1.msra.mxu0 %v251
  %253 = vmatprep.subr.mxu0 0.0
  %254 = vmatpush1.msra.mxu0 0.0
  %255 = vmatprep.subr.mxu0 0.0
  %256 = vmatpush1.msra.mxu0 0.0
  %257 = vmatprep.subr.mxu0 0.0
  %258 = vmatpush1.msra.mxu0 0.0
  %259 = vmatprep.subr.mxu0 0.0
  %260 = vmatpush1.msra.mxu0 0.0
  %261 = vmatprep.subr.mxu0 0.0
  %262 = vmatpush1.msra.mxu0 0.0
  %263 = vmatprep.subr.mxu0 0.0
  %264 = vmatpush1.msra.mxu0 0.0
  %265 = vmatprep.subr.mxu0 0.0
  %266 = vmatpush1.msra.mxu0 0.0
  %267 = vmatprep.subr.mxu0 0.0
  %268 = vmatpush1.msra.mxu0 0.0
  %269 = vmatprep.subr.mxu0 0.0
  %270 = vmatpush1.msra.mxu0 0.0
  %271 = vmatprep.subr.mxu0 0.0
  %272 = vmatpush1.msra.mxu0 0.0
  %273 = vmatprep.subr.mxu0 0.0
  %274 = vmatpush1.msra.mxu0 0.0
  %275 = vmatprep.subr.mxu0 0.0
  %276 = vmatpush1.msra.mxu0 0.0
  %277 = vmatprep.subr.mxu0 0.0
  %278 = vmatpush1.msra.mxu0 0.0
  %279 = vmatprep.subr.mxu0 0.0
  %280 = vmatpush1.msra.mxu0 0.0
  %281 = vmatprep.subr.mxu0 0.0
  %282 = vmatpush1.msra.mxu0 0.0
  %283 = vmatprep.subr.mxu0 0.0
  %284 = vmatpush1.msra.mxu0 0.0
  %285 = vmatprep.subr.mxu0 0.0
  %286 = vmatpush1.msra.mxu0 0.0
  %287 = vmatprep.subr.mxu0 0.0
  %288 = vmatpush1.msra.mxu0 0.0
  %289 = vmatprep.subr.mxu0 0.0
  %290 = vmatpush1.msra.mxu0 0.0
  %291 = vmatprep.subr.mxu0 0.0
  %292 = vmatpush1.msra.mxu0 0.0
  %293 = vmatprep.subr.mxu0 0.0
  %294 = vmatpush1.msra.mxu0 0.0
  %295 = vmatprep.subr.mxu0 0.0
  %296 = vmatpush1.msra.mxu0 0.0
  %297 = vmatprep.subr.mxu0 0.0
  %298 = vmatpush1.msra.mxu0 0.0
  %299 = vmatprep.subr.mxu0 0.0
  %300 = vmatpush1.msra.mxu0 0.0
  %301 = vmatprep.subr.mxu0 0.0
  %302 = vmatpush1.msra.mxu0 0.0
  %303 = vmatprep.subr.mxu0 0.0
  %304 = vmatpush1.msra.mxu0 0.0
  %305 = vmatprep.subr.mxu0 0.0
  %306 = vmatpush1.msra.mxu0 0.0
  %307 = vmatprep.subr.mxu0 0.0
  %308 = vmatpush1.msra.mxu0 0.0
  %309 = vmatprep.subr.mxu0 0.0
  %310 = vmatpush1.msra.mxu0 0.0
  %311 = vmatprep.subr.mxu0 0.0
  %312 = vmatpush1.msra.mxu0 0.0
  %313 = vmatprep.mubr.f32.mxu0 0.0
  %v314 = vand.u32 %v69, 4294901760
  %315 = vmatmul.mubr.f32.gmra.mrb[0].mxu0 %v314
  %v316 = vpop.f32.mrb[0].mxu0
  %v317 = vadd.f32 %v166, %v316
  %v318 = vpop.f32.mrb[0].mxu0
  %319 = vmatprep.mubr.f32.mxu0 0.0
  %v320 = vand.u32 %v72, 4294901760
  %321 = vmatmul.mubr.f32.gmra.mrb[0].mxu0 %v320
  %v322 = vpop.f32.mrb[0].mxu0
  %v323 = vadd.f32 %v176, %v322
  %v324 = vpop.f32.mrb[0].mxu0
  %325 = vmatprep.mubr.f32.mxu0 0.0
  %v326 = vand.u32 %v75, 4294901760
  %327 = vmatmul.mubr.f32.gmra.mrb[0].mxu0 %v326
  %v328 = vpop.f32.mrb[0].mxu0
  %v329 = vadd.f32 %v186, %v328
  %v330 = vpop.f32.mrb[0].mxu0
  %331 = vmatprep.mubr.f32.mxu0 0.0
  %v332 = vand.u32 %v78, 4294901760
  %333 = vmatmul.mubr.f32.gmra.mrb[0].mxu0 %v332
  %v334 = vpop.f32.mrb[0].mxu0
  %v335 = vadd.f32 %v196, %v334
  %v336 = vpop.f32.mrb[0].mxu0
  %337 = vmatprep.mubr.f32.mxu0 0.0
  %v338 = vand.u32 %v81, 4294901760
  %339 = vmatmul.mubr.f32.gmra.mrb[0].mxu0 %v338
  %v340 = vpop.f32.mrb[0].mxu0
  %v341 = vadd.f32 %v206, %v340
  %v342 = vpop.f32.mrb[0].mxu0
  %343 = vmatprep.mubr.f32.mxu0 0.0
  %v344 = vand.u32 %v84, 4294901760
  %345 = vmatmul.mubr.f32.gmra.mrb[0].mxu0 %v344
  %v346 = vpop.f32.mrb[0].mxu0
  %v347 = vadd.f32 %v216, %v346
  %v348 = vpop.f32.mrb[0].mxu0
  %349 = vmatprep.mubr.f32.mxu0 0.0
  %v350 = vand.u32 %v87, 4294901760
  %351 = vmatmul.mubr.f32.gmra.mrb[0].mxu0 %v350
  %v352 = vpop.f32.mrb[0].mxu0
  %v353 = vadd.f32 %v226, %v352
  %v354 = vpop.f32.mrb[0].mxu0
  %355 = vmatprep.mubr.f32.mxu0 0.0
  %v356 = vand.u32 %v90, 4294901760
  %357 = vmatmul.mubr.f32.gmra.mrb[0].mxu0 %v356
  %v358 = vpop.f32.mrb[0].mxu0
  %v359 = vadd.f32 %v236, %v358
  %v360 = vpop.f32.mrb[0].mxu0
  %361 = vdwg.mxu0
  %362 = vmatprep.subr.mxu0 0.0
  %v363 = vand.u32 %v58, 4294901760
  %v364 = vsub.f32 %v58, %v363
  %365 = vmatpush1.msra.mxu0 %v364
  %366 = vmatprep.subr.mxu0 0.0
  %v367 = vand.u32 %v59, 4294901760
  %v368 = vsub.f32 %v59, %v367
  %369 = vmatpush1.msra.mxu0 %v368
  %370 = vmatprep.subr.mxu0 0.0
  %371 = vmatpush1.msra.mxu0 0.0
  %372 = vmatprep.subr.mxu0 0.0
  %373 = vmatpush1.msra.mxu0 0.0
  %374 = vmatprep.subr.mxu0 0.0
  %375 = vmatpush1.msra.mxu0 0.0
  %376 = vmatprep.subr.mxu0 0.0
  %377 = vmatpush1.msra.mxu0 0.0
  %378 = vmatprep.subr.mxu0 0.0
  %379 = vmatpush1.msra.mxu0 0.0
  %380 = vmatprep.subr.mxu0 0.0
  %381 = vmatpush1.msra.mxu0 0.0
  %382 = vmatprep.subr.mxu0 0.0
  %383 = vmatpush1.msra.mxu0 0.0
  %384 = vmatprep.subr.mxu0 0.0
  %385 = vmatpush1.msra.mxu0 0.0
  %386 = vmatprep.subr.mxu0 0.0
  %387 = vmatpush1.msra.mxu0 0.0
  %388 = vmatprep.subr.mxu0 0.0
  %389 = vmatpush1.msra.mxu0 0.0
  %390 = vmatprep.subr.mxu0 0.0
  %391 = vmatpush1.msra.mxu0 0.0
  %392 = vmatprep.subr.mxu0 0.0
  %393 = vmatpush1.msra.mxu0 0.0
  %394 = vmatprep.subr.mxu0 0.0
  %395 = vmatpush1.msra.mxu0 0.0
  %396 = vmatprep.subr.mxu0 0.0
  %397 = vmatpush1.msra.mxu0 0.0
  %398 = vmatprep.subr.mxu0 0.0
  %399 = vmatpush1.msra.mxu0 0.0
  %400 = vmatprep.subr.mxu0 0.0
  %401 = vmatpush1.msra.mxu0 0.0
  %402 = vmatprep.subr.mxu0 0.0
  %403 = vmatpush1.msra.mxu0 0.0
  %404 = vmatprep.subr.mxu0 0.0
  %405 = vmatpush1.msra.mxu0 0.0
  %406 = vmatprep.subr.mxu0 0.0
  %407 = vmatpush1.msra.mxu0 0.0
  %408 = vmatprep.subr.mxu0 0.0
  %409 = vmatpush1.msra.mxu0 0.0
  %410 = vmatprep.subr.mxu0 0.0
  %411 = vmatpush1.msra.mxu0 0.0
  %412 = vmatprep.subr.mxu0 0.0
  %413 = vmatpush1.msra.mxu0 0.0
  %414 = vmatprep.subr.mxu0 0.0
  %415 = vmatpush1.msra.mxu0 0.0
  %416 = vmatprep.subr.mxu0 0.0
  %417 = vmatpush1.msra.mxu0 0.0
  %418 = vmatprep.subr.mxu0 0.0
  %419 = vmatpush1.msra.mxu0 0.0
  %420 = vmatprep.subr.mxu0 0.0
  %421 = vmatpush1.msra.mxu0 0.0
  %422 = vmatprep.subr.mxu0 0.0
  %423 = vmatpush1.msra.mxu0 0.0
  %424 = vmatprep.subr.mxu0 0.0
  %425 = vmatpush1.msra.mxu0 0.0
  %426 = vmatprep.subr.mxu0 0.0
  %427 = vmatpush1.msra.mxu0 0.0
  %428 = vmatprep.subr.mxu0 0.0
  %429 = vmatpush1.msra.mxu0 0.0
  %430 = vmatprep.mubr.f32.mxu0 0.0
  %v431 = vand.u32 %v69, 4294901760
  %v432 = vsub.f32 %v69, %v431
  %433 = vmatmul.mubr.f32.gmra.mrb[0].mxu0 %v432
  %v434 = vpop.f32.mrb[0].mxu0
  %v435 = vadd.f32 %v317, %v434
  %v436 = vpop.f32.mrb[0].mxu0
  %437 = vmatprep.mubr.f32.mxu0 0.0
  %v438 = vand.u32 %v72, 4294901760
  %v439 = vsub.f32 %v72, %v438
  %440 = vmatmul.mubr.f32.gmra.mrb[0].mxu0 %v439
  %v441 = vpop.f32.mrb[0].mxu0
  %v442 = vadd.f32 %v323, %v441
  %v443 = vpop.f32.mrb[0].mxu0
  %444 = vmatprep.mubr.f32.mxu0 0.0
  %v445 = vand.u32 %v75, 4294901760
  %v446 = vsub.f32 %v75, %v445
  %447 = vmatmul.mubr.f32.gmra.mrb[0].mxu0 %v446
  %v448 = vpop.f32.mrb[0].mxu0
  %v449 = vadd.f32 %v329, %v448
  %v450 = vpop.f32.mrb[0].mxu0
  %451 = vmatprep.mubr.f32.mxu0 0.0
  %v452 = vand.u32 %v78, 4294901760
  %v453 = vsub.f32 %v78, %v452
  %454 = vmatmul.mubr.f32.gmra.mrb[0].mxu0 %v453
  %v455 = vpop.f32.mrb[0].mxu0
  %v456 = vadd.f32 %v335, %v455
  %v457 = vpop.f32.mrb[0].mxu0
  %458 = vmatprep.mubr.f32.mxu0 0.0
  %v459 = vand.u32 %v81, 4294901760
  %v460 = vsub.f32 %v81, %v459
  %461 = vmatmul.mubr.f32.gmra.mrb[0].mxu0 %v460
  %v462 = vpop.f32.mrb[0].mxu0
  %v463 = vadd.f32 %v341, %v462
  %v464 = vpop.f32.mrb[0].mxu0
  %465 = vmatprep.mubr.f32.mxu0 0.0
  %v466 = vand.u32 %v84, 4294901760
  %v467 = vsub.f32 %v84, %v466
  %468 = vmatmul.mubr.f32.gmra.mrb[0].mxu0 %v467
  %v469 = vpop.f32.mrb[0].mxu0
  %v470 = vadd.f32 %v347, %v469
  %v471 = vpop.f32.mrb[0].mxu0
  %472 = vmatprep.mubr.f32.mxu0 0.0
  %v473 = vand.u32 %v87, 4294901760
  %v474 = vsub.f32 %v87, %v473
  %475 = vmatmul.mubr.f32.gmra.mrb[0].mxu0 %v474
  %v476 = vpop.f32.mrb[0].mxu0
  %v477 = vadd.f32 %v353, %v476
  %v478 = vpop.f32.mrb[0].mxu0
  %479 = vmatprep.mubr.f32.mxu0 0.0
  %v480 = vand.u32 %v90, 4294901760
  %v481 = vsub.f32 %v90, %v480
  %482 = vmatmul.mubr.f32.gmra.mrb[0].mxu0 %v481
  %v483 = vpop.f32.mrb[0].mxu0
  %v484 = vadd.f32 %v359, %v483
  %v485 = vpop.f32.mrb[0].mxu0
  %486 = vdwg.mxu0
  %487 = vmatprep.subr.mxu0 0.0
  %v488 = vand.u32 %v58, 4294901760
  %489 = vmatpush1.msra.mxu0 %v488
  %490 = vmatprep.subr.mxu0 0.0
  %v491 = vand.u32 %v59, 4294901760
  %492 = vmatpush1.msra.mxu0 %v491
  %493 = vmatprep.subr.mxu0 0.0
  %494 = vmatpush1.msra.mxu0 0.0
  %495 = vmatprep.subr.mxu0 0.0
  %496 = vmatpush1.msra.mxu0 0.0
  %497 = vmatprep.subr.mxu0 0.0
  %498 = vmatpush1.msra.mxu0 0.0
  %499 = vmatprep.subr.mxu0 0.0
  %500 = vmatpush1.msra.mxu0 0.0
  %501 = vmatprep.subr.mxu0 0.0
  %502 = vmatpush1.msra.mxu0 0.0
  %503 = vmatprep.subr.mxu0 0.0
  %504 = vmatpush1.msra.mxu0 0.0
  %505 = vmatprep.subr.mxu0 0.0
  %506 = vmatpush1.msra.mxu0 0.0
  %507 = vmatprep.subr.mxu0 0.0
  %508 = vmatpush1.msra.mxu0 0.0
  %509 = vmatprep.subr.mxu0 0.0
  %510 = vmatpush1.msra.mxu0 0.0
  %511 = vmatprep.subr.mxu0 0.0
  %512 = vmatpush1.msra.mxu0 0.0
  %513 = vmatprep.subr.mxu0 0.0
  %514 = vmatpush1.msra.mxu0 0.0
  %515 = vmatprep.subr.mxu0 0.0
  %516 = vmatpush1.msra.mxu0 0.0
  %517 = vmatprep.subr.mxu0 0.0
  %518 = vmatpush1.msra.mxu0 0.0
  %519 = vmatprep.subr.mxu0 0.0
  %520 = vmatpush1.msra.mxu0 0.0
  %521 = vmatprep.subr.mxu0 0.0
  %522 = vmatpush1.msra.mxu0 0.0
  %523 = vmatprep.subr.mxu0 0.0
  %524 = vmatpush1.msra.mxu0 0.0
  %525 = vmatprep.subr.mxu0 0.0
  %526 = vmatpush1.msra.mxu0 0.0
  %527 = vmatprep.subr.mxu0 0.0
  %528 = vmatpush1.msra.mxu0 0.0
  %529 = vmatprep.subr.mxu0 0.0
  %530 = vmatpush1.msra.mxu0 0.0
  %531 = vmatprep.subr.mxu0 0.0
  %532 = vmatpush1.msra.mxu0 0.0
  %533 = vmatprep.subr.mxu0 0.0
  %534 = vmatpush1.msra.mxu0 0.0
  %535 = vmatprep.subr.mxu0 0.0
  %536 = vmatpush1.msra.mxu0 0.0
  %537 = vmatprep.subr.mxu0 0.0
  %538 = vmatpush1.msra.mxu0 0.0
  %539 = vmatprep.subr.mxu0 0.0
  %540 = vmatpush1.msra.mxu0 0.0
  %541 = vmatprep.subr.mxu0 0.0
  %542 = vmatpush1.msra.mxu0 0.0
  %543 = vmatprep.subr.mxu0 0.0
  %544 = vmatpush1.msra.mxu0 0.0
  %545 = vmatprep.subr.mxu0 0.0
  %546 = vmatpush1.msra.mxu0 0.0
  %547 = vmatprep.subr.mxu0 0.0
  %548 = vmatpush1.msra.mxu0 0.0
  %549 = vmatprep.subr.mxu0 0.0
  %550 = vmatpush1.msra.mxu0 0.0
  %551 = vmatprep.subr.mxu0 0.0
  %552 = vmatpush1.msra.mxu0 0.0
  %553 = vmatprep.mubr.f32.mxu0 0.0
  %v554 = vand.u32 %v69, 4294901760
  %v555 = vsub.f32 %v69, %v554
  %v556 = vand.u32 %v555, 4294901760
  %557 = vmatmul.mubr.f32.gmra.mrb[0].mxu0 %v556
  %v558 = vpop.f32.mrb[0].mxu0
  %v559 = vadd.f32 %v435, %v558
  %v560 = vpop.f32.mrb[0].mxu0
  %561 = vmatprep.mubr.f32.mxu0 0.0
  %v562 = vand.u32 %v72, 4294901760
  %v563 = vsub.f32 %v72, %v562
  %v564 = vand.u32 %v563, 4294901760
  %565 = vmatmul.mubr.f32.gmra.mrb[0].mxu0 %v564
  %v566 = vpop.f32.mrb[0].mxu0
  %v567 = vadd.f32 %v442, %v566
  %v568 = vpop.f32.mrb[0].mxu0
  %569 = vmatprep.mubr.f32.mxu0 0.0
  %v570 = vand.u32 %v75, 4294901760
  %v571 = vsub.f32 %v75, %v570
  %v572 = vand.u32 %v571, 4294901760
  %573 = vmatmul.mubr.f32.gmra.mrb[0].mxu0 %v572
  %v574 = vpop.f32.mrb[0].mxu0
  %v575 = vadd.f32 %v449, %v574
  %v576 = vpop.f32.mrb[0].mxu0
  %577 = vmatprep.mubr.f32.mxu0 0.0
  %v578 = vand.u32 %v78, 4294901760
  %v579 = vsub.f32 %v78, %v578
  %v580 = vand.u32 %v579, 4294901760
  %581 = vmatmul.mubr.f32.gmra.mrb[0].mxu0 %v580
  %v582 = vpop.f32.mrb[0].mxu0
  %v583 = vadd.f32 %v456, %v582
  %v584 = vpop.f32.mrb[0].mxu0
  %585 = vmatprep.mubr.f32.mxu0 0.0
  %v586 = vand.u32 %v81, 4294901760
  %v587 = vsub.f32 %v81, %v586
  %v588 = vand.u32 %v587, 4294901760
  %589 = vmatmul.mubr.f32.gmra.mrb[0].mxu0 %v588
  %v590 = vpop.f32.mrb[0].mxu0
  %v591 = vadd.f32 %v463, %v590
  %v592 = vpop.f32.mrb[0].mxu0
  %593 = vmatprep.mubr.f32.mxu0 0.0
  %v594 = vand.u32 %v84, 4294901760
  %v595 = vsub.f32 %v84, %v594
  %v596 = vand.u32 %v595, 4294901760
  %597 = vmatmul.mubr.f32.gmra.mrb[0].mxu0 %v596
  %v598 = vpop.f32.mrb[0].mxu0
  %v599 = vadd.f32 %v470, %v598
  %v600 = vpop.f32.mrb[0].mxu0
  %601 = vmatprep.mubr.f32.mxu0 0.0
  %v602 = vand.u32 %v87, 4294901760
  %v603 = vsub.f32 %v87, %v602
  %v604 = vand.u32 %v603, 4294901760
  %605 = vmatmul.mubr.f32.gmra.mrb[0].mxu0 %v604
  %v606 = vpop.f32.mrb[0].mxu0
  %v607 = vadd.f32 %v477, %v606
  %v608 = vpop.f32.mrb[0].mxu0
  %609 = vmatprep.mubr.f32.mxu0 0.0
  %v610 = vand.u32 %v90, 4294901760
  %v611 = vsub.f32 %v90, %v610
  %v612 = vand.u32 %v611, 4294901760
  %613 = vmatmul.mubr.f32.gmra.mrb[0].mxu0 %v612
  %v614 = vpop.f32.mrb[0].mxu0
  %v615 = vadd.f32 %v484, %v614
  %v616 = vpop.f32.mrb[0].mxu0
  %617 = vdwg.mxu0
  %618 = vmatprep.subr.mxu0 0.0
  %v619 = vand.u32 %v58, 4294901760
  %v620 = vsub.f32 %v58, %v619
  %v621 = vand.u32 %v620, 4294901760
  %622 = vmatpush1.msra.mxu0 %v621
  %623 = vmatprep.subr.mxu0 0.0
  %v624 = vand.u32 %v59, 4294901760
  %v625 = vsub.f32 %v59, %v624
  %v626 = vand.u32 %v625, 4294901760
  %627 = vmatpush1.msra.mxu0 %v626
  %628 = vmatprep.subr.mxu0 0.0
  %629 = vmatpush1.msra.mxu0 0.0
  %630 = vmatprep.subr.mxu0 0.0
  %631 = vmatpush1.msra.mxu0 0.0
  %632 = vmatprep.subr.mxu0 0.0
  %633 = vmatpush1.msra.mxu0 0.0
  %634 = vmatprep.subr.mxu0 0.0
  %635 = vmatpush1.msra.mxu0 0.0
  %636 = vmatprep.subr.mxu0 0.0
  %637 = vmatpush1.msra.mxu0 0.0
  %638 = vmatprep.subr.mxu0 0.0
  %639 = vmatpush1.msra.mxu0 0.0
  %640 = vmatprep.subr.mxu0 0.0
  %641 = vmatpush1.msra.mxu0 0.0
  %642 = vmatprep.subr.mxu0 0.0
  %643 = vmatpush1.msra.mxu0 0.0
  %644 = vmatprep.subr.mxu0 0.0
  %645 = vmatpush1.msra.mxu0 0.0
  %646 = vmatprep.subr.mxu0 0.0
  %647 = vmatpush1.msra.mxu0 0.0
  %648 = vmatprep.subr.mxu0 0.0
  %649 = vmatpush1.msra.mxu0 0.0
  %650 = vmatprep.subr.mxu0 0.0
  %651 = vmatpush1.msra.mxu0 0.0
  %652 = vmatprep.subr.mxu0 0.0
  %653 = vmatpush1.msra.mxu0 0.0
  %654 = vmatprep.subr.mxu0 0.0
  %655 = vmatpush1.msra.mxu0 0.0
  %656 = vmatprep.subr.mxu0 0.0
  %657 = vmatpush1.msra.mxu0 0.0
  %658 = vmatprep.subr.mxu0 0.0
  %659 = vmatpush1.msra.mxu0 0.0
  %660 = vmatprep.subr.mxu0 0.0
  %661 = vmatpush1.msra.mxu0 0.0
  %662 = vmatprep.subr.mxu0 0.0
  %663 = vmatpush1.msra.mxu0 0.0
  %664 = vmatprep.subr.mxu0 0.0
  %665 = vmatpush1.msra.mxu0 0.0
  %666 = vmatprep.subr.mxu0 0.0
  %667 = vmatpush1.msra.mxu0 0.0
  %668 = vmatprep.subr.mxu0 0.0
  %669 = vmatpush1.msra.mxu0 0.0
  %670 = vmatprep.subr.mxu0 0.0
  %671 = vmatpush1.msra.mxu0 0.0
  %672 = vmatprep.subr.mxu0 0.0
  %673 = vmatpush1.msra.mxu0 0.0
  %674 = vmatprep.subr.mxu0 0.0
  %675 = vmatpush1.msra.mxu0 0.0
  %676 = vmatprep.subr.mxu0 0.0
  %677 = vmatpush1.msra.mxu0 0.0
  %678 = vmatprep.subr.mxu0 0.0
  %679 = vmatpush1.msra.mxu0 0.0
  %680 = vmatprep.subr.mxu0 0.0
  %681 = vmatpush1.msra.mxu0 0.0
  %682 = vmatprep.subr.mxu0 0.0
  %683 = vmatpush1.msra.mxu0 0.0
  %684 = vmatprep.subr.mxu0 0.0
  %685 = vmatpush1.msra.mxu0 0.0
  %686 = vmatprep.subr.mxu0 0.0
  %687 = vmatpush1.msra.mxu0 0.0
  %688 = vmatprep.mubr.f32.mxu0 0.0
  %v689 = vand.u32 %v69, 4294901760
  %690 = vmatmul.mubr.f32.gmra.mrb[0].mxu0 %v689
  %v691 = vpop.f32.mrb[0].mxu0
  %v692 = vadd.f32 %v559, %v691
  %v693 = vpop.f32.mrb[0].mxu0
  %694 = vmatprep.mubr.f32.mxu0 0.0
  %v695 = vand.u32 %v72, 4294901760
  %696 = vmatmul.mubr.f32.gmra.mrb[0].mxu0 %v695
  %v697 = vpop.f32.mrb[0].mxu0
  %v698 = vadd.f32 %v567, %v697
  %v699 = vpop.f32.mrb[0].mxu0
  %700 = vmatprep.mubr.f32.mxu0 0.0
  %v701 = vand.u32 %v75, 4294901760
  %702 = vmatmul.mubr.f32.gmra.mrb[0].mxu0 %v701
  %v703 = vpop.f32.mrb[0].mxu0
  %v704 = vadd.f32 %v575, %v703
  %v705 = vpop.f32.mrb[0].mxu0
  %706 = vmatprep.mubr.f32.mxu0 0.0
  %v707 = vand.u32 %v78, 4294901760
  %708 = vmatmul.mubr.f32.gmra.mrb[0].mxu0 %v707
  %v709 = vpop.f32.mrb[0].mxu0
  %v710 = vadd.f32 %v583, %v709
  %v711 = vpop.f32.mrb[0].mxu0
  %712 = vmatprep.mubr.f32.mxu0 0.0
  %v713 = vand.u32 %v81, 4294901760
  %714 = vmatmul.mubr.f32.gmra.mrb[0].mxu0 %v713
  %v715 = vpop.f32.mrb[0].mxu0
  %v716 = vadd.f32 %v591, %v715
  %v717 = vpop.f32.mrb[0].mxu0
  %718 = vmatprep.mubr.f32.mxu0 0.0
  %v719 = vand.u32 %v84, 4294901760
  %720 = vmatmul.mubr.f32.gmra.mrb[0].mxu0 %v719
  %v721 = vpop.f32.mrb[0].mxu0
  %v722 = vadd.f32 %v599, %v721
  %v723 = vpop.f32.mrb[0].mxu0
  %724 = vmatprep.mubr.f32.mxu0 0.0
  %v725 = vand.u32 %v87, 4294901760
  %726 = vmatmul.mubr.f32.gmra.mrb[0].mxu0 %v725
  %v727 = vpop.f32.mrb[0].mxu0
  %v728 = vadd.f32 %v607, %v727
  %v729 = vpop.f32.mrb[0].mxu0
  %730 = vmatprep.mubr.f32.mxu0 0.0
  %v731 = vand.u32 %v90, 4294901760
  %732 = vmatmul.mubr.f32.gmra.mrb[0].mxu0 %v731
  %v733 = vpop.f32.mrb[0].mxu0
  %v734 = vadd.f32 %v615, %v733
  %v735 = vpop.f32.mrb[0].mxu0
  %736 = vdwg.mxu0
  %737 = vmatprep.subr.mxu0 0.0
  %v738 = vand.u32 %v58, 4294901760
  %739 = vmatpush1.msra.mxu0 %v738
  %740 = vmatprep.subr.mxu0 0.0
  %v741 = vand.u32 %v59, 4294901760
  %742 = vmatpush1.msra.mxu0 %v741
  %743 = vmatprep.subr.mxu0 0.0
  %744 = vmatpush1.msra.mxu0 0.0
  %745 = vmatprep.subr.mxu0 0.0
  %746 = vmatpush1.msra.mxu0 0.0
  %747 = vmatprep.subr.mxu0 0.0
  %748 = vmatpush1.msra.mxu0 0.0
  %749 = vmatprep.subr.mxu0 0.0
  %750 = vmatpush1.msra.mxu0 0.0
  %751 = vmatprep.subr.mxu0 0.0
  %752 = vmatpush1.msra.mxu0 0.0
  %753 = vmatprep.subr.mxu0 0.0
  %754 = vmatpush1.msra.mxu0 0.0
  %755 = vmatprep.subr.mxu0 0.0
  %756 = vmatpush1.msra.mxu0 0.0
  %757 = vmatprep.subr.mxu0 0.0
  %758 = vmatpush1.msra.mxu0 0.0
  %759 = vmatprep.subr.mxu0 0.0
  %760 = vmatpush1.msra.mxu0 0.0
  %761 = vmatprep.subr.mxu0 0.0
  %762 = vmatpush1.msra.mxu0 0.0
  %763 = vmatprep.subr.mxu0 0.0
  %764 = vmatpush1.msra.mxu0 0.0
  %765 = vmatprep.subr.mxu0 0.0
  %766 = vmatpush1.msra.mxu0 0.0
  %767 = vmatprep.subr.mxu0 0.0
  %768 = vmatpush1.msra.mxu0 0.0
  %769 = vmatprep.subr.mxu0 0.0
  %770 = vmatpush1.msra.mxu0 0.0
  %771 = vmatprep.subr.mxu0 0.0
  %772 = vmatpush1.msra.mxu0 0.0
  %773 = vmatprep.subr.mxu0 0.0
  %774 = vmatpush1.msra.mxu0 0.0
  %775 = vmatprep.subr.mxu0 0.0
  %776 = vmatpush1.msra.mxu0 0.0
  %777 = vmatprep.subr.mxu0 0.0
  %778 = vmatpush1.msra.mxu0 0.0
  %779 = vmatprep.subr.mxu0 0.0
  %780 = vmatpush1.msra.mxu0 0.0
  %781 = vmatprep.subr.mxu0 0.0
  %782 = vmatpush1.msra.mxu0 0.0
  %783 = vmatprep.subr.mxu0 0.0
  %784 = vmatpush1.msra.mxu0 0.0
  %785 = vmatprep.subr.mxu0 0.0
  %786 = vmatpush1.msra.mxu0 0.0
  %787 = vmatprep.subr.mxu0 0.0
  %788 = vmatpush1.msra.mxu0 0.0
  %789 = vmatprep.subr.mxu0 0.0
  %790 = vmatpush1.msra.mxu0 0.0
  %791 = vmatprep.subr.mxu0 0.0
  %792 = vmatpush1.msra.mxu0 0.0
  %793 = vmatprep.subr.mxu0 0.0
  %794 = vmatpush1.msra.mxu0 0.0
  %795 = vmatprep.subr.mxu0 0.0
  %796 = vmatpush1.msra.mxu0 0.0
  %797 = vmatprep.subr.mxu0 0.0
  %798 = vmatpush1.msra.mxu0 0.0
  %799 = vmatprep.subr.mxu0 0.0
  %800 = vmatpush1.msra.mxu0 0.0
  %801 = vmatprep.subr.mxu0 0.0
  %802 = vmatpush1.msra.mxu0 0.0
  %803 = vmatprep.mubr.f32.mxu0 0.0
  %v804 = vand.u32 %v69, 4294901760
  %805 = vmatmul.mubr.f32.gmra.mrb[0].mxu0 %v804
  %v806 = vpop.f32.mrb[0].mxu0
  %v807 = vadd.f32 %v692, %v806
  %v808 = vpop.f32.mrb[0].mxu0
  %809 = vmatprep.mubr.f32.mxu0 0.0
  %v810 = vand.u32 %v72, 4294901760
  %811 = vmatmul.mubr.f32.gmra.mrb[0].mxu0 %v810
  %v812 = vpop.f32.mrb[0].mxu0
  %v813 = vadd.f32 %v698, %v812
  %v814 = vpop.f32.mrb[0].mxu0
  %815 = vmatprep.mubr.f32.mxu0 0.0
  %v816 = vand.u32 %v75, 4294901760
  %817 = vmatmul.mubr.f32.gmra.mrb[0].mxu0 %v816
  %v818 = vpop.f32.mrb[0].mxu0
  %v819 = vadd.f32 %v704, %v818
  %v820 = vpop.f32.mrb[0].mxu0
  %821 = vmatprep.mubr.f32.mxu0 0.0
  %v822 = vand.u32 %v78, 4294901760
  %823 = vmatmul.mubr.f32.gmra.mrb[0].mxu0 %v822
  %v824 = vpop.f32.mrb[0].mxu0
  %v825 = vadd.f32 %v710, %v824
  %v826 = vpop.f32.mrb[0].mxu0
  %827 = vmatprep.mubr.f32.mxu0 0.0
  %v828 = vand.u32 %v81, 4294901760
  %829 = vmatmul.mubr.f32.gmra.mrb[0].mxu0 %v828
  %v830 = vpop.f32.mrb[0].mxu0
  %v831 = vadd.f32 %v716, %v830
  %v832 = vpop.f32.mrb[0].mxu0
  %833 = vmatprep.mubr.f32.mxu0 0.0
  %v834 = vand.u32 %v84, 4294901760
  %835 = vmatmul.mubr.f32.gmra.mrb[0].mxu0 %v834
  %v836 = vpop.f32.mrb[0].mxu0
  %v837 = vadd.f32 %v722, %v836
  %v838 = vpop.f32.mrb[0].mxu0
  %839 = vmatprep.mubr.f32.mxu0 0.0
  %v840 = vand.u32 %v87, 4294901760
  %841 = vmatmul.mubr.f32.gmra.mrb[0].mxu0 %v840
  %v842 = vpop.f32.mrb[0].mxu0
  %v843 = vadd.f32 %v728, %v842
  %v844 = vpop.f32.mrb[0].mxu0
  %845 = vmatprep.mubr.f32.mxu0 0.0
  %v846 = vand.u32 %v90, 4294901760
  %847 = vmatmul.mubr.f32.gmra.mrb[0].mxu0 %v846
  %v848 = vpop.f32.mrb[0].mxu0
  %v849 = vadd.f32 %v734, %v848
  %v850 = vpop.f32.mrb[0].mxu0
  %851 = vdwg.mxu0
  %v852 = vld [vmem:[%s4] sm:$0xff]
  %v853 = vld [vmem:[%s4 + $0x8] sm:$0xff]
  %v854 = vld [vmem:[%s4 + $0x10] sm:$0xff]
  %v855 = vld [vmem:[%s4 + $0x18] sm:$0xff]
  %v856 = vld [vmem:[%s3] sm:$0xff]
  %vm857 = vcmask 261120
  %v859 = vsel %vm857, %v856, 0
  %861 = vmatprep.subr.mxu0 0.0
  %v862 = vand.u32 %v852, 4294901760
  %863 = vmatpush1.msra.mxu0 %v862
  %864 = vmatprep.subr.mxu0 0.0
  %v865 = vand.u32 %v853, 4294901760
  %866 = vmatpush1.msra.mxu0 %v865
  %867 = vmatprep.subr.mxu0 0.0
  %v868 = vand.u32 %v854, 4294901760
  %869 = vmatpush1.msra.mxu0 %v868
  %870 = vmatprep.subr.mxu0 0.0
  %v871 = vand.u32 %v855, 4294901760
  %872 = vmatpush1.msra.mxu0 %v871
  %873 = vmatprep.subr.mxu0 0.0
  %874 = vmatpush1.msra.mxu0 0.0
  %875 = vmatprep.subr.mxu0 0.0
  %876 = vmatpush1.msra.mxu0 0.0
  %877 = vmatprep.subr.mxu0 0.0
  %878 = vmatpush1.msra.mxu0 0.0
  %879 = vmatprep.subr.mxu0 0.0
  %880 = vmatpush1.msra.mxu0 0.0
  %881 = vmatprep.subr.mxu0 0.0
  %882 = vmatpush1.msra.mxu0 0.0
  %883 = vmatprep.subr.mxu0 0.0
  %884 = vmatpush1.msra.mxu0 0.0
  %885 = vmatprep.subr.mxu0 0.0
  %886 = vmatpush1.msra.mxu0 0.0
  %887 = vmatprep.subr.mxu0 0.0
  %888 = vmatpush1.msra.mxu0 0.0
  %889 = vmatprep.subr.mxu0 0.0
  %890 = vmatpush1.msra.mxu0 0.0
  %891 = vmatprep.subr.mxu0 0.0
  %892 = vmatpush1.msra.mxu0 0.0
  %893 = vmatprep.subr.mxu0 0.0
  %894 = vmatpush1.msra.mxu0 0.0
  %895 = vmatprep.subr.mxu0 0.0
  %896 = vmatpush1.msra.mxu0 0.0
  %897 = vmatprep.subr.mxu0 0.0
  %898 = vmatpush1.msra.mxu0 0.0
  %899 = vmatprep.subr.mxu0 0.0
  %900 = vmatpush1.msra.mxu0 0.0
  %901 = vmatprep.subr.mxu0 0.0
  %902 = vmatpush1.msra.mxu0 0.0
  %903 = vmatprep.subr.mxu0 0.0
  %904 = vmatpush1.msra.mxu0 0.0
  %905 = vmatprep.subr.mxu0 0.0
  %906 = vmatpush1.msra.mxu0 0.0
  %907 = vmatprep.subr.mxu0 0.0
  %908 = vmatpush1.msra.mxu0 0.0
  %909 = vmatprep.subr.mxu0 0.0
  %910 = vmatpush1.msra.mxu0 0.0
  %911 = vmatprep.subr.mxu0 0.0
  %912 = vmatpush1.msra.mxu0 0.0
  %913 = vmatprep.subr.mxu0 0.0
  %914 = vmatpush1.msra.mxu0 0.0
  %915 = vmatprep.subr.mxu0 0.0
  %916 = vmatpush1.msra.mxu0 0.0
  %917 = vmatprep.subr.mxu0 0.0
  %918 = vmatpush1.msra.mxu0 0.0
  %919 = vmatprep.subr.mxu0 0.0
  %920 = vmatpush1.msra.mxu0 0.0
  %921 = vmatprep.subr.mxu0 0.0
  %922 = vmatpush1.msra.mxu0 0.0
  %923 = vmatprep.subr.mxu0 0.0
  %924 = vmatpush1.msra.mxu0 0.0
  %925 = vmatprep.subr.mxu0 0.0
  %926 = vmatpush1.msra.mxu0 0.0
  %927 = vmatprep.subr.mxu0 0.0
  %928 = vmatpush1.msra.mxu0 0.0
  %929 = vmatprep.mubr.f32.mxu0 0.0
  %v930 = vand.u32 %v859, 4294901760
  %v931 = vsub.f32 %v859, %v930
  %v932 = vand.u32 %v931, 4294901760
  %v933 = vsub.f32 %v931, %v932
  %v934 = vand.u32 %v933, 4294901760
  %935 = vmatmul.mubr.f32.gmra.mrb[0].mxu0 %v934
  %v936 = vpop.f32.mrb[0].mxu0
  %v937 = vadd.f32 %v807, %v936
  %v938 = vpop.f32.mrb[0].mxu0
  %939 = vdwg.mxu0
  %940 = vmatprep.subr.mxu0 0.0
  %v941 = vand.u32 %v852, 4294901760
  %v942 = vsub.f32 %v852, %v941
  %v943 = vand.u32 %v942, 4294901760
  %v944 = vsub.f32 %v942, %v943
  %v945 = vand.u32 %v944, 4294901760
  %946 = vmatpush1.msra.mxu0 %v945
  %947 = vmatprep.subr.mxu0 0.0
  %v948 = vand.u32 %v853, 4294901760
  %v949 = vsub.f32 %v853, %v948
  %v950 = vand.u32 %v949, 4294901760
  %v951 = vsub.f32 %v949, %v950
  %v952 = vand.u32 %v951, 4294901760
  %953 = vmatpush1.msra.mxu0 %v952
  %954 = vmatprep.subr.mxu0 0.0
  %v955 = vand.u32 %v854, 4294901760
  %v956 = vsub.f32 %v854, %v955
  %v957 = vand.u32 %v956, 4294901760
  %v958 = vsub.f32 %v956, %v957
  %v959 = vand.u32 %v958, 4294901760
  %960 = vmatpush1.msra.mxu0 %v959
  %961 = vmatprep.subr.mxu0 0.0
  %v962 = vand.u32 %v855, 4294901760
  %v963 = vsub.f32 %v855, %v962
  %v964 = vand.u32 %v963, 4294901760
  %v965 = vsub.f32 %v963, %v964
  %v966 = vand.u32 %v965, 4294901760
  %967 = vmatpush1.msra.mxu0 %v966
  %968 = vmatprep.subr.mxu0 0.0
  %969 = vmatpush1.msra.mxu0 0.0
  %970 = vmatprep.subr.mxu0 0.0
  %971 = vmatpush1.msra.mxu0 0.0
  %972 = vmatprep.subr.mxu0 0.0
  %973 = vmatpush1.msra.mxu0 0.0
  %974 = vmatprep.subr.mxu0 0.0
  %975 = vmatpush1.msra.mxu0 0.0
  %976 = vmatprep.subr.mxu0 0.0
  %977 = vmatpush1.msra.mxu0 0.0
  %978 = vmatprep.subr.mxu0 0.0
  %979 = vmatpush1.msra.mxu0 0.0
  %980 = vmatprep.subr.mxu0 0.0
  %981 = vmatpush1.msra.mxu0 0.0
  %982 = vmatprep.subr.mxu0 0.0
  %983 = vmatpush1.msra.mxu0 0.0
  %984 = vmatprep.subr.mxu0 0.0
  %985 = vmatpush1.msra.mxu0 0.0
  %986 = vmatprep.subr.mxu0 0.0
  %987 = vmatpush1.msra.mxu0 0.0
  %988 = vmatprep.subr.mxu0 0.0
  %989 = vmatpush1.msra.mxu0 0.0
  %990 = vmatprep.subr.mxu0 0.0
  %991 = vmatpush1.msra.mxu0 0.0
  %992 = vmatprep.subr.mxu0 0.0
  %993 = vmatpush1.msra.mxu0 0.0
  %994 = vmatprep.subr.mxu0 0.0
  %995 = vmatpush1.msra.mxu0 0.0
  %996 = vmatprep.subr.mxu0 0.0
  %997 = vmatpush1.msra.mxu0 0.0
  %998 = vmatprep.subr.mxu0 0.0
  %999 = vmatpush1.msra.mxu0 0.0
  %1000 = vmatprep.subr.mxu0 0.0
  %1001 = vmatpush1.msra.mxu0 0.0
  %1002 = vmatprep.subr.mxu0 0.0
  %1003 = vmatpush1.msra.mxu0 0.0
  %1004 = vmatprep.subr.mxu0 0.0
  %1005 = vmatpush1.msra.mxu0 0.0
  %1006 = vmatprep.subr.mxu0 0.0
  %1007 = vmatpush1.msra.mxu0 0.0
  %1008 = vmatprep.subr.mxu0 0.0
  %1009 = vmatpush1.msra.mxu0 0.0
  %1010 = vmatprep.subr.mxu0 0.0
  %1011 = vmatpush1.msra.mxu0 0.0
  %1012 = vmatprep.subr.mxu0 0.0
  %1013 = vmatpush1.msra.mxu0 0.0
  %1014 = vmatprep.subr.mxu0 0.0
  %1015 = vmatpush1.msra.mxu0 0.0
  %1016 = vmatprep.subr.mxu0 0.0
  %1017 = vmatpush1.msra.mxu0 0.0
  %1018 = vmatprep.subr.mxu0 0.0
  %1019 = vmatpush1.msra.mxu0 0.0
  %1020 = vmatprep.subr.mxu0 0.0
  %1021 = vmatpush1.msra.mxu0 0.0
  %1022 = vmatprep.subr.mxu0 0.0
  %1023 = vmatpush1.msra.mxu0 0.0
  %1024 = vmatprep.mubr.f32.mxu0 0.0
  %v1025 = vand.u32 %v859, 4294901760
  %1026 = vmatmul.mubr.f32.gmra.mrb[0].mxu0 %v1025
  %v1027 = vpop.f32.mrb[0].mxu0
  %v1028 = vadd.f32 %v937, %v1027
  %v1029 = vpop.f32.mrb[0].mxu0
  %1030 = vdwg.mxu0
  %1031 = vmatprep.subr.mxu0 0.0
  %v1032 = vand.u32 %v852, 4294901760
  %v1033 = vsub.f32 %v852, %v1032
  %1034 = vmatpush1.msra.mxu0 %v1033
  %1035 = vmatprep.subr.mxu0 0.0
  %v1036 = vand.u32 %v853, 4294901760
  %v1037 = vsub.f32 %v853, %v1036
  %1038 = vmatpush1.msra.mxu0 %v1037
  %1039 = vmatprep.subr.mxu0 0.0
  %v1040 = vand.u32 %v854, 4294901760
  %v1041 = vsub.f32 %v854, %v1040
  %1042 = vmatpush1.msra.mxu0 %v1041
  %1043 = vmatprep.subr.mxu0 0.0
  %v1044 = vand.u32 %v855, 4294901760
  %v1045 = vsub.f32 %v855, %v1044
  %1046 = vmatpush1.msra.mxu0 %v1045
  %1047 = vmatprep.subr.mxu0 0.0
  %1048 = vmatpush1.msra.mxu0 0.0
  %1049 = vmatprep.subr.mxu0 0.0
  %1050 = vmatpush1.msra.mxu0 0.0
  %1051 = vmatprep.subr.mxu0 0.0
  %1052 = vmatpush1.msra.mxu0 0.0
  %1053 = vmatprep.subr.mxu0 0.0
  %1054 = vmatpush1.msra.mxu0 0.0
  %1055 = vmatprep.subr.mxu0 0.0
  %1056 = vmatpush1.msra.mxu0 0.0
  %1057 = vmatprep.subr.mxu0 0.0
  %1058 = vmatpush1.msra.mxu0 0.0
  %1059 = vmatprep.subr.mxu0 0.0
  %1060 = vmatpush1.msra.mxu0 0.0
  %1061 = vmatprep.subr.mxu0 0.0
  %1062 = vmatpush1.msra.mxu0 0.0
  %1063 = vmatprep.subr.mxu0 0.0
  %1064 = vmatpush1.msra.mxu0 0.0
  %1065 = vmatprep.subr.mxu0 0.0
  %1066 = vmatpush1.msra.mxu0 0.0
  %1067 = vmatprep.subr.mxu0 0.0
  %1068 = vmatpush1.msra.mxu0 0.0
  %1069 = vmatprep.subr.mxu0 0.0
  %1070 = vmatpush1.msra.mxu0 0.0
  %1071 = vmatprep.subr.mxu0 0.0
  %1072 = vmatpush1.msra.mxu0 0.0
  %1073 = vmatprep.subr.mxu0 0.0
  %1074 = vmatpush1.msra.mxu0 0.0
  %1075 = vmatprep.subr.mxu0 0.0
  %1076 = vmatpush1.msra.mxu0 0.0
  %1077 = vmatprep.subr.mxu0 0.0
  %1078 = vmatpush1.msra.mxu0 0.0
  %1079 = vmatprep.subr.mxu0 0.0
  %1080 = vmatpush1.msra.mxu0 0.0
  %1081 = vmatprep.subr.mxu0 0.0
  %1082 = vmatpush1.msra.mxu0 0.0
  %1083 = vmatprep.subr.mxu0 0.0
  %1084 = vmatpush1.msra.mxu0 0.0
  %1085 = vmatprep.subr.mxu0 0.0
  %1086 = vmatpush1.msra.mxu0 0.0
  %1087 = vmatprep.subr.mxu0 0.0
  %1088 = vmatpush1.msra.mxu0 0.0
  %1089 = vmatprep.subr.mxu0 0.0
  %1090 = vmatpush1.msra.mxu0 0.0
  %1091 = vmatprep.subr.mxu0 0.0
  %1092 = vmatpush1.msra.mxu0 0.0
  %1093 = vmatprep.subr.mxu0 0.0
  %1094 = vmatpush1.msra.mxu0 0.0
  %1095 = vmatprep.subr.mxu0 0.0
  %1096 = vmatpush1.msra.mxu0 0.0
  %1097 = vmatprep.subr.mxu0 0.0
  %1098 = vmatpush1.msra.mxu0 0.0
  %1099 = vmatprep.subr.mxu0 0.0
  %1100 = vmatpush1.msra.mxu0 0.0
  %1101 = vmatprep.subr.mxu0 0.0
  %1102 = vmatpush1.msra.mxu0 0.0
  %1103 = vmatprep.mubr.f32.mxu0 0.0
  %v1104 = vand.u32 %v859, 4294901760
  %v1105 = vsub.f32 %v859, %v1104
  %1106 = vmatmul.mubr.f32.gmra.mrb[0].mxu0 %v1105
  %v1107 = vpop.f32.mrb[0].mxu0
  %v1108 = vadd.f32 %v1028, %v1107
  %v1109 = vpop.f32.mrb[0].mxu0
  %1110 = vdwg.mxu0
  %1111 = vmatprep.subr.mxu0 0.0
  %v1112 = vand.u32 %v852, 4294901760
  %1113 = vmatpush1.msra.mxu0 %v1112
  %1114 = vmatprep.subr.mxu0 0.0
  %v1115 = vand.u32 %v853, 4294901760
  %1116 = vmatpush1.msra.mxu0 %v1115
  %1117 = vmatprep.subr.mxu0 0.0
  %v1118 = vand.u32 %v854, 4294901760
  %1119 = vmatpush1.msra.mxu0 %v1118
  %1120 = vmatprep.subr.mxu0 0.0
  %v1121 = vand.u32 %v855, 4294901760
  %1122 = vmatpush1.msra.mxu0 %v1121
  %1123 = vmatprep.subr.mxu0 0.0
  %1124 = vmatpush1.msra.mxu0 0.0
  %1125 = vmatprep.subr.mxu0 0.0
  %1126 = vmatpush1.msra.mxu0 0.0
  %1127 = vmatprep.subr.mxu0 0.0
  %1128 = vmatpush1.msra.mxu0 0.0
  %1129 = vmatprep.subr.mxu0 0.0
  %1130 = vmatpush1.msra.mxu0 0.0
  %1131 = vmatprep.subr.mxu0 0.0
  %1132 = vmatpush1.msra.mxu0 0.0
  %1133 = vmatprep.subr.mxu0 0.0
  %1134 = vmatpush1.msra.mxu0 0.0
  %1135 = vmatprep.subr.mxu0 0.0
  %1136 = vmatpush1.msra.mxu0 0.0
  %1137 = vmatprep.subr.mxu0 0.0
  %1138 = vmatpush1.msra.mxu0 0.0
  %1139 = vmatprep.subr.mxu0 0.0
  %1140 = vmatpush1.msra.mxu0 0.0
  %1141 = vmatprep.subr.mxu0 0.0
  %1142 = vmatpush1.msra.mxu0 0.0
  %1143 = vmatprep.subr.mxu0 0.0
  %1144 = vmatpush1.msra.mxu0 0.0
  %1145 = vmatprep.subr.mxu0 0.0
  %1146 = vmatpush1.msra.mxu0 0.0
  %1147 = vmatprep.subr.mxu0 0.0
  %1148 = vmatpush1.msra.mxu0 0.0
  %1149 = vmatprep.subr.mxu0 0.0
  %1150 = vmatpush1.msra.mxu0 0.0
  %1151 = vmatprep.subr.mxu0 0.0
  %1152 = vmatpush1.msra.mxu0 0.0
  %1153 = vmatprep.subr.mxu0 0.0
  %1154 = vmatpush1.msra.mxu0 0.0
  %1155 = vmatprep.subr.mxu0 0.0
  %1156 = vmatpush1.msra.mxu0 0.0
  %1157 = vmatprep.subr.mxu0 0.0
  %1158 = vmatpush1.msra.mxu0 0.0
  %1159 = vmatprep.subr.mxu0 0.0
  %1160 = vmatpush1.msra.mxu0 0.0
  %1161 = vmatprep.subr.mxu0 0.0
  %1162 = vmatpush1.msra.mxu0 0.0
  %1163 = vmatprep.subr.mxu0 0.0
  %1164 = vmatpush1.msra.mxu0 0.0
  %1165 = vmatprep.subr.mxu0 0.0
  %1166 = vmatpush1.msra.mxu0 0.0
  %1167 = vmatprep.subr.mxu0 0.0
  %1168 = vmatpush1.msra.mxu0 0.0
  %1169 = vmatprep.subr.mxu0 0.0
  %1170 = vmatpush1.msra.mxu0 0.0
  %1171 = vmatprep.subr.mxu0 0.0
  %1172 = vmatpush1.msra.mxu0 0.0
  %1173 = vmatprep.subr.mxu0 0.0
  %1174 = vmatpush1.msra.mxu0 0.0
  %1175 = vmatprep.subr.mxu0 0.0
  %1176 = vmatpush1.msra.mxu0 0.0
  %1177 = vmatprep.subr.mxu0 0.0
  %1178 = vmatpush1.msra.mxu0 0.0
  %1179 = vmatprep.mubr.f32.mxu0 0.0
  %v1180 = vand.u32 %v859, 4294901760
  %v1181 = vsub.f32 %v859, %v1180
  %v1182 = vand.u32 %v1181, 4294901760
  %1183 = vmatmul.mubr.f32.gmra.mrb[0].mxu0 %v1182
  %v1184 = vpop.f32.mrb[0].mxu0
  %v1185 = vadd.f32 %v1108, %v1184
  %v1186 = vpop.f32.mrb[0].mxu0
  %1187 = vdwg.mxu0
  %1188 = vmatprep.subr.mxu0 0.0
  %v1189 = vand.u32 %v852, 4294901760
  %v1190 = vsub.f32 %v852, %v1189
  %v1191 = vand.u32 %v1190, 4294901760
  %1192 = vmatpush1.msra.mxu0 %v1191
  %1193 = vmatprep.subr.mxu0 0.0
  %v1194 = vand.u32 %v853, 4294901760
  %v1195 = vsub.f32 %v853, %v1194
  %v1196 = vand.u32 %v1195, 4294901760
  %1197 = vmatpush1.msra.mxu0 %v1196
  %1198 = vmatprep.subr.mxu0 0.0
  %v1199 = vand.u32 %v854, 4294901760
  %v1200 = vsub.f32 %v854, %v1199
  %v1201 = vand.u32 %v1200, 4294901760
  %1202 = vmatpush1.msra.mxu0 %v1201
  %1203 = vmatprep.subr.mxu0 0.0
  %v1204 = vand.u32 %v855, 4294901760
  %v1205 = vsub.f32 %v855, %v1204
  %v1206 = vand.u32 %v1205, 4294901760
  %1207 = vmatpush1.msra.mxu0 %v1206
  %1208 = vmatprep.subr.mxu0 0.0
  %1209 = vmatpush1.msra.mxu0 0.0
  %1210 = vmatprep.subr.mxu0 0.0
  %1211 = vmatpush1.msra.mxu0 0.0
  %1212 = vmatprep.subr.mxu0 0.0
  %1213 = vmatpush1.msra.mxu0 0.0
  %1214 = vmatprep.subr.mxu0 0.0
  %1215 = vmatpush1.msra.mxu0 0.0
  %1216 = vmatprep.subr.mxu0 0.0
  %1217 = vmatpush1.msra.mxu0 0.0
  %1218 = vmatprep.subr.mxu0 0.0
  %1219 = vmatpush1.msra.mxu0 0.0
  %1220 = vmatprep.subr.mxu0 0.0
  %1221 = vmatpush1.msra.mxu0 0.0
  %1222 = vmatprep.subr.mxu0 0.0
  %1223 = vmatpush1.msra.mxu0 0.0
  %1224 = vmatprep.subr.mxu0 0.0
  %1225 = vmatpush1.msra.mxu0 0.0
  %1226 = vmatprep.subr.mxu0 0.0
  %1227 = vmatpush1.msra.mxu0 0.0
  %1228 = vmatprep.subr.mxu0 0.0
  %1229 = vmatpush1.msra.mxu0 0.0
  %1230 = vmatprep.subr.mxu0 0.0
  %1231 = vmatpush1.msra.mxu0 0.0
  %1232 = vmatprep.subr.mxu0 0.0
  %1233 = vmatpush1.msra.mxu0 0.0
  %1234 = vmatprep.subr.mxu0 0.0
  %1235 = vmatpush1.msra.mxu0 0.0
  %1236 = vmatprep.subr.mxu0 0.0
  %1237 = vmatpush1.msra.mxu0 0.0
  %1238 = vmatprep.subr.mxu0 0.0
  %1239 = vmatpush1.msra.mxu0 0.0
  %1240 = vmatprep.subr.mxu0 0.0
  %1241 = vmatpush1.msra.mxu0 0.0
  %1242 = vmatprep.subr.mxu0 0.0
  %1243 = vmatpush1.msra.mxu0 0.0
  %1244 = vmatprep.subr.mxu0 0.0
  %1245 = vmatpush1.msra.mxu0 0.0
  %1246 = vmatprep.subr.mxu0 0.0
  %1247 = vmatpush1.msra.mxu0 0.0
  %1248 = vmatprep.subr.mxu0 0.0
  %1249 = vmatpush1.msra.mxu0 0.0
  %1250 = vmatprep.subr.mxu0 0.0
  %1251 = vmatpush1.msra.mxu0 0.0
  %1252 = vmatprep.subr.mxu0 0.0
  %1253 = vmatpush1.msra.mxu0 0.0
  %1254 = vmatprep.subr.mxu0 0.0
  %1255 = vmatpush1.msra.mxu0 0.0
  %1256 = vmatprep.subr.mxu0 0.0
  %1257 = vmatpush1.msra.mxu0 0.0
  %1258 = vmatprep.subr.mxu0 0.0
  %1259 = vmatpush1.msra.mxu0 0.0
  %1260 = vmatprep.subr.mxu0 0.0
  %1261 = vmatpush1.msra.mxu0 0.0
  %1262 = vmatprep.subr.mxu0 0.0
  %1263 = vmatpush1.msra.mxu0 0.0
  %1264 = vmatprep.mubr.f32.mxu0 0.0
  %v1265 = vand.u32 %v859, 4294901760
  %1266 = vmatmul.mubr.f32.gmra.mrb[0].mxu0 %v1265
  %v1267 = vpop.f32.mrb[0].mxu0
  %v1268 = vadd.f32 %v1185, %v1267
  %v1269 = vpop.f32.mrb[0].mxu0
  %1270 = vdwg.mxu0
  %1271 = vmatprep.subr.mxu0 0.0
  %v1272 = vand.u32 %v852, 4294901760
  %1273 = vmatpush1.msra.mxu0 %v1272
  %1274 = vmatprep.subr.mxu0 0.0
  %v1275 = vand.u32 %v853, 4294901760
  %1276 = vmatpush1.msra.mxu0 %v1275
  %1277 = vmatprep.subr.mxu0 0.0
  %v1278 = vand.u32 %v854, 4294901760
  %1279 = vmatpush1.msra.mxu0 %v1278
  %1280 = vmatprep.subr.mxu0 0.0
  %v1281 = vand.u32 %v855, 4294901760
  %1282 = vmatpush1.msra.mxu0 %v1281
  %1283 = vmatprep.subr.mxu0 0.0
  %1284 = vmatpush1.msra.mxu0 0.0
  %1285 = vmatprep.subr.mxu0 0.0
  %1286 = vmatpush1.msra.mxu0 0.0
  %1287 = vmatprep.subr.mxu0 0.0
  %1288 = vmatpush1.msra.mxu0 0.0
  %1289 = vmatprep.subr.mxu0 0.0
  %1290 = vmatpush1.msra.mxu0 0.0
  %1291 = vmatprep.subr.mxu0 0.0
  %1292 = vmatpush1.msra.mxu0 0.0
  %1293 = vmatprep.subr.mxu0 0.0
  %1294 = vmatpush1.msra.mxu0 0.0
  %1295 = vmatprep.subr.mxu0 0.0
  %1296 = vmatpush1.msra.mxu0 0.0
  %1297 = vmatprep.subr.mxu0 0.0
  %1298 = vmatpush1.msra.mxu0 0.0
  %1299 = vmatprep.subr.mxu0 0.0
  %1300 = vmatpush1.msra.mxu0 0.0
  %1301 = vmatprep.subr.mxu0 0.0
  %1302 = vmatpush1.msra.mxu0 0.0
  %1303 = vmatprep.subr.mxu0 0.0
  %1304 = vmatpush1.msra.mxu0 0.0
  %1305 = vmatprep.subr.mxu0 0.0
  %1306 = vmatpush1.msra.mxu0 0.0
  %1307 = vmatprep.subr.mxu0 0.0
  %1308 = vmatpush1.msra.mxu0 0.0
  %1309 = vmatprep.subr.mxu0 0.0
  %1310 = vmatpush1.msra.mxu0 0.0
  %1311 = vmatprep.subr.mxu0 0.0
  %1312 = vmatpush1.msra.mxu0 0.0
  %1313 = vmatprep.subr.mxu0 0.0
  %1314 = vmatpush1.msra.mxu0 0.0
  %1315 = vmatprep.subr.mxu0 0.0
  %1316 = vmatpush1.msra.mxu0 0.0
  %1317 = vmatprep.subr.mxu0 0.0
  %1318 = vmatpush1.msra.mxu0 0.0
  %1319 = vmatprep.subr.mxu0 0.0
  %1320 = vmatpush1.msra.mxu0 0.0
  %1321 = vmatprep.subr.mxu0 0.0
  %1322 = vmatpush1.msra.mxu0 0.0
  %1323 = vmatprep.subr.mxu0 0.0
  %1324 = vmatpush1.msra.mxu0 0.0
  %1325 = vmatprep.subr.mxu0 0.0
  %1326 = vmatpush1.msra.mxu0 0.0
  %1327 = vmatprep.subr.mxu0 0.0
  %1328 = vmatpush1.msra.mxu0 0.0
  %1329 = vmatprep.subr.mxu0 0.0
  %1330 = vmatpush1.msra.mxu0 0.0
  %1331 = vmatprep.subr.mxu0 0.0
  %1332 = vmatpush1.msra.mxu0 0.0
  %1333 = vmatprep.subr.mxu0 0.0
  %1334 = vmatpush1.msra.mxu0 0.0
  %1335 = vmatprep.subr.mxu0 0.0
  %1336 = vmatpush1.msra.mxu0 0.0
  %1337 = vmatprep.subr.mxu0 0.0
  %1338 = vmatpush1.msra.mxu0 0.0
  %1339 = vmatprep.mubr.f32.mxu0 0.0
  %v1340 = vand.u32 %v859, 4294901760
  %1341 = vmatmul.mubr.f32.gmra.mrb[0].mxu0 %v1340
  %v1342 = vpop.f32.mrb[0].mxu0
  %v1343 = vadd.f32 %v1268, %v1342
  %v1344 = vpop.f32.mrb[0].mxu0
  %1345 = vdwg.mxu0
  %v1346 = vtanh.pop %v1343
  %1347 = vst.msk [vmem:[#allocation2] sm:$0xff] %vm857, %v1346
  %v1349 = vsel %vm857, %v1346, 0
  %1351 = vmatprep.subr.mxu0 0.0
  %v1352 = vand.u32 %v852, 4294901760
  %1353 = vmatpush1.msra.mxu0 %v1352
  %1354 = vmatprep.subr.mxu0 0.0
  %v1355 = vand.u32 %v853, 4294901760
  %1356 = vmatpush1.msra.mxu0 %v1355
  %1357 = vmatprep.subr.mxu0 0.0
  %v1358 = vand.u32 %v854, 4294901760
  %1359 = vmatpush1.msra.mxu0 %v1358
  %1360 = vmatprep.subr.mxu0 0.0
  %v1361 = vand.u32 %v855, 4294901760
  %1362 = vmatpush1.msra.mxu0 %v1361
  %1363 = vmatprep.subr.mxu0 0.0
  %1364 = vmatpush1.msra.mxu0 0.0
  %1365 = vmatprep.subr.mxu0 0.0
  %1366 = vmatpush1.msra.mxu0 0.0
  %1367 = vmatprep.subr.mxu0 0.0
  %1368 = vmatpush1.msra.mxu0 0.0
  %1369 = vmatprep.subr.mxu0 0.0
  %1370 = vmatpush1.msra.mxu0 0.0
  %1371 = vmatprep.subr.mxu0 0.0
  %1372 = vmatpush1.msra.mxu0 0.0
  %1373 = vmatprep.subr.mxu0 0.0
  %1374 = vmatpush1.msra.mxu0 0.0
  %1375 = vmatprep.subr.mxu0 0.0
  %1376 = vmatpush1.msra.mxu0 0.0
  %1377 = vmatprep.subr.mxu0 0.0
  %1378 = vmatpush1.msra.mxu0 0.0
  %1379 = vmatprep.subr.mxu0 0.0
  %1380 = vmatpush1.msra.mxu0 0.0
  %1381 = vmatprep.subr.mxu0 0.0
  %1382 = vmatpush1.msra.mxu0 0.0
  %1383 = vmatprep.subr.mxu0 0.0
  %1384 = vmatpush1.msra.mxu0 0.0
  %1385 = vmatprep.subr.mxu0 0.0
  %1386 = vmatpush1.msra.mxu0 0.0
  %1387 = vmatprep.subr.mxu0 0.0
  %1388 = vmatpush1.msra.mxu0 0.0
  %1389 = vmatprep.subr.mxu0 0.0
  %1390 = vmatpush1.msra.mxu0 0.0
  %1391 = vmatprep.subr.mxu0 0.0
  %1392 = vmatpush1.msra.mxu0 0.0
  %1393 = vmatprep.subr.mxu0 0.0
  %1394 = vmatpush1.msra.mxu0 0.0
  %1395 = vmatprep.subr.mxu0 0.0
  %1396 = vmatpush1.msra.mxu0 0.0
  %1397 = vmatprep.subr.mxu0 0.0
  %1398 = vmatpush1.msra.mxu0 0.0
  %1399 = vmatprep.subr.mxu0 0.0
  %1400 = vmatpush1.msra.mxu0 0.0
  %1401 = vmatprep.subr.mxu0 0.0
  %1402 = vmatpush1.msra.mxu0 0.0
  %1403 = vmatprep.subr.mxu0 0.0
  %1404 = vmatpush1.msra.mxu0 0.0
  %1405 = vmatprep.subr.mxu0 0.0
  %1406 = vmatpush1.msra.mxu0 0.0
  %1407 = vmatprep.subr.mxu0 0.0
  %1408 = vmatpush1.msra.mxu0 0.0
  %1409 = vmatprep.subr.mxu0 0.0
  %1410 = vmatpush1.msra.mxu0 0.0
  %1411 = vmatprep.subr.mxu0 0.0
  %1412 = vmatpush1.msra.mxu0 0.0
  %1413 = vmatprep.subr.mxu0 0.0
  %1414 = vmatpush1.msra.mxu0 0.0
  %1415 = vmatprep.subr.mxu0 0.0
  %1416 = vmatpush1.msra.mxu0 0.0
  %1417 = vmatprep.subr.mxu0 0.0
  %1418 = vmatpush1.msra.mxu0 0.0
  %1419 = vmatprep.mubr.f32.mxu0 0.0
  %v1420 = vand.u32 %v1349, 4294901760
  %v1421 = vsub.f32 %v1349, %v1420
  %v1422 = vand.u32 %v1421, 4294901760
  %v1423 = vsub.f32 %v1421, %v1422
  %v1424 = vand.u32 %v1423, 4294901760
  %1425 = vmatmul.mubr.f32.gmra.mrb[0].mxu0 %v1424
  %v1426 = vpop.f32.mrb[0].mxu0
  %v1427 = vadd.f32 %v813, %v1426
  %v1428 = vpop.f32.mrb[0].mxu0
  %1429 = vdwg.mxu0
  %1430 = vmatprep.subr.mxu0 0.0
  %v1431 = vand.u32 %v852, 4294901760
  %v1432 = vsub.f32 %v852, %v1431
  %v1433 = vand.u32 %v1432, 4294901760
  %v1434 = vsub.f32 %v1432, %v1433
  %v1435 = vand.u32 %v1434, 4294901760
  %1436 = vmatpush1.msra.mxu0 %v1435
  %1437 = vmatprep.subr.mxu0 0.0
  %v1438 = vand.u32 %v853, 4294901760
  %v1439 = vsub.f32 %v853, %v1438
  %v1440 = vand.u32 %v1439, 4294901760
  %v1441 = vsub.f32 %v1439, %v1440
  %v1442 = vand.u32 %v1441, 4294901760
  %1443 = vmatpush1.msra.mxu0 %v1442
  %1444 = vmatprep.subr.mxu0 0.0
  %v1445 = vand.u32 %v854, 4294901760
  %v1446 = vsub.f32 %v854, %v1445
  %v1447 = vand.u32 %v1446, 4294901760
  %v1448 = vsub.f32 %v1446, %v1447
  %v1449 = vand.u32 %v1448, 4294901760
  %1450 = vmatpush1.msra.mxu0 %v1449
  %1451 = vmatprep.subr.mxu0 0.0
  %v1452 = vand.u32 %v855, 4294901760
  %v1453 = vsub.f32 %v855, %v1452
  %v1454 = vand.u32 %v1453, 4294901760
  %v1455 = vsub.f32 %v1453, %v1454
  %v1456 = vand.u32 %v1455, 4294901760
  %1457 = vmatpush1.msra.mxu0 %v1456
  %1458 = vmatprep.subr.mxu0 0.0
  %1459 = vmatpush1.msra.mxu0 0.0
  %1460 = vmatprep.subr.mxu0 0.0
  %1461 = vmatpush1.msra.mxu0 0.0
  %1462 = vmatprep.subr.mxu0 0.0
  %1463 = vmatpush1.msra.mxu0 0.0
  %1464 = vmatprep.subr.mxu0 0.0
  %1465 = vmatpush1.msra.mxu0 0.0
  %1466 = vmatprep.subr.mxu0 0.0
  %1467 = vmatpush1.msra.mxu0 0.0
  %1468 = vmatprep.subr.mxu0 0.0
  %1469 = vmatpush1.msra.mxu0 0.0
  %1470 = vmatprep.subr.mxu0 0.0
  %1471 = vmatpush1.msra.mxu0 0.0
  %1472 = vmatprep.subr.mxu0 0.0
  %1473 = vmatpush1.msra.mxu0 0.0
  %1474 = vmatprep.subr.mxu0 0.0
  %1475 = vmatpush1.msra.mxu0 0.0
  %1476 = vmatprep.subr.mxu0 0.0
  %1477 = vmatpush1.msra.mxu0 0.0
  %1478 = vmatprep.subr.mxu0 0.0
  %1479 = vmatpush1.msra.mxu0 0.0
  %1480 = vmatprep.subr.mxu0 0.0
  %1481 = vmatpush1.msra.mxu0 0.0
  %1482 = vmatprep.subr.mxu0 0.0
  %1483 = vmatpush1.msra.mxu0 0.0
  %1484 = vmatprep.subr.mxu0 0.0
  %1485 = vmatpush1.msra.mxu0 0.0
  %1486 = vmatprep.subr.mxu0 0.0
  %1487 = vmatpush1.msra.mxu0 0.0
  %1488 = vmatprep.subr.mxu0 0.0
  %1489 = vmatpush1.msra.mxu0 0.0
  %1490 = vmatprep.subr.mxu0 0.0
  %1491 = vmatpush1.msra.mxu0 0.0
  %1492 = vmatprep.subr.mxu0 0.0
  %1493 = vmatpush1.msra.mxu0 0.0
  %1494 = vmatprep.subr.mxu0 0.0
  %1495 = vmatpush1.msra.mxu0 0.0
  %1496 = vmatprep.subr.mxu0 0.0
  %1497 = vmatpush1.msra.mxu0 0.0
  %1498 = vmatprep.subr.mxu0 0.0
  %1499 = vmatpush1.msra.mxu0 0.0
  %1500 = vmatprep.subr.mxu0 0.0
  %1501 = vmatpush1.msra.mxu0 0.0
  %1502 = vmatprep.subr.mxu0 0.0
  %1503 = vmatpush1.msra.mxu0 0.0
  %1504 = vmatprep.subr.mxu0 0.0
  %1505 = vmatpush1.msra.mxu0 0.0
  %1506 = vmatprep.subr.mxu0 0.0
  %1507 = vmatpush1.msra.mxu0 0.0
  %1508 = vmatprep.subr.mxu0 0.0
  %1509 = vmatpush1.msra.mxu0 0.0
  %1510 = vmatprep.subr.mxu0 0.0
  %1511 = vmatpush1.msra.mxu0 0.0
  %1512 = vmatprep.subr.mxu0 0.0
  %1513 = vmatpush1.msra.mxu0 0.0
  %1514 = vmatprep.mubr.f32.mxu0 0.0
  %v1515 = vand.u32 %v1349, 4294901760
  %1516 = vmatmul.mubr.f32.gmra.mrb[0].mxu0 %v1515
  %v1517 = vpop.f32.mrb[0].mxu0
  %v1518 = vadd.f32 %v1427, %v1517
  %v1519 = vpop.f32.mrb[0].mxu0
  %1520 = vdwg.mxu0
  %1521 = vmatprep.subr.mxu0 0.0
  %v1522 = vand.u32 %v852, 4294901760
  %v1523 = vsub.f32 %v852, %v1522
  %1524 = vmatpush1.msra.mxu0 %v1523
  %1525 = vmatprep.subr.mxu0 0.0
  %v1526 = vand.u32 %v853, 4294901760
  %v1527 = vsub.f32 %v853, %v1526
  %1528 = vmatpush1.msra.mxu0 %v1527
  %1529 = vmatprep.subr.mxu0 0.0
  %v1530 = vand.u32 %v854, 4294901760
  %v1531 = vsub.f32 %v854, %v1530
  %1532 = vmatpush1.msra.mxu0 %v1531
  %1533 = vmatprep.subr.mxu0 0.0
  %v1534 = vand.u32 %v855, 4294901760
  %v1535 = vsub.f32 %v855, %v1534
  %1536 = vmatpush1.msra.mxu0 %v1535
  %1537 = vmatprep.subr.mxu0 0.0
  %1538 = vmatpush1.msra.mxu0 0.0
  %1539 = vmatprep.subr.mxu0 0.0
  %1540 = vmatpush1.msra.mxu0 0.0
  %1541 = vmatprep.subr.mxu0 0.0
  %1542 = vmatpush1.msra.mxu0 0.0
  %1543 = vmatprep.subr.mxu0 0.0
  %1544 = vmatpush1.msra.mxu0 0.0
  %1545 = vmatprep.subr.mxu0 0.0
  %1546 = vmatpush1.msra.mxu0 0.0
  %1547 = vmatprep.subr.mxu0 0.0
  %1548 = vmatpush1.msra.mxu0 0.0
  %1549 = vmatprep.subr.mxu0 0.0
  %1550 = vmatpush1.msra.mxu0 0.0
  %1551 = vmatprep.subr.mxu0 0.0
  %1552 = vmatpush1.msra.mxu0 0.0
  %1553 = vmatprep.subr.mxu0 0.0
  %1554 = vmatpush1.msra.mxu0 0.0
  %1555 = vmatprep.subr.mxu0 0.0
  %1556 = vmatpush1.msra.mxu0 0.0
  %1557 = vmatprep.subr.mxu0 0.0
  %1558 = vmatpush1.msra.mxu0 0.0
  %1559 = vmatprep.subr.mxu0 0.0
  %1560 = vmatpush1.msra.mxu0 0.0
  %1561 = vmatprep.subr.mxu0 0.0
  %1562 = vmatpush1.msra.mxu0 0.0
  %1563 = vmatprep.subr.mxu0 0.0
  %1564 = vmatpush1.msra.mxu0 0.0
  %1565 = vmatprep.subr.mxu0 0.0
  %1566 = vmatpush1.msra.mxu0 0.0
  %1567 = vmatprep.subr.mxu0 0.0
  %1568 = vmatpush1.msra.mxu0 0.0
  %1569 = vmatprep.subr.mxu0 0.0
  %1570 = vmatpush1.msra.mxu0 0.0
  %1571 = vmatprep.subr.mxu0 0.0
  %1572 = vmatpush1.msra.mxu0 0.0
  %1573 = vmatprep.subr.mxu0 0.0
  %1574 = vmatpush1.msra.mxu0 0.0
  %1575 = vmatprep.subr.mxu0 0.0
  %1576 = vmatpush1.msra.mxu0 0.0
  %1577 = vmatprep.subr.mxu0 0.0
  %1578 = vmatpush1.msra.mxu0 0.0
  %1579 = vmatprep.subr.mxu0 0.0
  %1580 = vmatpush1.msra.mxu0 0.0
  %1581 = vmatprep.subr.mxu0 0.0
  %1582 = vmatpush1.msra.mxu0 0.0
  %1583 = vmatprep.subr.mxu0 0.0
  %1584 = vmatpush1.msra.mxu0 0.0
  %1585 = vmatprep.subr.mxu0 0.0
  %1586 = vmatpush1.msra.mxu0 0.0
  %1587 = vmatprep.subr.mxu0 0.0
  %1588 = vmatpush1.msra.mxu0 0.0
  %1589 = vmatprep.subr.mxu0 0.0
  %1590 = vmatpush1.msra.mxu0 0.0
  %1591 = vmatprep.subr.mxu0 0.0
  %1592 = vmatpush1.msra.mxu0 0.0
  %1593 = vmatprep.mubr.f32.mxu0 0.0
  %v1594 = vand.u32 %v1349, 4294901760
  %v1595 = vsub.f32 %v1349, %v1594
  %1596 = vmatmul.mubr.f32.gmra.mrb[0].mxu0 %v1595
  %v1597 = vpop.f32.mrb[0].mxu0
  %v1598 = vadd.f32 %v1518, %v1597
  %v1599 = vpop.f32.mrb[0].mxu0
  %1600 = vdwg.mxu0
  %1601 = vmatprep.subr.mxu0 0.0
  %v1602 = vand.u32 %v852, 4294901760
  %1603 = vmatpush1.msra.mxu0 %v1602
  %1604 = vmatprep.subr.mxu0 0.0
  %v1605 = vand.u32 %v853, 4294901760
  %1606 = vmatpush1.msra.mxu0 %v1605
  %1607 = vmatprep.subr.mxu0 0.0
  %v1608 = vand.u32 %v854, 4294901760
  %1609 = vmatpush1.msra.mxu0 %v1608
  %1610 = vmatprep.subr.mxu0 0.0
  %v1611 = vand.u32 %v855, 4294901760
  %1612 = vmatpush1.msra.mxu0 %v1611
  %1613 = vmatprep.subr.mxu0 0.0
  %1614 = vmatpush1.msra.mxu0 0.0
  %1615 = vmatprep.subr.mxu0 0.0
  %1616 = vmatpush1.msra.mxu0 0.0
  %1617 = vmatprep.subr.mxu0 0.0
  %1618 = vmatpush1.msra.mxu0 0.0
  %1619 = vmatprep.subr.mxu0 0.0
  %1620 = vmatpush1.msra.mxu0 0.0
  %1621 = vmatprep.subr.mxu0 0.0
  %1622 = vmatpush1.msra.mxu0 0.0
  %1623 = vmatprep.subr.mxu0 0.0
  %1624 = vmatpush1.msra.mxu0 0.0
  %1625 = vmatprep.subr.mxu0 0.0
  %1626 = vmatpush1.msra.mxu0 0.0
  %1627 = vmatprep.subr.mxu0 0.0
  %1628 = vmatpush1.msra.mxu0 0.0
  %1629 = vmatprep.subr.mxu0 0.0
  %1630 = vmatpush1.msra.mxu0 0.0
  %1631 = vmatprep.subr.mxu0 0.0
  %1632 = vmatpush1.msra.mxu0 0.0
  %1633 = vmatprep.subr.mxu0 0.0
  %1634 = vmatpush1.msra.mxu0 0.0
  %1635 = vmatprep.subr.mxu0 0.0
  %1636 = vmatpush1.msra.mxu0 0.0
  %1637 = vmatprep.subr.mxu0 0.0
  %1638 = vmatpush1.msra.mxu0 0.0
  %1639 = vmatprep.subr.mxu0 0.0
  %1640 = vmatpush1.msra.mxu0 0.0
  %1641 = vmatprep.subr.mxu0 0.0
  %1642 = vmatpush1.msra.mxu0 0.0
  %1643 = vmatprep.subr.mxu0 0.0
  %1644 = vmatpush1.msra.mxu0 0.0
  %1645 = vmatprep.subr.mxu0 0.0
  %1646 = vmatpush1.msra.mxu0 0.0
  %1647 = vmatprep.subr.mxu0 0.0
  %1648 = vmatpush1.msra.mxu0 0.0
  %1649 = vmatprep.subr.mxu0 0.0
  %1650 = vmatpush1.msra.mxu0 0.0
  %1651 = vmatprep.subr.mxu0 0.0
  %1652 = vmatpush1.msra.mxu0 0.0
  %1653 = vmatprep.subr.mxu0 0.0
  %1654 = vmatpush1.msra.mxu0 0.0
  %1655 = vmatprep.subr.mxu0 0.0
  %1656 = vmatpush1.msra.mxu0 0.0
  %1657 = vmatprep.subr.mxu0 0.0
  %1658 = vmatpush1.msra.mxu0 0.0
  %1659 = vmatprep.subr.mxu0 0.0
  %1660 = vmatpush1.msra.mxu0 0.0
  %1661 = vmatprep.subr.mxu0 0.0
  %1662 = vmatpush1.msra.mxu0 0.0
  %1663 = vmatprep.subr.mxu0 0.0
  %1664 = vmatpush1.msra.mxu0 0.0
  %1665 = vmatprep.subr.mxu0 0.0
  %1666 = vmatpush1.msra.mxu0 0.0
  %1667 = vmatprep.subr.mxu0 0.0
  %1668 = vmatpush1.msra.mxu0 0.0
  %1669 = vmatprep.mubr.f32.mxu0 0.0
  %v1670 = vand.u32 %v1349, 4294901760
  %v1671 = vsub.f32 %v1349, %v1670
  %v1672 = vand.u32 %v1671, 4294901760
  %1673 = vmatmul.mubr.f32.gmra.mrb[0].mxu0 %v1672
  %v1674 = vpop.f32.mrb[0].mxu0
  %v1675 = vadd.f32 %v1598, %v1674
  %v1676 = vpop.f32.mrb[0].mxu0
  %1677 = vdwg.mxu0
  %1678 = vmatprep.subr.mxu0 0.0
  %v1679 = vand.u32 %v852, 4294901760
  %v1680 = vsub.f32 %v852, %v1679
  %v1681 = vand.u32 %v1680, 4294901760
  %1682 = vmatpush1.msra.mxu0 %v1681
  %1683 = vmatprep.subr.mxu0 0.0
  %v1684 = vand.u32 %v853, 4294901760
  %v1685 = vsub.f32 %v853, %v1684
  %v1686 = vand.u32 %v1685, 4294901760
  %1687 = vmatpush1.msra.mxu0 %v1686
  %1688 = vmatprep.subr.mxu0 0.0
  %v1689 = vand.u32 %v854, 4294901760
  %v1690 = vsub.f32 %v854, %v1689
  %v1691 = vand.u32 %v1690, 4294901760
  %1692 = vmatpush1.msra.mxu0 %v1691
  %1693 = vmatprep.subr.mxu0 0.0
  %v1694 = vand.u32 %v855, 4294901760
  %v1695 = vsub.f32 %v855, %v1694
  %v1696 = vand.u32 %v1695, 4294901760
  %1697 = vmatpush1.msra.mxu0 %v1696
  %1698 = vmatprep.subr.mxu0 0.0
  %1699 = vmatpush1.msra.mxu0 0.0
  %1700 = vmatprep.subr.mxu0 0.0
  %1701 = vmatpush1.msra.mxu0 0.0
  %1702 = vmatprep.subr.mxu0 0.0
  %1703 = vmatpush1.msra.mxu0 0.0
  %1704 = vmatprep.subr.mxu0 0.0
  %1705 = vmatpush1.msra.mxu0 0.0
  %1706 = vmatprep.subr.mxu0 0.0
  %1707 = vmatpush1.msra.mxu0 0.0
  %1708 = vmatprep.subr.mxu0 0.0
  %1709 = vmatpush1.msra.mxu0 0.0
  %1710 = vmatprep.subr.mxu0 0.0
  %1711 = vmatpush1.msra.mxu0 0.0
  %1712 = vmatprep.subr.mxu0 0.0
  %1713 = vmatpush1.msra.mxu0 0.0
  %1714 = vmatprep.subr.mxu0 0.0
  %1715 = vmatpush1.msra.mxu0 0.0
  %1716 = vmatprep.subr.mxu0 0.0
  %1717 = vmatpush1.msra.mxu0 0.0
  %1718 = vmatprep.subr.mxu0 0.0
  %1719 = vmatpush1.msra.mxu0 0.0
  %1720 = vmatprep.subr.mxu0 0.0
  %1721 = vmatpush1.msra.mxu0 0.0
  %1722 = vmatprep.subr.mxu0 0.0
  %1723 = vmatpush1.msra.mxu0 0.0
  %1724 = vmatprep.subr.mxu0 0.0
  %1725 = vmatpush1.msra.mxu0 0.0
  %1726 = vmatprep.subr.mxu0 0.0
  %1727 = vmatpush1.msra.mxu0 0.0
  %1728 = vmatprep.subr.mxu0 0.0
  %1729 = vmatpush1.msra.mxu0 0.0
  %1730 = vmatprep.subr.mxu0 0.0
  %1731 = vmatpush1.msra.mxu0 0.0
  %1732 = vmatprep.subr.mxu0 0.0
  %1733 = vmatpush1.msra.mxu0 0.0
  %1734 = vmatprep.subr.mxu0 0.0
  %1735 = vmatpush1.msra.mxu0 0.0
  %1736 = vmatprep.subr.mxu0 0.0
  %1737 = vmatpush1.msra.mxu0 0.0
  %1738 = vmatprep.subr.mxu0 0.0
  %1739 = vmatpush1.msra.mxu0 0.0
  %1740 = vmatprep.subr.mxu0 0.0
  %1741 = vmatpush1.msra.mxu0 0.0
  %1742 = vmatprep.subr.mxu0 0.0
  %1743 = vmatpush1.msra.mxu0 0.0
  %1744 = vmatprep.subr.mxu0 0.0
  %1745 = vmatpush1.msra.mxu0 0.0
  %1746 = vmatprep.subr.mxu0 0.0
  %1747 = vmatpush1.msra.mxu0 0.0
  %1748 = vmatprep.subr.mxu0 0.0
  %1749 = vmatpush1.msra.mxu0 0.0
  %1750 = vmatprep.subr.mxu0 0.0
  %1751 = vmatpush1.msra.mxu0 0.0
  %1752 = vmatprep.subr.mxu0 0.0
  %1753 = vmatpush1.msra.mxu0 0.0
  %1754 = vmatprep.mubr.f32.mxu0 0.0
  %v1755 = vand.u32 %v1349, 4294901760
  %1756 = vmatmul.mubr.f32.gmra.mrb[0].mxu0 %v1755
  %v1757 = vpop.f32.mrb[0].mxu0
  %v1758 = vadd.f32 %v1675, %v1757
  %v1759 = vpop.f32.mrb[0].mxu0
  %1760 = vdwg.mxu0
  %1761 = vmatprep.subr.mxu0 0.0
  %v1762 = vand.u32 %v852, 4294901760
  %1763 = vmatpush1.msra.mxu0 %v1762
  %1764 = vmatprep.subr.mxu0 0.0
  %v1765 = vand.u32 %v853, 4294901760
  %1766 = vmatpush1.msra.mxu0 %v1765
  %1767 = vmatprep.subr.mxu0 0.0
  %v1768 = vand.u32 %v854, 4294901760
  %1769 = vmatpush1.msra.mxu0 %v1768
  %1770 = vmatprep.subr.mxu0 0.0
  %v1771 = vand.u32 %v855, 4294901760
  %1772 = vmatpush1.msra.mxu0 %v1771
  %1773 = vmatprep.subr.mxu0 0.0
  %1774 = vmatpush1.msra.mxu0 0.0
  %1775 = vmatprep.subr.mxu0 0.0
  %1776 = vmatpush1.msra.mxu0 0.0
  %1777 = vmatprep.subr.mxu0 0.0
  %1778 = vmatpush1.msra.mxu0 0.0
  %1779 = vmatprep.subr.mxu0 0.0
  %1780 = vmatpush1.msra.mxu0 0.0
  %1781 = vmatprep.subr.mxu0 0.0
  %1782 = vmatpush1.msra.mxu0 0.0
  %1783 = vmatprep.subr.mxu0 0.0
  %1784 = vmatpush1.msra.mxu0 0.0
  %1785 = vmatprep.subr.mxu0 0.0
  %1786 = vmatpush1.msra.mxu0 0.0
  %1787 = vmatprep.subr.mxu0 0.0
  %1788 = vmatpush1.msra.mxu0 0.0
  %1789 = vmatprep.subr.mxu0 0.0
  %1790 = vmatpush1.msra.mxu0 0.0
  %1791 = vmatprep.subr.mxu0 0.0
  %1792 = vmatpush1.msra.mxu0 0.0
  %1793 = vmatprep.subr.mxu0 0.0
  %1794 = vmatpush1.msra.mxu0 0.0
  %1795 = vmatprep.subr.mxu0 0.0
  %1796 = vmatpush1.msra.mxu0 0.0
  %1797 = vmatprep.subr.mxu0 0.0
  %1798 = vmatpush1.msra.mxu0 0.0
  %1799 = vmatprep.subr.mxu0 0.0
  %1800 = vmatpush1.msra.mxu0 0.0
  %1801 = vmatprep.subr.mxu0 0.0
  %1802 = vmatpush1.msra.mxu0 0.0
  %1803 = vmatprep.subr.mxu0 0.0
  %1804 = vmatpush1.msra.mxu0 0.0
  %1805 = vmatprep.subr.mxu0 0.0
  %1806 = vmatpush1.msra.mxu0 0.0
  %1807 = vmatprep.subr.mxu0 0.0
  %1808 = vmatpush1.msra.mxu0 0.0
  %1809 = vmatprep.subr.mxu0 0.0
  %1810 = vmatpush1.msra.mxu0 0.0
  %1811 = vmatprep.subr.mxu0 0.0
  %1812 = vmatpush1.msra.mxu0 0.0
  %1813 = vmatprep.subr.mxu0 0.0
  %1814 = vmatpush1.msra.mxu0 0.0
  %1815 = vmatprep.subr.mxu0 0.0
  %1816 = vmatpush1.msra.mxu0 0.0
  %1817 = vmatprep.subr.mxu0 0.0
  %1818 = vmatpush1.msra.mxu0 0.0
  %1819 = vmatprep.subr.mxu0 0.0
  %1820 = vmatpush1.msra.mxu0 0.0
  %1821 = vmatprep.subr.mxu0 0.0
  %1822 = vmatpush1.msra.mxu0 0.0
  %1823 = vmatprep.subr.mxu0 0.0
  %1824 = vmatpush1.msra.mxu0 0.0
  %1825 = vmatprep.subr.mxu0 0.0
  %1826 = vmatpush1.msra.mxu0 0.0
  %1827 = vmatprep.subr.mxu0 0.0
  %1828 = vmatpush1.msra.mxu0 0.0
  %1829 = vmatprep.mubr.f32.mxu0 0.0
  %v1830 = vand.u32 %v1349, 4294901760
  %1831 = vmatmul.mubr.f32.gmra.mrb[0].mxu0 %v1830
  %v1832 = vpop.f32.mrb[0].mxu0
  %v1833 = vadd.f32 %v1758, %v1832
  %v1834 = vpop.f32.mrb[0].mxu0
  %1835 = vdwg.mxu0
  %v1836 = vtanh.pop %v1833
  %1837 = vst.msk [vmem:[#allocation2 + $0x8] sm:$0xff] %vm857, %v1836
  %v1839 = vsel %vm857, %v1836, 0
  %1841 = vmatprep.subr.mxu0 0.0
  %v1842 = vand.u32 %v852, 4294901760
  %1843 = vmatpush1.msra.mxu0 %v1842
  %1844 = vmatprep.subr.mxu0 0.0
  %v1845 = vand.u32 %v853, 4294901760
  %1846 = vmatpush1.msra.mxu0 %v1845
  %1847 = vmatprep.subr.mxu0 0.0
  %v1848 = vand.u32 %v854, 4294901760
  %1849 = vmatpush1.msra.mxu0 %v1848
  %1850 = vmatprep.subr.mxu0 0.0
  %v1851 = vand.u32 %v855, 4294901760
  %1852 = vmatpush1.msra.mxu0 %v1851
  %1853 = vmatprep.subr.mxu0 0.0
  %1854 = vmatpush1.msra.mxu0 0.0
  %1855 = vmatprep.subr.mxu0 0.0
  %1856 = vmatpush1.msra.mxu0 0.0
  %1857 = vmatprep.subr.mxu0 0.0
  %1858 = vmatpush1.msra.mxu0 0.0
  %1859 = vmatprep.subr.mxu0 0.0
  %1860 = vmatpush1.msra.mxu0 0.0
  %1861 = vmatprep.subr.mxu0 0.0
  %1862 = vmatpush1.msra.mxu0 0.0
  %1863 = vmatprep.subr.mxu0 0.0
  %1864 = vmatpush1.msra.mxu0 0.0
  %1865 = vmatprep.subr.mxu0 0.0
  %1866 = vmatpush1.msra.mxu0 0.0
  %1867 = vmatprep.subr.mxu0 0.0
  %1868 = vmatpush1.msra.mxu0 0.0
  %1869 = vmatprep.subr.mxu0 0.0
  %1870 = vmatpush1.msra.mxu0 0.0
  %1871 = vmatprep.subr.mxu0 0.0
  %1872 = vmatpush1.msra.mxu0 0.0
  %1873 = vmatprep.subr.mxu0 0.0
  %1874 = vmatpush1.msra.mxu0 0.0
  %1875 = vmatprep.subr.mxu0 0.0
  %1876 = vmatpush1.msra.mxu0 0.0
  %1877 = vmatprep.subr.mxu0 0.0
  %1878 = vmatpush1.msra.mxu0 0.0
  %1879 = vmatprep.subr.mxu0 0.0
  %1880 = vmatpush1.msra.mxu0 0.0
  %1881 = vmatprep.subr.mxu0 0.0
  %1882 = vmatpush1.msra.mxu0 0.0
  %1883 = vmatprep.subr.mxu0 0.0
  %1884 = vmatpush1.msra.mxu0 0.0
  %1885 = vmatprep.subr.mxu0 0.0
  %1886 = vmatpush1.msra.mxu0 0.0
  %1887 = vmatprep.subr.mxu0 0.0
  %1888 = vmatpush1.msra.mxu0 0.0
  %1889 = vmatprep.subr.mxu0 0.0
  %1890 = vmatpush1.msra.mxu0 0.0
  %1891 = vmatprep.subr.mxu0 0.0
  %1892 = vmatpush1.msra.mxu0 0.0
  %1893 = vmatprep.subr.mxu0 0.0
  %1894 = vmatpush1.msra.mxu0 0.0
  %1895 = vmatprep.subr.mxu0 0.0
  %1896 = vmatpush1.msra.mxu0 0.0
  %1897 = vmatprep.subr.mxu0 0.0
  %1898 = vmatpush1.msra.mxu0 0.0
  %1899 = vmatprep.subr.mxu0 0.0
  %1900 = vmatpush1.msra.mxu0 0.0
  %1901 = vmatprep.subr.mxu0 0.0
  %1902 = vmatpush1.msra.mxu0 0.0
  %1903 = vmatprep.subr.mxu0 0.0
  %1904 = vmatpush1.msra.mxu0 0.0
  %1905 = vmatprep.subr.mxu0 0.0
  %1906 = vmatpush1.msra.mxu0 0.0
  %1907 = vmatprep.subr.mxu0 0.0
  %1908 = vmatpush1.msra.mxu0 0.0
  %1909 = vmatprep.mubr.f32.mxu0 0.0
  %v1910 = vand.u32 %v1839, 4294901760
  %v1911 = vsub.f32 %v1839, %v1910
  %v1912 = vand.u32 %v1911, 4294901760
  %v1913 = vsub.f32 %v1911, %v1912
  %v1914 = vand.u32 %v1913, 4294901760
  %1915 = vmatmul.mubr.f32.gmra.mrb[0].mxu0 %v1914
  %v1916 = vpop.f32.mrb[0].mxu0
  %v1917 = vadd.f32 %v819, %v1916
  %v1918 = vpop.f32.mrb[0].mxu0
  %1919 = vdwg.mxu0
  %1920 = vmatprep.subr.mxu0 0.0
  %v1921 = vand.u32 %v852, 4294901760
  %v1922 = vsub.f32 %v852, %v1921
  %v1923 = vand.u32 %v1922, 4294901760
  %v1924 = vsub.f32 %v1922, %v1923
  %v1925 = vand.u32 %v1924, 4294901760
  %1926 = vmatpush1.msra.mxu0 %v1925
  %1927 = vmatprep.subr.mxu0 0.0
  %v1928 = vand.u32 %v853, 4294901760
  %v1929 = vsub.f32 %v853, %v1928
  %v1930 = vand.u32 %v1929, 4294901760
  %v1931 = vsub.f32 %v1929, %v1930
  %v1932 = vand.u32 %v1931, 4294901760
  %1933 = vmatpush1.msra.mxu0 %v1932
  %1934 = vmatprep.subr.mxu0 0.0
  %v1935 = vand.u32 %v854, 4294901760
  %v1936 = vsub.f32 %v854, %v1935
  %v1937 = vand.u32 %v1936, 4294901760
  %v1938 = vsub.f32 %v1936, %v1937
  %v1939 = vand.u32 %v1938, 4294901760
  %1940 = vmatpush1.msra.mxu0 %v1939
  %1941 = vmatprep.subr.mxu0 0.0
  %v1942 = vand.u32 %v855, 4294901760
  %v1943 = vsub.f32 %v855, %v1942
  %v1944 = vand.u32 %v1943, 4294901760
  %v1945 = vsub.f32 %v1943, %v1944
  %v1946 = vand.u32 %v1945, 4294901760
  %1947 = vmatpush1.msra.mxu0 %v1946
  %1948 = vmatprep.subr.mxu0 0.0
  %1949 = vmatpush1.msra.mxu0 0.0
  %1950 = vmatprep.subr.mxu0 0.0
  %1951 = vmatpush1.msra.mxu0 0.0
  %1952 = vmatprep.subr.mxu0 0.0
  %1953 = vmatpush1.msra.mxu0 0.0
  %1954 = vmatprep.subr.mxu0 0.0
  %1955 = vmatpush1.msra.mxu0 0.0
  %1956 = vmatprep.subr.mxu0 0.0
  %1957 = vmatpush1.msra.mxu0 0.0
  %1958 = vmatprep.subr.mxu0 0.0
  %1959 = vmatpush1.msra.mxu0 0.0
  %1960 = vmatprep.subr.mxu0 0.0
  %1961 = vmatpush1.msra.mxu0 0.0
  %1962 = vmatprep.subr.mxu0 0.0
  %1963 = vmatpush1.msra.mxu0 0.0
  %1964 = vmatprep.subr.mxu0 0.0
  %1965 = vmatpush1.msra.mxu0 0.0
  %1966 = vmatprep.subr.mxu0 0.0
  %1967 = vmatpush1.msra.mxu0 0.0
  %1968 = vmatprep.subr.mxu0 0.0
  %1969 = vmatpush1.msra.mxu0 0.0
  %1970 = vmatprep.subr.mxu0 0.0
  %1971 = vmatpush1.msra.mxu0 0.0
  %1972 = vmatprep.subr.mxu0 0.0
  %1973 = vmatpush1.msra.mxu0 0.0
  %1974 = vmatprep.subr.mxu0 0.0
  %1975 = vmatpush1.msra.mxu0 0.0
  %1976 = vmatprep.subr.mxu0 0.0
  %1977 = vmatpush1.msra.mxu0 0.0
  %1978 = vmatprep.subr.mxu0 0.0
  %1979 = vmatpush1.msra.mxu0 0.0
  %1980 = vmatprep.subr.mxu0 0.0
  %1981 = vmatpush1.msra.mxu0 0.0
  %1982 = vmatprep.subr.mxu0 0.0
  %1983 = vmatpush1.msra.mxu0 0.0
  %1984 = vmatprep.subr.mxu0 0.0
  %1985 = vmatpush1.msra.mxu0 0.0
  %1986 = vmatprep.subr.mxu0 0.0
  %1987 = vmatpush1.msra.mxu0 0.0
  %1988 = vmatprep.subr.mxu0 0.0
  %1989 = vmatpush1.msra.mxu0 0.0
  %1990 = vmatprep.subr.mxu0 0.0
  %1991 = vmatpush1.msra.mxu0 0.0
  %1992 = vmatprep.subr.mxu0 0.0
  %1993 = vmatpush1.msra.mxu0 0.0
  %1994 = vmatprep.subr.mxu0 0.0
  %1995 = vmatpush1.msra.mxu0 0.0
  %1996 = vmatprep.subr.mxu0 0.0
  %1997 = vmatpush1.msra.mxu0 0.0
  %1998 = vmatprep.subr.mxu0 0.0
  %1999 = vmatpush1.msra.mxu0 0.0
  %2000 = vmatprep.subr.mxu0 0.0
  %2001 = vmatpush1.msra.mxu0 0.0
  %2002 = vmatprep.subr.mxu0 0.0
  %2003 = vmatpush1.msra.mxu0 0.0
  %2004 = vmatprep.mubr.f32.mxu0 0.0
  %v2005 = vand.u32 %v1839, 4294901760
  %2006 = vmatmul.mubr.f32.gmra.mrb[0].mxu0 %v2005
  %v2007 = vpop.f32.mrb[0].mxu0
  %v2008 = vadd.f32 %v1917, %v2007
  %v2009 = vpop.f32.mrb[0].mxu0
  %2010 = vdwg.mxu0
  %2011 = vmatprep.subr.mxu0 0.0
  %v2012 = vand.u32 %v852, 4294901760
  %v2013 = vsub.f32 %v852, %v2012
  %2014 = vmatpush1.msra.mxu0 %v2013
  %2015 = vmatprep.subr.mxu0 0.0
  %v2016 = vand.u32 %v853, 4294901760
  %v2017 = vsub.f32 %v853, %v2016
  %2018 = vmatpush1.msra.mxu0 %v2017
  %2019 = vmatprep.subr.mxu0 0.0
  %v2020 = vand.u32 %v854, 4294901760
  %v2021 = vsub.f32 %v854, %v2020
  %2022 = vmatpush1.msra.mxu0 %v2021
  %2023 = vmatprep.subr.mxu0 0.0
  %v2024 = vand.u32 %v855, 4294901760
  %v2025 = vsub.f32 %v855, %v2024
  %2026 = vmatpush1.msra.mxu0 %v2025
  %2027 = vmatprep.subr.mxu0 0.0
  %2028 = vmatpush1.msra.mxu0 0.0
  %2029 = vmatprep.subr.mxu0 0.0
  %2030 = vmatpush1.msra.mxu0 0.0
  %2031 = vmatprep.subr.mxu0 0.0
  %2032 = vmatpush1.msra.mxu0 0.0
  %2033 = vmatprep.subr.mxu0 0.0
  %2034 = vmatpush1.msra.mxu0 0.0
  %2035 = vmatprep.subr.mxu0 0.0
  %2036 = vmatpush1.msra.mxu0 0.0
  %2037 = vmatprep.subr.mxu0 0.0
  %2038 = vmatpush1.msra.mxu0 0.0
  %2039 = vmatprep.subr.mxu0 0.0
  %2040 = vmatpush1.msra.mxu0 0.0
  %2041 = vmatprep.subr.mxu0 0.0
  %2042 = vmatpush1.msra.mxu0 0.0
  %2043 = vmatprep.subr.mxu0 0.0
  %2044 = vmatpush1.msra.mxu0 0.0
  %2045 = vmatprep.subr.mxu0 0.0
  %2046 = vmatpush1.msra.mxu0 0.0
  %2047 = vmatprep.subr.mxu0 0.0
  %2048 = vmatpush1.msra.mxu0 0.0
  %2049 = vmatprep.subr.mxu0 0.0
  %2050 = vmatpush1.msra.mxu0 0.0
  %2051 = vmatprep.subr.mxu0 0.0
  %2052 = vmatpush1.msra.mxu0 0.0
  %2053 = vmatprep.subr.mxu0 0.0
  %2054 = vmatpush1.msra.mxu0 0.0
  %2055 = vmatprep.subr.mxu0 0.0
  %2056 = vmatpush1.msra.mxu0 0.0
  %2057 = vmatprep.subr.mxu0 0.0
  %2058 = vmatpush1.msra.mxu0 0.0
  %2059 = vmatprep.subr.mxu0 0.0
  %2060 = vmatpush1.msra.mxu0 0.0
  %2061 = vmatprep.subr.mxu0 0.0
  %2062 = vmatpush1.msra.mxu0 0.0
  %2063 = vmatprep.subr.mxu0 0.0
  %2064 = vmatpush1.msra.mxu0 0.0
  %2065 = vmatprep.subr.mxu0 0.0
  %2066 = vmatpush1.msra.mxu0 0.0
  %2067 = vmatprep.subr.mxu0 0.0
  %2068 = vmatpush1.msra.mxu0 0.0
  %2069 = vmatprep.subr.mxu0 0.0
  %2070 = vmatpush1.msra.mxu0 0.0
  %2071 = vmatprep.subr.mxu0 0.0
  %2072 = vmatpush1.msra.mxu0 0.0
  %2073 = vmatprep.subr.mxu0 0.0
  %2074 = vmatpush1.msra.mxu0 0.0
  %2075 = vmatprep.subr.mxu0 0.0
  %2076 = vmatpush1.msra.mxu0 0.0
  %2077 = vmatprep.subr.mxu0 0.0
  %2078 = vmatpush1.msra.mxu0 0.0
  %2079 = vmatprep.subr.mxu0 0.0
  %2080 = vmatpush1.msra.mxu0 0.0
  %2081 = vmatprep.subr.mxu0 0.0
  %2082 = vmatpush1.msra.mxu0 0.0
  %2083 = vmatprep.mubr.f32.mxu0 0.0
  %v2084 = vand.u32 %v1839, 4294901760
  %v2085 = vsub.f32 %v1839, %v2084
  %2086 = vmatmul.mubr.f32.gmra.mrb[0].mxu0 %v2085
  %v2087 = vpop.f32.mrb[0].mxu0
  %v2088 = vadd.f32 %v2008, %v2087
  %v2089 = vpop.f32.mrb[0].mxu0
  %2090 = vdwg.mxu0
  %2091 = vmatprep.subr.mxu0 0.0
  %v2092 = vand.u32 %v852, 4294901760
  %2093 = vmatpush1.msra.mxu0 %v2092
  %2094 = vmatprep.subr.mxu0 0.0
  %v2095 = vand.u32 %v853, 4294901760
  %2096 = vmatpush1.msra.mxu0 %v2095
  %2097 = vmatprep.subr.mxu0 0.0
  %v2098 = vand.u32 %v854, 4294901760
  %2099 = vmatpush1.msra.mxu0 %v2098
  %2100 = vmatprep.subr.mxu0 0.0
  %v2101 = vand.u32 %v855, 4294901760
  %2102 = vmatpush1.msra.mxu0 %v2101
  %2103 = vmatprep.subr.mxu0 0.0
  %2104 = vmatpush1.msra.mxu0 0.0
  %2105 = vmatprep.subr.mxu0 0.0
  %2106 = vmatpush1.msra.mxu0 0.0
  %2107 = vmatprep.subr.mxu0 0.0
  %2108 = vmatpush1.msra.mxu0 0.0
  %2109 = vmatprep.subr.mxu0 0.0
  %2110 = vmatpush1.msra.mxu0 0.0
  %2111 = vmatprep.subr.mxu0 0.0
  %2112 = vmatpush1.msra.mxu0 0.0
  %2113 = vmatprep.subr.mxu0 0.0
  %2114 = vmatpush1.msra.mxu0 0.0
  %2115 = vmatprep.subr.mxu0 0.0
  %2116 = vmatpush1.msra.mxu0 0.0
  %2117 = vmatprep.subr.mxu0 0.0
  %2118 = vmatpush1.msra.mxu0 0.0
  %2119 = vmatprep.subr.mxu0 0.0
  %2120 = vmatpush1.msra.mxu0 0.0
  %2121 = vmatprep.subr.mxu0 0.0
  %2122 = vmatpush1.msra.mxu0 0.0
  %2123 = vmatprep.subr.mxu0 0.0
  %2124 = vmatpush1.msra.mxu0 0.0
  %2125 = vmatprep.subr.mxu0 0.0
  %2126 = vmatpush1.msra.mxu0 0.0
  %2127 = vmatprep.subr.mxu0 0.0
  %2128 = vmatpush1.msra.mxu0 0.0
  %2129 = vmatprep.subr.mxu0 0.0
  %2130 = vmatpush1.msra.mxu0 0.0
  %2131 = vmatprep.subr.mxu0 0.0
  %2132 = vmatpush1.msra.mxu0 0.0
  %2133 = vmatprep.subr.mxu0 0.0
  %2134 = vmatpush1.msra.mxu0 0.0
  %2135 = vmatprep.subr.mxu0 0.0
  %2136 = vmatpush1.msra.mxu0 0.0
  %2137 = vmatprep.subr.mxu0 0.0
  %2138 = vmatpush1.msra.mxu0 0.0
  %2139 = vmatprep.subr.mxu0 0.0
  %2140 = vmatpush1.msra.mxu0 0.0
  %2141 = vmatprep.subr.mxu0 0.0
  %2142 = vmatpush1.msra.mxu0 0.0
  %2143 = vmatprep.subr.mxu0 0.0
  %2144 = vmatpush1.msra.mxu0 0.0
  %2145 = vmatprep.subr.mxu0 0.0
  %2146 = vmatpush1.msra.mxu0 0.0
  %2147 = vmatprep.subr.mxu0 0.0
  %2148 = vmatpush1.msra.mxu0 0.0
  %2149 = vmatprep.subr.mxu0 0.0
  %2150 = vmatpush1.msra.mxu0 0.0
  %2151 = vmatprep.subr.mxu0 0.0
  %2152 = vmatpush1.msra.mxu0 0.0
  %2153 = vmatprep.subr.mxu0 0.0
  %2154 = vmatpush1.msra.mxu0 0.0
  %2155 = vmatprep.subr.mxu0 0.0
  %2156 = vmatpush1.msra.mxu0 0.0
  %2157 = vmatprep.subr.mxu0 0.0
  %2158 = vmatpush1.msra.mxu0 0.0
  %2159 = vmatprep.mubr.f32.mxu0 0.0
  %v2160 = vand.u32 %v1839, 4294901760
  %v2161 = vsub.f32 %v1839, %v2160
  %v2162 = vand.u32 %v2161, 4294901760
  %2163 = vmatmul.mubr.f32.gmra.mrb[0].mxu0 %v2162
  %v2164 = vpop.f32.mrb[0].mxu0
  %v2165 = vadd.f32 %v2088, %v2164
  %v2166 = vpop.f32.mrb[0].mxu0
  %2167 = vdwg.mxu0
  %2168 = vmatprep.subr.mxu0 0.0
  %v2169 = vand.u32 %v852, 4294901760
  %v2170 = vsub.f32 %v852, %v2169
  %v2171 = vand.u32 %v2170, 4294901760
  %2172 = vmatpush1.msra.mxu0 %v2171
  %2173 = vmatprep.subr.mxu0 0.0
  %v2174 = vand.u32 %v853, 4294901760
  %v2175 = vsub.f32 %v853, %v2174
  %v2176 = vand.u32 %v2175, 4294901760
  %2177 = vmatpush1.msra.mxu0 %v2176
  %2178 = vmatprep.subr.mxu0 0.0
  %v2179 = vand.u32 %v854, 4294901760
  %v2180 = vsub.f32 %v854, %v2179
  %v2181 = vand.u32 %v2180, 4294901760
  %2182 = vmatpush1.msra.mxu0 %v2181
  %2183 = vmatprep.subr.mxu0 0.0
  %v2184 = vand.u32 %v855, 4294901760
  %v2185 = vsub.f32 %v855, %v2184
  %v2186 = vand.u32 %v2185, 4294901760
  %2187 = vmatpush1.msra.mxu0 %v2186
  %2188 = vmatprep.subr.mxu0 0.0
  %2189 = vmatpush1.msra.mxu0 0.0
  %2190 = vmatprep.subr.mxu0 0.0
  %2191 = vmatpush1.msra.mxu0 0.0
  %2192 = vmatprep.subr.mxu0 0.0
  %2193 = vmatpush1.msra.mxu0 0.0
  %2194 = vmatprep.subr.mxu0 0.0
  %2195 = vmatpush1.msra.mxu0 0.0
  %2196 = vmatprep.subr.mxu0 0.0
  %2197 = vmatpush1.msra.mxu0 0.0
  %2198 = vmatprep.subr.mxu0 0.0
  %2199 = vmatpush1.msra.mxu0 0.0
  %2200 = vmatprep.subr.mxu0 0.0
  %2201 = vmatpush1.msra.mxu0 0.0
  %2202 = vmatprep.subr.mxu0 0.0
  %2203 = vmatpush1.msra.mxu0 0.0
  %2204 = vmatprep.subr.mxu0 0.0
  %2205 = vmatpush1.msra.mxu0 0.0
  %2206 = vmatprep.subr.mxu0 0.0
  %2207 = vmatpush1.msra.mxu0 0.0
  %2208 = vmatprep.subr.mxu0 0.0
  %2209 = vmatpush1.msra.mxu0 0.0
  %2210 = vmatprep.subr.mxu0 0.0
  %2211 = vmatpush1.msra.mxu0 0.0
  %2212 = vmatprep.subr.mxu0 0.0
  %2213 = vmatpush1.msra.mxu0 0.0
  %2214 = vmatprep.subr.mxu0 0.0
  %2215 = vmatpush1.msra.mxu0 0.0
  %2216 = vmatprep.subr.mxu0 0.0
  %2217 = vmatpush1.msra.mxu0 0.0
  %2218 = vmatprep.subr.mxu0 0.0
  %2219 = vmatpush1.msra.mxu0 0.0
  %2220 = vmatprep.subr.mxu0 0.0
  %2221 = vmatpush1.msra.mxu0 0.0
  %2222 = vmatprep.subr.mxu0 0.0
  %2223 = vmatpush1.msra.mxu0 0.0
  %2224 = vmatprep.subr.mxu0 0.0
  %2225 = vmatpush1.msra.mxu0 0.0
  %2226 = vmatprep.subr.mxu0 0.0
  %2227 = vmatpush1.msra.mxu0 0.0
  %2228 = vmatprep.subr.mxu0 0.0
  %2229 = vmatpush1.msra.mxu0 0.0
  %2230 = vmatprep.subr.mxu0 0.0
  %2231 = vmatpush1.msra.mxu0 0.0
  %2232 = vmatprep.subr.mxu0 0.0
  %2233 = vmatpush1.msra.mxu0 0.0
  %2234 = vmatprep.subr.mxu0 0.0
  %2235 = vmatpush1.msra.mxu0 0.0
  %2236 = vmatprep.subr.mxu0 0.0
  %2237 = vmatpush1.msra.mxu0 0.0
  %2238 = vmatprep.subr.mxu0 0.0
  %2239 = vmatpush1.msra.mxu0 0.0
  %2240 = vmatprep.subr.mxu0 0.0
  %2241 = vmatpush1.msra.mxu0 0.0
  %2242 = vmatprep.subr.mxu0 0.0
  %2243 = vmatpush1.msra.mxu0 0.0
  %2244 = vmatprep.mubr.f32.mxu0 0.0
  %v2245 = vand.u32 %v1839, 4294901760
  %2246 = vmatmul.mubr.f32.gmra.mrb[0].mxu0 %v2245
  %v2247 = vpop.f32.mrb[0].mxu0
  %v2248 = vadd.f32 %v2165, %v2247
  %v2249 = vpop.f32.mrb[0].mxu0
  %2250 = vdwg.mxu0
  %2251 = vmatprep.subr.mxu0 0.0
  %v2252 = vand.u32 %v852, 4294901760
  %2253 = vmatpush1.msra.mxu0 %v2252
  %2254 = vmatprep.subr.mxu0 0.0
  %v2255 = vand.u32 %v853, 4294901760
  %2256 = vmatpush1.msra.mxu0 %v2255
  %2257 = vmatprep.subr.mxu0 0.0
  %v2258 = vand.u32 %v854, 4294901760
  %2259 = vmatpush1.msra.mxu0 %v2258
  %2260 = vmatprep.subr.mxu0 0.0
  %v2261 = vand.u32 %v855, 4294901760
  %2262 = vmatpush1.msra.mxu0 %v2261
  %2263 = vmatprep.subr.mxu0 0.0
  %2264 = vmatpush1.msra.mxu0 0.0
  %2265 = vmatprep.subr.mxu0 0.0
  %2266 = vmatpush1.msra.mxu0 0.0
  %2267 = vmatprep.subr.mxu0 0.0
  %2268 = vmatpush1.msra.mxu0 0.0
  %2269 = vmatprep.subr.mxu0 0.0
  %2270 = vmatpush1.msra.mxu0 0.0
  %2271 = vmatprep.subr.mxu0 0.0
  %2272 = vmatpush1.msra.mxu0 0.0
  %2273 = vmatprep.subr.mxu0 0.0
  %2274 = vmatpush1.msra.mxu0 0.0
  %2275 = vmatprep.subr.mxu0 0.0
  %2276 = vmatpush1.msra.mxu0 0.0
  %2277 = vmatprep.subr.mxu0 0.0
  %2278 = vmatpush1.msra.mxu0 0.0
  %2279 = vmatprep.subr.mxu0 0.0
  %2280 = vmatpush1.msra.mxu0 0.0
  %2281 = vmatprep.subr.mxu0 0.0
  %2282 = vmatpush1.msra.mxu0 0.0
  %2283 = vmatprep.subr.mxu0 0.0
  %2284 = vmatpush1.msra.mxu0 0.0
  %2285 = vmatprep.subr.mxu0 0.0
  %2286 = vmatpush1.msra.mxu0 0.0
  %2287 = vmatprep.subr.mxu0 0.0
  %2288 = vmatpush1.msra.mxu0 0.0
  %2289 = vmatprep.subr.mxu0 0.0
  %2290 = vmatpush1.msra.mxu0 0.0
  %2291 = vmatprep.subr.mxu0 0.0
  %2292 = vmatpush1.msra.mxu0 0.0
  %2293 = vmatprep.subr.mxu0 0.0
  %2294 = vmatpush1.msra.mxu0 0.0
  %2295 = vmatprep.subr.mxu0 0.0
  %2296 = vmatpush1.msra.mxu0 0.0
  %2297 = vmatprep.subr.mxu0 0.0
  %2298 = vmatpush1.msra.mxu0 0.0
  %2299 = vmatprep.subr.mxu0 0.0
  %2300 = vmatpush1.msra.mxu0 0.0
  %2301 = vmatprep.subr.mxu0 0.0
  %2302 = vmatpush1.msra.mxu0 0.0
  %2303 = vmatprep.subr.mxu0 0.0
  %2304 = vmatpush1.msra.mxu0 0.0
  %2305 = vmatprep.subr.mxu0 0.0
  %2306 = vmatpush1.msra.mxu0 0.0
  %2307 = vmatprep.subr.mxu0 0.0
  %2308 = vmatpush1.msra.mxu0 0.0
  %2309 = vmatprep.subr.mxu0 0.0
  %2310 = vmatpush1.msra.mxu0 0.0
  %2311 = vmatprep.subr.mxu0 0.0
  %2312 = vmatpush1.msra.mxu0 0.0
  %2313 = vmatprep.subr.mxu0 0.0
  %2314 = vmatpush1.msra.mxu0 0.0
  %2315 = vmatprep.subr.mxu0 0.0
  %2316 = vmatpush1.msra.mxu0 0.0
  %2317 = vmatprep.subr.mxu0 0.0
  %2318 = vmatpush1.msra.mxu0 0.0
  %2319 = vmatprep.mubr.f32.mxu0 0.0
  %v2320 = vand.u32 %v1839, 4294901760
  %2321 = vmatmul.mubr.f32.gmra.mrb[0].mxu0 %v2320
  %v2322 = vpop.f32.mrb[0].mxu0
  %v2323 = vadd.f32 %v2248, %v2322
  %v2324 = vpop.f32.mrb[0].mxu0
  %2325 = vdwg.mxu0
  %v2326 = vtanh.pop %v2323
  %2327 = vst.msk [vmem:[#allocation2 + $0x10] sm:$0xff] %vm857, %v2326
  %v2329 = vsel %vm857, %v2326, 0
  %2331 = vmatprep.subr.mxu0 0.0
  %v2332 = vand.u32 %v852, 4294901760
  %2333 = vmatpush1.msra.mxu0 %v2332
  %2334 = vmatprep.subr.mxu0 0.0
  %v2335 = vand.u32 %v853, 4294901760
  %2336 = vmatpush1.msra.mxu0 %v2335
  %2337 = vmatprep.subr.mxu0 0.0
  %v2338 = vand.u32 %v854, 4294901760
  %2339 = vmatpush1.msra.mxu0 %v2338
  %2340 = vmatprep.subr.mxu0 0.0
  %v2341 = vand.u32 %v855, 4294901760
  %2342 = vmatpush1.msra.mxu0 %v2341
  %2343 = vmatprep.subr.mxu0 0.0
  %2344 = vmatpush1.msra.mxu0 0.0
  %2345 = vmatprep.subr.mxu0 0.0
  %2346 = vmatpush1.msra.mxu0 0.0
  %2347 = vmatprep.subr.mxu0 0.0
  %2348 = vmatpush1.msra.mxu0 0.0
  %2349 = vmatprep.subr.mxu0 0.0
  %2350 = vmatpush1.msra.mxu0 0.0
  %2351 = vmatprep.subr.mxu0 0.0
  %2352 = vmatpush1.msra.mxu0 0.0
  %2353 = vmatprep.subr.mxu0 0.0
  %2354 = vmatpush1.msra.mxu0 0.0
  %2355 = vmatprep.subr.mxu0 0.0
  %2356 = vmatpush1.msra.mxu0 0.0
  %2357 = vmatprep.subr.mxu0 0.0
  %2358 = vmatpush1.msra.mxu0 0.0
  %2359 = vmatprep.subr.mxu0 0.0
  %2360 = vmatpush1.msra.mxu0 0.0
  %2361 = vmatprep.subr.mxu0 0.0
  %2362 = vmatpush1.msra.mxu0 0.0
  %2363 = vmatprep.subr.mxu0 0.0
  %2364 = vmatpush1.msra.mxu0 0.0
  %2365 = vmatprep.subr.mxu0 0.0
  %2366 = vmatpush1.msra.mxu0 0.0
  %2367 = vmatprep.subr.mxu0 0.0
  %2368 = vmatpush1.msra.mxu0 0.0
  %2369 = vmatprep.subr.mxu0 0.0
  %2370 = vmatpush1.msra.mxu0 0.0
  %2371 = vmatprep.subr.mxu0 0.0
  %2372 = vmatpush1.msra.mxu0 0.0
  %2373 = vmatprep.subr.mxu0 0.0
  %2374 = vmatpush1.msra.mxu0 0.0
  %2375 = vmatprep.subr.mxu0 0.0
  %2376 = vmatpush1.msra.mxu0 0.0
  %2377 = vmatprep.subr.mxu0 0.0
  %2378 = vmatpush1.msra.mxu0 0.0
  %2379 = vmatprep.subr.mxu0 0.0
  %2380 = vmatpush1.msra.mxu0 0.0
  %2381 = vmatprep.subr.mxu0 0.0
  %2382 = vmatpush1.msra.mxu0 0.0
  %2383 = vmatprep.subr.mxu0 0.0
  %2384 = vmatpush1.msra.mxu0 0.0
  %2385 = vmatprep.subr.mxu0 0.0
  %2386 = vmatpush1.msra.mxu0 0.0
  %2387 = vmatprep.subr.mxu0 0.0
  %2388 = vmatpush1.msra.mxu0 0.0
  %2389 = vmatprep.subr.mxu0 0.0
  %2390 = vmatpush1.msra.mxu0 0.0
  %2391 = vmatprep.subr.mxu0 0.0
  %2392 = vmatpush1.msra.mxu0 0.0
  %2393 = vmatprep.subr.mxu0 0.0
  %2394 = vmatpush1.msra.mxu0 0.0
  %2395 = vmatprep.subr.mxu0 0.0
  %2396 = vmatpush1.msra.mxu0 0.0
  %2397 = vmatprep.subr.mxu0 0.0
  %2398 = vmatpush1.msra.mxu0 0.0
  %2399 = vmatprep.mubr.f32.mxu0 0.0
  %v2400 = vand.u32 %v2329, 4294901760
  %v2401 = vsub.f32 %v2329, %v2400
  %v2402 = vand.u32 %v2401, 4294901760
  %v2403 = vsub.f32 %v2401, %v2402
  %v2404 = vand.u32 %v2403, 4294901760
  %2405 = vmatmul.mubr.f32.gmra.mrb[0].mxu0 %v2404
  %v2406 = vpop.f32.mrb[0].mxu0
  %v2407 = vadd.f32 %v825, %v2406
  %v2408 = vpop.f32.mrb[0].mxu0
  %2409 = vdwg.mxu0
  %2410 = vmatprep.subr.mxu0 0.0
  %v2411 = vand.u32 %v852, 4294901760
  %v2412 = vsub.f32 %v852, %v2411
  %v2413 = vand.u32 %v2412, 4294901760
  %v2414 = vsub.f32 %v2412, %v2413
  %v2415 = vand.u32 %v2414, 4294901760
  %2416 = vmatpush1.msra.mxu0 %v2415
  %2417 = vmatprep.subr.mxu0 0.0
  %v2418 = vand.u32 %v853, 4294901760
  %v2419 = vsub.f32 %v853, %v2418
  %v2420 = vand.u32 %v2419, 4294901760
  %v2421 = vsub.f32 %v2419, %v2420
  %v2422 = vand.u32 %v2421, 4294901760
  %2423 = vmatpush1.msra.mxu0 %v2422
  %2424 = vmatprep.subr.mxu0 0.0
  %v2425 = vand.u32 %v854, 4294901760
  %v2426 = vsub.f32 %v854, %v2425
  %v2427 = vand.u32 %v2426, 4294901760
  %v2428 = vsub.f32 %v2426, %v2427
  %v2429 = vand.u32 %v2428, 4294901760
  %2430 = vmatpush1.msra.mxu0 %v2429
  %2431 = vmatprep.subr.mxu0 0.0
  %v2432 = vand.u32 %v855, 4294901760
  %v2433 = vsub.f32 %v855, %v2432
  %v2434 = vand.u32 %v2433, 4294901760
  %v2435 = vsub.f32 %v2433, %v2434
  %v2436 = vand.u32 %v2435, 4294901760
  %2437 = vmatpush1.msra.mxu0 %v2436
  %2438 = vmatprep.subr.mxu0 0.0
  %2439 = vmatpush1.msra.mxu0 0.0
  %2440 = vmatprep.subr.mxu0 0.0
  %2441 = vmatpush1.msra.mxu0 0.0
  %2442 = vmatprep.subr.mxu0 0.0
  %2443 = vmatpush1.msra.mxu0 0.0
  %2444 = vmatprep.subr.mxu0 0.0
  %2445 = vmatpush1.msra.mxu0 0.0
  %2446 = vmatprep.subr.mxu0 0.0
  %2447 = vmatpush1.msra.mxu0 0.0
  %2448 = vmatprep.subr.mxu0 0.0
  %2449 = vmatpush1.msra.mxu0 0.0
  %2450 = vmatprep.subr.mxu0 0.0
  %2451 = vmatpush1.msra.mxu0 0.0
  %2452 = vmatprep.subr.mxu0 0.0
  %2453 = vmatpush1.msra.mxu0 0.0
  %2454 = vmatprep.subr.mxu0 0.0
  %2455 = vmatpush1.msra.mxu0 0.0
  %2456 = vmatprep.subr.mxu0 0.0
  %2457 = vmatpush1.msra.mxu0 0.0
  %2458 = vmatprep.subr.mxu0 0.0
  %2459 = vmatpush1.msra.mxu0 0.0
  %2460 = vmatprep.subr.mxu0 0.0
  %2461 = vmatpush1.msra.mxu0 0.0
  %2462 = vmatprep.subr.mxu0 0.0
  %2463 = vmatpush1.msra.mxu0 0.0
  %2464 = vmatprep.subr.mxu0 0.0
  %2465 = vmatpush1.msra.mxu0 0.0
  %2466 = vmatprep.subr.mxu0 0.0
  %2467 = vmatpush1.msra.mxu0 0.0
  %2468 = vmatprep.subr.mxu0 0.0
  %2469 = vmatpush1.msra.mxu0 0.0
  %2470 = vmatprep.subr.mxu0 0.0
  %2471 = vmatpush1.msra.mxu0 0.0
  %2472 = vmatprep.subr.mxu0 0.0
  %2473 = vmatpush1.msra.mxu0 0.0
  %2474 = vmatprep.subr.mxu0 0.0
  %2475 = vmatpush1.msra.mxu0 0.0
  %2476 = vmatprep.subr.mxu0 0.0
  %2477 = vmatpush1.msra.mxu0 0.0
  %2478 = vmatprep.subr.mxu0 0.0
  %2479 = vmatpush1.msra.mxu0 0.0
  %2480 = vmatprep.subr.mxu0 0.0
  %2481 = vmatpush1.msra.mxu0 0.0
  %2482 = vmatprep.subr.mxu0 0.0
  %2483 = vmatpush1.msra.mxu0 0.0
  %2484 = vmatprep.subr.mxu0 0.0
  %2485 = vmatpush1.msra.mxu0 0.0
  %2486 = vmatprep.subr.mxu0 0.0
  %2487 = vmatpush1.msra.mxu0 0.0
  %2488 = vmatprep.subr.mxu0 0.0
  %2489 = vmatpush1.msra.mxu0 0.0
  %2490 = vmatprep.subr.mxu0 0.0
  %2491 = vmatpush1.msra.mxu0 0.0
  %2492 = vmatprep.subr.mxu0 0.0
  %2493 = vmatpush1.msra.mxu0 0.0
  %2494 = vmatprep.mubr.f32.mxu0 0.0
  %v2495 = vand.u32 %v2329, 4294901760
  %2496 = vmatmul.mubr.f32.gmra.mrb[0].mxu0 %v2495
  %v2497 = vpop.f32.mrb[0].mxu0
  %v2498 = vadd.f32 %v2407, %v2497
  %v2499 = vpop.f32.mrb[0].mxu0
  %2500 = vdwg.mxu0
  %2501 = vmatprep.subr.mxu0 0.0
  %v2502 = vand.u32 %v852, 4294901760
  %v2503 = vsub.f32 %v852, %v2502
  %2504 = vmatpush1.msra.mxu0 %v2503
  %2505 = vmatprep.subr.mxu0 0.0
  %v2506 = vand.u32 %v853, 4294901760
  %v2507 = vsub.f32 %v853, %v2506
  %2508 = vmatpush1.msra.mxu0 %v2507
  %2509 = vmatprep.subr.mxu0 0.0
  %v2510 = vand.u32 %v854, 4294901760
  %v2511 = vsub.f32 %v854, %v2510
  %2512 = vmatpush1.msra.mxu0 %v2511
  %2513 = vmatprep.subr.mxu0 0.0
  %v2514 = vand.u32 %v855, 4294901760
  %v2515 = vsub.f32 %v855, %v2514
  %2516 = vmatpush1.msra.mxu0 %v2515
  %2517 = vmatprep.subr.mxu0 0.0
  %2518 = vmatpush1.msra.mxu0 0.0
  %2519 = vmatprep.subr.mxu0 0.0
  %2520 = vmatpush1.msra.mxu0 0.0
  %2521 = vmatprep.subr.mxu0 0.0
  %2522 = vmatpush1.msra.mxu0 0.0
  %2523 = vmatprep.subr.mxu0 0.0
  %2524 = vmatpush1.msra.mxu0 0.0
  %2525 = vmatprep.subr.mxu0 0.0
  %2526 = vmatpush1.msra.mxu0 0.0
  %2527 = vmatprep.subr.mxu0 0.0
  %2528 = vmatpush1.msra.mxu0 0.0
  %2529 = vmatprep.subr.mxu0 0.0
  %2530 = vmatpush1.msra.mxu0 0.0
  %2531 = vmatprep.subr.mxu0 0.0
  %2532 = vmatpush1.msra.mxu0 0.0
  %2533 = vmatprep.subr.mxu0 0.0
  %2534 = vmatpush1.msra.mxu0 0.0
  %2535 = vmatprep.subr.mxu0 0.0
  %2536 = vmatpush1.msra.mxu0 0.0
  %2537 = vmatprep.subr.mxu0 0.0
  %2538 = vmatpush1.msra.mxu0 0.0
  %2539 = vmatprep.subr.mxu0 0.0
  %2540 = vmatpush1.msra.mxu0 0.0
  %2541 = vmatprep.subr.mxu0 0.0
  %2542 = vmatpush1.msra.mxu0 0.0
  %2543 = vmatprep.subr.mxu0 0.0
  %2544 = vmatpush1.msra.mxu0 0.0
  %2545 = vmatprep.subr.mxu0 0.0
  %2546 = vmatpush1.msra.mxu0 0.0
  %2547 = vmatprep.subr.mxu0 0.0
  %2548 = vmatpush1.msra.mxu0 0.0
  %2549 = vmatprep.subr.mxu0 0.0
  %2550 = vmatpush1.msra.mxu0 0.0
  %2551 = vmatprep.subr.mxu0 0.0
  %2552 = vmatpush1.msra.mxu0 0.0
  %2553 = vmatprep.subr.mxu0 0.0
  %2554 = vmatpush1.msra.mxu0 0.0
  %2555 = vmatprep.subr.mxu0 0.0
  %2556 = vmatpush1.msra.mxu0 0.0
  %2557 = vmatprep.subr.mxu0 0.0
  %2558 = vmatpush1.msra.mxu0 0.0
  %2559 = vmatprep.subr.mxu0 0.0
  %2560 = vmatpush1.msra.mxu0 0.0
  %2561 = vmatprep.subr.mxu0 0.0
  %2562 = vmatpush1.msra.mxu0 0.0
  %2563 = vmatprep.subr.mxu0 0.0
  %2564 = vmatpush1.msra.mxu0 0.0
  %2565 = vmatprep.subr.mxu0 0.0
  %2566 = vmatpush1.msra.mxu0 0.0
  %2567 = vmatprep.subr.mxu0 0.0
  %2568 = vmatpush1.msra.mxu0 0.0
  %2569 = vmatprep.subr.mxu0 0.0
  %2570 = vmatpush1.msra.mxu0 0.0
  %2571 = vmatprep.subr.mxu0 0.0
  %2572 = vmatpush1.msra.mxu0 0.0
  %2573 = vmatprep.mubr.f32.mxu0 0.0
  %v2574 = vand.u32 %v2329, 4294901760
  %v2575 = vsub.f32 %v2329, %v2574
  %2576 = vmatmul.mubr.f32.gmra.mrb[0].mxu0 %v2575
  %v2577 = vpop.f32.mrb[0].mxu0
  %v2578 = vadd.f32 %v2498, %v2577
  %v2579 = vpop.f32.mrb[0].mxu0
  %2580 = vdwg.mxu0
  %2581 = vmatprep.subr.mxu0 0.0
  %v2582 = vand.u32 %v852, 4294901760
  %2583 = vmatpush1.msra.mxu0 %v2582
  %2584 = vmatprep.subr.mxu0 0.0
  %v2585 = vand.u32 %v853, 4294901760
  %2586 = vmatpush1.msra.mxu0 %v2585
  %2587 = vmatprep.subr.mxu0 0.0
  %v2588 = vand.u32 %v854, 4294901760
  %2589 = vmatpush1.msra.mxu0 %v2588
  %2590 = vmatprep.subr.mxu0 0.0
  %v2591 = vand.u32 %v855, 4294901760
  %2592 = vmatpush1.msra.mxu0 %v2591
  %2593 = vmatprep.subr.mxu0 0.0
  %2594 = vmatpush1.msra.mxu0 0.0
  %2595 = vmatprep.subr.mxu0 0.0
  %2596 = vmatpush1.msra.mxu0 0.0
  %2597 = vmatprep.subr.mxu0 0.0
  %2598 = vmatpush1.msra.mxu0 0.0
  %2599 = vmatprep.subr.mxu0 0.0
  %2600 = vmatpush1.msra.mxu0 0.0
  %2601 = vmatprep.subr.mxu0 0.0
  %2602 = vmatpush1.msra.mxu0 0.0
  %2603 = vmatprep.subr.mxu0 0.0
  %2604 = vmatpush1.msra.mxu0 0.0
  %2605 = vmatprep.subr.mxu0 0.0
  %2606 = vmatpush1.msra.mxu0 0.0
  %2607 = vmatprep.subr.mxu0 0.0
  %2608 = vmatpush1.msra.mxu0 0.0
  %2609 = vmatprep.subr.mxu0 0.0
  %2610 = vmatpush1.msra.mxu0 0.0
  %2611 = vmatprep.subr.mxu0 0.0
  %2612 = vmatpush1.msra.mxu0 0.0
  %2613 = vmatprep.subr.mxu0 0.0
  %2614 = vmatpush1.msra.mxu0 0.0
  %2615 = vmatprep.subr.mxu0 0.0
  %2616 = vmatpush1.msra.mxu0 0.0
  %2617 = vmatprep.subr.mxu0 0.0
  %2618 = vmatpush1.msra.mxu0 0.0
  %2619 = vmatprep.subr.mxu0 0.0
  %2620 = vmatpush1.msra.mxu0 0.0
  %2621 = vmatprep.subr.mxu0 0.0
  %2622 = vmatpush1.msra.mxu0 0.0
  %2623 = vmatprep.subr.mxu0 0.0
  %2624 = vmatpush1.msra.mxu0 0.0
  %2625 = vmatprep.subr.mxu0 0.0
  %2626 = vmatpush1.msra.mxu0 0.0
  %2627 = vmatprep.subr.mxu0 0.0
  %2628 = vmatpush1.msra.mxu0 0.0
  %2629 = vmatprep.subr.mxu0 0.0
  %2630 = vmatpush1.msra.mxu0 0.0
  %2631 = vmatprep.subr.mxu0 0.0
  %2632 = vmatpush1.msra.mxu0 0.0
  %2633 = vmatprep.subr.mxu0 0.0
  %2634 = vmatpush1.msra.mxu0 0.0
  %2635 = vmatprep.subr.mxu0 0.0
  %2636 = vmatpush1.msra.mxu0 0.0
  %2637 = vmatprep.subr.mxu0 0.0
  %2638 = vmatpush1.msra.mxu0 0.0
  %2639 = vmatprep.subr.mxu0 0.0
  %2640 = vmatpush1.msra.mxu0 0.0
  %2641 = vmatprep.subr.mxu0 0.0
  %2642 = vmatpush1.msra.mxu0 0.0
  %2643 = vmatprep.subr.mxu0 0.0
  %2644 = vmatpush1.msra.mxu0 0.0
  %2645 = vmatprep.subr.mxu0 0.0
  %2646 = vmatpush1.msra.mxu0 0.0
  %2647 = vmatprep.subr.mxu0 0.0
  %2648 = vmatpush1.msra.mxu0 0.0
  %2649 = vmatprep.mubr.f32.mxu0 0.0
  %v2650 = vand.u32 %v2329, 4294901760
  %v2651 = vsub.f32 %v2329, %v2650
  %v2652 = vand.u32 %v2651, 4294901760
  %2653 = vmatmul.mubr.f32.gmra.mrb[0].mxu0 %v2652
  %v2654 = vpop.f32.mrb[0].mxu0
  %v2655 = vadd.f32 %v2578, %v2654
  %v2656 = vpop.f32.mrb[0].mxu0
  %2657 = vdwg.mxu0
  %2658 = vmatprep.subr.mxu0 0.0
  %v2659 = vand.u32 %v852, 4294901760
  %v2660 = vsub.f32 %v852, %v2659
  %v2661 = vand.u32 %v2660, 4294901760
  %2662 = vmatpush1.msra.mxu0 %v2661
  %2663 = vmatprep.subr.mxu0 0.0
  %v2664 = vand.u32 %v853, 4294901760
  %v2665 = vsub.f32 %v853, %v2664
  %v2666 = vand.u32 %v2665, 4294901760
  %2667 = vmatpush1.msra.mxu0 %v2666
  %2668 = vmatprep.subr.mxu0 0.0
  %v2669 = vand.u32 %v854, 4294901760
  %v2670 = vsub.f32 %v854, %v2669
  %v2671 = vand.u32 %v2670, 4294901760
  %2672 = vmatpush1.msra.mxu0 %v2671
  %2673 = vmatprep.subr.mxu0 0.0
  %v2674 = vand.u32 %v855, 4294901760
  %v2675 = vsub.f32 %v855, %v2674
  %v2676 = vand.u32 %v2675, 4294901760
  %2677 = vmatpush1.msra.mxu0 %v2676
  %2678 = vmatprep.subr.mxu0 0.0
  %2679 = vmatpush1.msra.mxu0 0.0
  %2680 = vmatprep.subr.mxu0 0.0
  %2681 = vmatpush1.msra.mxu0 0.0
  %2682 = vmatprep.subr.mxu0 0.0
  %2683 = vmatpush1.msra.mxu0 0.0
  %2684 = vmatprep.subr.mxu0 0.0
  %2685 = vmatpush1.msra.mxu0 0.0
  %2686 = vmatprep.subr.mxu0 0.0
  %2687 = vmatpush1.msra.mxu0 0.0
  %2688 = vmatprep.subr.mxu0 0.0
  %2689 = vmatpush1.msra.mxu0 0.0
  %2690 = vmatprep.subr.mxu0 0.0
  %2691 = vmatpush1.msra.mxu0 0.0
  %2692 = vmatprep.subr.mxu0 0.0
  %2693 = vmatpush1.msra.mxu0 0.0
  %2694 = vmatprep.subr.mxu0 0.0
  %2695 = vmatpush1.msra.mxu0 0.0
  %2696 = vmatprep.subr.mxu0 0.0
  %2697 = vmatpush1.msra.mxu0 0.0
  %2698 = vmatprep.subr.mxu0 0.0
  %2699 = vmatpush1.msra.mxu0 0.0
  %2700 = vmatprep.subr.mxu0 0.0
  %2701 = vmatpush1.msra.mxu0 0.0
  %2702 = vmatprep.subr.mxu0 0.0
  %2703 = vmatpush1.msra.mxu0 0.0
  %2704 = vmatprep.subr.mxu0 0.0
  %2705 = vmatpush1.msra.mxu0 0.0
  %2706 = vmatprep.subr.mxu0 0.0
  %2707 = vmatpush1.msra.mxu0 0.0
  %2708 = vmatprep.subr.mxu0 0.0
  %2709 = vmatpush1.msra.mxu0 0.0
  %2710 = vmatprep.subr.mxu0 0.0
  %2711 = vmatpush1.msra.mxu0 0.0
  %2712 = vmatprep.subr.mxu0 0.0
  %2713 = vmatpush1.msra.mxu0 0.0
  %2714 = vmatprep.subr.mxu0 0.0
  %2715 = vmatpush1.msra.mxu0 0.0
  %2716 = vmatprep.subr.mxu0 0.0
  %2717 = vmatpush1.msra.mxu0 0.0
  %2718 = vmatprep.subr.mxu0 0.0
  %2719 = vmatpush1.msra.mxu0 0.0
  %2720 = vmatprep.subr.mxu0 0.0
  %2721 = vmatpush1.msra.mxu0 0.0
  %2722 = vmatprep.subr.mxu0 0.0
  %2723 = vmatpush1.msra.mxu0 0.0
  %2724 = vmatprep.subr.mxu0 0.0
  %2725 = vmatpush1.msra.mxu0 0.0
  %2726 = vmatprep.subr.mxu0 0.0
  %2727 = vmatpush1.msra.mxu0 0.0
  %2728 = vmatprep.subr.mxu0 0.0
  %2729 = vmatpush1.msra.mxu0 0.0
  %2730 = vmatprep.subr.mxu0 0.0
  %2731 = vmatpush1.msra.mxu0 0.0
  %2732 = vmatprep.subr.mxu0 0.0
  %2733 = vmatpush1.msra.mxu0 0.0
  %2734 = vmatprep.mubr.f32.mxu0 0.0
  %v2735 = vand.u32 %v2329, 4294901760
  %2736 = vmatmul.mubr.f32.gmra.mrb[0].mxu0 %v2735
  %v2737 = vpop.f32.mrb[0].mxu0
  %v2738 = vadd.f32 %v2655, %v2737
  %v2739 = vpop.f32.mrb[0].mxu0
  %2740 = vdwg.mxu0
  %2741 = vmatprep.subr.mxu0 0.0
  %v2742 = vand.u32 %v852, 4294901760
  %2743 = vmatpush1.msra.mxu0 %v2742
  %2744 = vmatprep.subr.mxu0 0.0
  %v2745 = vand.u32 %v853, 4294901760
  %2746 = vmatpush1.msra.mxu0 %v2745
  %2747 = vmatprep.subr.mxu0 0.0
  %v2748 = vand.u32 %v854, 4294901760
  %2749 = vmatpush1.msra.mxu0 %v2748
  %2750 = vmatprep.subr.mxu0 0.0
  %v2751 = vand.u32 %v855, 4294901760
  %2752 = vmatpush1.msra.mxu0 %v2751
  %2753 = vmatprep.subr.mxu0 0.0
  %2754 = vmatpush1.msra.mxu0 0.0
  %2755 = vmatprep.subr.mxu0 0.0
  %2756 = vmatpush1.msra.mxu0 0.0
  %2757 = vmatprep.subr.mxu0 0.0
  %2758 = vmatpush1.msra.mxu0 0.0
  %2759 = vmatprep.subr.mxu0 0.0
  %2760 = vmatpush1.msra.mxu0 0.0
  %2761 = vmatprep.subr.mxu0 0.0
  %2762 = vmatpush1.msra.mxu0 0.0
  %2763 = vmatprep.subr.mxu0 0.0
  %2764 = vmatpush1.msra.mxu0 0.0
  %2765 = vmatprep.subr.mxu0 0.0
  %2766 = vmatpush1.msra.mxu0 0.0
  %2767 = vmatprep.subr.mxu0 0.0
  %2768 = vmatpush1.msra.mxu0 0.0
  %2769 = vmatprep.subr.mxu0 0.0
  %2770 = vmatpush1.msra.mxu0 0.0
  %2771 = vmatprep.subr.mxu0 0.0
  %2772 = vmatpush1.msra.mxu0 0.0
  %2773 = vmatprep.subr.mxu0 0.0
  %2774 = vmatpush1.msra.mxu0 0.0
  %2775 = vmatprep.subr.mxu0 0.0
  %2776 = vmatpush1.msra.mxu0 0.0
  %2777 = vmatprep.subr.mxu0 0.0
  %2778 = vmatpush1.msra.mxu0 0.0
  %2779 = vmatprep.subr.mxu0 0.0
  %2780 = vmatpush1.msra.mxu0 0.0
  %2781 = vmatprep.subr.mxu0 0.0
  %2782 = vmatpush1.msra.mxu0 0.0
  %2783 = vmatprep.subr.mxu0 0.0
  %2784 = vmatpush1.msra.mxu0 0.0
  %2785 = vmatprep.subr.mxu0 0.0
  %2786 = vmatpush1.msra.mxu0 0.0
  %2787 = vmatprep.subr.mxu0 0.0
  %2788 = vmatpush1.msra.mxu0 0.0
  %2789 = vmatprep.subr.mxu0 0.0
  %2790 = vmatpush1.msra.mxu0 0.0
  %2791 = vmatprep.subr.mxu0 0.0
  %2792 = vmatpush1.msra.mxu0 0.0
  %2793 = vmatprep.subr.mxu0 0.0
  %2794 = vmatpush1.msra.mxu0 0.0
  %2795 = vmatprep.subr.mxu0 0.0
  %2796 = vmatpush1.msra.mxu0 0.0
  %2797 = vmatprep.subr.mxu0 0.0
  %2798 = vmatpush1.msra.mxu0 0.0
  %2799 = vmatprep.subr.mxu0 0.0
  %2800 = vmatpush1.msra.mxu0 0.0
  %2801 = vmatprep.subr.mxu0 0.0
  %2802 = vmatpush1.msra.mxu0 0.0
  %2803 = vmatprep.subr.mxu0 0.0
  %2804 = vmatpush1.msra.mxu0 0.0
  %2805 = vmatprep.subr.mxu0 0.0
  %2806 = vmatpush1.msra.mxu0 0.0
  %2807 = vmatprep.subr.mxu0 0.0
  %2808 = vmatpush1.msra.mxu0 0.0
  %2809 = vmatprep.mubr.f32.mxu0 0.0
  %v2810 = vand.u32 %v2329, 4294901760
  %2811 = vmatmul.mubr.f32.gmra.mrb[0].mxu0 %v2810
  %v2812 = vpop.f32.mrb[0].mxu0
  %v2813 = vadd.f32 %v2738, %v2812
  %v2814 = vpop.f32.mrb[0].mxu0
  %2815 = vdwg.mxu0
  %v2816 = vtanh.pop %v2813
  %2817 = vst.msk [vmem:[#allocation2 + $0x18] sm:$0xff] %vm857, %v2816
  %v2819 = vsel %vm857, %v2816, 0
  %2821 = vmatprep.subr.mxu0 0.0
  %v2822 = vand.u32 %v852, 4294901760
  %2823 = vmatpush1.msra.mxu0 %v2822
  %2824 = vmatprep.subr.mxu0 0.0
  %v2825 = vand.u32 %v853, 4294901760
  %2826 = vmatpush1.msra.mxu0 %v2825
  %2827 = vmatprep.subr.mxu0 0.0
  %v2828 = vand.u32 %v854, 4294901760
  %2829 = vmatpush1.msra.mxu0 %v2828
  %2830 = vmatprep.subr.mxu0 0.0
  %v2831 = vand.u32 %v855, 4294901760
  %2832 = vmatpush1.msra.mxu0 %v2831
  %2833 = vmatprep.subr.mxu0 0.0
  %2834 = vmatpush1.msra.mxu0 0.0
  %2835 = vmatprep.subr.mxu0 0.0
  %2836 = vmatpush1.msra.mxu0 0.0
  %2837 = vmatprep.subr.mxu0 0.0
  %2838 = vmatpush1.msra.mxu0 0.0
  %2839 = vmatprep.subr.mxu0 0.0
  %2840 = vmatpush1.msra.mxu0 0.0
  %2841 = vmatprep.subr.mxu0 0.0
  %2842 = vmatpush1.msra.mxu0 0.0
  %2843 = vmatprep.subr.mxu0 0.0
  %2844 = vmatpush1.msra.mxu0 0.0
  %2845 = vmatprep.subr.mxu0 0.0
  %2846 = vmatpush1.msra.mxu0 0.0
  %2847 = vmatprep.subr.mxu0 0.0
  %2848 = vmatpush1.msra.mxu0 0.0
  %2849 = vmatprep.subr.mxu0 0.0
  %2850 = vmatpush1.msra.mxu0 0.0
  %2851 = vmatprep.subr.mxu0 0.0
  %2852 = vmatpush1.msra.mxu0 0.0
  %2853 = vmatprep.subr.mxu0 0.0
  %2854 = vmatpush1.msra.mxu0 0.0
  %2855 = vmatprep.subr.mxu0 0.0
  %2856 = vmatpush1.msra.mxu0 0.0
  %2857 = vmatprep.subr.mxu0 0.0
  %2858 = vmatpush1.msra.mxu0 0.0
  %2859 = vmatprep.subr.mxu0 0.0
  %2860 = vmatpush1.msra.mxu0 0.0
  %2861 = vmatprep.subr.mxu0 0.0
  %2862 = vmatpush1.msra.mxu0 0.0
  %2863 = vmatprep.subr.mxu0 0.0
  %2864 = vmatpush1.msra.mxu0 0.0
  %2865 = vmatprep.subr.mxu0 0.0
  %2866 = vmatpush1.msra.mxu0 0.0
  %2867 = vmatprep.subr.mxu0 0.0
  %2868 = vmatpush1.msra.mxu0 0.0
  %2869 = vmatprep.subr.mxu0 0.0
  %2870 = vmatpush1.msra.mxu0 0.0
  %2871 = vmatprep.subr.mxu0 0.0
  %2872 = vmatpush1.msra.mxu0 0.0
  %2873 = vmatprep.subr.mxu0 0.0
  %2874 = vmatpush1.msra.mxu0 0.0
  %2875 = vmatprep.subr.mxu0 0.0
  %2876 = vmatpush1.msra.mxu0 0.0
  %2877 = vmatprep.subr.mxu0 0.0
  %2878 = vmatpush1.msra.mxu0 0.0
  %2879 = vmatprep.subr.mxu0 0.0
  %2880 = vmatpush1.msra.mxu0 0.0
  %2881 = vmatprep.subr.mxu0 0.0
  %2882 = vmatpush1.msra.mxu0 0.0
  %2883 = vmatprep.subr.mxu0 0.0
  %2884 = vmatpush1.msra.mxu0 0.0
  %2885 = vmatprep.subr.mxu0 0.0
  %2886 = vmatpush1.msra.mxu0 0.0
  %2887 = vmatprep.subr.mxu0 0.0
  %2888 = vmatpush1.msra.mxu0 0.0
  %2889 = vmatprep.mubr.f32.mxu0 0.0
  %v2890 = vand.u32 %v2819, 4294901760
  %v2891 = vsub.f32 %v2819, %v2890
  %v2892 = vand.u32 %v2891, 4294901760
  %v2893 = vsub.f32 %v2891, %v2892
  %v2894 = vand.u32 %v2893, 4294901760
  %2895 = vmatmul.mubr.f32.gmra.mrb[0].mxu0 %v2894
  %v2896 = vpop.f32.mrb[0].mxu0
  %v2897 = vadd.f32 %v831, %v2896
  %v2898 = vpop.f32.mrb[0].mxu0
  %2899 = vdwg.mxu0
  %2900 = vmatprep.subr.mxu0 0.0
  %v2901 = vand.u32 %v852, 4294901760
  %v2902 = vsub.f32 %v852, %v2901
  %v2903 = vand.u32 %v2902, 4294901760
  %v2904 = vsub.f32 %v2902, %v2903
  %v2905 = vand.u32 %v2904, 4294901760
  %2906 = vmatpush1.msra.mxu0 %v2905
  %2907 = vmatprep.subr.mxu0 0.0
  %v2908 = vand.u32 %v853, 4294901760
  %v2909 = vsub.f32 %v853, %v2908
  %v2910 = vand.u32 %v2909, 4294901760
  %v2911 = vsub.f32 %v2909, %v2910
  %v2912 = vand.u32 %v2911, 4294901760
  %2913 = vmatpush1.msra.mxu0 %v2912
  %2914 = vmatprep.subr.mxu0 0.0
  %v2915 = vand.u32 %v854, 4294901760
  %v2916 = vsub.f32 %v854, %v2915
  %v2917 = vand.u32 %v2916, 4294901760
  %v2918 = vsub.f32 %v2916, %v2917
  %v2919 = vand.u32 %v2918, 4294901760
  %2920 = vmatpush1.msra.mxu0 %v2919
  %2921 = vmatprep.subr.mxu0 0.0
  %v2922 = vand.u32 %v855, 4294901760
  %v2923 = vsub.f32 %v855, %v2922
  %v2924 = vand.u32 %v2923, 4294901760
  %v2925 = vsub.f32 %v2923, %v2924
  %v2926 = vand.u32 %v2925, 4294901760
  %2927 = vmatpush1.msra.mxu0 %v2926
  %2928 = vmatprep.subr.mxu0 0.0
  %2929 = vmatpush1.msra.mxu0 0.0
  %2930 = vmatprep.subr.mxu0 0.0
  %2931 = vmatpush1.msra.mxu0 0.0
  %2932 = vmatprep.subr.mxu0 0.0
  %2933 = vmatpush1.msra.mxu0 0.0
  %2934 = vmatprep.subr.mxu0 0.0
  %2935 = vmatpush1.msra.mxu0 0.0
  %2936 = vmatprep.subr.mxu0 0.0
  %2937 = vmatpush1.msra.mxu0 0.0
  %2938 = vmatprep.subr.mxu0 0.0
  %2939 = vmatpush1.msra.mxu0 0.0
  %2940 = vmatprep.subr.mxu0 0.0
  %2941 = vmatpush1.msra.mxu0 0.0
  %2942 = vmatprep.subr.mxu0 0.0
  %2943 = vmatpush1.msra.mxu0 0.0
  %2944 = vmatprep.subr.mxu0 0.0
  %2945 = vmatpush1.msra.mxu0 0.0
  %2946 = vmatprep.subr.mxu0 0.0
  %2947 = vmatpush1.msra.mxu0 0.0
  %2948 = vmatprep.subr.mxu0 0.0
  %2949 = vmatpush1.msra.mxu0 0.0
  %2950 = vmatprep.subr.mxu0 0.0
  %2951 = vmatpush1.msra.mxu0 0.0
  %2952 = vmatprep.subr.mxu0 0.0
  %2953 = vmatpush1.msra.mxu0 0.0
  %2954 = vmatprep.subr.mxu0 0.0
  %2955 = vmatpush1.msra.mxu0 0.0
  %2956 = vmatprep.subr.mxu0 0.0
  %2957 = vmatpush1.msra.mxu0 0.0
  %2958 = vmatprep.subr.mxu0 0.0
  %2959 = vmatpush1.msra.mxu0 0.0
  %2960 = vmatprep.subr.mxu0 0.0
  %2961 = vmatpush1.msra.mxu0 0.0
  %2962 = vmatprep.subr.mxu0 0.0
  %2963 = vmatpush1.msra.mxu0 0.0
  %2964 = vmatprep.subr.mxu0 0.0
  %2965 = vmatpush1.msra.mxu0 0.0
  %2966 = vmatprep.subr.mxu0 0.0
  %2967 = vmatpush1.msra.mxu0 0.0
  %2968 = vmatprep.subr.mxu0 0.0
  %2969 = vmatpush1.msra.mxu0 0.0
  %2970 = vmatprep.subr.mxu0 0.0
  %2971 = vmatpush1.msra.mxu0 0.0
  %2972 = vmatprep.subr.mxu0 0.0
  %2973 = vmatpush1.msra.mxu0 0.0
  %2974 = vmatprep.subr.mxu0 0.0
  %2975 = vmatpush1.msra.mxu0 0.0
  %2976 = vmatprep.subr.mxu0 0.0
  %2977 = vmatpush1.msra.mxu0 0.0
  %2978 = vmatprep.subr.mxu0 0.0
  %2979 = vmatpush1.msra.mxu0 0.0
  %2980 = vmatprep.subr.mxu0 0.0
  %2981 = vmatpush1.msra.mxu0 0.0
  %2982 = vmatprep.subr.mxu0 0.0
  %2983 = vmatpush1.msra.mxu0 0.0
  %2984 = vmatprep.mubr.f32.mxu0 0.0
  %v2985 = vand.u32 %v2819, 4294901760
  %2986 = vmatmul.mubr.f32.gmra.mrb[0].mxu0 %v2985
  %v2987 = vpop.f32.mrb[0].mxu0
  %v2988 = vadd.f32 %v2897, %v2987
  %v2989 = vpop.f32.mrb[0].mxu0
  %2990 = vdwg.mxu0
  %2991 = vmatprep.subr.mxu0 0.0
  %v2992 = vand.u32 %v852, 4294901760
  %v2993 = vsub.f32 %v852, %v2992
  %2994 = vmatpush1.msra.mxu0 %v2993
  %2995 = vmatprep.subr.mxu0 0.0
  %v2996 = vand.u32 %v853, 4294901760
  %v2997 = vsub.f32 %v853, %v2996
  %2998 = vmatpush1.msra.mxu0 %v2997
  %2999 = vmatprep.subr.mxu0 0.0
  %v3000 = vand.u32 %v854, 4294901760
  %v3001 = vsub.f32 %v854, %v3000
  %3002 = vmatpush1.msra.mxu0 %v3001
  %3003 = vmatprep.subr.mxu0 0.0
  %v3004 = vand.u32 %v855, 4294901760
  %v3005 = vsub.f32 %v855, %v3004
  %3006 = vmatpush1.msra.mxu0 %v3005
  %3007 = vmatprep.subr.mxu0 0.0
  %3008 = vmatpush1.msra.mxu0 0.0
  %3009 = vmatprep.subr.mxu0 0.0
  %3010 = vmatpush1.msra.mxu0 0.0
  %3011 = vmatprep.subr.mxu0 0.0
  %3012 = vmatpush1.msra.mxu0 0.0
  %3013 = vmatprep.subr.mxu0 0.0
  %3014 = vmatpush1.msra.mxu0 0.0
  %3015 = vmatprep.subr.mxu0 0.0
  %3016 = vmatpush1.msra.mxu0 0.0
  %3017 = vmatprep.subr.mxu0 0.0
  %3018 = vmatpush1.msra.mxu0 0.0
  %3019 = vmatprep.subr.mxu0 0.0
  %3020 = vmatpush1.msra.mxu0 0.0
  %3021 = vmatprep.subr.mxu0 0.0
  %3022 = vmatpush1.msra.mxu0 0.0
  %3023 = vmatprep.subr.mxu0 0.0
  %3024 = vmatpush1.msra.mxu0 0.0
  %3025 = vmatprep.subr.mxu0 0.0
  %3026 = vmatpush1.msra.mxu0 0.0
  %3027 = vmatprep.subr.mxu0 0.0
  %3028 = vmatpush1.msra.mxu0 0.0
  %3029 = vmatprep.subr.mxu0 0.0
  %3030 = vmatpush1.msra.mxu0 0.0
  %3031 = vmatprep.subr.mxu0 0.0
  %3032 = vmatpush1.msra.mxu0 0.0
  %3033 = vmatprep.subr.mxu0 0.0
  %3034 = vmatpush1.msra.mxu0 0.0
  %3035 = vmatprep.subr.mxu0 0.0
  %3036 = vmatpush1.msra.mxu0 0.0
  %3037 = vmatprep.subr.mxu0 0.0
  %3038 = vmatpush1.msra.mxu0 0.0
  %3039 = vmatprep.subr.mxu0 0.0
  %3040 = vmatpush1.msra.mxu0 0.0
  %3041 = vmatprep.subr.mxu0 0.0
  %3042 = vmatpush1.msra.mxu0 0.0
  %3043 = vmatprep.subr.mxu0 0.0
  %3044 = vmatpush1.msra.mxu0 0.0
  %3045 = vmatprep.subr.mxu0 0.0
  %3046 = vmatpush1.msra.mxu0 0.0
  %3047 = vmatprep.subr.mxu0 0.0
  %3048 = vmatpush1.msra.mxu0 0.0
  %3049 = vmatprep.subr.mxu0 0.0
  %3050 = vmatpush1.msra.mxu0 0.0
  %3051 = vmatprep.subr.mxu0 0.0
  %3052 = vmatpush1.msra.mxu0 0.0
  %3053 = vmatprep.subr.mxu0 0.0
  %3054 = vmatpush1.msra.mxu0 0.0
  %3055 = vmatprep.subr.mxu0 0.0
  %3056 = vmatpush1.msra.mxu0 0.0
  %3057 = vmatprep.subr.mxu0 0.0
  %3058 = vmatpush1.msra.mxu0 0.0
  %3059 = vmatprep.subr.mxu0 0.0
  %3060 = vmatpush1.msra.mxu0 0.0
  %3061 = vmatprep.subr.mxu0 0.0
  %3062 = vmatpush1.msra.mxu0 0.0
  %3063 = vmatprep.mubr.f32.mxu0 0.0
  %v3064 = vand.u32 %v2819, 4294901760
  %v3065 = vsub.f32 %v2819, %v3064
  %3066 = vmatmul.mubr.f32.gmra.mrb[0].mxu0 %v3065
  %v3067 = vpop.f32.mrb[0].mxu0
  %v3068 = vadd.f32 %v2988, %v3067
  %v3069 = vpop.f32.mrb[0].mxu0
  %3070 = vdwg.mxu0
  %3071 = vmatprep.subr.mxu0 0.0
  %v3072 = vand.u32 %v852, 4294901760
  %3073 = vmatpush1.msra.mxu0 %v3072
  %3074 = vmatprep.subr.mxu0 0.0
  %v3075 = vand.u32 %v853, 4294901760
  %3076 = vmatpush1.msra.mxu0 %v3075
  %3077 = vmatprep.subr.mxu0 0.0
  %v3078 = vand.u32 %v854, 4294901760
  %3079 = vmatpush1.msra.mxu0 %v3078
  %3080 = vmatprep.subr.mxu0 0.0
  %v3081 = vand.u32 %v855, 4294901760
  %3082 = vmatpush1.msra.mxu0 %v3081
  %3083 = vmatprep.subr.mxu0 0.0
  %3084 = vmatpush1.msra.mxu0 0.0
  %3085 = vmatprep.subr.mxu0 0.0
  %3086 = vmatpush1.msra.mxu0 0.0
  %3087 = vmatprep.subr.mxu0 0.0
  %3088 = vmatpush1.msra.mxu0 0.0
  %3089 = vmatprep.subr.mxu0 0.0
  %3090 = vmatpush1.msra.mxu0 0.0
  %3091 = vmatprep.subr.mxu0 0.0
  %3092 = vmatpush1.msra.mxu0 0.0
  %3093 = vmatprep.subr.mxu0 0.0
  %3094 = vmatpush1.msra.mxu0 0.0
  %3095 = vmatprep.subr.mxu0 0.0
  %3096 = vmatpush1.msra.mxu0 0.0
  %3097 = vmatprep.subr.mxu0 0.0
  %3098 = vmatpush1.msra.mxu0 0.0
  %3099 = vmatprep.subr.mxu0 0.0
  %3100 = vmatpush1.msra.mxu0 0.0
  %3101 = vmatprep.subr.mxu0 0.0
  %3102 = vmatpush1.msra.mxu0 0.0
  %3103 = vmatprep.subr.mxu0 0.0
  %3104 = vmatpush1.msra.mxu0 0.0
  %3105 = vmatprep.subr.mxu0 0.0
  %3106 = vmatpush1.msra.mxu0 0.0
  %3107 = vmatprep.subr.mxu0 0.0
  %3108 = vmatpush1.msra.mxu0 0.0
  %3109 = vmatprep.subr.mxu0 0.0
  %3110 = vmatpush1.msra.mxu0 0.0
  %3111 = vmatprep.subr.mxu0 0.0
  %3112 = vmatpush1.msra.mxu0 0.0
  %3113 = vmatprep.subr.mxu0 0.0
  %3114 = vmatpush1.msra.mxu0 0.0
  %3115 = vmatprep.subr.mxu0 0.0
  %3116 = vmatpush1.msra.mxu0 0.0
  %3117 = vmatprep.subr.mxu0 0.0
  %3118 = vmatpush1.msra.mxu0 0.0
  %3119 = vmatprep.subr.mxu0 0.0
  %3120 = vmatpush1.msra.mxu0 0.0
  %3121 = vmatprep.subr.mxu0 0.0
  %3122 = vmatpush1.msra.mxu0 0.0
  %3123 = vmatprep.subr.mxu0 0.0
  %3124 = vmatpush1.msra.mxu0 0.0
  %3125 = vmatprep.subr.mxu0 0.0
  %3126 = vmatpush1.msra.mxu0 0.0
  %3127 = vmatprep.subr.mxu0 0.0
  %3128 = vmatpush1.msra.mxu0 0.0
  %3129 = vmatprep.subr.mxu0 0.0
  %3130 = vmatpush1.msra.mxu0 0.0
  %3131 = vmatprep.subr.mxu0 0.0
  %3132 = vmatpush1.msra.mxu0 0.0
  %3133 = vmatprep.subr.mxu0 0.0
  %3134 = vmatpush1.msra.mxu0 0.0
  %3135 = vmatprep.subr.mxu0 0.0
  %3136 = vmatpush1.msra.mxu0 0.0
  %3137 = vmatprep.subr.mxu0 0.0
  %3138 = vmatpush1.msra.mxu0 0.0
  %3139 = vmatprep.mubr.f32.mxu0 0.0
  %v3140 = vand.u32 %v2819, 4294901760
  %v3141 = vsub.f32 %v2819, %v3140
  %v3142 = vand.u32 %v3141, 4294901760
  %3143 = vmatmul.mubr.f32.gmra.mrb[0].mxu0 %v3142
  %v3144 = vpop.f32.mrb[0].mxu0
  %v3145 = vadd.f32 %v3068, %v3144
  %v3146 = vpop.f32.mrb[0].mxu0
  %3147 = vdwg.mxu0
  %3148 = vmatprep.subr.mxu0 0.0
  %v3149 = vand.u32 %v852, 4294901760
  %v3150 = vsub.f32 %v852, %v3149
  %v3151 = vand.u32 %v3150, 4294901760
  %3152 = vmatpush1.msra.mxu0 %v3151
  %3153 = vmatprep.subr.mxu0 0.0
  %v3154 = vand.u32 %v853, 4294901760
  %v3155 = vsub.f32 %v853, %v3154
  %v3156 = vand.u32 %v3155, 4294901760
  %3157 = vmatpush1.msra.mxu0 %v3156
  %3158 = vmatprep.subr.mxu0 0.0
  %v3159 = vand.u32 %v854, 4294901760
  %v3160 = vsub.f32 %v854, %v3159
  %v3161 = vand.u32 %v3160, 4294901760
  %3162 = vmatpush1.msra.mxu0 %v3161
  %3163 = vmatprep.subr.mxu0 0.0
  %v3164 = vand.u32 %v855, 4294901760
  %v3165 = vsub.f32 %v855, %v3164
  %v3166 = vand.u32 %v3165, 4294901760
  %3167 = vmatpush1.msra.mxu0 %v3166
  %3168 = vmatprep.subr.mxu0 0.0
  %3169 = vmatpush1.msra.mxu0 0.0
  %3170 = vmatprep.subr.mxu0 0.0
  %3171 = vmatpush1.msra.mxu0 0.0
  %3172 = vmatprep.subr.mxu0 0.0
  %3173 = vmatpush1.msra.mxu0 0.0
  %3174 = vmatprep.subr.mxu0 0.0
  %3175 = vmatpush1.msra.mxu0 0.0
  %3176 = vmatprep.subr.mxu0 0.0
  %3177 = vmatpush1.msra.mxu0 0.0
  %3178 = vmatprep.subr.mxu0 0.0
  %3179 = vmatpush1.msra.mxu0 0.0
  %3180 = vmatprep.subr.mxu0 0.0
  %3181 = vmatpush1.msra.mxu0 0.0
  %3182 = vmatprep.subr.mxu0 0.0
  %3183 = vmatpush1.msra.mxu0 0.0
  %3184 = vmatprep.subr.mxu0 0.0
  %3185 = vmatpush1.msra.mxu0 0.0
  %3186 = vmatprep.subr.mxu0 0.0
  %3187 = vmatpush1.msra.mxu0 0.0
  %3188 = vmatprep.subr.mxu0 0.0
  %3189 = vmatpush1.msra.mxu0 0.0
  %3190 = vmatprep.subr.mxu0 0.0
  %3191 = vmatpush1.msra.mxu0 0.0
  %3192 = vmatprep.subr.mxu0 0.0
  %3193 = vmatpush1.msra.mxu0 0.0
  %3194 = vmatprep.subr.mxu0 0.0
  %3195 = vmatpush1.msra.mxu0 0.0
  %3196 = vmatprep.subr.mxu0 0.0
  %3197 = vmatpush1.msra.mxu0 0.0
  %3198 = vmatprep.subr.mxu0 0.0
  %3199 = vmatpush1.msra.mxu0 0.0
  %3200 = vmatprep.subr.mxu0 0.0
  %3201 = vmatpush1.msra.mxu0 0.0
  %3202 = vmatprep.subr.mxu0 0.0
  %3203 = vmatpush1.msra.mxu0 0.0
  %3204 = vmatprep.subr.mxu0 0.0
  %3205 = vmatpush1.msra.mxu0 0.0
  %3206 = vmatprep.subr.mxu0 0.0
  %3207 = vmatpush1.msra.mxu0 0.0
  %3208 = vmatprep.subr.mxu0 0.0
  %3209 = vmatpush1.msra.mxu0 0.0
  %3210 = vmatprep.subr.mxu0 0.0
  %3211 = vmatpush1.msra.mxu0 0.0
  %3212 = vmatprep.subr.mxu0 0.0
  %3213 = vmatpush1.msra.mxu0 0.0
  %3214 = vmatprep.subr.mxu0 0.0
  %3215 = vmatpush1.msra.mxu0 0.0
  %3216 = vmatprep.subr.mxu0 0.0
  %3217 = vmatpush1.msra.mxu0 0.0
  %3218 = vmatprep.subr.mxu0 0.0
  %3219 = vmatpush1.msra.mxu0 0.0
  %3220 = vmatprep.subr.mxu0 0.0
  %3221 = vmatpush1.msra.mxu0 0.0
  %3222 = vmatprep.subr.mxu0 0.0
  %3223 = vmatpush1.msra.mxu0 0.0
  %3224 = vmatprep.mubr.f32.mxu0 0.0
  %v3225 = vand.u32 %v2819, 4294901760
  %3226 = vmatmul.mubr.f32.gmra.mrb[0].mxu0 %v3225
  %v3227 = vpop.f32.mrb[0].mxu0
  %v3228 = vadd.f32 %v3145, %v3227
  %v3229 = vpop.f32.mrb[0].mxu0
  %3230 = vdwg.mxu0
  %3231 = vmatprep.subr.mxu0 0.0
  %v3232 = vand.u32 %v852, 4294901760
  %3233 = vmatpush1.msra.mxu0 %v3232
  %3234 = vmatprep.subr.mxu0 0.0
  %v3235 = vand.u32 %v853, 4294901760
  %3236 = vmatpush1.msra.mxu0 %v3235
  %3237 = vmatprep.subr.mxu0 0.0
  %v3238 = vand.u32 %v854, 4294901760
  %3239 = vmatpush1.msra.mxu0 %v3238
  %3240 = vmatprep.subr.mxu0 0.0
  %v3241 = vand.u32 %v855, 4294901760
  %3242 = vmatpush1.msra.mxu0 %v3241
  %3243 = vmatprep.subr.mxu0 0.0
  %3244 = vmatpush1.msra.mxu0 0.0
  %3245 = vmatprep.subr.mxu0 0.0
  %3246 = vmatpush1.msra.mxu0 0.0
  %3247 = vmatprep.subr.mxu0 0.0
  %3248 = vmatpush1.msra.mxu0 0.0
  %3249 = vmatprep.subr.mxu0 0.0
  %3250 = vmatpush1.msra.mxu0 0.0
  %3251 = vmatprep.subr.mxu0 0.0
  %3252 = vmatpush1.msra.mxu0 0.0
  %3253 = vmatprep.subr.mxu0 0.0
  %3254 = vmatpush1.msra.mxu0 0.0
  %3255 = vmatprep.subr.mxu0 0.0
  %3256 = vmatpush1.msra.mxu0 0.0
  %3257 = vmatprep.subr.mxu0 0.0
  %3258 = vmatpush1.msra.mxu0 0.0
  %3259 = vmatprep.subr.mxu0 0.0
  %3260 = vmatpush1.msra.mxu0 0.0
  %3261 = vmatprep.subr.mxu0 0.0
  %3262 = vmatpush1.msra.mxu0 0.0
  %3263 = vmatprep.subr.mxu0 0.0
  %3264 = vmatpush1.msra.mxu0 0.0
  %3265 = vmatprep.subr.mxu0 0.0
  %3266 = vmatpush1.msra.mxu0 0.0
  %3267 = vmatprep.subr.mxu0 0.0
  %3268 = vmatpush1.msra.mxu0 0.0
  %3269 = vmatprep.subr.mxu0 0.0
  %3270 = vmatpush1.msra.mxu0 0.0
  %3271 = vmatprep.subr.mxu0 0.0
  %3272 = vmatpush1.msra.mxu0 0.0
  %3273 = vmatprep.subr.mxu0 0.0
  %3274 = vmatpush1.msra.mxu0 0.0
  %3275 = vmatprep.subr.mxu0 0.0
  %3276 = vmatpush1.msra.mxu0 0.0
  %3277 = vmatprep.subr.mxu0 0.0
  %3278 = vmatpush1.msra.mxu0 0.0
  %3279 = vmatprep.subr.mxu0 0.0
  %3280 = vmatpush1.msra.mxu0 0.0
  %3281 = vmatprep.subr.mxu0 0.0
  %3282 = vmatpush1.msra.mxu0 0.0
  %3283 = vmatprep.subr.mxu0 0.0
  %3284 = vmatpush1.msra.mxu0 0.0
  %3285 = vmatprep.subr.mxu0 0.0
  %3286 = vmatpush1.msra.mxu0 0.0
  %3287 = vmatprep.subr.mxu0 0.0
  %3288 = vmatpush1.msra.mxu0 0.0
  %3289 = vmatprep.subr.mxu0 0.0
  %3290 = vmatpush1.msra.mxu0 0.0
  %3291 = vmatprep.subr.mxu0 0.0
  %3292 = vmatpush1.msra.mxu0 0.0
  %3293 = vmatprep.subr.mxu0 0.0
  %3294 = vmatpush1.msra.mxu0 0.0
  %3295 = vmatprep.subr.mxu0 0.0
  %3296 = vmatpush1.msra.mxu0 0.0
  %3297 = vmatprep.subr.mxu0 0.0
  %3298 = vmatpush1.msra.mxu0 0.0
  %3299 = vmatprep.mubr.f32.mxu0 0.0
  %v3300 = vand.u32 %v2819, 4294901760
  %3301 = vmatmul.mubr.f32.gmra.mrb[0].mxu0 %v3300
  %v3302 = vpop.f32.mrb[0].mxu0
  %v3303 = vadd.f32 %v3228, %v3302
  %v3304 = vpop.f32.mrb[0].mxu0
  %3305 = vdwg.mxu0
  %v3306 = vtanh.pop %v3303
  %3307 = vst.msk [vmem:[#allocation2 + $0x20] sm:$0xff] %vm857, %v3306
  %v3309 = vsel %vm857, %v3306, 0
  %3311 = vmatprep.subr.mxu0 0.0
  %v3312 = vand.u32 %v852, 4294901760
  %3313 = vmatpush1.msra.mxu0 %v3312
  %3314 = vmatprep.subr.mxu0 0.0
  %v3315 = vand.u32 %v853, 4294901760
  %3316 = vmatpush1.msra.mxu0 %v3315
  %3317 = vmatprep.subr.mxu0 0.0
  %v3318 = vand.u32 %v854, 4294901760
  %3319 = vmatpush1.msra.mxu0 %v3318
  %3320 = vmatprep.subr.mxu0 0.0
  %v3321 = vand.u32 %v855, 4294901760
  %3322 = vmatpush1.msra.mxu0 %v3321
  %3323 = vmatprep.subr.mxu0 0.0
  %3324 = vmatpush1.msra.mxu0 0.0
  %3325 = vmatprep.subr.mxu0 0.0
  %3326 = vmatpush1.msra.mxu0 0.0
  %3327 = vmatprep.subr.mxu0 0.0
  %3328 = vmatpush1.msra.mxu0 0.0
  %3329 = vmatprep.subr.mxu0 0.0
  %3330 = vmatpush1.msra.mxu0 0.0
  %3331 = vmatprep.subr.mxu0 0.0
  %3332 = vmatpush1.msra.mxu0 0.0
  %3333 = vmatprep.subr.mxu0 0.0
  %3334 = vmatpush1.msra.mxu0 0.0
  %3335 = vmatprep.subr.mxu0 0.0
  %3336 = vmatpush1.msra.mxu0 0.0
  %3337 = vmatprep.subr.mxu0 0.0
  %3338 = vmatpush1.msra.mxu0 0.0
  %3339 = vmatprep.subr.mxu0 0.0
  %3340 = vmatpush1.msra.mxu0 0.0
  %3341 = vmatprep.subr.mxu0 0.0
  %3342 = vmatpush1.msra.mxu0 0.0
  %3343 = vmatprep.subr.mxu0 0.0
  %3344 = vmatpush1.msra.mxu0 0.0
  %3345 = vmatprep.subr.mxu0 0.0
  %3346 = vmatpush1.msra.mxu0 0.0
  %3347 = vmatprep.subr.mxu0 0.0
  %3348 = vmatpush1.msra.mxu0 0.0
  %3349 = vmatprep.subr.mxu0 0.0
  %3350 = vmatpush1.msra.mxu0 0.0
  %3351 = vmatprep.subr.mxu0 0.0
  %3352 = vmatpush1.msra.mxu0 0.0
  %3353 = vmatprep.subr.mxu0 0.0
  %3354 = vmatpush1.msra.mxu0 0.0
  %3355 = vmatprep.subr.mxu0 0.0
  %3356 = vmatpush1.msra.mxu0 0.0
  %3357 = vmatprep.subr.mxu0 0.0
  %3358 = vmatpush1.msra.mxu0 0.0
  %3359 = vmatprep.subr.mxu0 0.0
  %3360 = vmatpush1.msra.mxu0 0.0
  %3361 = vmatprep.subr.mxu0 0.0
  %3362 = vmatpush1.msra.mxu0 0.0
  %3363 = vmatprep.subr.mxu0 0.0
  %3364 = vmatpush1.msra.mxu0 0.0
  %3365 = vmatprep.subr.mxu0 0.0
  %3366 = vmatpush1.msra.mxu0 0.0
  %3367 = vmatprep.subr.mxu0 0.0
  %3368 = vmatpush1.msra.mxu0 0.0
  %3369 = vmatprep.subr.mxu0 0.0
  %3370 = vmatpush1.msra.mxu0 0.0
  %3371 = vmatprep.subr.mxu0 0.0
  %3372 = vmatpush1.msra.mxu0 0.0
  %3373 = vmatprep.subr.mxu0 0.0
  %3374 = vmatpush1.msra.mxu0 0.0
  %3375 = vmatprep.subr.mxu0 0.0
  %3376 = vmatpush1.msra.mxu0 0.0
  %3377 = vmatprep.subr.mxu0 0.0
  %3378 = vmatpush1.msra.mxu0 0.0
  %3379 = vmatprep.mubr.f32.mxu0 0.0
  %v3380 = vand.u32 %v3309, 4294901760
  %v3381 = vsub.f32 %v3309, %v3380
  %v3382 = vand.u32 %v3381, 4294901760
  %v3383 = vsub.f32 %v3381, %v3382
  %v3384 = vand.u32 %v3383, 4294901760
  %3385 = vmatmul.mubr.f32.gmra.mrb[0].mxu0 %v3384
  %v3386 = vpop.f32.mrb[0].mxu0
  %v3387 = vadd.f32 %v837, %v3386
  %v3388 = vpop.f32.mrb[0].mxu0
  %3389 = vdwg.mxu0
  %3390 = vmatprep.subr.mxu0 0.0
  %v3391 = vand.u32 %v852, 4294901760
  %v3392 = vsub.f32 %v852, %v3391
  %v3393 = vand.u32 %v3392, 4294901760
  %v3394 = vsub.f32 %v3392, %v3393
  %v3395 = vand.u32 %v3394, 4294901760
  %3396 = vmatpush1.msra.mxu0 %v3395
  %3397 = vmatprep.subr.mxu0 0.0
  %v3398 = vand.u32 %v853, 4294901760
  %v3399 = vsub.f32 %v853, %v3398
  %v3400 = vand.u32 %v3399, 4294901760
  %v3401 = vsub.f32 %v3399, %v3400
  %v3402 = vand.u32 %v3401, 4294901760
  %3403 = vmatpush1.msra.mxu0 %v3402
  %3404 = vmatprep.subr.mxu0 0.0
  %v3405 = vand.u32 %v854, 4294901760
  %v3406 = vsub.f32 %v854, %v3405
  %v3407 = vand.u32 %v3406, 4294901760
  %v3408 = vsub.f32 %v3406, %v3407
  %v3409 = vand.u32 %v3408, 4294901760
  %3410 = vmatpush1.msra.mxu0 %v3409
  %3411 = vmatprep.subr.mxu0 0.0
  %v3412 = vand.u32 %v855, 4294901760
  %v3413 = vsub.f32 %v855, %v3412
  %v3414 = vand.u32 %v3413, 4294901760
  %v3415 = vsub.f32 %v3413, %v3414
  %v3416 = vand.u32 %v3415, 4294901760
  %3417 = vmatpush1.msra.mxu0 %v3416
  %3418 = vmatprep.subr.mxu0 0.0
  %3419 = vmatpush1.msra.mxu0 0.0
  %3420 = vmatprep.subr.mxu0 0.0
  %3421 = vmatpush1.msra.mxu0 0.0
  %3422 = vmatprep.subr.mxu0 0.0
  %3423 = vmatpush1.msra.mxu0 0.0
  %3424 = vmatprep.subr.mxu0 0.0
  %3425 = vmatpush1.msra.mxu0 0.0
  %3426 = vmatprep.subr.mxu0 0.0
  %3427 = vmatpush1.msra.mxu0 0.0
  %3428 = vmatprep.subr.mxu0 0.0
  %3429 = vmatpush1.msra.mxu0 0.0
  %3430 = vmatprep.subr.mxu0 0.0
  %3431 = vmatpush1.msra.mxu0 0.0
  %3432 = vmatprep.subr.mxu0 0.0
  %3433 = vmatpush1.msra.mxu0 0.0
  %3434 = vmatprep.subr.mxu0 0.0
  %3435 = vmatpush1.msra.mxu0 0.0
  %3436 = vmatprep.subr.mxu0 0.0
  %3437 = vmatpush1.msra.mxu0 0.0
  %3438 = vmatprep.subr.mxu0 0.0
  %3439 = vmatpush1.msra.mxu0 0.0
  %3440 = vmatprep.subr.mxu0 0.0
  %3441 = vmatpush1.msra.mxu0 0.0
  %3442 = vmatprep.subr.mxu0 0.0
  %3443 = vmatpush1.msra.mxu0 0.0
  %3444 = vmatprep.subr.mxu0 0.0
  %3445 = vmatpush1.msra.mxu0 0.0
  %3446 = vmatprep.subr.mxu0 0.0
  %3447 = vmatpush1.msra.mxu0 0.0
  %3448 = vmatprep.subr.mxu0 0.0
  %3449 = vmatpush1.msra.mxu0 0.0
  %3450 = vmatprep.subr.mxu0 0.0
  %3451 = vmatpush1.msra.mxu0 0.0
  %3452 = vmatprep.subr.mxu0 0.0
  %3453 = vmatpush1.msra.mxu0 0.0
  %3454 = vmatprep.subr.mxu0 0.0
  %3455 = vmatpush1.msra.mxu0 0.0
  %3456 = vmatprep.subr.mxu0 0.0
  %3457 = vmatpush1.msra.mxu0 0.0
  %3458 = vmatprep.subr.mxu0 0.0
  %3459 = vmatpush1.msra.mxu0 0.0
  %3460 = vmatprep.subr.mxu0 0.0
  %3461 = vmatpush1.msra.mxu0 0.0
  %3462 = vmatprep.subr.mxu0 0.0
  %3463 = vmatpush1.msra.mxu0 0.0
  %3464 = vmatprep.subr.mxu0 0.0
  %3465 = vmatpush1.msra.mxu0 0.0
  %3466 = vmatprep.subr.mxu0 0.0
  %3467 = vmatpush1.msra.mxu0 0.0
  %3468 = vmatprep.subr.mxu0 0.0
  %3469 = vmatpush1.msra.mxu0 0.0
  %3470 = vmatprep.subr.mxu0 0.0
  %3471 = vmatpush1.msra.mxu0 0.0
  %3472 = vmatprep.subr.mxu0 0.0
  %3473 = vmatpush1.msra.mxu0 0.0
  %3474 = vmatprep.mubr.f32.mxu0 0.0
  %v3475 = vand.u32 %v3309, 4294901760
  %3476 = vmatmul.mubr.f32.gmra.mrb[0].mxu0 %v3475
  %v3477 = vpop.f32.mrb[0].mxu0
  %v3478 = vadd.f32 %v3387, %v3477
  %v3479 = vpop.f32.mrb[0].mxu0
  %3480 = vdwg.mxu0
  %3481 = vmatprep.subr.mxu0 0.0
  %v3482 = vand.u32 %v852, 4294901760
  %v3483 = vsub.f32 %v852, %v3482
  %3484 = vmatpush1.msra.mxu0 %v3483
  %3485 = vmatprep.subr.mxu0 0.0
  %v3486 = vand.u32 %v853, 4294901760
  %v3487 = vsub.f32 %v853, %v3486
  %3488 = vmatpush1.msra.mxu0 %v3487
  %3489 = vmatprep.subr.mxu0 0.0
  %v3490 = vand.u32 %v854, 4294901760
  %v3491 = vsub.f32 %v854, %v3490
  %3492 = vmatpush1.msra.mxu0 %v3491
  %3493 = vmatprep.subr.mxu0 0.0
  %v3494 = vand.u32 %v855, 4294901760
  %v3495 = vsub.f32 %v855, %v3494
  %3496 = vmatpush1.msra.mxu0 %v3495
  %3497 = vmatprep.subr.mxu0 0.0
  %3498 = vmatpush1.msra.mxu0 0.0
  %3499 = vmatprep.subr.mxu0 0.0
  %3500 = vmatpush1.msra.mxu0 0.0
  %3501 = vmatprep.subr.mxu0 0.0
  %3502 = vmatpush1.msra.mxu0 0.0
  %3503 = vmatprep.subr.mxu0 0.0
  %3504 = vmatpush1.msra.mxu0 0.0
  %3505 = vmatprep.subr.mxu0 0.0
  %3506 = vmatpush1.msra.mxu0 0.0
  %3507 = vmatprep.subr.mxu0 0.0
  %3508 = vmatpush1.msra.mxu0 0.0
  %3509 = vmatprep.subr.mxu0 0.0
  %3510 = vmatpush1.msra.mxu0 0.0
  %3511 = vmatprep.subr.mxu0 0.0
  %3512 = vmatpush1.msra.mxu0 0.0
  %3513 = vmatprep.subr.mxu0 0.0
  %3514 = vmatpush1.msra.mxu0 0.0
  %3515 = vmatprep.subr.mxu0 0.0
  %3516 = vmatpush1.msra.mxu0 0.0
  %3517 = vmatprep.subr.mxu0 0.0
  %3518 = vmatpush1.msra.mxu0 0.0
  %3519 = vmatprep.subr.mxu0 0.0
  %3520 = vmatpush1.msra.mxu0 0.0
  %3521 = vmatprep.subr.mxu0 0.0
  %3522 = vmatpush1.msra.mxu0 0.0
  %3523 = vmatprep.subr.mxu0 0.0
  %3524 = vmatpush1.msra.mxu0 0.0
  %3525 = vmatprep.subr.mxu0 0.0
  %3526 = vmatpush1.msra.mxu0 0.0
  %3527 = vmatprep.subr.mxu0 0.0
  %3528 = vmatpush1.msra.mxu0 0.0
  %3529 = vmatprep.subr.mxu0 0.0
  %3530 = vmatpush1.msra.mxu0 0.0
  %3531 = vmatprep.subr.mxu0 0.0
  %3532 = vmatpush1.msra.mxu0 0.0
  %3533 = vmatprep.subr.mxu0 0.0
  %3534 = vmatpush1.msra.mxu0 0.0
  %3535 = vmatprep.subr.mxu0 0.0
  %3536 = vmatpush1.msra.mxu0 0.0
  %3537 = vmatprep.subr.mxu0 0.0
  %3538 = vmatpush1.msra.mxu0 0.0
  %3539 = vmatprep.subr.mxu0 0.0
  %3540 = vmatpush1.msra.mxu0 0.0
  %3541 = vmatprep.subr.mxu0 0.0
  %3542 = vmatpush1.msra.mxu0 0.0
  %3543 = vmatprep.subr.mxu0 0.0
  %3544 = vmatpush1.msra.mxu0 0.0
  %3545 = vmatprep.subr.mxu0 0.0
  %3546 = vmatpush1.msra.mxu0 0.0
  %3547 = vmatprep.subr.mxu0 0.0
  %3548 = vmatpush1.msra.mxu0 0.0
  %3549 = vmatprep.subr.mxu0 0.0
  %3550 = vmatpush1.msra.mxu0 0.0
  %3551 = vmatprep.subr.mxu0 0.0
  %3552 = vmatpush1.msra.mxu0 0.0
  %3553 = vmatprep.mubr.f32.mxu0 0.0
  %v3554 = vand.u32 %v3309, 4294901760
  %v3555 = vsub.f32 %v3309, %v3554
  %3556 = vmatmul.mubr.f32.gmra.mrb[0].mxu0 %v3555
  %v3557 = vpop.f32.mrb[0].mxu0
  %v3558 = vadd.f32 %v3478, %v3557
  %v3559 = vpop.f32.mrb[0].mxu0
  %3560 = vdwg.mxu0
  %3561 = vmatprep.subr.mxu0 0.0
  %v3562 = vand.u32 %v852, 4294901760
  %3563 = vmatpush1.msra.mxu0 %v3562
  %3564 = vmatprep.subr.mxu0 0.0
  %v3565 = vand.u32 %v853, 4294901760
  %3566 = vmatpush1.msra.mxu0 %v3565
  %3567 = vmatprep.subr.mxu0 0.0
  %v3568 = vand.u32 %v854, 4294901760
  %3569 = vmatpush1.msra.mxu0 %v3568
  %3570 = vmatprep.subr.mxu0 0.0
  %v3571 = vand.u32 %v855, 4294901760
  %3572 = vmatpush1.msra.mxu0 %v3571
  %3573 = vmatprep.subr.mxu0 0.0
  %3574 = vmatpush1.msra.mxu0 0.0
  %3575 = vmatprep.subr.mxu0 0.0
  %3576 = vmatpush1.msra.mxu0 0.0
  %3577 = vmatprep.subr.mxu0 0.0
  %3578 = vmatpush1.msra.mxu0 0.0
  %3579 = vmatprep.subr.mxu0 0.0
  %3580 = vmatpush1.msra.mxu0 0.0
  %3581 = vmatprep.subr.mxu0 0.0
  %3582 = vmatpush1.msra.mxu0 0.0
  %3583 = vmatprep.subr.mxu0 0.0
  %3584 = vmatpush1.msra.mxu0 0.0
  %3585 = vmatprep.subr.mxu0 0.0
  %3586 = vmatpush1.msra.mxu0 0.0
  %3587 = vmatprep.subr.mxu0 0.0
  %3588 = vmatpush1.msra.mxu0 0.0
  %3589 = vmatprep.subr.mxu0 0.0
  %3590 = vmatpush1.msra.mxu0 0.0
  %3591 = vmatprep.subr.mxu0 0.0
  %3592 = vmatpush1.msra.mxu0 0.0
  %3593 = vmatprep.subr.mxu0 0.0
  %3594 = vmatpush1.msra.mxu0 0.0
  %3595 = vmatprep.subr.mxu0 0.0
  %3596 = vmatpush1.msra.mxu0 0.0
  %3597 = vmatprep.subr.mxu0 0.0
  %3598 = vmatpush1.msra.mxu0 0.0
  %3599 = vmatprep.subr.mxu0 0.0
  %3600 = vmatpush1.msra.mxu0 0.0
  %3601 = vmatprep.subr.mxu0 0.0
  %3602 = vmatpush1.msra.mxu0 0.0
  %3603 = vmatprep.subr.mxu0 0.0
  %3604 = vmatpush1.msra.mxu0 0.0
  %3605 = vmatprep.subr.mxu0 0.0
  %3606 = vmatpush1.msra.mxu0 0.0
  %3607 = vmatprep.subr.mxu0 0.0
  %3608 = vmatpush1.msra.mxu0 0.0
  %3609 = vmatprep.subr.mxu0 0.0
  %3610 = vmatpush1.msra.mxu0 0.0
  %3611 = vmatprep.subr.mxu0 0.0
  %3612 = vmatpush1.msra.mxu0 0.0
  %3613 = vmatprep.subr.mxu0 0.0
  %3614 = vmatpush1.msra.mxu0 0.0
  %3615 = vmatprep.subr.mxu0 0.0
  %3616 = vmatpush1.msra.mxu0 0.0
  %3617 = vmatprep.subr.mxu0 0.0
  %3618 = vmatpush1.msra.mxu0 0.0
  %3619 = vmatprep.subr.mxu0 0.0
  %3620 = vmatpush1.msra.mxu0 0.0
  %3621 = vmatprep.subr.mxu0 0.0
  %3622 = vmatpush1.msra.mxu0 0.0
  %3623 = vmatprep.subr.mxu0 0.0
  %3624 = vmatpush1.msra.mxu0 0.0
  %3625 = vmatprep.subr.mxu0 0.0
  %3626 = vmatpush1.msra.mxu0 0.0
  %3627 = vmatprep.subr.mxu0 0.0
  %3628 = vmatpush1.msra.mxu0 0.0
  %3629 = vmatprep.mubr.f32.mxu0 0.0
  %v3630 = vand.u32 %v3309, 4294901760
  %v3631 = vsub.f32 %v3309, %v3630
  %v3632 = vand.u32 %v3631, 4294901760
  %3633 = vmatmul.mubr.f32.gmra.mrb[0].mxu0 %v3632
  %v3634 = vpop.f32.mrb[0].mxu0
  %v3635 = vadd.f32 %v3558, %v3634
  %v3636 = vpop.f32.mrb[0].mxu0
  %3637 = vdwg.mxu0
  %3638 = vmatprep.subr.mxu0 0.0
  %v3639 = vand.u32 %v852, 4294901760
  %v3640 = vsub.f32 %v852, %v3639
  %v3641 = vand.u32 %v3640, 4294901760
  %3642 = vmatpush1.msra.mxu0 %v3641
  %3643 = vmatprep.subr.mxu0 0.0
  %v3644 = vand.u32 %v853, 4294901760
  %v3645 = vsub.f32 %v853, %v3644
  %v3646 = vand.u32 %v3645, 4294901760
  %3647 = vmatpush1.msra.mxu0 %v3646
  %3648 = vmatprep.subr.mxu0 0.0
  %v3649 = vand.u32 %v854, 4294901760
  %v3650 = vsub.f32 %v854, %v3649
  %v3651 = vand.u32 %v3650, 4294901760
  %3652 = vmatpush1.msra.mxu0 %v3651
  %3653 = vmatprep.subr.mxu0 0.0
  %v3654 = vand.u32 %v855, 4294901760
  %v3655 = vsub.f32 %v855, %v3654
  %v3656 = vand.u32 %v3655, 4294901760
  %3657 = vmatpush1.msra.mxu0 %v3656
  %3658 = vmatprep.subr.mxu0 0.0
  %3659 = vmatpush1.msra.mxu0 0.0
  %3660 = vmatprep.subr.mxu0 0.0
  %3661 = vmatpush1.msra.mxu0 0.0
  %3662 = vmatprep.subr.mxu0 0.0
  %3663 = vmatpush1.msra.mxu0 0.0
  %3664 = vmatprep.subr.mxu0 0.0
  %3665 = vmatpush1.msra.mxu0 0.0
  %3666 = vmatprep.subr.mxu0 0.0
  %3667 = vmatpush1.msra.mxu0 0.0
  %3668 = vmatprep.subr.mxu0 0.0
  %3669 = vmatpush1.msra.mxu0 0.0
  %3670 = vmatprep.subr.mxu0 0.0
  %3671 = vmatpush1.msra.mxu0 0.0
  %3672 = vmatprep.subr.mxu0 0.0
  %3673 = vmatpush1.msra.mxu0 0.0
  %3674 = vmatprep.subr.mxu0 0.0
  %3675 = vmatpush1.msra.mxu0 0.0
  %3676 = vmatprep.subr.mxu0 0.0
  %3677 = vmatpush1.msra.mxu0 0.0
  %3678 = vmatprep.subr.mxu0 0.0
  %3679 = vmatpush1.msra.mxu0 0.0
  %3680 = vmatprep.subr.mxu0 0.0
  %3681 = vmatpush1.msra.mxu0 0.0
  %3682 = vmatprep.subr.mxu0 0.0
  %3683 = vmatpush1.msra.mxu0 0.0
  %3684 = vmatprep.subr.mxu0 0.0
  %3685 = vmatpush1.msra.mxu0 0.0
  %3686 = vmatprep.subr.mxu0 0.0
  %3687 = vmatpush1.msra.mxu0 0.0
  %3688 = vmatprep.subr.mxu0 0.0
  %3689 = vmatpush1.msra.mxu0 0.0
  %3690 = vmatprep.subr.mxu0 0.0
  %3691 = vmatpush1.msra.mxu0 0.0
  %3692 = vmatprep.subr.mxu0 0.0
  %3693 = vmatpush1.msra.mxu0 0.0
  %3694 = vmatprep.subr.mxu0 0.0
  %3695 = vmatpush1.msra.mxu0 0.0
  %3696 = vmatprep.subr.mxu0 0.0
  %3697 = vmatpush1.msra.mxu0 0.0
  %3698 = vmatprep.subr.mxu0 0.0
  %3699 = vmatpush1.msra.mxu0 0.0
  %3700 = vmatprep.subr.mxu0 0.0
  %3701 = vmatpush1.msra.mxu0 0.0
  %3702 = vmatprep.subr.mxu0 0.0
  %3703 = vmatpush1.msra.mxu0 0.0
  %3704 = vmatprep.subr.mxu0 0.0
  %3705 = vmatpush1.msra.mxu0 0.0
  %3706 = vmatprep.subr.mxu0 0.0
  %3707 = vmatpush1.msra.mxu0 0.0
  %3708 = vmatprep.subr.mxu0 0.0
  %3709 = vmatpush1.msra.mxu0 0.0
  %3710 = vmatprep.subr.mxu0 0.0
  %3711 = vmatpush1.msra.mxu0 0.0
  %3712 = vmatprep.subr.mxu0 0.0
  %3713 = vmatpush1.msra.mxu0 0.0
  %3714 = vmatprep.mubr.f32.mxu0 0.0
  %v3715 = vand.u32 %v3309, 4294901760
  %3716 = vmatmul.mubr.f32.gmra.mrb[0].mxu0 %v3715
  %v3717 = vpop.f32.mrb[0].mxu0
  %v3718 = vadd.f32 %v3635, %v3717
  %v3719 = vpop.f32.mrb[0].mxu0
  %3720 = vdwg.mxu0
  %3721 = vmatprep.subr.mxu0 0.0
  %v3722 = vand.u32 %v852, 4294901760
  %3723 = vmatpush1.msra.mxu0 %v3722
  %3724 = vmatprep.subr.mxu0 0.0
  %v3725 = vand.u32 %v853, 4294901760
  %3726 = vmatpush1.msra.mxu0 %v3725
  %3727 = vmatprep.subr.mxu0 0.0
  %v3728 = vand.u32 %v854, 4294901760
  %3729 = vmatpush1.msra.mxu0 %v3728
  %3730 = vmatprep.subr.mxu0 0.0
  %v3731 = vand.u32 %v855, 4294901760
  %3732 = vmatpush1.msra.mxu0 %v3731
  %3733 = vmatprep.subr.mxu0 0.0
  %3734 = vmatpush1.msra.mxu0 0.0
  %3735 = vmatprep.subr.mxu0 0.0
  %3736 = vmatpush1.msra.mxu0 0.0
  %3737 = vmatprep.subr.mxu0 0.0
  %3738 = vmatpush1.msra.mxu0 0.0
  %3739 = vmatprep.subr.mxu0 0.0
  %3740 = vmatpush1.msra.mxu0 0.0
  %3741 = vmatprep.subr.mxu0 0.0
  %3742 = vmatpush1.msra.mxu0 0.0
  %3743 = vmatprep.subr.mxu0 0.0
  %3744 = vmatpush1.msra.mxu0 0.0
  %3745 = vmatprep.subr.mxu0 0.0
  %3746 = vmatpush1.msra.mxu0 0.0
  %3747 = vmatprep.subr.mxu0 0.0
  %3748 = vmatpush1.msra.mxu0 0.0
  %3749 = vmatprep.subr.mxu0 0.0
  %3750 = vmatpush1.msra.mxu0 0.0
  %3751 = vmatprep.subr.mxu0 0.0
  %3752 = vmatpush1.msra.mxu0 0.0
  %3753 = vmatprep.subr.mxu0 0.0
  %3754 = vmatpush1.msra.mxu0 0.0
  %3755 = vmatprep.subr.mxu0 0.0
  %3756 = vmatpush1.msra.mxu0 0.0
  %3757 = vmatprep.subr.mxu0 0.0
  %3758 = vmatpush1.msra.mxu0 0.0
  %3759 = vmatprep.subr.mxu0 0.0
  %3760 = vmatpush1.msra.mxu0 0.0
  %3761 = vmatprep.subr.mxu0 0.0
  %3762 = vmatpush1.msra.mxu0 0.0
  %3763 = vmatprep.subr.mxu0 0.0
  %3764 = vmatpush1.msra.mxu0 0.0
  %3765 = vmatprep.subr.mxu0 0.0
  %3766 = vmatpush1.msra.mxu0 0.0
  %3767 = vmatprep.subr.mxu0 0.0
  %3768 = vmatpush1.msra.mxu0 0.0
  %3769 = vmatprep.subr.mxu0 0.0
  %3770 = vmatpush1.msra.mxu0 0.0
  %3771 = vmatprep.subr.mxu0 0.0
  %3772 = vmatpush1.msra.mxu0 0.0
  %3773 = vmatprep.subr.mxu0 0.0
  %3774 = vmatpush1.msra.mxu0 0.0
  %3775 = vmatprep.subr.mxu0 0.0
  %3776 = vmatpush1.msra.mxu0 0.0
  %3777 = vmatprep.subr.mxu0 0.0
  %3778 = vmatpush1.msra.mxu0 0.0
  %3779 = vmatprep.subr.mxu0 0.0
  %3780 = vmatpush1.msra.mxu0 0.0
  %3781 = vmatprep.subr.mxu0 0.0
  %3782 = vmatpush1.msra.mxu0 0.0
  %3783 = vmatprep.subr.mxu0 0.0
  %3784 = vmatpush1.msra.mxu0 0.0
  %3785 = vmatprep.subr.mxu0 0.0
  %3786 = vmatpush1.msra.mxu0 0.0
  %3787 = vmatprep.subr.mxu0 0.0
  %3788 = vmatpush1.msra.mxu0 0.0
  %3789 = vmatprep.mubr.f32.mxu0 0.0
  %v3790 = vand.u32 %v3309, 4294901760
  %3791 = vmatmul.mubr.f32.gmra.mrb[0].mxu0 %v3790
  %v3792 = vpop.f32.mrb[0].mxu0
  %v3793 = vadd.f32 %v3718, %v3792
  %v3794 = vpop.f32.mrb[0].mxu0
  %3795 = vdwg.mxu0
  %v3796 = vtanh.pop %v3793
  %3797 = vst.msk [vmem:[#allocation2 + $0x28] sm:$0xff] %vm857, %v3796
  %v3799 = vsel %vm857, %v3796, 0
  %3801 = vmatprep.subr.mxu0 0.0
  %v3802 = vand.u32 %v852, 4294901760
  %3803 = vmatpush1.msra.mxu0 %v3802
  %3804 = vmatprep.subr.mxu0 0.0
  %v3805 = vand.u32 %v853, 4294901760
  %3806 = vmatpush1.msra.mxu0 %v3805
  %3807 = vmatprep.subr.mxu0 0.0
  %v3808 = vand.u32 %v854, 4294901760
  %3809 = vmatpush1.msra.mxu0 %v3808
  %3810 = vmatprep.subr.mxu0 0.0
  %v3811 = vand.u32 %v855, 4294901760
  %3812 = vmatpush1.msra.mxu0 %v3811
  %3813 = vmatprep.subr.mxu0 0.0
  %3814 = vmatpush1.msra.mxu0 0.0
  %3815 = vmatprep.subr.mxu0 0.0
  %3816 = vmatpush1.msra.mxu0 0.0
  %3817 = vmatprep.subr.mxu0 0.0
  %3818 = vmatpush1.msra.mxu0 0.0
  %3819 = vmatprep.subr.mxu0 0.0
  %3820 = vmatpush1.msra.mxu0 0.0
  %3821 = vmatprep.subr.mxu0 0.0
  %3822 = vmatpush1.msra.mxu0 0.0
  %3823 = vmatprep.subr.mxu0 0.0
  %3824 = vmatpush1.msra.mxu0 0.0
  %3825 = vmatprep.subr.mxu0 0.0
  %3826 = vmatpush1.msra.mxu0 0.0
  %3827 = vmatprep.subr.mxu0 0.0
  %3828 = vmatpush1.msra.mxu0 0.0
  %3829 = vmatprep.subr.mxu0 0.0
  %3830 = vmatpush1.msra.mxu0 0.0
  %3831 = vmatprep.subr.mxu0 0.0
  %3832 = vmatpush1.msra.mxu0 0.0
  %3833 = vmatprep.subr.mxu0 0.0
  %3834 = vmatpush1.msra.mxu0 0.0
  %3835 = vmatprep.subr.mxu0 0.0
  %3836 = vmatpush1.msra.mxu0 0.0
  %3837 = vmatprep.subr.mxu0 0.0
  %3838 = vmatpush1.msra.mxu0 0.0
  %3839 = vmatprep.subr.mxu0 0.0
  %3840 = vmatpush1.msra.mxu0 0.0
  %3841 = vmatprep.subr.mxu0 0.0
  %3842 = vmatpush1.msra.mxu0 0.0
  %3843 = vmatprep.subr.mxu0 0.0
  %3844 = vmatpush1.msra.mxu0 0.0
  %3845 = vmatprep.subr.mxu0 0.0
  %3846 = vmatpush1.msra.mxu0 0.0
  %3847 = vmatprep.subr.mxu0 0.0
  %3848 = vmatpush1.msra.mxu0 0.0
  %3849 = vmatprep.subr.mxu0 0.0
  %3850 = vmatpush1.msra.mxu0 0.0
  %3851 = vmatprep.subr.mxu0 0.0
  %3852 = vmatpush1.msra.mxu0 0.0
  %3853 = vmatprep.subr.mxu0 0.0
  %3854 = vmatpush1.msra.mxu0 0.0
  %3855 = vmatprep.subr.mxu0 0.0
  %3856 = vmatpush1.msra.mxu0 0.0
  %3857 = vmatprep.subr.mxu0 0.0
  %3858 = vmatpush1.msra.mxu0 0.0
  %3859 = vmatprep.subr.mxu0 0.0
  %3860 = vmatpush1.msra.mxu0 0.0
  %3861 = vmatprep.subr.mxu0 0.0
  %3862 = vmatpush1.msra.mxu0 0.0
  %3863 = vmatprep.subr.mxu0 0.0
  %3864 = vmatpush1.msra.mxu0 0.0
  %3865 = vmatprep.subr.mxu0 0.0
  %3866 = vmatpush1.msra.mxu0 0.0
  %3867 = vmatprep.subr.mxu0 0.0
  %3868 = vmatpush1.msra.mxu0 0.0
  %3869 = vmatprep.mubr.f32.mxu0 0.0
  %v3870 = vand.u32 %v3799, 4294901760
  %v3871 = vsub.f32 %v3799, %v3870
  %v3872 = vand.u32 %v3871, 4294901760
  %v3873 = vsub.f32 %v3871, %v3872
  %v3874 = vand.u32 %v3873, 4294901760
  %3875 = vmatmul.mubr.f32.gmra.mrb[0].mxu0 %v3874
  %v3876 = vpop.f32.mrb[0].mxu0
  %v3877 = vadd.f32 %v843, %v3876
  %v3878 = vpop.f32.mrb[0].mxu0
  %3879 = vdwg.mxu0
  %3880 = vmatprep.subr.mxu0 0.0
  %v3881 = vand.u32 %v852, 4294901760
  %v3882 = vsub.f32 %v852, %v3881
  %v3883 = vand.u32 %v3882, 4294901760
  %v3884 = vsub.f32 %v3882, %v3883
  %v3885 = vand.u32 %v3884, 4294901760
  %3886 = vmatpush1.msra.mxu0 %v3885
  %3887 = vmatprep.subr.mxu0 0.0
  %v3888 = vand.u32 %v853, 4294901760
  %v3889 = vsub.f32 %v853, %v3888
  %v3890 = vand.u32 %v3889, 4294901760
  %v3891 = vsub.f32 %v3889, %v3890
  %v3892 = vand.u32 %v3891, 4294901760
  %3893 = vmatpush1.msra.mxu0 %v3892
  %3894 = vmatprep.subr.mxu0 0.0
  %v3895 = vand.u32 %v854, 4294901760
  %v3896 = vsub.f32 %v854, %v3895
  %v3897 = vand.u32 %v3896, 4294901760
  %v3898 = vsub.f32 %v3896, %v3897
  %v3899 = vand.u32 %v3898, 4294901760
  %3900 = vmatpush1.msra.mxu0 %v3899
  %3901 = vmatprep.subr.mxu0 0.0
  %v3902 = vand.u32 %v855, 4294901760
  %v3903 = vsub.f32 %v855, %v3902
  %v3904 = vand.u32 %v3903, 4294901760
  %v3905 = vsub.f32 %v3903, %v3904
  %v3906 = vand.u32 %v3905, 4294901760
  %3907 = vmatpush1.msra.mxu0 %v3906
  %3908 = vmatprep.subr.mxu0 0.0
  %3909 = vmatpush1.msra.mxu0 0.0
  %3910 = vmatprep.subr.mxu0 0.0
  %3911 = vmatpush1.msra.mxu0 0.0
  %3912 = vmatprep.subr.mxu0 0.0
  %3913 = vmatpush1.msra.mxu0 0.0
  %3914 = vmatprep.subr.mxu0 0.0
  %3915 = vmatpush1.msra.mxu0 0.0
  %3916 = vmatprep.subr.mxu0 0.0
  %3917 = vmatpush1.msra.mxu0 0.0
  %3918 = vmatprep.subr.mxu0 0.0
  %3919 = vmatpush1.msra.mxu0 0.0
  %3920 = vmatprep.subr.mxu0 0.0
  %3921 = vmatpush1.msra.mxu0 0.0
  %3922 = vmatprep.subr.mxu0 0.0
  %3923 = vmatpush1.msra.mxu0 0.0
  %3924 = vmatprep.subr.mxu0 0.0
  %3925 = vmatpush1.msra.mxu0 0.0
  %3926 = vmatprep.subr.mxu0 0.0
  %3927 = vmatpush1.msra.mxu0 0.0
  %3928 = vmatprep.subr.mxu0 0.0
  %3929 = vmatpush1.msra.mxu0 0.0
  %3930 = vmatprep.subr.mxu0 0.0
  %3931 = vmatpush1.msra.mxu0 0.0
  %3932 = vmatprep.subr.mxu0 0.0
  %3933 = vmatpush1.msra.mxu0 0.0
  %3934 = vmatprep.subr.mxu0 0.0
  %3935 = vmatpush1.msra.mxu0 0.0
  %3936 = vmatprep.subr.mxu0 0.0
  %3937 = vmatpush1.msra.mxu0 0.0
  %3938 = vmatprep.subr.mxu0 0.0
  %3939 = vmatpush1.msra.mxu0 0.0
  %3940 = vmatprep.subr.mxu0 0.0
  %3941 = vmatpush1.msra.mxu0 0.0
  %3942 = vmatprep.subr.mxu0 0.0
  %3943 = vmatpush1.msra.mxu0 0.0
  %3944 = vmatprep.subr.mxu0 0.0
  %3945 = vmatpush1.msra.mxu0 0.0
  %3946 = vmatprep.subr.mxu0 0.0
  %3947 = vmatpush1.msra.mxu0 0.0
  %3948 = vmatprep.subr.mxu0 0.0
  %3949 = vmatpush1.msra.mxu0 0.0
  %3950 = vmatprep.subr.mxu0 0.0
  %3951 = vmatpush1.msra.mxu0 0.0
  %3952 = vmatprep.subr.mxu0 0.0
  %3953 = vmatpush1.msra.mxu0 0.0
  %3954 = vmatprep.subr.mxu0 0.0
  %3955 = vmatpush1.msra.mxu0 0.0
  %3956 = vmatprep.subr.mxu0 0.0
  %3957 = vmatpush1.msra.mxu0 0.0
  %3958 = vmatprep.subr.mxu0 0.0
  %3959 = vmatpush1.msra.mxu0 0.0
  %3960 = vmatprep.subr.mxu0 0.0
  %3961 = vmatpush1.msra.mxu0 0.0
  %3962 = vmatprep.subr.mxu0 0.0
  %3963 = vmatpush1.msra.mxu0 0.0
  %3964 = vmatprep.mubr.f32.mxu0 0.0
  %v3965 = vand.u32 %v3799, 4294901760
  %3966 = vmatmul.mubr.f32.gmra.mrb[0].mxu0 %v3965
  %v3967 = vpop.f32.mrb[0].mxu0
  %v3968 = vadd.f32 %v3877, %v3967
  %v3969 = vpop.f32.mrb[0].mxu0
  %3970 = vdwg.mxu0
  %3971 = vmatprep.subr.mxu0 0.0
  %v3972 = vand.u32 %v852, 4294901760
  %v3973 = vsub.f32 %v852, %v3972
  %3974 = vmatpush1.msra.mxu0 %v3973
  %3975 = vmatprep.subr.mxu0 0.0
  %v3976 = vand.u32 %v853, 4294901760
  %v3977 = vsub.f32 %v853, %v3976
  %3978 = vmatpush1.msra.mxu0 %v3977
  %3979 = vmatprep.subr.mxu0 0.0
  %v3980 = vand.u32 %v854, 4294901760
  %v3981 = vsub.f32 %v854, %v3980
  %3982 = vmatpush1.msra.mxu0 %v3981
  %3983 = vmatprep.subr.mxu0 0.0
  %v3984 = vand.u32 %v855, 4294901760
  %v3985 = vsub.f32 %v855, %v3984
  %3986 = vmatpush1.msra.mxu0 %v3985
  %3987 = vmatprep.subr.mxu0 0.0
  %3988 = vmatpush1.msra.mxu0 0.0
  %3989 = vmatprep.subr.mxu0 0.0
  %3990 = vmatpush1.msra.mxu0 0.0
  %3991 = vmatprep.subr.mxu0 0.0
  %3992 = vmatpush1.msra.mxu0 0.0
  %3993 = vmatprep.subr.mxu0 0.0
  %3994 = vmatpush1.msra.mxu0 0.0
  %3995 = vmatprep.subr.mxu0 0.0
  %3996 = vmatpush1.msra.mxu0 0.0
  %3997 = vmatprep.subr.mxu0 0.0
  %3998 = vmatpush1.msra.mxu0 0.0
  %3999 = vmatprep.subr.mxu0 0.0
  %4000 = vmatpush1.msra.mxu0 0.0
  %4001 = vmatprep.subr.mxu0 0.0
  %4002 = vmatpush1.msra.mxu0 0.0
  %4003 = vmatprep.subr.mxu0 0.0
  %4004 = vmatpush1.msra.mxu0 0.0
  %4005 = vmatprep.subr.mxu0 0.0
  %4006 = vmatpush1.msra.mxu0 0.0
  %4007 = vmatprep.subr.mxu0 0.0
  %4008 = vmatpush1.msra.mxu0 0.0
  %4009 = vmatprep.subr.mxu0 0.0
  %4010 = vmatpush1.msra.mxu0 0.0
  %4011 = vmatprep.subr.mxu0 0.0
  %4012 = vmatpush1.msra.mxu0 0.0
  %4013 = vmatprep.subr.mxu0 0.0
  %4014 = vmatpush1.msra.mxu0 0.0
  %4015 = vmatprep.subr.mxu0 0.0
  %4016 = vmatpush1.msra.mxu0 0.0
  %4017 = vmatprep.subr.mxu0 0.0
  %4018 = vmatpush1.msra.mxu0 0.0
  %4019 = vmatprep.subr.mxu0 0.0
  %4020 = vmatpush1.msra.mxu0 0.0
  %4021 = vmatprep.subr.mxu0 0.0
  %4022 = vmatpush1.msra.mxu0 0.0
  %4023 = vmatprep.subr.mxu0 0.0
  %4024 = vmatpush1.msra.mxu0 0.0
  %4025 = vmatprep.subr.mxu0 0.0
  %4026 = vmatpush1.msra.mxu0 0.0
  %4027 = vmatprep.subr.mxu0 0.0
  %4028 = vmatpush1.msra.mxu0 0.0
  %4029 = vmatprep.subr.mxu0 0.0
  %4030 = vmatpush1.msra.mxu0 0.0
  %4031 = vmatprep.subr.mxu0 0.0
  %4032 = vmatpush1.msra.mxu0 0.0
  %4033 = vmatprep.subr.mxu0 0.0
  %4034 = vmatpush1.msra.mxu0 0.0
  %4035 = vmatprep.subr.mxu0 0.0
  %4036 = vmatpush1.msra.mxu0 0.0
  %4037 = vmatprep.subr.mxu0 0.0
  %4038 = vmatpush1.msra.mxu0 0.0
  %4039 = vmatprep.subr.mxu0 0.0
  %4040 = vmatpush1.msra.mxu0 0.0
  %4041 = vmatprep.subr.mxu0 0.0
  %4042 = vmatpush1.msra.mxu0 0.0
  %4043 = vmatprep.mubr.f32.mxu0 0.0
  %v4044 = vand.u32 %v3799, 4294901760
  %v4045 = vsub.f32 %v3799, %v4044
  %4046 = vmatmul.mubr.f32.gmra.mrb[0].mxu0 %v4045
  %v4047 = vpop.f32.mrb[0].mxu0
  %v4048 = vadd.f32 %v3968, %v4047
  %v4049 = vpop.f32.mrb[0].mxu0
  %4050 = vdwg.mxu0
  %4051 = vmatprep.subr.mxu0 0.0
  %v4052 = vand.u32 %v852, 4294901760
  %4053 = vmatpush1.msra.mxu0 %v4052
  %4054 = vmatprep.subr.mxu0 0.0
  %v4055 = vand.u32 %v853, 4294901760
  %4056 = vmatpush1.msra.mxu0 %v4055
  %4057 = vmatprep.subr.mxu0 0.0
  %v4058 = vand.u32 %v854, 4294901760
  %4059 = vmatpush1.msra.mxu0 %v4058
  %4060 = vmatprep.subr.mxu0 0.0
  %v4061 = vand.u32 %v855, 4294901760
  %4062 = vmatpush1.msra.mxu0 %v4061
  %4063 = vmatprep.subr.mxu0 0.0
  %4064 = vmatpush1.msra.mxu0 0.0
  %4065 = vmatprep.subr.mxu0 0.0
  %4066 = vmatpush1.msra.mxu0 0.0
  %4067 = vmatprep.subr.mxu0 0.0
  %4068 = vmatpush1.msra.mxu0 0.0
  %4069 = vmatprep.subr.mxu0 0.0
  %4070 = vmatpush1.msra.mxu0 0.0
  %4071 = vmatprep.subr.mxu0 0.0
  %4072 = vmatpush1.msra.mxu0 0.0
  %4073 = vmatprep.subr.mxu0 0.0
  %4074 = vmatpush1.msra.mxu0 0.0
  %4075 = vmatprep.subr.mxu0 0.0
  %4076 = vmatpush1.msra.mxu0 0.0
  %4077 = vmatprep.subr.mxu0 0.0
  %4078 = vmatpush1.msra.mxu0 0.0
  %4079 = vmatprep.subr.mxu0 0.0
  %4080 = vmatpush1.msra.mxu0 0.0
  %4081 = vmatprep.subr.mxu0 0.0
  %4082 = vmatpush1.msra.mxu0 0.0
  %4083 = vmatprep.subr.mxu0 0.0
  %4084 = vmatpush1.msra.mxu0 0.0
  %4085 = vmatprep.subr.mxu0 0.0
  %4086 = vmatpush1.msra.mxu0 0.0
  %4087 = vmatprep.subr.mxu0 0.0
  %4088 = vmatpush1.msra.mxu0 0.0
  %4089 = vmatprep.subr.mxu0 0.0
  %4090 = vmatpush1.msra.mxu0 0.0
  %4091 = vmatprep.subr.mxu0 0.0
  %4092 = vmatpush1.msra.mxu0 0.0
  %4093 = vmatprep.subr.mxu0 0.0
  %4094 = vmatpush1.msra.mxu0 0.0
  %4095 = vmatprep.subr.mxu0 0.0
  %4096 = vmatpush1.msra.mxu0 0.0
  %4097 = vmatprep.subr.mxu0 0.0
  %4098 = vmatpush1.msra.mxu0 0.0
  %4099 = vmatprep.subr.mxu0 0.0
  %4100 = vmatpush1.msra.mxu0 0.0
  %4101 = vmatprep.subr.mxu0 0.0
  %4102 = vmatpush1.msra.mxu0 0.0
  %4103 = vmatprep.subr.mxu0 0.0
  %4104 = vmatpush1.msra.mxu0 0.0
  %4105 = vmatprep.subr.mxu0 0.0
  %4106 = vmatpush1.msra.mxu0 0.0
  %4107 = vmatprep.subr.mxu0 0.0
  %4108 = vmatpush1.msra.mxu0 0.0
  %4109 = vmatprep.subr.mxu0 0.0
  %4110 = vmatpush1.msra.mxu0 0.0
  %4111 = vmatprep.subr.mxu0 0.0
  %4112 = vmatpush1.msra.mxu0 0.0
  %4113 = vmatprep.subr.mxu0 0.0
  %4114 = vmatpush1.msra.mxu0 0.0
  %4115 = vmatprep.subr.mxu0 0.0
  %4116 = vmatpush1.msra.mxu0 0.0
  %4117 = vmatprep.subr.mxu0 0.0
  %4118 = vmatpush1.msra.mxu0 0.0
  %4119 = vmatprep.mubr.f32.mxu0 0.0
  %v4120 = vand.u32 %v3799, 4294901760
  %v4121 = vsub.f32 %v3799, %v4120
  %v4122 = vand.u32 %v4121, 4294901760
  %4123 = vmatmul.mubr.f32.gmra.mrb[0].mxu0 %v4122
  %v4124 = vpop.f32.mrb[0].mxu0
  %v4125 = vadd.f32 %v4048, %v4124
  %v4126 = vpop.f32.mrb[0].mxu0
  %4127 = vdwg.mxu0
  %4128 = vmatprep.subr.mxu0 0.0
  %v4129 = vand.u32 %v852, 4294901760
  %v4130 = vsub.f32 %v852, %v4129
  %v4131 = vand.u32 %v4130, 4294901760
  %4132 = vmatpush1.msra.mxu0 %v4131
  %4133 = vmatprep.subr.mxu0 0.0
  %v4134 = vand.u32 %v853, 4294901760
  %v4135 = vsub.f32 %v853, %v4134
  %v4136 = vand.u32 %v4135, 4294901760
  %4137 = vmatpush1.msra.mxu0 %v4136
  %4138 = vmatprep.subr.mxu0 0.0
  %v4139 = vand.u32 %v854, 4294901760
  %v4140 = vsub.f32 %v854, %v4139
  %v4141 = vand.u32 %v4140, 4294901760
  %4142 = vmatpush1.msra.mxu0 %v4141
  %4143 = vmatprep.subr.mxu0 0.0
  %v4144 = vand.u32 %v855, 4294901760
  %v4145 = vsub.f32 %v855, %v4144
  %v4146 = vand.u32 %v4145, 4294901760
  %4147 = vmatpush1.msra.mxu0 %v4146
  %4148 = vmatprep.subr.mxu0 0.0
  %4149 = vmatpush1.msra.mxu0 0.0
  %4150 = vmatprep.subr.mxu0 0.0
  %4151 = vmatpush1.msra.mxu0 0.0
  %4152 = vmatprep.subr.mxu0 0.0
  %4153 = vmatpush1.msra.mxu0 0.0
  %4154 = vmatprep.subr.mxu0 0.0
  %4155 = vmatpush1.msra.mxu0 0.0
  %4156 = vmatprep.subr.mxu0 0.0
  %4157 = vmatpush1.msra.mxu0 0.0
  %4158 = vmatprep.subr.mxu0 0.0
  %4159 = vmatpush1.msra.mxu0 0.0
  %4160 = vmatprep.subr.mxu0 0.0
  %4161 = vmatpush1.msra.mxu0 0.0
  %4162 = vmatprep.subr.mxu0 0.0
  %4163 = vmatpush1.msra.mxu0 0.0
  %4164 = vmatprep.subr.mxu0 0.0
  %4165 = vmatpush1.msra.mxu0 0.0
  %4166 = vmatprep.subr.mxu0 0.0
  %4167 = vmatpush1.msra.mxu0 0.0
  %4168 = vmatprep.subr.mxu0 0.0
  %4169 = vmatpush1.msra.mxu0 0.0
  %4170 = vmatprep.subr.mxu0 0.0
  %4171 = vmatpush1.msra.mxu0 0.0
  %4172 = vmatprep.subr.mxu0 0.0
  %4173 = vmatpush1.msra.mxu0 0.0
  %4174 = vmatprep.subr.mxu0 0.0
  %4175 = vmatpush1.msra.mxu0 0.0
  %4176 = vmatprep.subr.mxu0 0.0
  %4177 = vmatpush1.msra.mxu0 0.0
  %4178 = vmatprep.subr.mxu0 0.0
  %4179 = vmatpush1.msra.mxu0 0.0
  %4180 = vmatprep.subr.mxu0 0.0
  %4181 = vmatpush1.msra.mxu0 0.0
  %4182 = vmatprep.subr.mxu0 0.0
  %4183 = vmatpush1.msra.mxu0 0.0
  %4184 = vmatprep.subr.mxu0 0.0
  %4185 = vmatpush1.msra.mxu0 0.0
  %4186 = vmatprep.subr.mxu0 0.0
  %4187 = vmatpush1.msra.mxu0 0.0
  %4188 = vmatprep.subr.mxu0 0.0
  %4189 = vmatpush1.msra.mxu0 0.0
  %4190 = vmatprep.subr.mxu0 0.0
  %4191 = vmatpush1.msra.mxu0 0.0
  %4192 = vmatprep.subr.mxu0 0.0
  %4193 = vmatpush1.msra.mxu0 0.0
  %4194 = vmatprep.subr.mxu0 0.0
  %4195 = vmatpush1.msra.mxu0 0.0
  %4196 = vmatprep.subr.mxu0 0.0
  %4197 = vmatpush1.msra.mxu0 0.0
  %4198 = vmatprep.subr.mxu0 0.0
  %4199 = vmatpush1.msra.mxu0 0.0
  %4200 = vmatprep.subr.mxu0 0.0
  %4201 = vmatpush1.msra.mxu0 0.0
  %4202 = vmatprep.subr.mxu0 0.0
  %4203 = vmatpush1.msra.mxu0 0.0
  %4204 = vmatprep.mubr.f32.mxu0 0.0
  %v4205 = vand.u32 %v3799, 4294901760
  %4206 = vmatmul.mubr.f32.gmra.mrb[0].mxu0 %v4205
  %v4207 = vpop.f32.mrb[0].mxu0
  %v4208 = vadd.f32 %v4125, %v4207
  %v4209 = vpop.f32.mrb[0].mxu0
  %4210 = vdwg.mxu0
  %4211 = vmatprep.subr.mxu0 0.0
  %v4212 = vand.u32 %v852, 4294901760
  %4213 = vmatpush1.msra.mxu0 %v4212
  %4214 = vmatprep.subr.mxu0 0.0
  %v4215 = vand.u32 %v853, 4294901760
  %4216 = vmatpush1.msra.mxu0 %v4215
  %4217 = vmatprep.subr.mxu0 0.0
  %v4218 = vand.u32 %v854, 4294901760
  %4219 = vmatpush1.msra.mxu0 %v4218
  %4220 = vmatprep.subr.mxu0 0.0
  %v4221 = vand.u32 %v855, 4294901760
  %4222 = vmatpush1.msra.mxu0 %v4221
  %4223 = vmatprep.subr.mxu0 0.0
  %4224 = vmatpush1.msra.mxu0 0.0
  %4225 = vmatprep.subr.mxu0 0.0
  %4226 = vmatpush1.msra.mxu0 0.0
  %4227 = vmatprep.subr.mxu0 0.0
  %4228 = vmatpush1.msra.mxu0 0.0
  %4229 = vmatprep.subr.mxu0 0.0
  %4230 = vmatpush1.msra.mxu0 0.0
  %4231 = vmatprep.subr.mxu0 0.0
  %4232 = vmatpush1.msra.mxu0 0.0
  %4233 = vmatprep.subr.mxu0 0.0
  %4234 = vmatpush1.msra.mxu0 0.0
  %4235 = vmatprep.subr.mxu0 0.0
  %4236 = vmatpush1.msra.mxu0 0.0
  %4237 = vmatprep.subr.mxu0 0.0
  %4238 = vmatpush1.msra.mxu0 0.0
  %4239 = vmatprep.subr.mxu0 0.0
  %4240 = vmatpush1.msra.mxu0 0.0
  %4241 = vmatprep.subr.mxu0 0.0
  %4242 = vmatpush1.msra.mxu0 0.0
  %4243 = vmatprep.subr.mxu0 0.0
  %4244 = vmatpush1.msra.mxu0 0.0
  %4245 = vmatprep.subr.mxu0 0.0
  %4246 = vmatpush1.msra.mxu0 0.0
  %4247 = vmatprep.subr.mxu0 0.0
  %4248 = vmatpush1.msra.mxu0 0.0
  %4249 = vmatprep.subr.mxu0 0.0
  %4250 = vmatpush1.msra.mxu0 0.0
  %4251 = vmatprep.subr.mxu0 0.0
  %4252 = vmatpush1.msra.mxu0 0.0
  %4253 = vmatprep.subr.mxu0 0.0
  %4254 = vmatpush1.msra.mxu0 0.0
  %4255 = vmatprep.subr.mxu0 0.0
  %4256 = vmatpush1.msra.mxu0 0.0
  %4257 = vmatprep.subr.mxu0 0.0
  %4258 = vmatpush1.msra.mxu0 0.0
  %4259 = vmatprep.subr.mxu0 0.0
  %4260 = vmatpush1.msra.mxu0 0.0
  %4261 = vmatprep.subr.mxu0 0.0
  %4262 = vmatpush1.msra.mxu0 0.0
  %4263 = vmatprep.subr.mxu0 0.0
  %4264 = vmatpush1.msra.mxu0 0.0
  %4265 = vmatprep.subr.mxu0 0.0
  %4266 = vmatpush1.msra.mxu0 0.0
  %4267 = vmatprep.subr.mxu0 0.0
  %4268 = vmatpush1.msra.mxu0 0.0
  %4269 = vmatprep.subr.mxu0 0.0
  %4270 = vmatpush1.msra.mxu0 0.0
  %4271 = vmatprep.subr.mxu0 0.0
  %4272 = vmatpush1.msra.mxu0 0.0
  %4273 = vmatprep.subr.mxu0 0.0
  %4274 = vmatpush1.msra.mxu0 0.0
  %4275 = vmatprep.subr.mxu0 0.0
  %4276 = vmatpush1.msra.mxu0 0.0
  %4277 = vmatprep.subr.mxu0 0.0
  %4278 = vmatpush1.msra.mxu0 0.0
  %4279 = vmatprep.mubr.f32.mxu0 0.0
  %v4280 = vand.u32 %v3799, 4294901760
  %4281 = vmatmul.mubr.f32.gmra.mrb[0].mxu0 %v4280
  %v4282 = vpop.f32.mrb[0].mxu0
  %v4283 = vadd.f32 %v4208, %v4282
  %v4284 = vpop.f32.mrb[0].mxu0
  %4285 = vdwg.mxu0
  %v4286 = vtanh.pop %v4283
  %4287 = vst.msk [vmem:[#allocation2 + $0x30] sm:$0xff] %vm857, %v4286
  %v4289 = vsel %vm857, %v4286, 0
  %4291 = vmatprep.subr.mxu0 0.0
  %v4292 = vand.u32 %v852, 4294901760
  %4293 = vmatpush1.msra.mxu0 %v4292
  %4294 = vmatprep.subr.mxu0 0.0
  %v4295 = vand.u32 %v853, 4294901760
  %4296 = vmatpush1.msra.mxu0 %v4295
  %4297 = vmatprep.subr.mxu0 0.0
  %v4298 = vand.u32 %v854, 4294901760
  %4299 = vmatpush1.msra.mxu0 %v4298
  %4300 = vmatprep.subr.mxu0 0.0
  %v4301 = vand.u32 %v855, 4294901760
  %4302 = vmatpush1.msra.mxu0 %v4301
  %4303 = vmatprep.subr.mxu0 0.0
  %4304 = vmatpush1.msra.mxu0 0.0
  %4305 = vmatprep.subr.mxu0 0.0
  %4306 = vmatpush1.msra.mxu0 0.0
  %4307 = vmatprep.subr.mxu0 0.0
  %4308 = vmatpush1.msra.mxu0 0.0
  %4309 = vmatprep.subr.mxu0 0.0
  %4310 = vmatpush1.msra.mxu0 0.0
  %4311 = vmatprep.subr.mxu0 0.0
  %4312 = vmatpush1.msra.mxu0 0.0
  %4313 = vmatprep.subr.mxu0 0.0
  %4314 = vmatpush1.msra.mxu0 0.0
  %4315 = vmatprep.subr.mxu0 0.0
  %4316 = vmatpush1.msra.mxu0 0.0
  %4317 = vmatprep.subr.mxu0 0.0
  %4318 = vmatpush1.msra.mxu0 0.0
  %4319 = vmatprep.subr.mxu0 0.0
  %4320 = vmatpush1.msra.mxu0 0.0
  %4321 = vmatprep.subr.mxu0 0.0
  %4322 = vmatpush1.msra.mxu0 0.0
  %4323 = vmatprep.subr.mxu0 0.0
  %4324 = vmatpush1.msra.mxu0 0.0
  %4325 = vmatprep.subr.mxu0 0.0
  %4326 = vmatpush1.msra.mxu0 0.0
  %4327 = vmatprep.subr.mxu0 0.0
  %4328 = vmatpush1.msra.mxu0 0.0
  %4329 = vmatprep.subr.mxu0 0.0
  %4330 = vmatpush1.msra.mxu0 0.0
  %4331 = vmatprep.subr.mxu0 0.0
  %4332 = vmatpush1.msra.mxu0 0.0
  %4333 = vmatprep.subr.mxu0 0.0
  %4334 = vmatpush1.msra.mxu0 0.0
  %4335 = vmatprep.subr.mxu0 0.0
  %4336 = vmatpush1.msra.mxu0 0.0
  %4337 = vmatprep.subr.mxu0 0.0
  %4338 = vmatpush1.msra.mxu0 0.0
  %4339 = vmatprep.subr.mxu0 0.0
  %4340 = vmatpush1.msra.mxu0 0.0
  %4341 = vmatprep.subr.mxu0 0.0
  %4342 = vmatpush1.msra.mxu0 0.0
  %4343 = vmatprep.subr.mxu0 0.0
  %4344 = vmatpush1.msra.mxu0 0.0
  %4345 = vmatprep.subr.mxu0 0.0
  %4346 = vmatpush1.msra.mxu0 0.0
  %4347 = vmatprep.subr.mxu0 0.0
  %4348 = vmatpush1.msra.mxu0 0.0
  %4349 = vmatprep.subr.mxu0 0.0
  %4350 = vmatpush1.msra.mxu0 0.0
  %4351 = vmatprep.subr.mxu0 0.0
  %4352 = vmatpush1.msra.mxu0 0.0
  %4353 = vmatprep.subr.mxu0 0.0
  %4354 = vmatpush1.msra.mxu0 0.0
  %4355 = vmatprep.subr.mxu0 0.0
  %4356 = vmatpush1.msra.mxu0 0.0
  %4357 = vmatprep.subr.mxu0 0.0
  %4358 = vmatpush1.msra.mxu0 0.0
  %4359 = vmatprep.mubr.f32.mxu0 0.0
  %v4360 = vand.u32 %v4289, 4294901760
  %v4361 = vsub.f32 %v4289, %v4360
  %v4362 = vand.u32 %v4361, 4294901760
  %v4363 = vsub.f32 %v4361, %v4362
  %v4364 = vand.u32 %v4363, 4294901760
  %4365 = vmatmul.mubr.f32.gmra.mrb[0].mxu0 %v4364
  %v4366 = vpop.f32.mrb[0].mxu0
  %v4367 = vadd.f32 %v849, %v4366
  %v4368 = vpop.f32.mrb[0].mxu0
  %4369 = vdwg.mxu0
  %4370 = vmatprep.subr.mxu0 0.0
  %v4371 = vand.u32 %v852, 4294901760
  %v4372 = vsub.f32 %v852, %v4371
  %v4373 = vand.u32 %v4372, 4294901760
  %v4374 = vsub.f32 %v4372, %v4373
  %v4375 = vand.u32 %v4374, 4294901760
  %4376 = vmatpush1.msra.mxu0 %v4375
  %4377 = vmatprep.subr.mxu0 0.0
  %v4378 = vand.u32 %v853, 4294901760
  %v4379 = vsub.f32 %v853, %v4378
  %v4380 = vand.u32 %v4379, 4294901760
  %v4381 = vsub.f32 %v4379, %v4380
  %v4382 = vand.u32 %v4381, 4294901760
  %4383 = vmatpush1.msra.mxu0 %v4382
  %4384 = vmatprep.subr.mxu0 0.0
  %v4385 = vand.u32 %v854, 4294901760
  %v4386 = vsub.f32 %v854, %v4385
  %v4387 = vand.u32 %v4386, 4294901760
  %v4388 = vsub.f32 %v4386, %v4387
  %v4389 = vand.u32 %v4388, 4294901760
  %4390 = vmatpush1.msra.mxu0 %v4389
  %4391 = vmatprep.subr.mxu0 0.0
  %v4392 = vand.u32 %v855, 4294901760
  %v4393 = vsub.f32 %v855, %v4392
  %v4394 = vand.u32 %v4393, 4294901760
  %v4395 = vsub.f32 %v4393, %v4394
  %v4396 = vand.u32 %v4395, 4294901760
  %4397 = vmatpush1.msra.mxu0 %v4396
  %4398 = vmatprep.subr.mxu0 0.0
  %4399 = vmatpush1.msra.mxu0 0.0
  %4400 = vmatprep.subr.mxu0 0.0
  %4401 = vmatpush1.msra.mxu0 0.0
  %4402 = vmatprep.subr.mxu0 0.0
  %4403 = vmatpush1.msra.mxu0 0.0
  %4404 = vmatprep.subr.mxu0 0.0
  %4405 = vmatpush1.msra.mxu0 0.0
  %4406 = vmatprep.subr.mxu0 0.0
  %4407 = vmatpush1.msra.mxu0 0.0
  %4408 = vmatprep.subr.mxu0 0.0
  %4409 = vmatpush1.msra.mxu0 0.0
  %4410 = vmatprep.subr.mxu0 0.0
  %4411 = vmatpush1.msra.mxu0 0.0
  %4412 = vmatprep.subr.mxu0 0.0
  %4413 = vmatpush1.msra.mxu0 0.0
  %4414 = vmatprep.subr.mxu0 0.0
  %4415 = vmatpush1.msra.mxu0 0.0
  %4416 = vmatprep.subr.mxu0 0.0
  %4417 = vmatpush1.msra.mxu0 0.0
  %4418 = vmatprep.subr.mxu0 0.0
  %4419 = vmatpush1.msra.mxu0 0.0
  %4420 = vmatprep.subr.mxu0 0.0
  %4421 = vmatpush1.msra.mxu0 0.0
  %4422 = vmatprep.subr.mxu0 0.0
  %4423 = vmatpush1.msra.mxu0 0.0
  %4424 = vmatprep.subr.mxu0 0.0
  %4425 = vmatpush1.msra.mxu0 0.0
  %4426 = vmatprep.subr.mxu0 0.0
  %4427 = vmatpush1.msra.mxu0 0.0
  %4428 = vmatprep.subr.mxu0 0.0
  %4429 = vmatpush1.msra.mxu0 0.0
  %4430 = vmatprep.subr.mxu0 0.0
  %4431 = vmatpush1.msra.mxu0 0.0
  %4432 = vmatprep.subr.mxu0 0.0
  %4433 = vmatpush1.msra.mxu0 0.0
  %4434 = vmatprep.subr.mxu0 0.0
  %4435 = vmatpush1.msra.mxu0 0.0
  %4436 = vmatprep.subr.mxu0 0.0
  %4437 = vmatpush1.msra.mxu0 0.0
  %4438 = vmatprep.subr.mxu0 0.0
  %4439 = vmatpush1.msra.mxu0 0.0
  %4440 = vmatprep.subr.mxu0 0.0
  %4441 = vmatpush1.msra.mxu0 0.0
  %4442 = vmatprep.subr.mxu0 0.0
  %4443 = vmatpush1.msra.mxu0 0.0
  %4444 = vmatprep.subr.mxu0 0.0
  %4445 = vmatpush1.msra.mxu0 0.0
  %4446 = vmatprep.subr.mxu0 0.0
  %4447 = vmatpush1.msra.mxu0 0.0
  %4448 = vmatprep.subr.mxu0 0.0
  %4449 = vmatpush1.msra.mxu0 0.0
  %4450 = vmatprep.subr.mxu0 0.0
  %4451 = vmatpush1.msra.mxu0 0.0
  %4452 = vmatprep.subr.mxu0 0.0
  %4453 = vmatpush1.msra.mxu0 0.0
  %4454 = vmatprep.mubr.f32.mxu0 0.0
  %v4455 = vand.u32 %v4289, 4294901760
  %4456 = vmatmul.mubr.f32.gmra.mrb[0].mxu0 %v4455
  %v4457 = vpop.f32.mrb[0].mxu0
  %v4458 = vadd.f32 %v4367, %v4457
  %v4459 = vpop.f32.mrb[0].mxu0
  %4460 = vdwg.mxu0
  %4461 = vmatprep.subr.mxu0 0.0
  %v4462 = vand.u32 %v852, 4294901760
  %v4463 = vsub.f32 %v852, %v4462
  %4464 = vmatpush1.msra.mxu0 %v4463
  %4465 = vmatprep.subr.mxu0 0.0
  %v4466 = vand.u32 %v853, 4294901760
  %v4467 = vsub.f32 %v853, %v4466
  %4468 = vmatpush1.msra.mxu0 %v4467
  %4469 = vmatprep.subr.mxu0 0.0
  %v4470 = vand.u32 %v854, 4294901760
  %v4471 = vsub.f32 %v854, %v4470
  %4472 = vmatpush1.msra.mxu0 %v4471
  %4473 = vmatprep.subr.mxu0 0.0
  %v4474 = vand.u32 %v855, 4294901760
  %v4475 = vsub.f32 %v855, %v4474
  %4476 = vmatpush1.msra.mxu0 %v4475
  %4477 = vmatprep.subr.mxu0 0.0
  %4478 = vmatpush1.msra.mxu0 0.0
  %4479 = vmatprep.subr.mxu0 0.0
  %4480 = vmatpush1.msra.mxu0 0.0
  %4481 = vmatprep.subr.mxu0 0.0
  %4482 = vmatpush1.msra.mxu0 0.0
  %4483 = vmatprep.subr.mxu0 0.0
  %4484 = vmatpush1.msra.mxu0 0.0
  %4485 = vmatprep.subr.mxu0 0.0
  %4486 = vmatpush1.msra.mxu0 0.0
  %4487 = vmatprep.subr.mxu0 0.0
  %4488 = vmatpush1.msra.mxu0 0.0
  %4489 = vmatprep.subr.mxu0 0.0
  %4490 = vmatpush1.msra.mxu0 0.0
  %4491 = vmatprep.subr.mxu0 0.0
  %4492 = vmatpush1.msra.mxu0 0.0
  %4493 = vmatprep.subr.mxu0 0.0
  %4494 = vmatpush1.msra.mxu0 0.0
  %4495 = vmatprep.subr.mxu0 0.0
  %4496 = vmatpush1.msra.mxu0 0.0
  %4497 = vmatprep.subr.mxu0 0.0
  %4498 = vmatpush1.msra.mxu0 0.0
  %4499 = vmatprep.subr.mxu0 0.0
  %4500 = vmatpush1.msra.mxu0 0.0
  %4501 = vmatprep.subr.mxu0 0.0
  %4502 = vmatpush1.msra.mxu0 0.0
  %4503 = vmatprep.subr.mxu0 0.0
  %4504 = vmatpush1.msra.mxu0 0.0
  %4505 = vmatprep.subr.mxu0 0.0
  %4506 = vmatpush1.msra.mxu0 0.0
  %4507 = vmatprep.subr.mxu0 0.0
  %4508 = vmatpush1.msra.mxu0 0.0
  %4509 = vmatprep.subr.mxu0 0.0
  %4510 = vmatpush1.msra.mxu0 0.0
  %4511 = vmatprep.subr.mxu0 0.0
  %4512 = vmatpush1.msra.mxu0 0.0
  %4513 = vmatprep.subr.mxu0 0.0
  %4514 = vmatpush1.msra.mxu0 0.0
  %4515 = vmatprep.subr.mxu0 0.0
  %4516 = vmatpush1.msra.mxu0 0.0
  %4517 = vmatprep.subr.mxu0 0.0
  %4518 = vmatpush1.msra.mxu0 0.0
  %4519 = vmatprep.subr.mxu0 0.0
  %4520 = vmatpush1.msra.mxu0 0.0
  %4521 = vmatprep.subr.mxu0 0.0
  %4522 = vmatpush1.msra.mxu0 0.0
  %4523 = vmatprep.subr.mxu0 0.0
  %4524 = vmatpush1.msra.mxu0 0.0
  %4525 = vmatprep.subr.mxu0 0.0
  %4526 = vmatpush1.msra.mxu0 0.0
  %4527 = vmatprep.subr.mxu0 0.0
  %4528 = vmatpush1.msra.mxu0 0.0
  %4529 = vmatprep.subr.mxu0 0.0
  %4530 = vmatpush1.msra.mxu0 0.0
  %4531 = vmatprep.subr.mxu0 0.0
  %4532 = vmatpush1.msra.mxu0 0.0
  %4533 = vmatprep.mubr.f32.mxu0 0.0
  %v4534 = vand.u32 %v4289, 4294901760
  %v4535 = vsub.f32 %v4289, %v4534
  %4536 = vmatmul.mubr.f32.gmra.mrb[0].mxu0 %v4535
  %v4537 = vpop.f32.mrb[0].mxu0
  %v4538 = vadd.f32 %v4458, %v4537
  %v4539 = vpop.f32.mrb[0].mxu0
  %4540 = vdwg.mxu0
  %4541 = vmatprep.subr.mxu0 0.0
  %v4542 = vand.u32 %v852, 4294901760
  %4543 = vmatpush1.msra.mxu0 %v4542
  %4544 = vmatprep.subr.mxu0 0.0
  %v4545 = vand.u32 %v853, 4294901760
  %4546 = vmatpush1.msra.mxu0 %v4545
  %4547 = vmatprep.subr.mxu0 0.0
  %v4548 = vand.u32 %v854, 4294901760
  %4549 = vmatpush1.msra.mxu0 %v4548
  %4550 = vmatprep.subr.mxu0 0.0
  %v4551 = vand.u32 %v855, 4294901760
  %4552 = vmatpush1.msra.mxu0 %v4551
  %4553 = vmatprep.subr.mxu0 0.0
  %4554 = vmatpush1.msra.mxu0 0.0
  %4555 = vmatprep.subr.mxu0 0.0
  %4556 = vmatpush1.msra.mxu0 0.0
  %4557 = vmatprep.subr.mxu0 0.0
  %4558 = vmatpush1.msra.mxu0 0.0
  %4559 = vmatprep.subr.mxu0 0.0
  %4560 = vmatpush1.msra.mxu0 0.0
  %4561 = vmatprep.subr.mxu0 0.0
  %4562 = vmatpush1.msra.mxu0 0.0
  %4563 = vmatprep.subr.mxu0 0.0
  %4564 = vmatpush1.msra.mxu0 0.0
  %4565 = vmatprep.subr.mxu0 0.0
  %4566 = vmatpush1.msra.mxu0 0.0
  %4567 = vmatprep.subr.mxu0 0.0
  %4568 = vmatpush1.msra.mxu0 0.0
  %4569 = vmatprep.subr.mxu0 0.0
  %4570 = vmatpush1.msra.mxu0 0.0
  %4571 = vmatprep.subr.mxu0 0.0
  %4572 = vmatpush1.msra.mxu0 0.0
  %4573 = vmatprep.subr.mxu0 0.0
  %4574 = vmatpush1.msra.mxu0 0.0
  %4575 = vmatprep.subr.mxu0 0.0
  %4576 = vmatpush1.msra.mxu0 0.0
  %4577 = vmatprep.subr.mxu0 0.0
  %4578 = vmatpush1.msra.mxu0 0.0
  %4579 = vmatprep.subr.mxu0 0.0
  %4580 = vmatpush1.msra.mxu0 0.0
  %4581 = vmatprep.subr.mxu0 0.0
  %4582 = vmatpush1.msra.mxu0 0.0
  %4583 = vmatprep.subr.mxu0 0.0
  %4584 = vmatpush1.msra.mxu0 0.0
  %4585 = vmatprep.subr.mxu0 0.0
  %4586 = vmatpush1.msra.mxu0 0.0
  %4587 = vmatprep.subr.mxu0 0.0
  %4588 = vmatpush1.msra.mxu0 0.0
  %4589 = vmatprep.subr.mxu0 0.0
  %4590 = vmatpush1.msra.mxu0 0.0
  %4591 = vmatprep.subr.mxu0 0.0
  %4592 = vmatpush1.msra.mxu0 0.0
  %4593 = vmatprep.subr.mxu0 0.0
  %4594 = vmatpush1.msra.mxu0 0.0
  %4595 = vmatprep.subr.mxu0 0.0
  %4596 = vmatpush1.msra.mxu0 0.0
  %4597 = vmatprep.subr.mxu0 0.0
  %4598 = vmatpush1.msra.mxu0 0.0
  %4599 = vmatprep.subr.mxu0 0.0
  %4600 = vmatpush1.msra.mxu0 0.0
  %4601 = vmatprep.subr.mxu0 0.0
  %4602 = vmatpush1.msra.mxu0 0.0
  %4603 = vmatprep.subr.mxu0 0.0
  %4604 = vmatpush1.msra.mxu0 0.0
  %4605 = vmatprep.subr.mxu0 0.0
  %4606 = vmatpush1.msra.mxu0 0.0
  %4607 = vmatprep.subr.mxu0 0.0
  %4608 = vmatpush1.msra.mxu0 0.0
  %4609 = vmatprep.mubr.f32.mxu0 0.0
  %v4610 = vand.u32 %v4289, 4294901760
  %v4611 = vsub.f32 %v4289, %v4610
  %v4612 = vand.u32 %v4611, 4294901760
  %4613 = vmatmul.mubr.f32.gmra.mrb[0].mxu0 %v4612
  %v4614 = vpop.f32.mrb[0].mxu0
  %v4615 = vadd.f32 %v4538, %v4614
  %v4616 = vpop.f32.mrb[0].mxu0
  %4617 = vdwg.mxu0
  %4618 = vmatprep.subr.mxu0 0.0
  %v4619 = vand.u32 %v852, 4294901760
  %v4620 = vsub.f32 %v852, %v4619
  %v4621 = vand.u32 %v4620, 4294901760
  %4622 = vmatpush1.msra.mxu0 %v4621
  %4623 = vmatprep.subr.mxu0 0.0
  %v4624 = vand.u32 %v853, 4294901760
  %v4625 = vsub.f32 %v853, %v4624
  %v4626 = vand.u32 %v4625, 4294901760
  %4627 = vmatpush1.msra.mxu0 %v4626
  %4628 = vmatprep.subr.mxu0 0.0
  %v4629 = vand.u32 %v854, 4294901760
  %v4630 = vsub.f32 %v854, %v4629
  %v4631 = vand.u32 %v4630, 4294901760
  %4632 = vmatpush1.msra.mxu0 %v4631
  %4633 = vmatprep.subr.mxu0 0.0
  %v4634 = vand.u32 %v855, 4294901760
  %v4635 = vsub.f32 %v855, %v4634
  %v4636 = vand.u32 %v4635, 4294901760
  %4637 = vmatpush1.msra.mxu0 %v4636
  %4638 = vmatprep.subr.mxu0 0.0
  %4639 = vmatpush1.msra.mxu0 0.0
  %4640 = vmatprep.subr.mxu0 0.0
  %4641 = vmatpush1.msra.mxu0 0.0
  %4642 = vmatprep.subr.mxu0 0.0
  %4643 = vmatpush1.msra.mxu0 0.0
  %4644 = vmatprep.subr.mxu0 0.0
  %4645 = vmatpush1.msra.mxu0 0.0
  %4646 = vmatprep.subr.mxu0 0.0
  %4647 = vmatpush1.msra.mxu0 0.0
  %4648 = vmatprep.subr.mxu0 0.0
  %4649 = vmatpush1.msra.mxu0 0.0
  %4650 = vmatprep.subr.mxu0 0.0
  %4651 = vmatpush1.msra.mxu0 0.0
  %4652 = vmatprep.subr.mxu0 0.0
  %4653 = vmatpush1.msra.mxu0 0.0
  %4654 = vmatprep.subr.mxu0 0.0
  %4655 = vmatpush1.msra.mxu0 0.0
  %4656 = vmatprep.subr.mxu0 0.0
  %4657 = vmatpush1.msra.mxu0 0.0
  %4658 = vmatprep.subr.mxu0 0.0
  %4659 = vmatpush1.msra.mxu0 0.0
  %4660 = vmatprep.subr.mxu0 0.0
  %4661 = vmatpush1.msra.mxu0 0.0
  %4662 = vmatprep.subr.mxu0 0.0
  %4663 = vmatpush1.msra.mxu0 0.0
  %4664 = vmatprep.subr.mxu0 0.0
  %4665 = vmatpush1.msra.mxu0 0.0
  %4666 = vmatprep.subr.mxu0 0.0
  %4667 = vmatpush1.msra.mxu0 0.0
  %4668 = vmatprep.subr.mxu0 0.0
  %4669 = vmatpush1.msra.mxu0 0.0
  %4670 = vmatprep.subr.mxu0 0.0
  %4671 = vmatpush1.msra.mxu0 0.0
  %4672 = vmatprep.subr.mxu0 0.0
  %4673 = vmatpush1.msra.mxu0 0.0
  %4674 = vmatprep.subr.mxu0 0.0
  %4675 = vmatpush1.msra.mxu0 0.0
  %4676 = vmatprep.subr.mxu0 0.0
  %4677 = vmatpush1.msra.mxu0 0.0
  %4678 = vmatprep.subr.mxu0 0.0
  %4679 = vmatpush1.msra.mxu0 0.0
  %4680 = vmatprep.subr.mxu0 0.0
  %4681 = vmatpush1.msra.mxu0 0.0
  %4682 = vmatprep.subr.mxu0 0.0
  %4683 = vmatpush1.msra.mxu0 0.0
  %4684 = vmatprep.subr.mxu0 0.0
  %4685 = vmatpush1.msra.mxu0 0.0
  %4686 = vmatprep.subr.mxu0 0.0
  %4687 = vmatpush1.msra.mxu0 0.0
  %4688 = vmatprep.subr.mxu0 0.0
  %4689 = vmatpush1.msra.mxu0 0.0
  %4690 = vmatprep.subr.mxu0 0.0
  %4691 = vmatpush1.msra.mxu0 0.0
  %4692 = vmatprep.subr.mxu0 0.0
  %4693 = vmatpush1.msra.mxu0 0.0
  %4694 = vmatprep.mubr.f32.mxu0 0.0
  %v4695 = vand.u32 %v4289, 4294901760
  %4696 = vmatmul.mubr.f32.gmra.mrb[0].mxu0 %v4695
  %v4697 = vpop.f32.mrb[0].mxu0
  %v4698 = vadd.f32 %v4615, %v4697
  %v4699 = vpop.f32.mrb[0].mxu0
  %4700 = vdwg.mxu0
  %4701 = vmatprep.subr.mxu0 0.0
  %v4702 = vand.u32 %v852, 4294901760
  %4703 = vmatpush1.msra.mxu0 %v4702
  %4704 = vmatprep.subr.mxu0 0.0
  %v4705 = vand.u32 %v853, 4294901760
  %4706 = vmatpush1.msra.mxu0 %v4705
  %4707 = vmatprep.subr.mxu0 0.0
  %v4708 = vand.u32 %v854, 4294901760
  %4709 = vmatpush1.msra.mxu0 %v4708
  %4710 = vmatprep.subr.mxu0 0.0
  %v4711 = vand.u32 %v855, 4294901760
  %4712 = vmatpush1.msra.mxu0 %v4711
  %4713 = vmatprep.subr.mxu0 0.0
  %4714 = vmatpush1.msra.mxu0 0.0
  %4715 = vmatprep.subr.mxu0 0.0
  %4716 = vmatpush1.msra.mxu0 0.0
  %4717 = vmatprep.subr.mxu0 0.0
  %4718 = vmatpush1.msra.mxu0 0.0
  %4719 = vmatprep.subr.mxu0 0.0
  %4720 = vmatpush1.msra.mxu0 0.0
  %4721 = vmatprep.subr.mxu0 0.0
  %4722 = vmatpush1.msra.mxu0 0.0
  %4723 = vmatprep.subr.mxu0 0.0
  %4724 = vmatpush1.msra.mxu0 0.0
  %4725 = vmatprep.subr.mxu0 0.0
  %4726 = vmatpush1.msra.mxu0 0.0
  %4727 = vmatprep.subr.mxu0 0.0
  %4728 = vmatpush1.msra.mxu0 0.0
  %4729 = vmatprep.subr.mxu0 0.0
  %4730 = vmatpush1.msra.mxu0 0.0
  %4731 = vmatprep.subr.mxu0 0.0
  %4732 = vmatpush1.msra.mxu0 0.0
  %4733 = vmatprep.subr.mxu0 0.0
  %4734 = vmatpush1.msra.mxu0 0.0
  %4735 = vmatprep.subr.mxu0 0.0
  %4736 = vmatpush1.msra.mxu0 0.0
  %4737 = vmatprep.subr.mxu0 0.0
  %4738 = vmatpush1.msra.mxu0 0.0
  %4739 = vmatprep.subr.mxu0 0.0
  %4740 = vmatpush1.msra.mxu0 0.0
  %4741 = vmatprep.subr.mxu0 0.0
  %4742 = vmatpush1.msra.mxu0 0.0
  %4743 = vmatprep.subr.mxu0 0.0
  %4744 = vmatpush1.msra.mxu0 0.0
  %4745 = vmatprep.subr.mxu0 0.0
  %4746 = vmatpush1.msra.mxu0 0.0
  %4747 = vmatprep.subr.mxu0 0.0
  %4748 = vmatpush1.msra.mxu0 0.0
  %4749 = vmatprep.subr.mxu0 0.0
  %4750 = vmatpush1.msra.mxu0 0.0
  %4751 = vmatprep.subr.mxu0 0.0
  %4752 = vmatpush1.msra.mxu0 0.0
  %4753 = vmatprep.subr.mxu0 0.0
  %4754 = vmatpush1.msra.mxu0 0.0
  %4755 = vmatprep.subr.mxu0 0.0
  %4756 = vmatpush1.msra.mxu0 0.0
  %4757 = vmatprep.subr.mxu0 0.0
  %4758 = vmatpush1.msra.mxu0 0.0
  %4759 = vmatprep.subr.mxu0 0.0
  %4760 = vmatpush1.msra.mxu0 0.0
  %4761 = vmatprep.subr.mxu0 0.0
  %4762 = vmatpush1.msra.mxu0 0.0
  %4763 = vmatprep.subr.mxu0 0.0
  %4764 = vmatpush1.msra.mxu0 0.0
  %4765 = vmatprep.subr.mxu0 0.0
  %4766 = vmatpush1.msra.mxu0 0.0
  %4767 = vmatprep.subr.mxu0 0.0
  %4768 = vmatpush1.msra.mxu0 0.0
  %4769 = vmatprep.mubr.f32.mxu0 0.0
  %v4770 = vand.u32 %v4289, 4294901760
  %4771 = vmatmul.mubr.f32.gmra.mrb[0].mxu0 %v4770
  %v4772 = vpop.f32.mrb[0].mxu0
  %v4773 = vadd.f32 %v4698, %v4772
  %v4774 = vpop.f32.mrb[0].mxu0
  %4775 = vdwg.mxu0
  %v4776 = vtanh.pop %v4773
  %4777 = vst.msk [vmem:[#allocation2 + $0x38] sm:$0xff] %vm857, %v4776
  %v4778 = vld [vmem:[#allocation2] sm:$0xff]
  %v4779 = vld [vmem:[#allocation2 + $0x8] sm:$0xff]
  %v4780 = vld [vmem:[#allocation2 + $0x10] sm:$0xff]
  %v4781 = vld [vmem:[#allocation2 + $0x18] sm:$0xff]
  %v4782 = vld [vmem:[#allocation2 + $0x20] sm:$0xff]
  %v4783 = vld [vmem:[#allocation2 + $0x28] sm:$0xff]
  %v4784 = vld [vmem:[#allocation2 + $0x30] sm:$0xff]
  %v4785 = vld [vmem:[#allocation2 + $0x38] sm:$0xff]
  %v4786 = vld [vmem:[%s7] sm:$0xff]
  %v4787 = vld [vmem:[%s7 + $0x8] sm:$0xff]
  %v4788 = vld [vmem:[%s7 + $0x10] sm:$0xff]
  %v4789 = vld [vmem:[%s7 + $0x18] sm:$0xff]
  %v4790 = vld [vmem:[%s8] sm:$0x1]
  %v4792 = vlaneseq
  %v4793 = vshrl.u32 %v4792, 7
  %v4794 = vsub.s32 0, %v4793
  %v4795 = vrot.slane %v4790, %v4794
  %v4798 = vsel %vm857, %v4778, 0
  %v4801 = vsel %vm857, %v4779, 0
  %v4804 = vsel %vm857, %v4780, 0
  %v4807 = vsel %vm857, %v4781, 0
  %v4810 = vsel %vm857, %v4782, 0
  %v4813 = vsel %vm857, %v4783, 0
  %v4816 = vsel %vm857, %v4784, 0
  %v4819 = vsel %vm857, %v4785, 0
  %4821 = vmatprep.subr.mxu0 0.0
  %v4822 = vand.u32 %v4786, 4294901760
  %4823 = vmatpush1.msra.mxu0 %v4822
  %4824 = vmatprep.subr.mxu0 0.0
  %v4825 = vand.u32 %v4787, 4294901760
  %4826 = vmatpush1.msra.mxu0 %v4825
  %4827 = vmatprep.subr.mxu0 0.0
  %v4828 = vand.u32 %v4788, 4294901760
  %4829 = vmatpush1.msra.mxu0 %v4828
  %4830 = vmatprep.subr.mxu0 0.0
  %v4831 = vand.u32 %v4789, 4294901760
  %4832 = vmatpush1.msra.mxu0 %v4831
  %4833 = vmatprep.subr.mxu0 0.0
  %4834 = vmatpush1.msra.mxu0 0.0
  %4835 = vmatprep.subr.mxu0 0.0
  %4836 = vmatpush1.msra.mxu0 0.0
  %4837 = vmatprep.subr.mxu0 0.0
  %4838 = vmatpush1.msra.mxu0 0.0
  %4839 = vmatprep.subr.mxu0 0.0
  %4840 = vmatpush1.msra.mxu0 0.0
  %4841 = vmatprep.subr.mxu0 0.0
  %4842 = vmatpush1.msra.mxu0 0.0
  %4843 = vmatprep.subr.mxu0 0.0
  %4844 = vmatpush1.msra.mxu0 0.0
  %4845 = vmatprep.subr.mxu0 0.0
  %4846 = vmatpush1.msra.mxu0 0.0
  %4847 = vmatprep.subr.mxu0 0.0
  %4848 = vmatpush1.msra.mxu0 0.0
  %4849 = vmatprep.subr.mxu0 0.0
  %4850 = vmatpush1.msra.mxu0 0.0
  %4851 = vmatprep.subr.mxu0 0.0
  %4852 = vmatpush1.msra.mxu0 0.0
  %4853 = vmatprep.subr.mxu0 0.0
  %4854 = vmatpush1.msra.mxu0 0.0
  %4855 = vmatprep.subr.mxu0 0.0
  %4856 = vmatpush1.msra.mxu0 0.0
  %4857 = vmatprep.subr.mxu0 0.0
  %4858 = vmatpush1.msra.mxu0 0.0
  %4859 = vmatprep.subr.mxu0 0.0
  %4860 = vmatpush1.msra.mxu0 0.0
  %4861 = vmatprep.subr.mxu0 0.0
  %4862 = vmatpush1.msra.mxu0 0.0
  %4863 = vmatprep.subr.mxu0 0.0
  %4864 = vmatpush1.msra.mxu0 0.0
  %4865 = vmatprep.subr.mxu0 0.0
  %4866 = vmatpush1.msra.mxu0 0.0
  %4867 = vmatprep.subr.mxu0 0.0
  %4868 = vmatpush1.msra.mxu0 0.0
  %4869 = vmatprep.subr.mxu0 0.0
  %4870 = vmatpush1.msra.mxu0 0.0
  %4871 = vmatprep.subr.mxu0 0.0
  %4872 = vmatpush1.msra.mxu0 0.0
  %4873 = vmatprep.subr.mxu0 0.0
  %4874 = vmatpush1.msra.mxu0 0.0
  %4875 = vmatprep.subr.mxu0 0.0
  %4876 = vmatpush1.msra.mxu0 0.0
  %4877 = vmatprep.subr.mxu0 0.0
  %4878 = vmatpush1.msra.mxu0 0.0
  %4879 = vmatprep.subr.mxu0 0.0
  %4880 = vmatpush1.msra.mxu0 0.0
  %4881 = vmatprep.subr.mxu0 0.0
  %4882 = vmatpush1.msra.mxu0 0.0
  %4883 = vmatprep.subr.mxu0 0.0
  %4884 = vmatpush1.msra.mxu0 0.0
  %4885 = vmatprep.subr.mxu0 0.0
  %4886 = vmatpush1.msra.mxu0 0.0
  %4887 = vmatprep.subr.mxu0 0.0
  %4888 = vmatpush1.msra.mxu0 0.0
  %4889 = vmatprep.mubr.f32.mxu0 0.0
  %v4890 = vand.u32 %v4798, 4294901760
  %v4891 = vsub.f32 %v4798, %v4890
  %v4892 = vand.u32 %v4891, 4294901760
  %v4893 = vsub.f32 %v4891, %v4892
  %v4894 = vand.u32 %v4893, 4294901760
  %4895 = vmatmul.mubr.f32.gmra.mrb[0].mxu0 %v4894
  %v4896 = vpop.f32.mrb[0].mxu0
  %v4897 = vadd.f32 %v4795, %v4896
  %v4898 = vpop.f32.mrb[0].mxu0
  %4899 = vmatprep.mubr.f32.mxu0 0.0
  %v4900 = vand.u32 %v4801, 4294901760
  %v4901 = vsub.f32 %v4801, %v4900
  %v4902 = vand.u32 %v4901, 4294901760
  %v4903 = vsub.f32 %v4901, %v4902
  %v4904 = vand.u32 %v4903, 4294901760
  %4905 = vmatmul.mubr.f32.gmra.mrb[0].mxu0 %v4904
  %v4906 = vpop.f32.mrb[0].mxu0
  %v4907 = vadd.f32 %v4795, %v4906
  %v4908 = vpop.f32.mrb[0].mxu0
  %4909 = vmatprep.mubr.f32.mxu0 0.0
  %v4910 = vand.u32 %v4804, 4294901760
  %v4911 = vsub.f32 %v4804, %v4910
  %v4912 = vand.u32 %v4911, 4294901760
  %v4913 = vsub.f32 %v4911, %v4912
  %v4914 = vand.u32 %v4913, 4294901760
  %4915 = vmatmul.mubr.f32.gmra.mrb[0].mxu0 %v4914
  %v4916 = vpop.f32.mrb[0].mxu0
  %v4917 = vadd.f32 %v4795, %v4916
  %v4918 = vpop.f32.mrb[0].mxu0
  %4919 = vmatprep.mubr.f32.mxu0 0.0
  %v4920 = vand.u32 %v4807, 4294901760
  %v4921 = vsub.f32 %v4807, %v4920
  %v4922 = vand.u32 %v4921, 4294901760
  %v4923 = vsub.f32 %v4921, %v4922
  %v4924 = vand.u32 %v4923, 4294901760
  %4925 = vmatmul.mubr.f32.gmra.mrb[0].mxu0 %v4924
  %v4926 = vpop.f32.mrb[0].mxu0
  %v4927 = vadd.f32 %v4795, %v4926
  %v4928 = vpop.f32.mrb[0].mxu0
  %4929 = vmatprep.mubr.f32.mxu0 0.0
  %v4930 = vand.u32 %v4810, 4294901760
  %v4931 = vsub.f32 %v4810, %v4930
  %v4932 = vand.u32 %v4931, 4294901760
  %v4933 = vsub.f32 %v4931, %v4932
  %v4934 = vand.u32 %v4933, 4294901760
  %4935 = vmatmul.mubr.f32.gmra.mrb[0].mxu0 %v4934
  %v4936 = vpop.f32.mrb[0].mxu0
  %v4937 = vadd.f32 %v4795, %v4936
  %v4938 = vpop.f32.mrb[0].mxu0
  %4939 = vmatprep.mubr.f32.mxu0 0.0
  %v4940 = vand.u32 %v4813, 4294901760
  %v4941 = vsub.f32 %v4813, %v4940
  %v4942 = vand.u32 %v4941, 4294901760
  %v4943 = vsub.f32 %v4941, %v4942
  %v4944 = vand.u32 %v4943, 4294901760
  %4945 = vmatmul.mubr.f32.gmra.mrb[0].mxu0 %v4944
  %v4946 = vpop.f32.mrb[0].mxu0
  %v4947 = vadd.f32 %v4795, %v4946
  %v4948 = vpop.f32.mrb[0].mxu0
  %4949 = vmatprep.mubr.f32.mxu0 0.0
  %v4950 = vand.u32 %v4816, 4294901760
  %v4951 = vsub.f32 %v4816, %v4950
  %v4952 = vand.u32 %v4951, 4294901760
  %v4953 = vsub.f32 %v4951, %v4952
  %v4954 = vand.u32 %v4953, 4294901760
  %4955 = vmatmul.mubr.f32.gmra.mrb[0].mxu0 %v4954
  %v4956 = vpop.f32.mrb[0].mxu0
  %v4957 = vadd.f32 %v4795, %v4956
  %v4958 = vpop.f32.mrb[0].mxu0
  %4959 = vmatprep.mubr.f32.mxu0 0.0
  %v4960 = vand.u32 %v4819, 4294901760
  %v4961 = vsub.f32 %v4819, %v4960
  %v4962 = vand.u32 %v4961, 4294901760
  %v4963 = vsub.f32 %v4961, %v4962
  %v4964 = vand.u32 %v4963, 4294901760
  %4965 = vmatmul.mubr.f32.gmra.mrb[0].mxu0 %v4964
  %v4966 = vpop.f32.mrb[0].mxu0
  %v4967 = vadd.f32 %v4795, %v4966
  %v4968 = vpop.f32.mrb[0].mxu0
  %4969 = vdwg.mxu0
  %4970 = vmatprep.subr.mxu0 0.0
  %v4971 = vand.u32 %v4786, 4294901760
  %v4972 = vsub.f32 %v4786, %v4971
  %v4973 = vand.u32 %v4972, 4294901760
  %v4974 = vsub.f32 %v4972, %v4973
  %v4975 = vand.u32 %v4974, 4294901760
  %4976 = vmatpush1.msra.mxu0 %v4975
  %4977 = vmatprep.subr.mxu0 0.0
  %v4978 = vand.u32 %v4787, 4294901760
  %v4979 = vsub.f32 %v4787, %v4978
  %v4980 = vand.u32 %v4979, 4294901760
  %v4981 = vsub.f32 %v4979, %v4980
  %v4982 = vand.u32 %v4981, 4294901760
  %4983 = vmatpush1.msra.mxu0 %v4982
  %4984 = vmatprep.subr.mxu0 0.0
  %v4985 = vand.u32 %v4788, 4294901760
  %v4986 = vsub.f32 %v4788, %v4985
  %v4987 = vand.u32 %v4986, 4294901760
  %v4988 = vsub.f32 %v4986, %v4987
  %v4989 = vand.u32 %v4988, 4294901760
  %4990 = vmatpush1.msra.mxu0 %v4989
  %4991 = vmatprep.subr.mxu0 0.0
  %v4992 = vand.u32 %v4789, 4294901760
  %v4993 = vsub.f32 %v4789, %v4992
  %v4994 = vand.u32 %v4993, 4294901760
  %v4995 = vsub.f32 %v4993, %v4994
  %v4996 = vand.u32 %v4995, 4294901760
  %4997 = vmatpush1.msra.mxu0 %v4996
  %4998 = vmatprep.subr.mxu0 0.0
  %4999 = vmatpush1.msra.mxu0 0.0
  %5000 = vmatprep.subr.mxu0 0.0
  %5001 = vmatpush1.msra.mxu0 0.0
  %5002 = vmatprep.subr.mxu0 0.0
  %5003 = vmatpush1.msra.mxu0 0.0
  %5004 = vmatprep.subr.mxu0 0.0
  %5005 = vmatpush1.msra.mxu0 0.0
  %5006 = vmatprep.subr.mxu0 0.0
  %5007 = vmatpush1.msra.mxu0 0.0
  %5008 = vmatprep.subr.mxu0 0.0
  %5009 = vmatpush1.msra.mxu0 0.0
  %5010 = vmatprep.subr.mxu0 0.0
  %5011 = vmatpush1.msra.mxu0 0.0
  %5012 = vmatprep.subr.mxu0 0.0
  %5013 = vmatpush1.msra.mxu0 0.0
  %5014 = vmatprep.subr.mxu0 0.0
  %5015 = vmatpush1.msra.mxu0 0.0
  %5016 = vmatprep.subr.mxu0 0.0
  %5017 = vmatpush1.msra.mxu0 0.0
  %5018 = vmatprep.subr.mxu0 0.0
  %5019 = vmatpush1.msra.mxu0 0.0
  %5020 = vmatprep.subr.mxu0 0.0
  %5021 = vmatpush1.msra.mxu0 0.0
  %5022 = vmatprep.subr.mxu0 0.0
  %5023 = vmatpush1.msra.mxu0 0.0
  %5024 = vmatprep.subr.mxu0 0.0
  %5025 = vmatpush1.msra.mxu0 0.0
  %5026 = vmatprep.subr.mxu0 0.0
  %5027 = vmatpush1.msra.mxu0 0.0
  %5028 = vmatprep.subr.mxu0 0.0
  %5029 = vmatpush1.msra.mxu0 0.0
  %5030 = vmatprep.subr.mxu0 0.0
  %5031 = vmatpush1.msra.mxu0 0.0
  %5032 = vmatprep.subr.mxu0 0.0
  %5033 = vmatpush1.msra.mxu0 0.0
  %5034 = vmatprep.subr.mxu0 0.0
  %5035 = vmatpush1.msra.mxu0 0.0
  %5036 = vmatprep.subr.mxu0 0.0
  %5037 = vmatpush1.msra.mxu0 0.0
  %5038 = vmatprep.subr.mxu0 0.0
  %5039 = vmatpush1.msra.mxu0 0.0
  %5040 = vmatprep.subr.mxu0 0.0
  %5041 = vmatpush1.msra.mxu0 0.0
  %5042 = vmatprep.subr.mxu0 0.0
  %5043 = vmatpush1.msra.mxu0 0.0
  %5044 = vmatprep.subr.mxu0 0.0
  %5045 = vmatpush1.msra.mxu0 0.0
  %5046 = vmatprep.subr.mxu0 0.0
  %5047 = vmatpush1.msra.mxu0 0.0
  %5048 = vmatprep.subr.mxu0 0.0
  %5049 = vmatpush1.msra.mxu0 0.0
  %5050 = vmatprep.subr.mxu0 0.0
  %5051 = vmatpush1.msra.mxu0 0.0
  %5052 = vmatprep.subr.mxu0 0.0
  %5053 = vmatpush1.msra.mxu0 0.0
  %5054 = vmatprep.mubr.f32.mxu0 0.0
  %v5055 = vand.u32 %v4798, 4294901760
  %5056 = vmatmul.mubr.f32.gmra.mrb[0].mxu0 %v5055
  %v5057 = vpop.f32.mrb[0].mxu0
  %v5058 = vadd.f32 %v4897, %v5057
  %v5059 = vpop.f32.mrb[0].mxu0
  %5060 = vmatprep.mubr.f32.mxu0 0.0
  %v5061 = vand.u32 %v4801, 4294901760
  %5062 = vmatmul.mubr.f32.gmra.mrb[0].mxu0 %v5061
  %v5063 = vpop.f32.mrb[0].mxu0
  %v5064 = vadd.f32 %v4907, %v5063
  %v5065 = vpop.f32.mrb[0].mxu0
  %5066 = vmatprep.mubr.f32.mxu0 0.0
  %v5067 = vand.u32 %v4804, 4294901760
  %5068 = vmatmul.mubr.f32.gmra.mrb[0].mxu0 %v5067
  %v5069 = vpop.f32.mrb[0].mxu0
  %v5070 = vadd.f32 %v4917, %v5069
  %v5071 = vpop.f32.mrb[0].mxu0
  %5072 = vmatprep.mubr.f32.mxu0 0.0
  %v5073 = vand.u32 %v4807, 4294901760
  %5074 = vmatmul.mubr.f32.gmra.mrb[0].mxu0 %v5073
  %v5075 = vpop.f32.mrb[0].mxu0
  %v5076 = vadd.f32 %v4927, %v5075
  %v5077 = vpop.f32.mrb[0].mxu0
  %5078 = vmatprep.mubr.f32.mxu0 0.0
  %v5079 = vand.u32 %v4810, 4294901760
  %5080 = vmatmul.mubr.f32.gmra.mrb[0].mxu0 %v5079
  %v5081 = vpop.f32.mrb[0].mxu0
  %v5082 = vadd.f32 %v4937, %v5081
  %v5083 = vpop.f32.mrb[0].mxu0
  %5084 = vmatprep.mubr.f32.mxu0 0.0
  %v5085 = vand.u32 %v4813, 4294901760
  %5086 = vmatmul.mubr.f32.gmra.mrb[0].mxu0 %v5085
  %v5087 = vpop.f32.mrb[0].mxu0
  %v5088 = vadd.f32 %v4947, %v5087
  %v5089 = vpop.f32.mrb[0].mxu0
  %5090 = vmatprep.mubr.f32.mxu0 0.0
  %v5091 = vand.u32 %v4816, 4294901760
  %5092 = vmatmul.mubr.f32.gmra.mrb[0].mxu0 %v5091
  %v5093 = vpop.f32.mrb[0].mxu0
  %v5094 = vadd.f32 %v4957, %v5093
  %v5095 = vpop.f32.mrb[0].mxu0
  %5096 = vmatprep.mubr.f32.mxu0 0.0
  %v5097 = vand.u32 %v4819, 4294901760
  %5098 = vmatmul.mubr.f32.gmra.mrb[0].mxu0 %v5097
  %v5099 = vpop.f32.mrb[0].mxu0
  %v5100 = vadd.f32 %v4967, %v5099
  %v5101 = vpop.f32.mrb[0].mxu0
  %5102 = vdwg.mxu0
  %5103 = vmatprep.subr.mxu0 0.0
  %v5104 = vand.u32 %v4786, 4294901760
  %v5105 = vsub.f32 %v4786, %v5104
  %5106 = vmatpush1.msra.mxu0 %v5105
  %5107 = vmatprep.subr.mxu0 0.0
  %v5108 = vand.u32 %v4787, 4294901760
  %v5109 = vsub.f32 %v4787, %v5108
  %5110 = vmatpush1.msra.mxu0 %v5109
  %5111 = vmatprep.subr.mxu0 0.0
  %v5112 = vand.u32 %v4788, 4294901760
  %v5113 = vsub.f32 %v4788, %v5112
  %5114 = vmatpush1.msra.mxu0 %v5113
  %5115 = vmatprep.subr.mxu0 0.0
  %v5116 = vand.u32 %v4789, 4294901760
  %v5117 = vsub.f32 %v4789, %v5116
  %5118 = vmatpush1.msra.mxu0 %v5117
  %5119 = vmatprep.subr.mxu0 0.0
  %5120 = vmatpush1.msra.mxu0 0.0
  %5121 = vmatprep.subr.mxu0 0.0
  %5122 = vmatpush1.msra.mxu0 0.0
  %5123 = vmatprep.subr.mxu0 0.0
  %5124 = vmatpush1.msra.mxu0 0.0
  %5125 = vmatprep.subr.mxu0 0.0
  %5126 = vmatpush1.msra.mxu0 0.0
  %5127 = vmatprep.subr.mxu0 0.0
  %5128 = vmatpush1.msra.mxu0 0.0
  %5129 = vmatprep.subr.mxu0 0.0
  %5130 = vmatpush1.msra.mxu0 0.0
  %5131 = vmatprep.subr.mxu0 0.0
  %5132 = vmatpush1.msra.mxu0 0.0
  %5133 = vmatprep.subr.mxu0 0.0
  %5134 = vmatpush1.msra.mxu0 0.0
  %5135 = vmatprep.subr.mxu0 0.0
  %5136 = vmatpush1.msra.mxu0 0.0
  %5137 = vmatprep.subr.mxu0 0.0
  %5138 = vmatpush1.msra.mxu0 0.0
  %5139 = vmatprep.subr.mxu0 0.0
  %5140 = vmatpush1.msra.mxu0 0.0
  %5141 = vmatprep.subr.mxu0 0.0
  %5142 = vmatpush1.msra.mxu0 0.0
  %5143 = vmatprep.subr.mxu0 0.0
  %5144 = vmatpush1.msra.mxu0 0.0
  %5145 = vmatprep.subr.mxu0 0.0
  %5146 = vmatpush1.msra.mxu0 0.0
  %5147 = vmatprep.subr.mxu0 0.0
  %5148 = vmatpush1.msra.mxu0 0.0
  %5149 = vmatprep.subr.mxu0 0.0
  %5150 = vmatpush1.msra.mxu0 0.0
  %5151 = vmatprep.subr.mxu0 0.0
  %5152 = vmatpush1.msra.mxu0 0.0
  %5153 = vmatprep.subr.mxu0 0.0
  %5154 = vmatpush1.msra.mxu0 0.0
  %5155 = vmatprep.subr.mxu0 0.0
  %5156 = vmatpush1.msra.mxu0 0.0
  %5157 = vmatprep.subr.mxu0 0.0
  %5158 = vmatpush1.msra.mxu0 0.0
  %5159 = vmatprep.subr.mxu0 0.0
  %5160 = vmatpush1.msra.mxu0 0.0
  %5161 = vmatprep.subr.mxu0 0.0
  %5162 = vmatpush1.msra.mxu0 0.0
  %5163 = vmatprep.subr.mxu0 0.0
  %5164 = vmatpush1.msra.mxu0 0.0
  %5165 = vmatprep.subr.mxu0 0.0
  %5166 = vmatpush1.msra.mxu0 0.0
  %5167 = vmatprep.subr.mxu0 0.0
  %5168 = vmatpush1.msra.mxu0 0.0
  %5169 = vmatprep.subr.mxu0 0.0
  %5170 = vmatpush1.msra.mxu0 0.0
  %5171 = vmatprep.subr.mxu0 0.0
  %5172 = vmatpush1.msra.mxu0 0.0
  %5173 = vmatprep.subr.mxu0 0.0
  %5174 = vmatpush1.msra.mxu0 0.0
  %5175 = vmatprep.mubr.f32.mxu0 0.0
  %v5176 = vand.u32 %v4798, 4294901760
  %v5177 = vsub.f32 %v4798, %v5176
  %5178 = vmatmul.mubr.f32.gmra.mrb[0].mxu0 %v5177
  %v5179 = vpop.f32.mrb[0].mxu0
  %v5180 = vadd.f32 %v5058, %v5179
  %v5181 = vpop.f32.mrb[0].mxu0
  %5182 = vmatprep.mubr.f32.mxu0 0.0
  %v5183 = vand.u32 %v4801, 4294901760
  %v5184 = vsub.f32 %v4801, %v5183
  %5185 = vmatmul.mubr.f32.gmra.mrb[0].mxu0 %v5184
  %v5186 = vpop.f32.mrb[0].mxu0
  %v5187 = vadd.f32 %v5064, %v5186
  %v5188 = vpop.f32.mrb[0].mxu0
  %5189 = vmatprep.mubr.f32.mxu0 0.0
  %v5190 = vand.u32 %v4804, 4294901760
  %v5191 = vsub.f32 %v4804, %v5190
  %5192 = vmatmul.mubr.f32.gmra.mrb[0].mxu0 %v5191
  %v5193 = vpop.f32.mrb[0].mxu0
  %v5194 = vadd.f32 %v5070, %v5193
  %v5195 = vpop.f32.mrb[0].mxu0
  %5196 = vmatprep.mubr.f32.mxu0 0.0
  %v5197 = vand.u32 %v4807, 4294901760
  %v5198 = vsub.f32 %v4807, %v5197
  %5199 = vmatmul.mubr.f32.gmra.mrb[0].mxu0 %v5198
  %v5200 = vpop.f32.mrb[0].mxu0
  %v5201 = vadd.f32 %v5076, %v5200
  %v5202 = vpop.f32.mrb[0].mxu0
  %5203 = vmatprep.mubr.f32.mxu0 0.0
  %v5204 = vand.u32 %v4810, 4294901760
  %v5205 = vsub.f32 %v4810, %v5204
  %5206 = vmatmul.mubr.f32.gmra.mrb[0].mxu0 %v5205
  %v5207 = vpop.f32.mrb[0].mxu0
  %v5208 = vadd.f32 %v5082, %v5207
  %v5209 = vpop.f32.mrb[0].mxu0
  %5210 = vmatprep.mubr.f32.mxu0 0.0
  %v5211 = vand.u32 %v4813, 4294901760
  %v5212 = vsub.f32 %v4813, %v5211
  %5213 = vmatmul.mubr.f32.gmra.mrb[0].mxu0 %v5212
  %v5214 = vpop.f32.mrb[0].mxu0
  %v5215 = vadd.f32 %v5088, %v5214
  %v5216 = vpop.f32.mrb[0].mxu0
  %5217 = vmatprep.mubr.f32.mxu0 0.0
  %v5218 = vand.u32 %v4816, 4294901760
  %v5219 = vsub.f32 %v4816, %v5218
  %5220 = vmatmul.mubr.f32.gmra.mrb[0].mxu0 %v5219
  %v5221 = vpop.f32.mrb[0].mxu0
  %v5222 = vadd.f32 %v5094, %v5221
  %v5223 = vpop.f32.mrb[0].mxu0
  %5224 = vmatprep.mubr.f32.mxu0 0.0
  %v5225 = vand.u32 %v4819, 4294901760
  %v5226 = vsub.f32 %v4819, %v5225
  %5227 = vmatmul.mubr.f32.gmra.mrb[0].mxu0 %v5226
  %v5228 = vpop.f32.mrb[0].mxu0
  %v5229 = vadd.f32 %v5100, %v5228
  %v5230 = vpop.f32.mrb[0].mxu0
  %5231 = vdwg.mxu0
  %5232 = vmatprep.subr.mxu0 0.0
  %v5233 = vand.u32 %v4786, 4294901760
  %5234 = vmatpush1.msra.mxu0 %v5233
  %5235 = vmatprep.subr.mxu0 0.0
  %v5236 = vand.u32 %v4787, 4294901760
  %5237 = vmatpush1.msra.mxu0 %v5236
  %5238 = vmatprep.subr.mxu0 0.0
  %v5239 = vand.u32 %v4788, 4294901760
  %5240 = vmatpush1.msra.mxu0 %v5239
  %5241 = vmatprep.subr.mxu0 0.0
  %v5242 = vand.u32 %v4789, 4294901760
  %5243 = vmatpush1.msra.mxu0 %v5242
  %5244 = vmatprep.subr.mxu0 0.0
  %5245 = vmatpush1.msra.mxu0 0.0
  %5246 = vmatprep.subr.mxu0 0.0
  %5247 = vmatpush1.msra.mxu0 0.0
  %5248 = vmatprep.subr.mxu0 0.0
  %5249 = vmatpush1.msra.mxu0 0.0
  %5250 = vmatprep.subr.mxu0 0.0
  %5251 = vmatpush1.msra.mxu0 0.0
  %5252 = vmatprep.subr.mxu0 0.0
  %5253 = vmatpush1.msra.mxu0 0.0
  %5254 = vmatprep.subr.mxu0 0.0
  %5255 = vmatpush1.msra.mxu0 0.0
  %5256 = vmatprep.subr.mxu0 0.0
  %5257 = vmatpush1.msra.mxu0 0.0
  %5258 = vmatprep.subr.mxu0 0.0
  %5259 = vmatpush1.msra.mxu0 0.0
  %5260 = vmatprep.subr.mxu0 0.0
  %5261 = vmatpush1.msra.mxu0 0.0
  %5262 = vmatprep.subr.mxu0 0.0
  %5263 = vmatpush1.msra.mxu0 0.0
  %5264 = vmatprep.subr.mxu0 0.0
  %5265 = vmatpush1.msra.mxu0 0.0
  %5266 = vmatprep.subr.mxu0 0.0
  %5267 = vmatpush1.msra.mxu0 0.0
  %5268 = vmatprep.subr.mxu0 0.0
  %5269 = vmatpush1.msra.mxu0 0.0
  %5270 = vmatprep.subr.mxu0 0.0
  %5271 = vmatpush1.msra.mxu0 0.0
  %5272 = vmatprep.subr.mxu0 0.0
  %5273 = vmatpush1.msra.mxu0 0.0
  %5274 = vmatprep.subr.mxu0 0.0
  %5275 = vmatpush1.msra.mxu0 0.0
  %5276 = vmatprep.subr.mxu0 0.0
  %5277 = vmatpush1.msra.mxu0 0.0
  %5278 = vmatprep.subr.mxu0 0.0
  %5279 = vmatpush1.msra.mxu0 0.0
  %5280 = vmatprep.subr.mxu0 0.0
  %5281 = vmatpush1.msra.mxu0 0.0
  %5282 = vmatprep.subr.mxu0 0.0
  %5283 = vmatpush1.msra.mxu0 0.0
  %5284 = vmatprep.subr.mxu0 0.0
  %5285 = vmatpush1.msra.mxu0 0.0
  %5286 = vmatprep.subr.mxu0 0.0
  %5287 = vmatpush1.msra.mxu0 0.0
  %5288 = vmatprep.subr.mxu0 0.0
  %5289 = vmatpush1.msra.mxu0 0.0
  %5290 = vmatprep.subr.mxu0 0.0
  %5291 = vmatpush1.msra.mxu0 0.0
  %5292 = vmatprep.subr.mxu0 0.0
  %5293 = vmatpush1.msra.mxu0 0.0
  %5294 = vmatprep.subr.mxu0 0.0
  %5295 = vmatpush1.msra.mxu0 0.0
  %5296 = vmatprep.subr.mxu0 0.0
  %5297 = vmatpush1.msra.mxu0 0.0
  %5298 = vmatprep.subr.mxu0 0.0
  %5299 = vmatpush1.msra.mxu0 0.0
  %5300 = vmatprep.mubr.f32.mxu0 0.0
  %v5301 = vand.u32 %v4798, 4294901760
  %v5302 = vsub.f32 %v4798, %v5301
  %v5303 = vand.u32 %v5302, 4294901760
  %5304 = vmatmul.mubr.f32.gmra.mrb[0].mxu0 %v5303
  %v5305 = vpop.f32.mrb[0].mxu0
  %v5306 = vadd.f32 %v5180, %v5305
  %v5307 = vpop.f32.mrb[0].mxu0
  %5308 = vmatprep.mubr.f32.mxu0 0.0
  %v5309 = vand.u32 %v4801, 4294901760
  %v5310 = vsub.f32 %v4801, %v5309
  %v5311 = vand.u32 %v5310, 4294901760
  %5312 = vmatmul.mubr.f32.gmra.mrb[0].mxu0 %v5311
  %v5313 = vpop.f32.mrb[0].mxu0
  %v5314 = vadd.f32 %v5187, %v5313
  %v5315 = vpop.f32.mrb[0].mxu0
  %5316 = vmatprep.mubr.f32.mxu0 0.0
  %v5317 = vand.u32 %v4804, 4294901760
  %v5318 = vsub.f32 %v4804, %v5317
  %v5319 = vand.u32 %v5318, 4294901760
  %5320 = vmatmul.mubr.f32.gmra.mrb[0].mxu0 %v5319
  %v5321 = vpop.f32.mrb[0].mxu0
  %v5322 = vadd.f32 %v5194, %v5321
  %v5323 = vpop.f32.mrb[0].mxu0
  %5324 = vmatprep.mubr.f32.mxu0 0.0
  %v5325 = vand.u32 %v4807, 4294901760
  %v5326 = vsub.f32 %v4807, %v5325
  %v5327 = vand.u32 %v5326, 4294901760
  %5328 = vmatmul.mubr.f32.gmra.mrb[0].mxu0 %v5327
  %v5329 = vpop.f32.mrb[0].mxu0
  %v5330 = vadd.f32 %v5201, %v5329
  %v5331 = vpop.f32.mrb[0].mxu0
  %5332 = vmatprep.mubr.f32.mxu0 0.0
  %v5333 = vand.u32 %v4810, 4294901760
  %v5334 = vsub.f32 %v4810, %v5333
  %v5335 = vand.u32 %v5334, 4294901760
  %5336 = vmatmul.mubr.f32.gmra.mrb[0].mxu0 %v5335
  %v5337 = vpop.f32.mrb[0].mxu0
  %v5338 = vadd.f32 %v5208, %v5337
  %v5339 = vpop.f32.mrb[0].mxu0
  %5340 = vmatprep.mubr.f32.mxu0 0.0
  %v5341 = vand.u32 %v4813, 4294901760
  %v5342 = vsub.f32 %v4813, %v5341
  %v5343 = vand.u32 %v5342, 4294901760
  %5344 = vmatmul.mubr.f32.gmra.mrb[0].mxu0 %v5343
  %v5345 = vpop.f32.mrb[0].mxu0
  %v5346 = vadd.f32 %v5215, %v5345
  %v5347 = vpop.f32.mrb[0].mxu0
  %5348 = vmatprep.mubr.f32.mxu0 0.0
  %v5349 = vand.u32 %v4816, 4294901760
  %v5350 = vsub.f32 %v4816, %v5349
  %v5351 = vand.u32 %v5350, 4294901760
  %5352 = vmatmul.mubr.f32.gmra.mrb[0].mxu0 %v5351
  %v5353 = vpop.f32.mrb[0].mxu0
  %v5354 = vadd.f32 %v5222, %v5353
  %v5355 = vpop.f32.mrb[0].mxu0
  %5356 = vmatprep.mubr.f32.mxu0 0.0
  %v5357 = vand.u32 %v4819, 4294901760
  %v5358 = vsub.f32 %v4819, %v5357
  %v5359 = vand.u32 %v5358, 4294901760
  %5360 = vmatmul.mubr.f32.gmra.mrb[0].mxu0 %v5359
  %v5361 = vpop.f32.mrb[0].mxu0
  %v5362 = vadd.f32 %v5229, %v5361
  %v5363 = vpop.f32.mrb[0].mxu0
  %5364 = vdwg.mxu0
  %5365 = vmatprep.subr.mxu0 0.0
  %v5366 = vand.u32 %v4786, 4294901760
  %v5367 = vsub.f32 %v4786, %v5366
  %v5368 = vand.u32 %v5367, 4294901760
  %5369 = vmatpush1.msra.mxu0 %v5368
  %5370 = vmatprep.subr.mxu0 0.0
  %v5371 = vand.u32 %v4787, 4294901760
  %v5372 = vsub.f32 %v4787, %v5371
  %v5373 = vand.u32 %v5372, 4294901760
  %5374 = vmatpush1.msra.mxu0 %v5373
  %5375 = vmatprep.subr.mxu0 0.0
  %v5376 = vand.u32 %v4788, 4294901760
  %v5377 = vsub.f32 %v4788, %v5376
  %v5378 = vand.u32 %v5377, 4294901760
  %5379 = vmatpush1.msra.mxu0 %v5378
  %5380 = vmatprep.subr.mxu0 0.0
  %v5381 = vand.u32 %v4789, 4294901760
  %v5382 = vsub.f32 %v4789, %v5381
  %v5383 = vand.u32 %v5382, 4294901760
  %5384 = vmatpush1.msra.mxu0 %v5383
  %5385 = vmatprep.subr.mxu0 0.0
  %5386 = vmatpush1.msra.mxu0 0.0
  %5387 = vmatprep.subr.mxu0 0.0
  %5388 = vmatpush1.msra.mxu0 0.0
  %5389 = vmatprep.subr.mxu0 0.0
  %5390 = vmatpush1.msra.mxu0 0.0
  %5391 = vmatprep.subr.mxu0 0.0
  %5392 = vmatpush1.msra.mxu0 0.0
  %5393 = vmatprep.subr.mxu0 0.0
  %5394 = vmatpush1.msra.mxu0 0.0
  %5395 = vmatprep.subr.mxu0 0.0
  %5396 = vmatpush1.msra.mxu0 0.0
  %5397 = vmatprep.subr.mxu0 0.0
  %5398 = vmatpush1.msra.mxu0 0.0
  %5399 = vmatprep.subr.mxu0 0.0
  %5400 = vmatpush1.msra.mxu0 0.0
  %5401 = vmatprep.subr.mxu0 0.0
  %5402 = vmatpush1.msra.mxu0 0.0
  %5403 = vmatprep.subr.mxu0 0.0
  %5404 = vmatpush1.msra.mxu0 0.0
  %5405 = vmatprep.subr.mxu0 0.0
  %5406 = vmatpush1.msra.mxu0 0.0
  %5407 = vmatprep.subr.mxu0 0.0
  %5408 = vmatpush1.msra.mxu0 0.0
  %5409 = vmatprep.subr.mxu0 0.0
  %5410 = vmatpush1.msra.mxu0 0.0
  %5411 = vmatprep.subr.mxu0 0.0
  %5412 = vmatpush1.msra.mxu0 0.0
  %5413 = vmatprep.subr.mxu0 0.0
  %5414 = vmatpush1.msra.mxu0 0.0
  %5415 = vmatprep.subr.mxu0 0.0
  %5416 = vmatpush1.msra.mxu0 0.0
  %5417 = vmatprep.subr.mxu0 0.0
  %5418 = vmatpush1.msra.mxu0 0.0
  %5419 = vmatprep.subr.mxu0 0.0
  %5420 = vmatpush1.msra.mxu0 0.0
  %5421 = vmatprep.subr.mxu0 0.0
  %5422 = vmatpush1.msra.mxu0 0.0
  %5423 = vmatprep.subr.mxu0 0.0
  %5424 = vmatpush1.msra.mxu0 0.0
  %5425 = vmatprep.subr.mxu0 0.0
  %5426 = vmatpush1.msra.mxu0 0.0
  %5427 = vmatprep.subr.mxu0 0.0
  %5428 = vmatpush1.msra.mxu0 0.0
  %5429 = vmatprep.subr.mxu0 0.0
  %5430 = vmatpush1.msra.mxu0 0.0
  %5431 = vmatprep.subr.mxu0 0.0
  %5432 = vmatpush1.msra.mxu0 0.0
  %5433 = vmatprep.subr.mxu0 0.0
  %5434 = vmatpush1.msra.mxu0 0.0
  %5435 = vmatprep.subr.mxu0 0.0
  %5436 = vmatpush1.msra.mxu0 0.0
  %5437 = vmatprep.subr.mxu0 0.0
  %5438 = vmatpush1.msra.mxu0 0.0
  %5439 = vmatprep.subr.mxu0 0.0
  %5440 = vmatpush1.msra.mxu0 0.0
  %5441 = vmatprep.mubr.f32.mxu0 0.0
  %v5442 = vand.u32 %v4798, 4294901760
  %5443 = vmatmul.mubr.f32.gmra.mrb[0].mxu0 %v5442
  %v5444 = vpop.f32.mrb[0].mxu0
  %v5445 = vadd.f32 %v5306, %v5444
  %v5446 = vpop.f32.mrb[0].mxu0
  %5447 = vmatprep.mubr.f32.mxu0 0.0
  %v5448 = vand.u32 %v4801, 4294901760
  %5449 = vmatmul.mubr.f32.gmra.mrb[0].mxu0 %v5448
  %v5450 = vpop.f32.mrb[0].mxu0
  %v5451 = vadd.f32 %v5314, %v5450
  %v5452 = vpop.f32.mrb[0].mxu0
  %5453 = vmatprep.mubr.f32.mxu0 0.0
  %v5454 = vand.u32 %v4804, 4294901760
  %5455 = vmatmul.mubr.f32.gmra.mrb[0].mxu0 %v5454
  %v5456 = vpop.f32.mrb[0].mxu0
  %v5457 = vadd.f32 %v5322, %v5456
  %v5458 = vpop.f32.mrb[0].mxu0
  %5459 = vmatprep.mubr.f32.mxu0 0.0
  %v5460 = vand.u32 %v4807, 4294901760
  %5461 = vmatmul.mubr.f32.gmra.mrb[0].mxu0 %v5460
  %v5462 = vpop.f32.mrb[0].mxu0
  %v5463 = vadd.f32 %v5330, %v5462
  %v5464 = vpop.f32.mrb[0].mxu0
  %5465 = vmatprep.mubr.f32.mxu0 0.0
  %v5466 = vand.u32 %v4810, 4294901760
  %5467 = vmatmul.mubr.f32.gmra.mrb[0].mxu0 %v5466
  %v5468 = vpop.f32.mrb[0].mxu0
  %v5469 = vadd.f32 %v5338, %v5468
  %v5470 = vpop.f32.mrb[0].mxu0
  %5471 = vmatprep.mubr.f32.mxu0 0.0
  %v5472 = vand.u32 %v4813, 4294901760
  %5473 = vmatmul.mubr.f32.gmra.mrb[0].mxu0 %v5472
  %v5474 = vpop.f32.mrb[0].mxu0
  %v5475 = vadd.f32 %v5346, %v5474
  %v5476 = vpop.f32.mrb[0].mxu0
  %5477 = vmatprep.mubr.f32.mxu0 0.0
  %v5478 = vand.u32 %v4816, 4294901760
  %5479 = vmatmul.mubr.f32.gmra.mrb[0].mxu0 %v5478
  %v5480 = vpop.f32.mrb[0].mxu0
  %v5481 = vadd.f32 %v5354, %v5480
  %v5482 = vpop.f32.mrb[0].mxu0
  %5483 = vmatprep.mubr.f32.mxu0 0.0
  %v5484 = vand.u32 %v4819, 4294901760
  %5485 = vmatmul.mubr.f32.gmra.mrb[0].mxu0 %v5484
  %v5486 = vpop.f32.mrb[0].mxu0
  %v5487 = vadd.f32 %v5362, %v5486
  %v5488 = vpop.f32.mrb[0].mxu0
  %5489 = vdwg.mxu0
  %5490 = vmatprep.subr.mxu0 0.0
  %v5491 = vand.u32 %v4786, 4294901760
  %5492 = vmatpush1.msra.mxu0 %v5491
  %5493 = vmatprep.subr.mxu0 0.0
  %v5494 = vand.u32 %v4787, 4294901760
  %5495 = vmatpush1.msra.mxu0 %v5494
  %5496 = vmatprep.subr.mxu0 0.0
  %v5497 = vand.u32 %v4788, 4294901760
  %5498 = vmatpush1.msra.mxu0 %v5497
  %5499 = vmatprep.subr.mxu0 0.0
  %v5500 = vand.u32 %v4789, 4294901760
  %5501 = vmatpush1.msra.mxu0 %v5500
  %5502 = vmatprep.subr.mxu0 0.0
  %5503 = vmatpush1.msra.mxu0 0.0
  %5504 = vmatprep.subr.mxu0 0.0
  %5505 = vmatpush1.msra.mxu0 0.0
  %5506 = vmatprep.subr.mxu0 0.0
  %5507 = vmatpush1.msra.mxu0 0.0
  %5508 = vmatprep.subr.mxu0 0.0
  %5509 = vmatpush1.msra.mxu0 0.0
  %5510 = vmatprep.subr.mxu0 0.0
  %5511 = vmatpush1.msra.mxu0 0.0
  %5512 = vmatprep.subr.mxu0 0.0
  %5513 = vmatpush1.msra.mxu0 0.0
  %5514 = vmatprep.subr.mxu0 0.0
  %5515 = vmatpush1.msra.mxu0 0.0
  %5516 = vmatprep.subr.mxu0 0.0
  %5517 = vmatpush1.msra.mxu0 0.0
  %5518 = vmatprep.subr.mxu0 0.0
  %5519 = vmatpush1.msra.mxu0 0.0
  %5520 = vmatprep.subr.mxu0 0.0
  %5521 = vmatpush1.msra.mxu0 0.0
  %5522 = vmatprep.subr.mxu0 0.0
  %5523 = vmatpush1.msra.mxu0 0.0
  %5524 = vmatprep.subr.mxu0 0.0
  %5525 = vmatpush1.msra.mxu0 0.0
  %5526 = vmatprep.subr.mxu0 0.0
  %5527 = vmatpush1.msra.mxu0 0.0
  %5528 = vmatprep.subr.mxu0 0.0
  %5529 = vmatpush1.msra.mxu0 0.0
  %5530 = vmatprep.subr.mxu0 0.0
  %5531 = vmatpush1.msra.mxu0 0.0
  %5532 = vmatprep.subr.mxu0 0.0
  %5533 = vmatpush1.msra.mxu0 0.0
  %5534 = vmatprep.subr.mxu0 0.0
  %5535 = vmatpush1.msra.mxu0 0.0
  %5536 = vmatprep.subr.mxu0 0.0
  %5537 = vmatpush1.msra.mxu0 0.0
  %5538 = vmatprep.subr.mxu0 0.0
  %5539 = vmatpush1.msra.mxu0 0.0
  %5540 = vmatprep.subr.mxu0 0.0
  %5541 = vmatpush1.msra.mxu0 0.0
  %5542 = vmatprep.subr.mxu0 0.0
  %5543 = vmatpush1.msra.mxu0 0.0
  %5544 = vmatprep.subr.mxu0 0.0
  %5545 = vmatpush1.msra.mxu0 0.0
  %5546 = vmatprep.subr.mxu0 0.0
  %5547 = vmatpush1.msra.mxu0 0.0
  %5548 = vmatprep.subr.mxu0 0.0
  %5549 = vmatpush1.msra.mxu0 0.0
  %5550 = vmatprep.subr.mxu0 0.0
  %5551 = vmatpush1.msra.mxu0 0.0
  %5552 = vmatprep.subr.mxu0 0.0
  %5553 = vmatpush1.msra.mxu0 0.0
  %5554 = vmatprep.subr.mxu0 0.0
  %5555 = vmatpush1.msra.mxu0 0.0
  %5556 = vmatprep.subr.mxu0 0.0
  %5557 = vmatpush1.msra.mxu0 0.0
  %5558 = vmatprep.mubr.f32.mxu0 0.0
  %v5559 = vand.u32 %v4798, 4294901760
  %5560 = vmatmul.mubr.f32.gmra.mrb[0].mxu0 %v5559
  %v5561 = vpop.f32.mrb[0].mxu0
  %v5562 = vadd.f32 %v5445, %v5561
  %v5563 = vpop.f32.mrb[0].mxu0
  %5564 = vmatprep.mubr.f32.mxu0 0.0
  %v5565 = vand.u32 %v4801, 4294901760
  %5566 = vmatmul.mubr.f32.gmra.mrb[0].mxu0 %v5565
  %v5567 = vpop.f32.mrb[0].mxu0
  %v5568 = vadd.f32 %v5451, %v5567
  %v5569 = vpop.f32.mrb[0].mxu0
  %5570 = vmatprep.mubr.f32.mxu0 0.0
  %v5571 = vand.u32 %v4804, 4294901760
  %5572 = vmatmul.mubr.f32.gmra.mrb[0].mxu0 %v5571
  %v5573 = vpop.f32.mrb[0].mxu0
  %v5574 = vadd.f32 %v5457, %v5573
  %v5575 = vpop.f32.mrb[0].mxu0
  %5576 = vmatprep.mubr.f32.mxu0 0.0
  %v5577 = vand.u32 %v4807, 4294901760
  %5578 = vmatmul.mubr.f32.gmra.mrb[0].mxu0 %v5577
  %v5579 = vpop.f32.mrb[0].mxu0
  %v5580 = vadd.f32 %v5463, %v5579
  %v5581 = vpop.f32.mrb[0].mxu0
  %5582 = vmatprep.mubr.f32.mxu0 0.0
  %v5583 = vand.u32 %v4810, 4294901760
  %5584 = vmatmul.mubr.f32.gmra.mrb[0].mxu0 %v5583
  %v5585 = vpop.f32.mrb[0].mxu0
  %v5586 = vadd.f32 %v5469, %v5585
  %v5587 = vpop.f32.mrb[0].mxu0
  %5588 = vmatprep.mubr.f32.mxu0 0.0
  %v5589 = vand.u32 %v4813, 4294901760
  %5590 = vmatmul.mubr.f32.gmra.mrb[0].mxu0 %v5589
  %v5591 = vpop.f32.mrb[0].mxu0
  %v5592 = vadd.f32 %v5475, %v5591
  %v5593 = vpop.f32.mrb[0].mxu0
  %5594 = vmatprep.mubr.f32.mxu0 0.0
  %v5595 = vand.u32 %v4816, 4294901760
  %5596 = vmatmul.mubr.f32.gmra.mrb[0].mxu0 %v5595
  %v5597 = vpop.f32.mrb[0].mxu0
  %v5598 = vadd.f32 %v5481, %v5597
  %v5599 = vpop.f32.mrb[0].mxu0
  %5600 = vmatprep.mubr.f32.mxu0 0.0
  %v5601 = vand.u32 %v4819, 4294901760
  %5602 = vmatmul.mubr.f32.gmra.mrb[0].mxu0 %v5601
  %v5603 = vpop.f32.mrb[0].mxu0
  %v5604 = vadd.f32 %v5487, %v5603
  %v5605 = vpop.f32.mrb[0].mxu0
  %5606 = vdwg.mxu0
  %v5607 = vld [vmem:[%s6] sm:$0xff]
  %v5608 = vld [vmem:[%s6 + $0x8] sm:$0xff]
  %v5609 = vld [vmem:[%s6 + $0x10] sm:$0xff]
  %v5610 = vld [vmem:[%s6 + $0x18] sm:$0xff]
  %v5611 = vld [vmem:[%s5] sm:$0xff]
  %v5613 = vsel %vm857, %v5611, 0
  %5615 = vmatprep.subr.mxu0 0.0
  %v5616 = vand.u32 %v5607, 4294901760
  %5617 = vmatpush1.msra.mxu0 %v5616
  %5618 = vmatprep.subr.mxu0 0.0
  %v5619 = vand.u32 %v5608, 4294901760
  %5620 = vmatpush1.msra.mxu0 %v5619
  %5621 = vmatprep.subr.mxu0 0.0
  %v5622 = vand.u32 %v5609, 4294901760
  %5623 = vmatpush1.msra.mxu0 %v5622
  %5624 = vmatprep.subr.mxu0 0.0
  %v5625 = vand.u32 %v5610, 4294901760
  %5626 = vmatpush1.msra.mxu0 %v5625
  %5627 = vmatprep.subr.mxu0 0.0
  %5628 = vmatpush1.msra.mxu0 0.0
  %5629 = vmatprep.subr.mxu0 0.0
  %5630 = vmatpush1.msra.mxu0 0.0
  %5631 = vmatprep.subr.mxu0 0.0
  %5632 = vmatpush1.msra.mxu0 0.0
  %5633 = vmatprep.subr.mxu0 0.0
  %5634 = vmatpush1.msra.mxu0 0.0
  %5635 = vmatprep.subr.mxu0 0.0
  %5636 = vmatpush1.msra.mxu0 0.0
  %5637 = vmatprep.subr.mxu0 0.0
  %5638 = vmatpush1.msra.mxu0 0.0
  %5639 = vmatprep.subr.mxu0 0.0
  %5640 = vmatpush1.msra.mxu0 0.0
  %5641 = vmatprep.subr.mxu0 0.0
  %5642 = vmatpush1.msra.mxu0 0.0
  %5643 = vmatprep.subr.mxu0 0.0
  %5644 = vmatpush1.msra.mxu0 0.0
  %5645 = vmatprep.subr.mxu0 0.0
  %5646 = vmatpush1.msra.mxu0 0.0
  %5647 = vmatprep.subr.mxu0 0.0
  %5648 = vmatpush1.msra.mxu0 0.0
  %5649 = vmatprep.subr.mxu0 0.0
  %5650 = vmatpush1.msra.mxu0 0.0
  %5651 = vmatprep.subr.mxu0 0.0
  %5652 = vmatpush1.msra.mxu0 0.0
  %5653 = vmatprep.subr.mxu0 0.0
  %5654 = vmatpush1.msra.mxu0 0.0
  %5655 = vmatprep.subr.mxu0 0.0
  %5656 = vmatpush1.msra.mxu0 0.0
  %5657 = vmatprep.subr.mxu0 0.0
  %5658 = vmatpush1.msra.mxu0 0.0
  %5659 = vmatprep.subr.mxu0 0.0
  %5660 = vmatpush1.msra.mxu0 0.0
  %5661 = vmatprep.subr.mxu0 0.0
  %5662 = vmatpush1.msra.mxu0 0.0
  %5663 = vmatprep.subr.mxu0 0.0
  %5664 = vmatpush1.msra.mxu0 0.0
  %5665 = vmatprep.subr.mxu0 0.0
  %5666 = vmatpush1.msra.mxu0 0.0
  %5667 = vmatprep.subr.mxu0 0.0
  %5668 = vmatpush1.msra.mxu0 0.0
  %5669 = vmatprep.subr.mxu0 0.0
  %5670 = vmatpush1.msra.mxu0 0.0
  %5671 = vmatprep.subr.mxu0 0.0
  %5672 = vmatpush1.msra.mxu0 0.0
  %5673 = vmatprep.subr.mxu0 0.0
  %5674 = vmatpush1.msra.mxu0 0.0
  %5675 = vmatprep.subr.mxu0 0.0
  %5676 = vmatpush1.msra.mxu0 0.0
  %5677 = vmatprep.subr.mxu0 0.0
  %5678 = vmatpush1.msra.mxu0 0.0
  %5679 = vmatprep.subr.mxu0 0.0
  %5680 = vmatpush1.msra.mxu0 0.0
  %5681 = vmatprep.subr.mxu0 0.0
  %5682 = vmatpush1.msra.mxu0 0.0
  %5683 = vmatprep.mubr.f32.mxu0 0.0
  %v5684 = vand.u32 %v5613, 4294901760
  %v5685 = vsub.f32 %v5613, %v5684
  %v5686 = vand.u32 %v5685, 4294901760
  %v5687 = vsub.f32 %v5685, %v5686
  %v5688 = vand.u32 %v5687, 4294901760
  %5689 = vmatmul.mubr.f32.gmra.mrb[0].mxu0 %v5688
  %v5690 = vpop.f32.mrb[0].mxu0
  %v5691 = vadd.f32 %v5562, %v5690
  %v5692 = vpop.f32.mrb[0].mxu0
  %5693 = vdwg.mxu0
  %5694 = vmatprep.subr.mxu0 0.0
  %v5695 = vand.u32 %v5607, 4294901760
  %v5696 = vsub.f32 %v5607, %v5695
  %v5697 = vand.u32 %v5696, 4294901760
  %v5698 = vsub.f32 %v5696, %v5697
  %v5699 = vand.u32 %v5698, 4294901760
  %5700 = vmatpush1.msra.mxu0 %v5699
  %5701 = vmatprep.subr.mxu0 0.0
  %v5702 = vand.u32 %v5608, 4294901760
  %v5703 = vsub.f32 %v5608, %v5702
  %v5704 = vand.u32 %v5703, 4294901760
  %v5705 = vsub.f32 %v5703, %v5704
  %v5706 = vand.u32 %v5705, 4294901760
  %5707 = vmatpush1.msra.mxu0 %v5706
  %5708 = vmatprep.subr.mxu0 0.0
  %v5709 = vand.u32 %v5609, 4294901760
  %v5710 = vsub.f32 %v5609, %v5709
  %v5711 = vand.u32 %v5710, 4294901760
  %v5712 = vsub.f32 %v5710, %v5711
  %v5713 = vand.u32 %v5712, 4294901760
  %5714 = vmatpush1.msra.mxu0 %v5713
  %5715 = vmatprep.subr.mxu0 0.0
  %v5716 = vand.u32 %v5610, 4294901760
  %v5717 = vsub.f32 %v5610, %v5716
  %v5718 = vand.u32 %v5717, 4294901760
  %v5719 = vsub.f32 %v5717, %v5718
  %v5720 = vand.u32 %v5719, 4294901760
  %5721 = vmatpush1.msra.mxu0 %v5720
  %5722 = vmatprep.subr.mxu0 0.0
  %5723 = vmatpush1.msra.mxu0 0.0
  %5724 = vmatprep.subr.mxu0 0.0
  %5725 = vmatpush1.msra.mxu0 0.0
  %5726 = vmatprep.subr.mxu0 0.0
  %5727 = vmatpush1.msra.mxu0 0.0
  %5728 = vmatprep.subr.mxu0 0.0
  %5729 = vmatpush1.msra.mxu0 0.0
  %5730 = vmatprep.subr.mxu0 0.0
  %5731 = vmatpush1.msra.mxu0 0.0
  %5732 = vmatprep.subr.mxu0 0.0
  %5733 = vmatpush1.msra.mxu0 0.0
  %5734 = vmatprep.subr.mxu0 0.0
  %5735 = vmatpush1.msra.mxu0 0.0
  %5736 = vmatprep.subr.mxu0 0.0
  %5737 = vmatpush1.msra.mxu0 0.0
  %5738 = vmatprep.subr.mxu0 0.0
  %5739 = vmatpush1.msra.mxu0 0.0
  %5740 = vmatprep.subr.mxu0 0.0
  %5741 = vmatpush1.msra.mxu0 0.0
  %5742 = vmatprep.subr.mxu0 0.0
  %5743 = vmatpush1.msra.mxu0 0.0
  %5744 = vmatprep.subr.mxu0 0.0
  %5745 = vmatpush1.msra.mxu0 0.0
  %5746 = vmatprep.subr.mxu0 0.0
  %5747 = vmatpush1.msra.mxu0 0.0
  %5748 = vmatprep.subr.mxu0 0.0
  %5749 = vmatpush1.msra.mxu0 0.0
  %5750 = vmatprep.subr.mxu0 0.0
  %5751 = vmatpush1.msra.mxu0 0.0
  %5752 = vmatprep.subr.mxu0 0.0
  %5753 = vmatpush1.msra.mxu0 0.0
  %5754 = vmatprep.subr.mxu0 0.0
  %5755 = vmatpush1.msra.mxu0 0.0
  %5756 = vmatprep.subr.mxu0 0.0
  %5757 = vmatpush1.msra.mxu0 0.0
  %5758 = vmatprep.subr.mxu0 0.0
  %5759 = vmatpush1.msra.mxu0 0.0
  %5760 = vmatprep.subr.mxu0 0.0
  %5761 = vmatpush1.msra.mxu0 0.0
  %5762 = vmatprep.subr.mxu0 0.0
  %5763 = vmatpush1.msra.mxu0 0.0
  %5764 = vmatprep.subr.mxu0 0.0
  %5765 = vmatpush1.msra.mxu0 0.0
  %5766 = vmatprep.subr.mxu0 0.0
  %5767 = vmatpush1.msra.mxu0 0.0
  %5768 = vmatprep.subr.mxu0 0.0
  %5769 = vmatpush1.msra.mxu0 0.0
  %5770 = vmatprep.subr.mxu0 0.0
  %5771 = vmatpush1.msra.mxu0 0.0
  %5772 = vmatprep.subr.mxu0 0.0
  %5773 = vmatpush1.msra.mxu0 0.0
  %5774 = vmatprep.subr.mxu0 0.0
  %5775 = vmatpush1.msra.mxu0 0.0
  %5776 = vmatprep.subr.mxu0 0.0
  %5777 = vmatpush1.msra.mxu0 0.0
  %5778 = vmatprep.mubr.f32.mxu0 0.0
  %v5779 = vand.u32 %v5613, 4294901760
  %5780 = vmatmul.mubr.f32.gmra.mrb[0].mxu0 %v5779
  %v5781 = vpop.f32.mrb[0].mxu0
  %v5782 = vadd.f32 %v5691, %v5781
  %v5783 = vpop.f32.mrb[0].mxu0
  %5784 = vdwg.mxu0
  %5785 = vmatprep.subr.mxu0 0.0
  %v5786 = vand.u32 %v5607, 4294901760
  %v5787 = vsub.f32 %v5607, %v5786
  %5788 = vmatpush1.msra.mxu0 %v5787
  %5789 = vmatprep.subr.mxu0 0.0
  %v5790 = vand.u32 %v5608, 4294901760
  %v5791 = vsub.f32 %v5608, %v5790
  %5792 = vmatpush1.msra.mxu0 %v5791
  %5793 = vmatprep.subr.mxu0 0.0
  %v5794 = vand.u32 %v5609, 4294901760
  %v5795 = vsub.f32 %v5609, %v5794
  %5796 = vmatpush1.msra.mxu0 %v5795
  %5797 = vmatprep.subr.mxu0 0.0
  %v5798 = vand.u32 %v5610, 4294901760
  %v5799 = vsub.f32 %v5610, %v5798
  %5800 = vmatpush1.msra.mxu0 %v5799
  %5801 = vmatprep.subr.mxu0 0.0
  %5802 = vmatpush1.msra.mxu0 0.0
  %5803 = vmatprep.subr.mxu0 0.0
  %5804 = vmatpush1.msra.mxu0 0.0
  %5805 = vmatprep.subr.mxu0 0.0
  %5806 = vmatpush1.msra.mxu0 0.0
  %5807 = vmatprep.subr.mxu0 0.0
  %5808 = vmatpush1.msra.mxu0 0.0
  %5809 = vmatprep.subr.mxu0 0.0
  %5810 = vmatpush1.msra.mxu0 0.0
  %5811 = vmatprep.subr.mxu0 0.0
  %5812 = vmatpush1.msra.mxu0 0.0
  %5813 = vmatprep.subr.mxu0 0.0
  %5814 = vmatpush1.msra.mxu0 0.0
  %5815 = vmatprep.subr.mxu0 0.0
  %5816 = vmatpush1.msra.mxu0 0.0
  %5817 = vmatprep.subr.mxu0 0.0
  %5818 = vmatpush1.msra.mxu0 0.0
  %5819 = vmatprep.subr.mxu0 0.0
  %5820 = vmatpush1.msra.mxu0 0.0
  %5821 = vmatprep.subr.mxu0 0.0
  %5822 = vmatpush1.msra.mxu0 0.0
  %5823 = vmatprep.subr.mxu0 0.0
  %5824 = vmatpush1.msra.mxu0 0.0
  %5825 = vmatprep.subr.mxu0 0.0
  %5826 = vmatpush1.msra.mxu0 0.0
  %5827 = vmatprep.subr.mxu0 0.0
  %5828 = vmatpush1.msra.mxu0 0.0
  %5829 = vmatprep.subr.mxu0 0.0
  %5830 = vmatpush1.msra.mxu0 0.0
  %5831 = vmatprep.subr.mxu0 0.0
  %5832 = vmatpush1.msra.mxu0 0.0
  %5833 = vmatprep.subr.mxu0 0.0
  %5834 = vmatpush1.msra.mxu0 0.0
  %5835 = vmatprep.subr.mxu0 0.0
  %5836 = vmatpush1.msra.mxu0 0.0
  %5837 = vmatprep.subr.mxu0 0.0
  %5838 = vmatpush1.msra.mxu0 0.0
  %5839 = vmatprep.subr.mxu0 0.0
  %5840 = vmatpush1.msra.mxu0 0.0
  %5841 = vmatprep.subr.mxu0 0.0
  %5842 = vmatpush1.msra.mxu0 0.0
  %5843 = vmatprep.subr.mxu0 0.0
  %5844 = vmatpush1.msra.mxu0 0.0
  %5845 = vmatprep.subr.mxu0 0.0
  %5846 = vmatpush1.msra.mxu0 0.0
  %5847 = vmatprep.subr.mxu0 0.0
  %5848 = vmatpush1.msra.mxu0 0.0
  %5849 = vmatprep.subr.mxu0 0.0
  %5850 = vmatpush1.msra.mxu0 0.0
  %5851 = vmatprep.subr.mxu0 0.0
  %5852 = vmatpush1.msra.mxu0 0.0
  %5853 = vmatprep.subr.mxu0 0.0
  %5854 = vmatpush1.msra.mxu0 0.0
  %5855 = vmatprep.subr.mxu0 0.0
  %5856 = vmatpush1.msra.mxu0 0.0
  %5857 = vmatprep.mubr.f32.mxu0 0.0
  %v5858 = vand.u32 %v5613, 4294901760
  %v5859 = vsub.f32 %v5613, %v5858
  %5860 = vmatmul.mubr.f32.gmra.mrb[0].mxu0 %v5859
  %v5861 = vpop.f32.mrb[0].mxu0
  %v5862 = vadd.f32 %v5782, %v5861
  %v5863 = vpop.f32.mrb[0].mxu0
  %5864 = vdwg.mxu0
  %5865 = vmatprep.subr.mxu0 0.0
  %v5866 = vand.u32 %v5607, 4294901760
  %5867 = vmatpush1.msra.mxu0 %v5866
  %5868 = vmatprep.subr.mxu0 0.0
  %v5869 = vand.u32 %v5608, 4294901760
  %5870 = vmatpush1.msra.mxu0 %v5869
  %5871 = vmatprep.subr.mxu0 0.0
  %v5872 = vand.u32 %v5609, 4294901760
  %5873 = vmatpush1.msra.mxu0 %v5872
  %5874 = vmatprep.subr.mxu0 0.0
  %v5875 = vand.u32 %v5610, 4294901760
  %5876 = vmatpush1.msra.mxu0 %v5875
  %5877 = vmatprep.subr.mxu0 0.0
  %5878 = vmatpush1.msra.mxu0 0.0
  %5879 = vmatprep.subr.mxu0 0.0
  %5880 = vmatpush1.msra.mxu0 0.0
  %5881 = vmatprep.subr.mxu0 0.0
  %5882 = vmatpush1.msra.mxu0 0.0
  %5883 = vmatprep.subr.mxu0 0.0
  %5884 = vmatpush1.msra.mxu0 0.0
  %5885 = vmatprep.subr.mxu0 0.0
  %5886 = vmatpush1.msra.mxu0 0.0
  %5887 = vmatprep.subr.mxu0 0.0
  %5888 = vmatpush1.msra.mxu0 0.0
  %5889 = vmatprep.subr.mxu0 0.0
  %5890 = vmatpush1.msra.mxu0 0.0
  %5891 = vmatprep.subr.mxu0 0.0
  %5892 = vmatpush1.msra.mxu0 0.0
  %5893 = vmatprep.subr.mxu0 0.0
  %5894 = vmatpush1.msra.mxu0 0.0
  %5895 = vmatprep.subr.mxu0 0.0
  %5896 = vmatpush1.msra.mxu0 0.0
  %5897 = vmatprep.subr.mxu0 0.0
  %5898 = vmatpush1.msra.mxu0 0.0
  %5899 = vmatprep.subr.mxu0 0.0
  %5900 = vmatpush1.msra.mxu0 0.0
  %5901 = vmatprep.subr.mxu0 0.0
  %5902 = vmatpush1.msra.mxu0 0.0
  %5903 = vmatprep.subr.mxu0 0.0
  %5904 = vmatpush1.msra.mxu0 0.0
  %5905 = vmatprep.subr.mxu0 0.0
  %5906 = vmatpush1.msra.mxu0 0.0
  %5907 = vmatprep.subr.mxu0 0.0
  %5908 = vmatpush1.msra.mxu0 0.0
  %5909 = vmatprep.subr.mxu0 0.0
  %5910 = vmatpush1.msra.mxu0 0.0
  %5911 = vmatprep.subr.mxu0 0.0
  %5912 = vmatpush1.msra.mxu0 0.0
  %5913 = vmatprep.subr.mxu0 0.0
  %5914 = vmatpush1.msra.mxu0 0.0
  %5915 = vmatprep.subr.mxu0 0.0
  %5916 = vmatpush1.msra.mxu0 0.0
  %5917 = vmatprep.subr.mxu0 0.0
  %5918 = vmatpush1.msra.mxu0 0.0
  %5919 = vmatprep.subr.mxu0 0.0
  %5920 = vmatpush1.msra.mxu0 0.0
  %5921 = vmatprep.subr.mxu0 0.0
  %5922 = vmatpush1.msra.mxu0 0.0
  %5923 = vmatprep.subr.mxu0 0.0
  %5924 = vmatpush1.msra.mxu0 0.0
  %5925 = vmatprep.subr.mxu0 0.0
  %5926 = vmatpush1.msra.mxu0 0.0
  %5927 = vmatprep.subr.mxu0 0.0
  %5928 = vmatpush1.msra.mxu0 0.0
  %5929 = vmatprep.subr.mxu0 0.0
  %5930 = vmatpush1.msra.mxu0 0.0
  %5931 = vmatprep.subr.mxu0 0.0
  %5932 = vmatpush1.msra.mxu0 0.0
  %5933 = vmatprep.mubr.f32.mxu0 0.0
  %v5934 = vand.u32 %v5613, 4294901760
  %v5935 = vsub.f32 %v5613, %v5934
  %v5936 = vand.u32 %v5935, 4294901760
  %5937 = vmatmul.mubr.f32.gmra.mrb[0].mxu0 %v5936
  %v5938 = vpop.f32.mrb[0].mxu0
  %v5939 = vadd.f32 %v5862, %v5938
  %v5940 = vpop.f32.mrb[0].mxu0
  %5941 = vdwg.mxu0
  %5942 = vmatprep.subr.mxu0 0.0
  %v5943 = vand.u32 %v5607, 4294901760
  %v5944 = vsub.f32 %v5607, %v5943
  %v5945 = vand.u32 %v5944, 4294901760
  %5946 = vmatpush1.msra.mxu0 %v5945
  %5947 = vmatprep.subr.mxu0 0.0
  %v5948 = vand.u32 %v5608, 4294901760
  %v5949 = vsub.f32 %v5608, %v5948
  %v5950 = vand.u32 %v5949, 4294901760
  %5951 = vmatpush1.msra.mxu0 %v5950
  %5952 = vmatprep.subr.mxu0 0.0
  %v5953 = vand.u32 %v5609, 4294901760
  %v5954 = vsub.f32 %v5609, %v5953
  %v5955 = vand.u32 %v5954, 4294901760
  %5956 = vmatpush1.msra.mxu0 %v5955
  %5957 = vmatprep.subr.mxu0 0.0
  %v5958 = vand.u32 %v5610, 4294901760
  %v5959 = vsub.f32 %v5610, %v5958
  %v5960 = vand.u32 %v5959, 4294901760
  %5961 = vmatpush1.msra.mxu0 %v5960
  %5962 = vmatprep.subr.mxu0 0.0
  %5963 = vmatpush1.msra.mxu0 0.0
  %5964 = vmatprep.subr.mxu0 0.0
  %5965 = vmatpush1.msra.mxu0 0.0
  %5966 = vmatprep.subr.mxu0 0.0
  %5967 = vmatpush1.msra.mxu0 0.0
  %5968 = vmatprep.subr.mxu0 0.0
  %5969 = vmatpush1.msra.mxu0 0.0
  %5970 = vmatprep.subr.mxu0 0.0
  %5971 = vmatpush1.msra.mxu0 0.0
  %5972 = vmatprep.subr.mxu0 0.0
  %5973 = vmatpush1.msra.mxu0 0.0
  %5974 = vmatprep.subr.mxu0 0.0
  %5975 = vmatpush1.msra.mxu0 0.0
  %5976 = vmatprep.subr.mxu0 0.0
  %5977 = vmatpush1.msra.mxu0 0.0
  %5978 = vmatprep.subr.mxu0 0.0
  %5979 = vmatpush1.msra.mxu0 0.0
  %5980 = vmatprep.subr.mxu0 0.0
  %5981 = vmatpush1.msra.mxu0 0.0
  %5982 = vmatprep.subr.mxu0 0.0
  %5983 = vmatpush1.msra.mxu0 0.0
  %5984 = vmatprep.subr.mxu0 0.0
  %5985 = vmatpush1.msra.mxu0 0.0
  %5986 = vmatprep.subr.mxu0 0.0
  %5987 = vmatpush1.msra.mxu0 0.0
  %5988 = vmatprep.subr.mxu0 0.0
  %5989 = vmatpush1.msra.mxu0 0.0
  %5990 = vmatprep.subr.mxu0 0.0
  %5991 = vmatpush1.msra.mxu0 0.0
  %5992 = vmatprep.subr.mxu0 0.0
  %5993 = vmatpush1.msra.mxu0 0.0
  %5994 = vmatprep.subr.mxu0 0.0
  %5995 = vmatpush1.msra.mxu0 0.0
  %5996 = vmatprep.subr.mxu0 0.0
  %5997 = vmatpush1.msra.mxu0 0.0
  %5998 = vmatprep.subr.mxu0 0.0
  %5999 = vmatpush1.msra.mxu0 0.0
  %6000 = vmatprep.subr.mxu0 0.0
  %6001 = vmatpush1.msra.mxu0 0.0
  %6002 = vmatprep.subr.mxu0 0.0
  %6003 = vmatpush1.msra.mxu0 0.0
  %6004 = vmatprep.subr.mxu0 0.0
  %6005 = vmatpush1.msra.mxu0 0.0
  %6006 = vmatprep.subr.mxu0 0.0
  %6007 = vmatpush1.msra.mxu0 0.0
  %6008 = vmatprep.subr.mxu0 0.0
  %6009 = vmatpush1.msra.mxu0 0.0
  %6010 = vmatprep.subr.mxu0 0.0
  %6011 = vmatpush1.msra.mxu0 0.0
  %6012 = vmatprep.subr.mxu0 0.0
  %6013 = vmatpush1.msra.mxu0 0.0
  %6014 = vmatprep.subr.mxu0 0.0
  %6015 = vmatpush1.msra.mxu0 0.0
  %6016 = vmatprep.subr.mxu0 0.0
  %6017 = vmatpush1.msra.mxu0 0.0
  %6018 = vmatprep.mubr.f32.mxu0 0.0
  %v6019 = vand.u32 %v5613, 4294901760
  %6020 = vmatmul.mubr.f32.gmra.mrb[0].mxu0 %v6019
  %v6021 = vpop.f32.mrb[0].mxu0
  %v6022 = vadd.f32 %v5939, %v6021
  %v6023 = vpop.f32.mrb[0].mxu0
  %6024 = vdwg.mxu0
  %6025 = vmatprep.subr.mxu0 0.0
  %v6026 = vand.u32 %v5607, 4294901760
  %6027 = vmatpush1.msra.mxu0 %v6026
  %6028 = vmatprep.subr.mxu0 0.0
  %v6029 = vand.u32 %v5608, 4294901760
  %6030 = vmatpush1.msra.mxu0 %v6029
  %6031 = vmatprep.subr.mxu0 0.0
  %v6032 = vand.u32 %v5609, 4294901760
  %6033 = vmatpush1.msra.mxu0 %v6032
  %6034 = vmatprep.subr.mxu0 0.0
  %v6035 = vand.u32 %v5610, 4294901760
  %6036 = vmatpush1.msra.mxu0 %v6035
  %6037 = vmatprep.subr.mxu0 0.0
  %6038 = vmatpush1.msra.mxu0 0.0
  %6039 = vmatprep.subr.mxu0 0.0
  %6040 = vmatpush1.msra.mxu0 0.0
  %6041 = vmatprep.subr.mxu0 0.0
  %6042 = vmatpush1.msra.mxu0 0.0
  %6043 = vmatprep.subr.mxu0 0.0
  %6044 = vmatpush1.msra.mxu0 0.0
  %6045 = vmatprep.subr.mxu0 0.0
  %6046 = vmatpush1.msra.mxu0 0.0
  %6047 = vmatprep.subr.mxu0 0.0
  %6048 = vmatpush1.msra.mxu0 0.0
  %6049 = vmatprep.subr.mxu0 0.0
  %6050 = vmatpush1.msra.mxu0 0.0
  %6051 = vmatprep.subr.mxu0 0.0
  %6052 = vmatpush1.msra.mxu0 0.0
  %6053 = vmatprep.subr.mxu0 0.0
  %6054 = vmatpush1.msra.mxu0 0.0
  %6055 = vmatprep.subr.mxu0 0.0
  %6056 = vmatpush1.msra.mxu0 0.0
  %6057 = vmatprep.subr.mxu0 0.0
  %6058 = vmatpush1.msra.mxu0 0.0
  %6059 = vmatprep.subr.mxu0 0.0
  %6060 = vmatpush1.msra.mxu0 0.0
  %6061 = vmatprep.subr.mxu0 0.0
  %6062 = vmatpush1.msra.mxu0 0.0
  %6063 = vmatprep.subr.mxu0 0.0
  %6064 = vmatpush1.msra.mxu0 0.0
  %6065 = vmatprep.subr.mxu0 0.0
  %6066 = vmatpush1.msra.mxu0 0.0
  %6067 = vmatprep.subr.mxu0 0.0
  %6068 = vmatpush1.msra.mxu0 0.0
  %6069 = vmatprep.subr.mxu0 0.0
  %6070 = vmatpush1.msra.mxu0 0.0
  %6071 = vmatprep.subr.mxu0 0.0
  %6072 = vmatpush1.msra.mxu0 0.0
  %6073 = vmatprep.subr.mxu0 0.0
  %6074 = vmatpush1.msra.mxu0 0.0
  %6075 = vmatprep.subr.mxu0 0.0
  %6076 = vmatpush1.msra.mxu0 0.0
  %6077 = vmatprep.subr.mxu0 0.0
  %6078 = vmatpush1.msra.mxu0 0.0
  %6079 = vmatprep.subr.mxu0 0.0
  %6080 = vmatpush1.msra.mxu0 0.0
  %6081 = vmatprep.subr.mxu0 0.0
  %6082 = vmatpush1.msra.mxu0 0.0
  %6083 = vmatprep.subr.mxu0 0.0
  %6084 = vmatpush1.msra.mxu0 0.0
  %6085 = vmatprep.subr.mxu0 0.0
  %6086 = vmatpush1.msra.mxu0 0.0
  %6087 = vmatprep.subr.mxu0 0.0
  %6088 = vmatpush1.msra.mxu0 0.0
  %6089 = vmatprep.subr.mxu0 0.0
  %6090 = vmatpush1.msra.mxu0 0.0
  %6091 = vmatprep.subr.mxu0 0.0
  %6092 = vmatpush1.msra.mxu0 0.0
  %6093 = vmatprep.mubr.f32.mxu0 0.0
  %v6094 = vand.u32 %v5613, 4294901760
  %6095 = vmatmul.mubr.f32.gmra.mrb[0].mxu0 %v6094
  %v6096 = vpop.f32.mrb[0].mxu0
  %v6097 = vadd.f32 %v6022, %v6096
  %v6098 = vpop.f32.mrb[0].mxu0
  %6099 = vdwg.mxu0
  %v6100 = vtanh.pop %v6097
  %v6102 = vsel %vm857, %v6100, 0
  %6104 = vmatprep.subr.mxu0 0.0
  %v6105 = vand.u32 %v5607, 4294901760
  %6106 = vmatpush1.msra.mxu0 %v6105
  %6107 = vmatprep.subr.mxu0 0.0
  %v6108 = vand.u32 %v5608, 4294901760
  %6109 = vmatpush1.msra.mxu0 %v6108
  %6110 = vmatprep.subr.mxu0 0.0
  %v6111 = vand.u32 %v5609, 4294901760
  %6112 = vmatpush1.msra.mxu0 %v6111
  %6113 = vmatprep.subr.mxu0 0.0
  %v6114 = vand.u32 %v5610, 4294901760
  %6115 = vmatpush1.msra.mxu0 %v6114
  %6116 = vmatprep.subr.mxu0 0.0
  %6117 = vmatpush1.msra.mxu0 0.0
  %6118 = vmatprep.subr.mxu0 0.0
  %6119 = vmatpush1.msra.mxu0 0.0
  %6120 = vmatprep.subr.mxu0 0.0
  %6121 = vmatpush1.msra.mxu0 0.0
  %6122 = vmatprep.subr.mxu0 0.0
  %6123 = vmatpush1.msra.mxu0 0.0
  %6124 = vmatprep.subr.mxu0 0.0
  %6125 = vmatpush1.msra.mxu0 0.0
  %6126 = vmatprep.subr.mxu0 0.0
  %6127 = vmatpush1.msra.mxu0 0.0
  %6128 = vmatprep.subr.mxu0 0.0
  %6129 = vmatpush1.msra.mxu0 0.0
  %6130 = vmatprep.subr.mxu0 0.0
  %6131 = vmatpush1.msra.mxu0 0.0
  %6132 = vmatprep.subr.mxu0 0.0
  %6133 = vmatpush1.msra.mxu0 0.0
  %6134 = vmatprep.subr.mxu0 0.0
  %6135 = vmatpush1.msra.mxu0 0.0
  %6136 = vmatprep.subr.mxu0 0.0
  %6137 = vmatpush1.msra.mxu0 0.0
  %6138 = vmatprep.subr.mxu0 0.0
  %6139 = vmatpush1.msra.mxu0 0.0
  %6140 = vmatprep.subr.mxu0 0.0
  %6141 = vmatpush1.msra.mxu0 0.0
  %6142 = vmatprep.subr.mxu0 0.0
  %6143 = vmatpush1.msra.mxu0 0.0
  %6144 = vmatprep.subr.mxu0 0.0
  %6145 = vmatpush1.msra.mxu0 0.0
  %6146 = vmatprep.subr.mxu0 0.0
  %6147 = vmatpush1.msra.mxu0 0.0
  %6148 = vmatprep.subr.mxu0 0.0
  %6149 = vmatpush1.msra.mxu0 0.0
  %6150 = vmatprep.subr.mxu0 0.0
  %6151 = vmatpush1.msra.mxu0 0.0
  %6152 = vmatprep.subr.mxu0 0.0
  %6153 = vmatpush1.msra.mxu0 0.0
  %6154 = vmatprep.subr.mxu0 0.0
  %6155 = vmatpush1.msra.mxu0 0.0
  %6156 = vmatprep.subr.mxu0 0.0
  %6157 = vmatpush1.msra.mxu0 0.0
  %6158 = vmatprep.subr.mxu0 0.0
  %6159 = vmatpush1.msra.mxu0 0.0
  %6160 = vmatprep.subr.mxu0 0.0
  %6161 = vmatpush1.msra.mxu0 0.0
  %6162 = vmatprep.subr.mxu0 0.0
  %6163 = vmatpush1.msra.mxu0 0.0
  %6164 = vmatprep.subr.mxu0 0.0
  %6165 = vmatpush1.msra.mxu0 0.0
  %6166 = vmatprep.subr.mxu0 0.0
  %6167 = vmatpush1.msra.mxu0 0.0
  %6168 = vmatprep.subr.mxu0 0.0
  %6169 = vmatpush1.msra.mxu0 0.0
  %6170 = vmatprep.subr.mxu0 0.0
  %6171 = vmatpush1.msra.mxu0 0.0
  %6172 = vmatprep.mubr.f32.mxu0 0.0
  %v6173 = vand.u32 %v6102, 4294901760
  %v6174 = vsub.f32 %v6102, %v6173
  %v6175 = vand.u32 %v6174, 4294901760
  %v6176 = vsub.f32 %v6174, %v6175
  %v6177 = vand.u32 %v6176, 4294901760
  %6178 = vmatmul.mubr.f32.gmra.mrb[0].mxu0 %v6177
  %v6179 = vpop.f32.mrb[0].mxu0
  %v6180 = vadd.f32 %v5568, %v6179
  %v6181 = vpop.f32.mrb[0].mxu0
  %6182 = vdwg.mxu0
  %6183 = vmatprep.subr.mxu0 0.0
  %v6184 = vand.u32 %v5607, 4294901760
  %v6185 = vsub.f32 %v5607, %v6184
  %v6186 = vand.u32 %v6185, 4294901760
  %v6187 = vsub.f32 %v6185, %v6186
  %v6188 = vand.u32 %v6187, 4294901760
  %6189 = vmatpush1.msra.mxu0 %v6188
  %6190 = vmatprep.subr.mxu0 0.0
  %v6191 = vand.u32 %v5608, 4294901760
  %v6192 = vsub.f32 %v5608, %v6191
  %v6193 = vand.u32 %v6192, 4294901760
  %v6194 = vsub.f32 %v6192, %v6193
  %v6195 = vand.u32 %v6194, 4294901760
  %6196 = vmatpush1.msra.mxu0 %v6195
  %6197 = vmatprep.subr.mxu0 0.0
  %v6198 = vand.u32 %v5609, 4294901760
  %v6199 = vsub.f32 %v5609, %v6198
  %v6200 = vand.u32 %v6199, 4294901760
  %v6201 = vsub.f32 %v6199, %v6200
  %v6202 = vand.u32 %v6201, 4294901760
  %6203 = vmatpush1.msra.mxu0 %v6202
  %6204 = vmatprep.subr.mxu0 0.0
  %v6205 = vand.u32 %v5610, 4294901760
  %v6206 = vsub.f32 %v5610, %v6205
  %v6207 = vand.u32 %v6206, 4294901760
  %v6208 = vsub.f32 %v6206, %v6207
  %v6209 = vand.u32 %v6208, 4294901760
  %6210 = vmatpush1.msra.mxu0 %v6209
  %6211 = vmatprep.subr.mxu0 0.0
  %6212 = vmatpush1.msra.mxu0 0.0
  %6213 = vmatprep.subr.mxu0 0.0
  %6214 = vmatpush1.msra.mxu0 0.0
  %6215 = vmatprep.subr.mxu0 0.0
  %6216 = vmatpush1.msra.mxu0 0.0
  %6217 = vmatprep.subr.mxu0 0.0
  %6218 = vmatpush1.msra.mxu0 0.0
  %6219 = vmatprep.subr.mxu0 0.0
  %6220 = vmatpush1.msra.mxu0 0.0
  %6221 = vmatprep.subr.mxu0 0.0
  %6222 = vmatpush1.msra.mxu0 0.0
  %6223 = vmatprep.subr.mxu0 0.0
  %6224 = vmatpush1.msra.mxu0 0.0
  %6225 = vmatprep.subr.mxu0 0.0
  %6226 = vmatpush1.msra.mxu0 0.0
  %6227 = vmatprep.subr.mxu0 0.0
  %6228 = vmatpush1.msra.mxu0 0.0
  %6229 = vmatprep.subr.mxu0 0.0
  %6230 = vmatpush1.msra.mxu0 0.0
  %6231 = vmatprep.subr.mxu0 0.0
  %6232 = vmatpush1.msra.mxu0 0.0
  %6233 = vmatprep.subr.mxu0 0.0
  %6234 = vmatpush1.msra.mxu0 0.0
  %6235 = vmatprep.subr.mxu0 0.0
  %6236 = vmatpush1.msra.mxu0 0.0
  %6237 = vmatprep.subr.mxu0 0.0
  %6238 = vmatpush1.msra.mxu0 0.0
  %6239 = vmatprep.subr.mxu0 0.0
  %6240 = vmatpush1.msra.mxu0 0.0
  %6241 = vmatprep.subr.mxu0 0.0
  %6242 = vmatpush1.msra.mxu0 0.0
  %6243 = vmatprep.subr.mxu0 0.0
  %6244 = vmatpush1.msra.mxu0 0.0
  %6245 = vmatprep.subr.mxu0 0.0
  %6246 = vmatpush1.msra.mxu0 0.0
  %6247 = vmatprep.subr.mxu0 0.0
  %6248 = vmatpush1.msra.mxu0 0.0
  %6249 = vmatprep.subr.mxu0 0.0
  %6250 = vmatpush1.msra.mxu0 0.0
  %6251 = vmatprep.subr.mxu0 0.0
  %6252 = vmatpush1.msra.mxu0 0.0
  %6253 = vmatprep.subr.mxu0 0.0
  %6254 = vmatpush1.msra.mxu0 0.0
  %6255 = vmatprep.subr.mxu0 0.0
  %6256 = vmatpush1.msra.mxu0 0.0
  %6257 = vmatprep.subr.mxu0 0.0
  %6258 = vmatpush1.msra.mxu0 0.0
  %6259 = vmatprep.subr.mxu0 0.0
  %6260 = vmatpush1.msra.mxu0 0.0
  %6261 = vmatprep.subr.mxu0 0.0
  %6262 = vmatpush1.msra.mxu0 0.0
  %6263 = vmatprep.subr.mxu0 0.0
  %6264 = vmatpush1.msra.mxu0 0.0
  %6265 = vmatprep.subr.mxu0 0.0
  %6266 = vmatpush1.msra.mxu0 0.0
  %6267 = vmatprep.mubr.f32.mxu0 0.0
  %v6268 = vand.u32 %v6102, 4294901760
  %6269 = vmatmul.mubr.f32.gmra.mrb[0].mxu0 %v6268
  %v6270 = vpop.f32.mrb[0].mxu0
  %v6271 = vadd.f32 %v6180, %v6270
  %v6272 = vpop.f32.mrb[0].mxu0
  %6273 = vdwg.mxu0
  %6274 = vmatprep.subr.mxu0 0.0
  %v6275 = vand.u32 %v5607, 4294901760
  %v6276 = vsub.f32 %v5607, %v6275
  %6277 = vmatpush1.msra.mxu0 %v6276
  %6278 = vmatprep.subr.mxu0 0.0
  %v6279 = vand.u32 %v5608, 4294901760
  %v6280 = vsub.f32 %v5608, %v6279
  %6281 = vmatpush1.msra.mxu0 %v6280
  %6282 = vmatprep.subr.mxu0 0.0
  %v6283 = vand.u32 %v5609, 4294901760
  %v6284 = vsub.f32 %v5609, %v6283
  %6285 = vmatpush1.msra.mxu0 %v6284
  %6286 = vmatprep.subr.mxu0 0.0
  %v6287 = vand.u32 %v5610, 4294901760
  %v6288 = vsub.f32 %v5610, %v6287
  %6289 = vmatpush1.msra.mxu0 %v6288
  %6290 = vmatprep.subr.mxu0 0.0
  %6291 = vmatpush1.msra.mxu0 0.0
  %6292 = vmatprep.subr.mxu0 0.0
  %6293 = vmatpush1.msra.mxu0 0.0
  %6294 = vmatprep.subr.mxu0 0.0
  %6295 = vmatpush1.msra.mxu0 0.0
  %6296 = vmatprep.subr.mxu0 0.0
  %6297 = vmatpush1.msra.mxu0 0.0
  %6298 = vmatprep.subr.mxu0 0.0
  %6299 = vmatpush1.msra.mxu0 0.0
  %6300 = vmatprep.subr.mxu0 0.0
  %6301 = vmatpush1.msra.mxu0 0.0
  %6302 = vmatprep.subr.mxu0 0.0
  %6303 = vmatpush1.msra.mxu0 0.0
  %6304 = vmatprep.subr.mxu0 0.0
  %6305 = vmatpush1.msra.mxu0 0.0
  %6306 = vmatprep.subr.mxu0 0.0
  %6307 = vmatpush1.msra.mxu0 0.0
  %6308 = vmatprep.subr.mxu0 0.0
  %6309 = vmatpush1.msra.mxu0 0.0
  %6310 = vmatprep.subr.mxu0 0.0
  %6311 = vmatpush1.msra.mxu0 0.0
  %6312 = vmatprep.subr.mxu0 0.0
  %6313 = vmatpush1.msra.mxu0 0.0
  %6314 = vmatprep.subr.mxu0 0.0
  %6315 = vmatpush1.msra.mxu0 0.0
  %6316 = vmatprep.subr.mxu0 0.0
  %6317 = vmatpush1.msra.mxu0 0.0
  %6318 = vmatprep.subr.mxu0 0.0
  %6319 = vmatpush1.msra.mxu0 0.0
  %6320 = vmatprep.subr.mxu0 0.0
  %6321 = vmatpush1.msra.mxu0 0.0
  %6322 = vmatprep.subr.mxu0 0.0
  %6323 = vmatpush1.msra.mxu0 0.0
  %6324 = vmatprep.subr.mxu0 0.0
  %6325 = vmatpush1.msra.mxu0 0.0
  %6326 = vmatprep.subr.mxu0 0.0
  %6327 = vmatpush1.msra.mxu0 0.0
  %6328 = vmatprep.subr.mxu0 0.0
  %6329 = vmatpush1.msra.mxu0 0.0
  %6330 = vmatprep.subr.mxu0 0.0
  %6331 = vmatpush1.msra.mxu0 0.0
  %6332 = vmatprep.subr.mxu0 0.0
  %6333 = vmatpush1.msra.mxu0 0.0
  %6334 = vmatprep.subr.mxu0 0.0
  %6335 = vmatpush1.msra.mxu0 0.0
  %6336 = vmatprep.subr.mxu0 0.0
  %6337 = vmatpush1.msra.mxu0 0.0
  %6338 = vmatprep.subr.mxu0 0.0
  %6339 = vmatpush1.msra.mxu0 0.0
  %6340 = vmatprep.subr.mxu0 0.0
  %6341 = vmatpush1.msra.mxu0 0.0
  %6342 = vmatprep.subr.mxu0 0.0
  %6343 = vmatpush1.msra.mxu0 0.0
  %6344 = vmatprep.subr.mxu0 0.0
  %6345 = vmatpush1.msra.mxu0 0.0
  %6346 = vmatprep.mubr.f32.mxu0 0.0
  %v6347 = vand.u32 %v6102, 4294901760
  %v6348 = vsub.f32 %v6102, %v6347
  %6349 = vmatmul.mubr.f32.gmra.mrb[0].mxu0 %v6348
  %v6350 = vpop.f32.mrb[0].mxu0
  %v6351 = vadd.f32 %v6271, %v6350
  %v6352 = vpop.f32.mrb[0].mxu0
  %6353 = vdwg.mxu0
  %6354 = vmatprep.subr.mxu0 0.0
  %v6355 = vand.u32 %v5607, 4294901760
  %6356 = vmatpush1.msra.mxu0 %v6355
  %6357 = vmatprep.subr.mxu0 0.0
  %v6358 = vand.u32 %v5608, 4294901760
  %6359 = vmatpush1.msra.mxu0 %v6358
  %6360 = vmatprep.subr.mxu0 0.0
  %v6361 = vand.u32 %v5609, 4294901760
  %6362 = vmatpush1.msra.mxu0 %v6361
  %6363 = vmatprep.subr.mxu0 0.0
  %v6364 = vand.u32 %v5610, 4294901760
  %6365 = vmatpush1.msra.mxu0 %v6364
  %6366 = vmatprep.subr.mxu0 0.0
  %6367 = vmatpush1.msra.mxu0 0.0
  %6368 = vmatprep.subr.mxu0 0.0
  %6369 = vmatpush1.msra.mxu0 0.0
  %6370 = vmatprep.subr.mxu0 0.0
  %6371 = vmatpush1.msra.mxu0 0.0
  %6372 = vmatprep.subr.mxu0 0.0
  %6373 = vmatpush1.msra.mxu0 0.0
  %6374 = vmatprep.subr.mxu0 0.0
  %6375 = vmatpush1.msra.mxu0 0.0
  %6376 = vmatprep.subr.mxu0 0.0
  %6377 = vmatpush1.msra.mxu0 0.0
  %6378 = vmatprep.subr.mxu0 0.0
  %6379 = vmatpush1.msra.mxu0 0.0
  %6380 = vmatprep.subr.mxu0 0.0
  %6381 = vmatpush1.msra.mxu0 0.0
  %6382 = vmatprep.subr.mxu0 0.0
  %6383 = vmatpush1.msra.mxu0 0.0
  %6384 = vmatprep.subr.mxu0 0.0
  %6385 = vmatpush1.msra.mxu0 0.0
  %6386 = vmatprep.subr.mxu0 0.0
  %6387 = vmatpush1.msra.mxu0 0.0
  %6388 = vmatprep.subr.mxu0 0.0
  %6389 = vmatpush1.msra.mxu0 0.0
  %6390 = vmatprep.subr.mxu0 0.0
  %6391 = vmatpush1.msra.mxu0 0.0
  %6392 = vmatprep.subr.mxu0 0.0
  %6393 = vmatpush1.msra.mxu0 0.0
  %6394 = vmatprep.subr.mxu0 0.0
  %6395 = vmatpush1.msra.mxu0 0.0
  %6396 = vmatprep.subr.mxu0 0.0
  %6397 = vmatpush1.msra.mxu0 0.0
  %6398 = vmatprep.subr.mxu0 0.0
  %6399 = vmatpush1.msra.mxu0 0.0
  %6400 = vmatprep.subr.mxu0 0.0
  %6401 = vmatpush1.msra.mxu0 0.0
  %6402 = vmatprep.subr.mxu0 0.0
  %6403 = vmatpush1.msra.mxu0 0.0
  %6404 = vmatprep.subr.mxu0 0.0
  %6405 = vmatpush1.msra.mxu0 0.0
  %6406 = vmatprep.subr.mxu0 0.0
  %6407 = vmatpush1.msra.mxu0 0.0
  %6408 = vmatprep.subr.mxu0 0.0
  %6409 = vmatpush1.msra.mxu0 0.0
  %6410 = vmatprep.subr.mxu0 0.0
  %6411 = vmatpush1.msra.mxu0 0.0
  %6412 = vmatprep.subr.mxu0 0.0
  %6413 = vmatpush1.msra.mxu0 0.0
  %6414 = vmatprep.subr.mxu0 0.0
  %6415 = vmatpush1.msra.mxu0 0.0
  %6416 = vmatprep.subr.mxu0 0.0
  %6417 = vmatpush1.msra.mxu0 0.0
  %6418 = vmatprep.subr.mxu0 0.0
  %6419 = vmatpush1.msra.mxu0 0.0
  %6420 = vmatprep.subr.mxu0 0.0
  %6421 = vmatpush1.msra.mxu0 0.0
  %6422 = vmatprep.mubr.f32.mxu0 0.0
  %v6423 = vand.u32 %v6102, 4294901760
  %v6424 = vsub.f32 %v6102, %v6423
  %v6425 = vand.u32 %v6424, 4294901760
  %6426 = vmatmul.mubr.f32.gmra.mrb[0].mxu0 %v6425
  %v6427 = vpop.f32.mrb[0].mxu0
  %v6428 = vadd.f32 %v6351, %v6427
  %v6429 = vpop.f32.mrb[0].mxu0
  %6430 = vdwg.mxu0
  %6431 = vmatprep.subr.mxu0 0.0
  %v6432 = vand.u32 %v5607, 4294901760
  %v6433 = vsub.f32 %v5607, %v6432
  %v6434 = vand.u32 %v6433, 4294901760
  %6435 = vmatpush1.msra.mxu0 %v6434
  %6436 = vmatprep.subr.mxu0 0.0
  %v6437 = vand.u32 %v5608, 4294901760
  %v6438 = vsub.f32 %v5608, %v6437
  %v6439 = vand.u32 %v6438, 4294901760
  %6440 = vmatpush1.msra.mxu0 %v6439
  %6441 = vmatprep.subr.mxu0 0.0
  %v6442 = vand.u32 %v5609, 4294901760
  %v6443 = vsub.f32 %v5609, %v6442
  %v6444 = vand.u32 %v6443, 4294901760
  %6445 = vmatpush1.msra.mxu0 %v6444
  %6446 = vmatprep.subr.mxu0 0.0
  %v6447 = vand.u32 %v5610, 4294901760
  %v6448 = vsub.f32 %v5610, %v6447
  %v6449 = vand.u32 %v6448, 4294901760
  %6450 = vmatpush1.msra.mxu0 %v6449
  %6451 = vmatprep.subr.mxu0 0.0
  %6452 = vmatpush1.msra.mxu0 0.0
  %6453 = vmatprep.subr.mxu0 0.0
  %6454 = vmatpush1.msra.mxu0 0.0
  %6455 = vmatprep.subr.mxu0 0.0
  %6456 = vmatpush1.msra.mxu0 0.0
  %6457 = vmatprep.subr.mxu0 0.0
  %6458 = vmatpush1.msra.mxu0 0.0
  %6459 = vmatprep.subr.mxu0 0.0
  %6460 = vmatpush1.msra.mxu0 0.0
  %6461 = vmatprep.subr.mxu0 0.0
  %6462 = vmatpush1.msra.mxu0 0.0
  %6463 = vmatprep.subr.mxu0 0.0
  %6464 = vmatpush1.msra.mxu0 0.0
  %6465 = vmatprep.subr.mxu0 0.0
  %6466 = vmatpush1.msra.mxu0 0.0
  %6467 = vmatprep.subr.mxu0 0.0
  %6468 = vmatpush1.msra.mxu0 0.0
  %6469 = vmatprep.subr.mxu0 0.0
  %6470 = vmatpush1.msra.mxu0 0.0
  %6471 = vmatprep.subr.mxu0 0.0
  %6472 = vmatpush1.msra.mxu0 0.0
  %6473 = vmatprep.subr.mxu0 0.0
  %6474 = vmatpush1.msra.mxu0 0.0
  %6475 = vmatprep.subr.mxu0 0.0
  %6476 = vmatpush1.msra.mxu0 0.0
  %6477 = vmatprep.subr.mxu0 0.0
  %6478 = vmatpush1.msra.mxu0 0.0
  %6479 = vmatprep.subr.mxu0 0.0
  %6480 = vmatpush1.msra.mxu0 0.0
  %6481 = vmatprep.subr.mxu0 0.0
  %6482 = vmatpush1.msra.mxu0 0.0
  %6483 = vmatprep.subr.mxu0 0.0
  %6484 = vmatpush1.msra.mxu0 0.0
  %6485 = vmatprep.subr.mxu0 0.0
  %6486 = vmatpush1.msra.mxu0 0.0
  %6487 = vmatprep.subr.mxu0 0.0
  %6488 = vmatpush1.msra.mxu0 0.0
  %6489 = vmatprep.subr.mxu0 0.0
  %6490 = vmatpush1.msra.mxu0 0.0
  %6491 = vmatprep.subr.mxu0 0.0
  %6492 = vmatpush1.msra.mxu0 0.0
  %6493 = vmatprep.subr.mxu0 0.0
  %6494 = vmatpush1.msra.mxu0 0.0
  %6495 = vmatprep.subr.mxu0 0.0
  %6496 = vmatpush1.msra.mxu0 0.0
  %6497 = vmatprep.subr.mxu0 0.0
  %6498 = vmatpush1.msra.mxu0 0.0
  %6499 = vmatprep.subr.mxu0 0.0
  %6500 = vmatpush1.msra.mxu0 0.0
  %6501 = vmatprep.subr.mxu0 0.0
  %6502 = vmatpush1.msra.mxu0 0.0
  %6503 = vmatprep.subr.mxu0 0.0
  %6504 = vmatpush1.msra.mxu0 0.0
  %6505 = vmatprep.subr.mxu0 0.0
  %6506 = vmatpush1.msra.mxu0 0.0
  %6507 = vmatprep.mubr.f32.mxu0 0.0
  %v6508 = vand.u32 %v6102, 4294901760
  %6509 = vmatmul.mubr.f32.gmra.mrb[0].mxu0 %v6508
  %v6510 = vpop.f32.mrb[0].mxu0
  %v6511 = vadd.f32 %v6428, %v6510
  %v6512 = vpop.f32.mrb[0].mxu0
  %6513 = vdwg.mxu0
  %6514 = vmatprep.subr.mxu0 0.0
  %v6515 = vand.u32 %v5607, 4294901760
  %6516 = vmatpush1.msra.mxu0 %v6515
  %6517 = vmatprep.subr.mxu0 0.0
  %v6518 = vand.u32 %v5608, 4294901760
  %6519 = vmatpush1.msra.mxu0 %v6518
  %6520 = vmatprep.subr.mxu0 0.0
  %v6521 = vand.u32 %v5609, 4294901760
  %6522 = vmatpush1.msra.mxu0 %v6521
  %6523 = vmatprep.subr.mxu0 0.0
  %v6524 = vand.u32 %v5610, 4294901760
  %6525 = vmatpush1.msra.mxu0 %v6524
  %6526 = vmatprep.subr.mxu0 0.0
  %6527 = vmatpush1.msra.mxu0 0.0
  %6528 = vmatprep.subr.mxu0 0.0
  %6529 = vmatpush1.msra.mxu0 0.0
  %6530 = vmatprep.subr.mxu0 0.0
  %6531 = vmatpush1.msra.mxu0 0.0
  %6532 = vmatprep.subr.mxu0 0.0
  %6533 = vmatpush1.msra.mxu0 0.0
  %6534 = vmatprep.subr.mxu0 0.0
  %6535 = vmatpush1.msra.mxu0 0.0
  %6536 = vmatprep.subr.mxu0 0.0
  %6537 = vmatpush1.msra.mxu0 0.0
  %6538 = vmatprep.subr.mxu0 0.0
  %6539 = vmatpush1.msra.mxu0 0.0
  %6540 = vmatprep.subr.mxu0 0.0
  %6541 = vmatpush1.msra.mxu0 0.0
  %6542 = vmatprep.subr.mxu0 0.0
  %6543 = vmatpush1.msra.mxu0 0.0
  %6544 = vmatprep.subr.mxu0 0.0
  %6545 = vmatpush1.msra.mxu0 0.0
  %6546 = vmatprep.subr.mxu0 0.0
  %6547 = vmatpush1.msra.mxu0 0.0
  %6548 = vmatprep.subr.mxu0 0.0
  %6549 = vmatpush1.msra.mxu0 0.0
  %6550 = vmatprep.subr.mxu0 0.0
  %6551 = vmatpush1.msra.mxu0 0.0
  %6552 = vmatprep.subr.mxu0 0.0
  %6553 = vmatpush1.msra.mxu0 0.0
  %6554 = vmatprep.subr.mxu0 0.0
  %6555 = vmatpush1.msra.mxu0 0.0
  %6556 = vmatprep.subr.mxu0 0.0
  %6557 = vmatpush1.msra.mxu0 0.0
  %6558 = vmatprep.subr.mxu0 0.0
  %6559 = vmatpush1.msra.mxu0 0.0
  %6560 = vmatprep.subr.mxu0 0.0
  %6561 = vmatpush1.msra.mxu0 0.0
  %6562 = vmatprep.subr.mxu0 0.0
  %6563 = vmatpush1.msra.mxu0 0.0
  %6564 = vmatprep.subr.mxu0 0.0
  %6565 = vmatpush1.msra.mxu0 0.0
  %6566 = vmatprep.subr.mxu0 0.0
  %6567 = vmatpush1.msra.mxu0 0.0
  %6568 = vmatprep.subr.mxu0 0.0
  %6569 = vmatpush1.msra.mxu0 0.0
  %6570 = vmatprep.subr.mxu0 0.0
  %6571 = vmatpush1.msra.mxu0 0.0
  %6572 = vmatprep.subr.mxu0 0.0
  %6573 = vmatpush1.msra.mxu0 0.0
  %6574 = vmatprep.subr.mxu0 0.0
  %6575 = vmatpush1.msra.mxu0 0.0
  %6576 = vmatprep.subr.mxu0 0.0
  %6577 = vmatpush1.msra.mxu0 0.0
  %6578 = vmatprep.subr.mxu0 0.0
  %6579 = vmatpush1.msra.mxu0 0.0
  %6580 = vmatprep.subr.mxu0 0.0
  %6581 = vmatpush1.msra.mxu0 0.0
  %6582 = vmatprep.mubr.f32.mxu0 0.0
  %v6583 = vand.u32 %v6102, 4294901760
  %6584 = vmatmul.mubr.f32.gmra.mrb[0].mxu0 %v6583
  %v6585 = vpop.f32.mrb[0].mxu0
  %v6586 = vadd.f32 %v6511, %v6585
  %v6587 = vpop.f32.mrb[0].mxu0
  %6588 = vdwg.mxu0
  %v6589 = vtanh.pop %v6586
  %v6591 = vsel %vm857, %v6589, 0
  %6593 = vmatprep.subr.mxu0 0.0
  %v6594 = vand.u32 %v5607, 4294901760
  %6595 = vmatpush1.msra.mxu0 %v6594
  %6596 = vmatprep.subr.mxu0 0.0
  %v6597 = vand.u32 %v5608, 4294901760
  %6598 = vmatpush1.msra.mxu0 %v6597
  %6599 = vmatprep.subr.mxu0 0.0
  %v6600 = vand.u32 %v5609, 4294901760
  %6601 = vmatpush1.msra.mxu0 %v6600
  %6602 = vmatprep.subr.mxu0 0.0
  %v6603 = vand.u32 %v5610, 4294901760
  %6604 = vmatpush1.msra.mxu0 %v6603
  %6605 = vmatprep.subr.mxu0 0.0
  %6606 = vmatpush1.msra.mxu0 0.0
  %6607 = vmatprep.subr.mxu0 0.0
  %6608 = vmatpush1.msra.mxu0 0.0
  %6609 = vmatprep.subr.mxu0 0.0
  %6610 = vmatpush1.msra.mxu0 0.0
  %6611 = vmatprep.subr.mxu0 0.0
  %6612 = vmatpush1.msra.mxu0 0.0
  %6613 = vmatprep.subr.mxu0 0.0
  %6614 = vmatpush1.msra.mxu0 0.0
  %6615 = vmatprep.subr.mxu0 0.0
  %6616 = vmatpush1.msra.mxu0 0.0
  %6617 = vmatprep.subr.mxu0 0.0
  %6618 = vmatpush1.msra.mxu0 0.0
  %6619 = vmatprep.subr.mxu0 0.0
  %6620 = vmatpush1.msra.mxu0 0.0
  %6621 = vmatprep.subr.mxu0 0.0
  %6622 = vmatpush1.msra.mxu0 0.0
  %6623 = vmatprep.subr.mxu0 0.0
  %6624 = vmatpush1.msra.mxu0 0.0
  %6625 = vmatprep.subr.mxu0 0.0
  %6626 = vmatpush1.msra.mxu0 0.0
  %6627 = vmatprep.subr.mxu0 0.0
  %6628 = vmatpush1.msra.mxu0 0.0
  %6629 = vmatprep.subr.mxu0 0.0
  %6630 = vmatpush1.msra.mxu0 0.0
  %6631 = vmatprep.subr.mxu0 0.0
  %6632 = vmatpush1.msra.mxu0 0.0
  %6633 = vmatprep.subr.mxu0 0.0
  %6634 = vmatpush1.msra.mxu0 0.0
  %6635 = vmatprep.subr.mxu0 0.0
  %6636 = vmatpush1.msra.mxu0 0.0
  %6637 = vmatprep.subr.mxu0 0.0
  %6638 = vmatpush1.msra.mxu0 0.0
  %6639 = vmatprep.subr.mxu0 0.0
  %6640 = vmatpush1.msra.mxu0 0.0
  %6641 = vmatprep.subr.mxu0 0.0
  %6642 = vmatpush1.msra.mxu0 0.0
  %6643 = vmatprep.subr.mxu0 0.0
  %6644 = vmatpush1.msra.mxu0 0.0
  %6645 = vmatprep.subr.mxu0 0.0
  %6646 = vmatpush1.msra.mxu0 0.0
  %6647 = vmatprep.subr.mxu0 0.0
  %6648 = vmatpush1.msra.mxu0 0.0
  %6649 = vmatprep.subr.mxu0 0.0
  %6650 = vmatpush1.msra.mxu0 0.0
  %6651 = vmatprep.subr.mxu0 0.0
  %6652 = vmatpush1.msra.mxu0 0.0
  %6653 = vmatprep.subr.mxu0 0.0
  %6654 = vmatpush1.msra.mxu0 0.0
  %6655 = vmatprep.subr.mxu0 0.0
  %6656 = vmatpush1.msra.mxu0 0.0
  %6657 = vmatprep.subr.mxu0 0.0
  %6658 = vmatpush1.msra.mxu0 0.0
  %6659 = vmatprep.subr.mxu0 0.0
  %6660 = vmatpush1.msra.mxu0 0.0
  %6661 = vmatprep.mubr.f32.mxu0 0.0
  %v6662 = vand.u32 %v6591, 4294901760
  %v6663 = vsub.f32 %v6591, %v6662
  %v6664 = vand.u32 %v6663, 4294901760
  %v6665 = vsub.f32 %v6663, %v6664
  %v6666 = vand.u32 %v6665, 4294901760
  %6667 = vmatmul.mubr.f32.gmra.mrb[0].mxu0 %v6666
  %v6668 = vpop.f32.mrb[0].mxu0
  %v6669 = vadd.f32 %v5574, %v6668
  %v6670 = vpop.f32.mrb[0].mxu0
  %6671 = vdwg.mxu0
  %6672 = vmatprep.subr.mxu0 0.0
  %v6673 = vand.u32 %v5607, 4294901760
  %v6674 = vsub.f32 %v5607, %v6673
  %v6675 = vand.u32 %v6674, 4294901760
  %v6676 = vsub.f32 %v6674, %v6675
  %v6677 = vand.u32 %v6676, 4294901760
  %6678 = vmatpush1.msra.mxu0 %v6677
  %6679 = vmatprep.subr.mxu0 0.0
  %v6680 = vand.u32 %v5608, 4294901760
  %v6681 = vsub.f32 %v5608, %v6680
  %v6682 = vand.u32 %v6681, 4294901760
  %v6683 = vsub.f32 %v6681, %v6682
  %v6684 = vand.u32 %v6683, 4294901760
  %6685 = vmatpush1.msra.mxu0 %v6684
  %6686 = vmatprep.subr.mxu0 0.0
  %v6687 = vand.u32 %v5609, 4294901760
  %v6688 = vsub.f32 %v5609, %v6687
  %v6689 = vand.u32 %v6688, 4294901760
  %v6690 = vsub.f32 %v6688, %v6689
  %v6691 = vand.u32 %v6690, 4294901760
  %6692 = vmatpush1.msra.mxu0 %v6691
  %6693 = vmatprep.subr.mxu0 0.0
  %v6694 = vand.u32 %v5610, 4294901760
  %v6695 = vsub.f32 %v5610, %v6694
  %v6696 = vand.u32 %v6695, 4294901760
  %v6697 = vsub.f32 %v6695, %v6696
  %v6698 = vand.u32 %v6697, 4294901760
  %6699 = vmatpush1.msra.mxu0 %v6698
  %6700 = vmatprep.subr.mxu0 0.0
  %6701 = vmatpush1.msra.mxu0 0.0
  %6702 = vmatprep.subr.mxu0 0.0
  %6703 = vmatpush1.msra.mxu0 0.0
  %6704 = vmatprep.subr.mxu0 0.0
  %6705 = vmatpush1.msra.mxu0 0.0
  %6706 = vmatprep.subr.mxu0 0.0
  %6707 = vmatpush1.msra.mxu0 0.0
  %6708 = vmatprep.subr.mxu0 0.0
  %6709 = vmatpush1.msra.mxu0 0.0
  %6710 = vmatprep.subr.mxu0 0.0
  %6711 = vmatpush1.msra.mxu0 0.0
  %6712 = vmatprep.subr.mxu0 0.0
  %6713 = vmatpush1.msra.mxu0 0.0
  %6714 = vmatprep.subr.mxu0 0.0
  %6715 = vmatpush1.msra.mxu0 0.0
  %6716 = vmatprep.subr.mxu0 0.0
  %6717 = vmatpush1.msra.mxu0 0.0
  %6718 = vmatprep.subr.mxu0 0.0
  %6719 = vmatpush1.msra.mxu0 0.0
  %6720 = vmatprep.subr.mxu0 0.0
  %6721 = vmatpush1.msra.mxu0 0.0
  %6722 = vmatprep.subr.mxu0 0.0
  %6723 = vmatpush1.msra.mxu0 0.0
  %6724 = vmatprep.subr.mxu0 0.0
  %6725 = vmatpush1.msra.mxu0 0.0
  %6726 = vmatprep.subr.mxu0 0.0
  %6727 = vmatpush1.msra.mxu0 0.0
  %6728 = vmatprep.subr.mxu0 0.0
  %6729 = vmatpush1.msra.mxu0 0.0
  %6730 = vmatprep.subr.mxu0 0.0
  %6731 = vmatpush1.msra.mxu0 0.0
  %6732 = vmatprep.subr.mxu0 0.0
  %6733 = vmatpush1.msra.mxu0 0.0
  %6734 = vmatprep.subr.mxu0 0.0
  %6735 = vmatpush1.msra.mxu0 0.0
  %6736 = vmatprep.subr.mxu0 0.0
  %6737 = vmatpush1.msra.mxu0 0.0
  %6738 = vmatprep.subr.mxu0 0.0
  %6739 = vmatpush1.msra.mxu0 0.0
  %6740 = vmatprep.subr.mxu0 0.0
  %6741 = vmatpush1.msra.mxu0 0.0
  %6742 = vmatprep.subr.mxu0 0.0
  %6743 = vmatpush1.msra.mxu0 0.0
  %6744 = vmatprep.subr.mxu0 0.0
  %6745 = vmatpush1.msra.mxu0 0.0
  %6746 = vmatprep.subr.mxu0 0.0
  %6747 = vmatpush1.msra.mxu0 0.0
  %6748 = vmatprep.subr.mxu0 0.0
  %6749 = vmatpush1.msra.mxu0 0.0
  %6750 = vmatprep.subr.mxu0 0.0
  %6751 = vmatpush1.msra.mxu0 0.0
  %6752 = vmatprep.subr.mxu0 0.0
  %6753 = vmatpush1.msra.mxu0 0.0
  %6754 = vmatprep.subr.mxu0 0.0
  %6755 = vmatpush1.msra.mxu0 0.0
  %6756 = vmatprep.mubr.f32.mxu0 0.0
  %v6757 = vand.u32 %v6591, 4294901760
  %6758 = vmatmul.mubr.f32.gmra.mrb[0].mxu0 %v6757
  %v6759 = vpop.f32.mrb[0].mxu0
  %v6760 = vadd.f32 %v6669, %v6759
  %v6761 = vpop.f32.mrb[0].mxu0
  %6762 = vdwg.mxu0
  %6763 = vmatprep.subr.mxu0 0.0
  %v6764 = vand.u32 %v5607, 4294901760
  %v6765 = vsub.f32 %v5607, %v6764
  %6766 = vmatpush1.msra.mxu0 %v6765
  %6767 = vmatprep.subr.mxu0 0.0
  %v6768 = vand.u32 %v5608, 4294901760
  %v6769 = vsub.f32 %v5608, %v6768
  %6770 = vmatpush1.msra.mxu0 %v6769
  %6771 = vmatprep.subr.mxu0 0.0
  %v6772 = vand.u32 %v5609, 4294901760
  %v6773 = vsub.f32 %v5609, %v6772
  %6774 = vmatpush1.msra.mxu0 %v6773
  %6775 = vmatprep.subr.mxu0 0.0
  %v6776 = vand.u32 %v5610, 4294901760
  %v6777 = vsub.f32 %v5610, %v6776
  %6778 = vmatpush1.msra.mxu0 %v6777
  %6779 = vmatprep.subr.mxu0 0.0
  %6780 = vmatpush1.msra.mxu0 0.0
  %6781 = vmatprep.subr.mxu0 0.0
  %6782 = vmatpush1.msra.mxu0 0.0
  %6783 = vmatprep.subr.mxu0 0.0
  %6784 = vmatpush1.msra.mxu0 0.0
  %6785 = vmatprep.subr.mxu0 0.0
  %6786 = vmatpush1.msra.mxu0 0.0
  %6787 = vmatprep.subr.mxu0 0.0
  %6788 = vmatpush1.msra.mxu0 0.0
  %6789 = vmatprep.subr.mxu0 0.0
  %6790 = vmatpush1.msra.mxu0 0.0
  %6791 = vmatprep.subr.mxu0 0.0
  %6792 = vmatpush1.msra.mxu0 0.0
  %6793 = vmatprep.subr.mxu0 0.0
  %6794 = vmatpush1.msra.mxu0 0.0
  %6795 = vmatprep.subr.mxu0 0.0
  %6796 = vmatpush1.msra.mxu0 0.0
  %6797 = vmatprep.subr.mxu0 0.0
  %6798 = vmatpush1.msra.mxu0 0.0
  %6799 = vmatprep.subr.mxu0 0.0
  %6800 = vmatpush1.msra.mxu0 0.0
  %6801 = vmatprep.subr.mxu0 0.0
  %6802 = vmatpush1.msra.mxu0 0.0
  %6803 = vmatprep.subr.mxu0 0.0
  %6804 = vmatpush1.msra.mxu0 0.0
  %6805 = vmatprep.subr.mxu0 0.0
  %6806 = vmatpush1.msra.mxu0 0.0
  %6807 = vmatprep.subr.mxu0 0.0
  %6808 = vmatpush1.msra.mxu0 0.0
  %6809 = vmatprep.subr.mxu0 0.0
  %6810 = vmatpush1.msra.mxu0 0.0
  %6811 = vmatprep.subr.mxu0 0.0
  %6812 = vmatpush1.msra.mxu0 0.0
  %6813 = vmatprep.subr.mxu0 0.0
  %6814 = vmatpush1.msra.mxu0 0.0
  %6815 = vmatprep.subr.mxu0 0.0
  %6816 = vmatpush1.msra.mxu0 0.0
  %6817 = vmatprep.subr.mxu0 0.0
  %6818 = vmatpush1.msra.mxu0 0.0
  %6819 = vmatprep.subr.mxu0 0.0
  %6820 = vmatpush1.msra.mxu0 0.0
  %6821 = vmatprep.subr.mxu0 0.0
  %6822 = vmatpush1.msra.mxu0 0.0
  %6823 = vmatprep.subr.mxu0 0.0
  %6824 = vmatpush1.msra.mxu0 0.0
  %6825 = vmatprep.subr.mxu0 0.0
  %6826 = vmatpush1.msra.mxu0 0.0
  %6827 = vmatprep.subr.mxu0 0.0
  %6828 = vmatpush1.msra.mxu0 0.0
  %6829 = vmatprep.subr.mxu0 0.0
  %6830 = vmatpush1.msra.mxu0 0.0
  %6831 = vmatprep.subr.mxu0 0.0
  %6832 = vmatpush1.msra.mxu0 0.0
  %6833 = vmatprep.subr.mxu0 0.0
  %6834 = vmatpush1.msra.mxu0 0.0
  %6835 = vmatprep.mubr.f32.mxu0 0.0
  %v6836 = vand.u32 %v6591, 4294901760
  %v6837 = vsub.f32 %v6591, %v6836
  %6838 = vmatmul.mubr.f32.gmra.mrb[0].mxu0 %v6837
  %v6839 = vpop.f32.mrb[0].mxu0
  %v6840 = vadd.f32 %v6760, %v6839
  %v6841 = vpop.f32.mrb[0].mxu0
  %6842 = vdwg.mxu0
  %6843 = vmatprep.subr.mxu0 0.0
  %v6844 = vand.u32 %v5607, 4294901760
  %6845 = vmatpush1.msra.mxu0 %v6844
  %6846 = vmatprep.subr.mxu0 0.0
  %v6847 = vand.u32 %v5608, 4294901760
  %6848 = vmatpush1.msra.mxu0 %v6847
  %6849 = vmatprep.subr.mxu0 0.0
  %v6850 = vand.u32 %v5609, 4294901760
  %6851 = vmatpush1.msra.mxu0 %v6850
  %6852 = vmatprep.subr.mxu0 0.0
  %v6853 = vand.u32 %v5610, 4294901760
  %6854 = vmatpush1.msra.mxu0 %v6853
  %6855 = vmatprep.subr.mxu0 0.0
  %6856 = vmatpush1.msra.mxu0 0.0
  %6857 = vmatprep.subr.mxu0 0.0
  %6858 = vmatpush1.msra.mxu0 0.0
  %6859 = vmatprep.subr.mxu0 0.0
  %6860 = vmatpush1.msra.mxu0 0.0
  %6861 = vmatprep.subr.mxu0 0.0
  %6862 = vmatpush1.msra.mxu0 0.0
  %6863 = vmatprep.subr.mxu0 0.0
  %6864 = vmatpush1.msra.mxu0 0.0
  %6865 = vmatprep.subr.mxu0 0.0
  %6866 = vmatpush1.msra.mxu0 0.0
  %6867 = vmatprep.subr.mxu0 0.0
  %6868 = vmatpush1.msra.mxu0 0.0
  %6869 = vmatprep.subr.mxu0 0.0
  %6870 = vmatpush1.msra.mxu0 0.0
  %6871 = vmatprep.subr.mxu0 0.0
  %6872 = vmatpush1.msra.mxu0 0.0
  %6873 = vmatprep.subr.mxu0 0.0
  %6874 = vmatpush1.msra.mxu0 0.0
  %6875 = vmatprep.subr.mxu0 0.0
  %6876 = vmatpush1.msra.mxu0 0.0
  %6877 = vmatprep.subr.mxu0 0.0
  %6878 = vmatpush1.msra.mxu0 0.0
  %6879 = vmatprep.subr.mxu0 0.0
  %6880 = vmatpush1.msra.mxu0 0.0
  %6881 = vmatprep.subr.mxu0 0.0
  %6882 = vmatpush1.msra.mxu0 0.0
  %6883 = vmatprep.subr.mxu0 0.0
  %6884 = vmatpush1.msra.mxu0 0.0
  %6885 = vmatprep.subr.mxu0 0.0
  %6886 = vmatpush1.msra.mxu0 0.0
  %6887 = vmatprep.subr.mxu0 0.0
  %6888 = vmatpush1.msra.mxu0 0.0
  %6889 = vmatprep.subr.mxu0 0.0
  %6890 = vmatpush1.msra.mxu0 0.0
  %6891 = vmatprep.subr.mxu0 0.0
  %6892 = vmatpush1.msra.mxu0 0.0
  %6893 = vmatprep.subr.mxu0 0.0
  %6894 = vmatpush1.msra.mxu0 0.0
  %6895 = vmatprep.subr.mxu0 0.0
  %6896 = vmatpush1.msra.mxu0 0.0
  %6897 = vmatprep.subr.mxu0 0.0
  %6898 = vmatpush1.msra.mxu0 0.0
  %6899 = vmatprep.subr.mxu0 0.0
  %6900 = vmatpush1.msra.mxu0 0.0
  %6901 = vmatprep.subr.mxu0 0.0
  %6902 = vmatpush1.msra.mxu0 0.0
  %6903 = vmatprep.subr.mxu0 0.0
  %6904 = vmatpush1.msra.mxu0 0.0
  %6905 = vmatprep.subr.mxu0 0.0
  %6906 = vmatpush1.msra.mxu0 0.0
  %6907 = vmatprep.subr.mxu0 0.0
  %6908 = vmatpush1.msra.mxu0 0.0
  %6909 = vmatprep.subr.mxu0 0.0
  %6910 = vmatpush1.msra.mxu0 0.0
  %6911 = vmatprep.mubr.f32.mxu0 0.0
  %v6912 = vand.u32 %v6591, 4294901760
  %v6913 = vsub.f32 %v6591, %v6912
  %v6914 = vand.u32 %v6913, 4294901760
  %6915 = vmatmul.mubr.f32.gmra.mrb[0].mxu0 %v6914
  %v6916 = vpop.f32.mrb[0].mxu0
  %v6917 = vadd.f32 %v6840, %v6916
  %v6918 = vpop.f32.mrb[0].mxu0
  %6919 = vdwg.mxu0
  %6920 = vmatprep.subr.mxu0 0.0
  %v6921 = vand.u32 %v5607, 4294901760
  %v6922 = vsub.f32 %v5607, %v6921
  %v6923 = vand.u32 %v6922, 4294901760
  %6924 = vmatpush1.msra.mxu0 %v6923
  %6925 = vmatprep.subr.mxu0 0.0
  %v6926 = vand.u32 %v5608, 4294901760
  %v6927 = vsub.f32 %v5608, %v6926
  %v6928 = vand.u32 %v6927, 4294901760
  %6929 = vmatpush1.msra.mxu0 %v6928
  %6930 = vmatprep.subr.mxu0 0.0
  %v6931 = vand.u32 %v5609, 4294901760
  %v6932 = vsub.f32 %v5609, %v6931
  %v6933 = vand.u32 %v6932, 4294901760
  %6934 = vmatpush1.msra.mxu0 %v6933
  %6935 = vmatprep.subr.mxu0 0.0
  %v6936 = vand.u32 %v5610, 4294901760
  %v6937 = vsub.f32 %v5610, %v6936
  %v6938 = vand.u32 %v6937, 4294901760
  %6939 = vmatpush1.msra.mxu0 %v6938
  %6940 = vmatprep.subr.mxu0 0.0
  %6941 = vmatpush1.msra.mxu0 0.0
  %6942 = vmatprep.subr.mxu0 0.0
  %6943 = vmatpush1.msra.mxu0 0.0
  %6944 = vmatprep.subr.mxu0 0.0
  %6945 = vmatpush1.msra.mxu0 0.0
  %6946 = vmatprep.subr.mxu0 0.0
  %6947 = vmatpush1.msra.mxu0 0.0
  %6948 = vmatprep.subr.mxu0 0.0
  %6949 = vmatpush1.msra.mxu0 0.0
  %6950 = vmatprep.subr.mxu0 0.0
  %6951 = vmatpush1.msra.mxu0 0.0
  %6952 = vmatprep.subr.mxu0 0.0
  %6953 = vmatpush1.msra.mxu0 0.0
  %6954 = vmatprep.subr.mxu0 0.0
  %6955 = vmatpush1.msra.mxu0 0.0
  %6956 = vmatprep.subr.mxu0 0.0
  %6957 = vmatpush1.msra.mxu0 0.0
  %6958 = vmatprep.subr.mxu0 0.0
  %6959 = vmatpush1.msra.mxu0 0.0
  %6960 = vmatprep.subr.mxu0 0.0
  %6961 = vmatpush1.msra.mxu0 0.0
  %6962 = vmatprep.subr.mxu0 0.0
  %6963 = vmatpush1.msra.mxu0 0.0
  %6964 = vmatprep.subr.mxu0 0.0
  %6965 = vmatpush1.msra.mxu0 0.0
  %6966 = vmatprep.subr.mxu0 0.0
  %6967 = vmatpush1.msra.mxu0 0.0
  %6968 = vmatprep.subr.mxu0 0.0
  %6969 = vmatpush1.msra.mxu0 0.0
  %6970 = vmatprep.subr.mxu0 0.0
  %6971 = vmatpush1.msra.mxu0 0.0
  %6972 = vmatprep.subr.mxu0 0.0
  %6973 = vmatpush1.msra.mxu0 0.0
  %6974 = vmatprep.subr.mxu0 0.0
  %6975 = vmatpush1.msra.mxu0 0.0
  %6976 = vmatprep.subr.mxu0 0.0
  %6977 = vmatpush1.msra.mxu0 0.0
  %6978 = vmatprep.subr.mxu0 0.0
  %6979 = vmatpush1.msra.mxu0 0.0
  %6980 = vmatprep.subr.mxu0 0.0
  %6981 = vmatpush1.msra.mxu0 0.0
  %6982 = vmatprep.subr.mxu0 0.0
  %6983 = vmatpush1.msra.mxu0 0.0
  %6984 = vmatprep.subr.mxu0 0.0
  %6985 = vmatpush1.msra.mxu0 0.0
  %6986 = vmatprep.subr.mxu0 0.0
  %6987 = vmatpush1.msra.mxu0 0.0
  %6988 = vmatprep.subr.mxu0 0.0
  %6989 = vmatpush1.msra.mxu0 0.0
  %6990 = vmatprep.subr.mxu0 0.0
  %6991 = vmatpush1.msra.mxu0 0.0
  %6992 = vmatprep.subr.mxu0 0.0
  %6993 = vmatpush1.msra.mxu0 0.0
  %6994 = vmatprep.subr.mxu0 0.0
  %6995 = vmatpush1.msra.mxu0 0.0
  %6996 = vmatprep.mubr.f32.mxu0 0.0
  %v6997 = vand.u32 %v6591, 4294901760
  %6998 = vmatmul.mubr.f32.gmra.mrb[0].mxu0 %v6997
  %v6999 = vpop.f32.mrb[0].mxu0
  %v7000 = vadd.f32 %v6917, %v6999
  %v7001 = vpop.f32.mrb[0].mxu0
  %7002 = vdwg.mxu0
  %7003 = vmatprep.subr.mxu0 0.0
  %v7004 = vand.u32 %v5607, 4294901760
  %7005 = vmatpush1.msra.mxu0 %v7004
  %7006 = vmatprep.subr.mxu0 0.0
  %v7007 = vand.u32 %v5608, 4294901760
  %7008 = vmatpush1.msra.mxu0 %v7007
  %7009 = vmatprep.subr.mxu0 0.0
  %v7010 = vand.u32 %v5609, 4294901760
  %7011 = vmatpush1.msra.mxu0 %v7010
  %7012 = vmatprep.subr.mxu0 0.0
  %v7013 = vand.u32 %v5610, 4294901760
  %7014 = vmatpush1.msra.mxu0 %v7013
  %7015 = vmatprep.subr.mxu0 0.0
  %7016 = vmatpush1.msra.mxu0 0.0
  %7017 = vmatprep.subr.mxu0 0.0
  %7018 = vmatpush1.msra.mxu0 0.0
  %7019 = vmatprep.subr.mxu0 0.0
  %7020 = vmatpush1.msra.mxu0 0.0
  %7021 = vmatprep.subr.mxu0 0.0
  %7022 = vmatpush1.msra.mxu0 0.0
  %7023 = vmatprep.subr.mxu0 0.0
  %7024 = vmatpush1.msra.mxu0 0.0
  %7025 = vmatprep.subr.mxu0 0.0
  %7026 = vmatpush1.msra.mxu0 0.0
  %7027 = vmatprep.subr.mxu0 0.0
  %7028 = vmatpush1.msra.mxu0 0.0
  %7029 = vmatprep.subr.mxu0 0.0
  %7030 = vmatpush1.msra.mxu0 0.0
  %7031 = vmatprep.subr.mxu0 0.0
  %7032 = vmatpush1.msra.mxu0 0.0
  %7033 = vmatprep.subr.mxu0 0.0
  %7034 = vmatpush1.msra.mxu0 0.0
  %7035 = vmatprep.subr.mxu0 0.0
  %7036 = vmatpush1.msra.mxu0 0.0
  %7037 = vmatprep.subr.mxu0 0.0
  %7038 = vmatpush1.msra.mxu0 0.0
  %7039 = vmatprep.subr.mxu0 0.0
  %7040 = vmatpush1.msra.mxu0 0.0
  %7041 = vmatprep.subr.mxu0 0.0
  %7042 = vmatpush1.msra.mxu0 0.0
  %7043 = vmatprep.subr.mxu0 0.0
  %7044 = vmatpush1.msra.mxu0 0.0
  %7045 = vmatprep.subr.mxu0 0.0
  %7046 = vmatpush1.msra.mxu0 0.0
  %7047 = vmatprep.subr.mxu0 0.0
  %7048 = vmatpush1.msra.mxu0 0.0
  %7049 = vmatprep.subr.mxu0 0.0
  %7050 = vmatpush1.msra.mxu0 0.0
  %7051 = vmatprep.subr.mxu0 0.0
  %7052 = vmatpush1.msra.mxu0 0.0
  %7053 = vmatprep.subr.mxu0 0.0
  %7054 = vmatpush1.msra.mxu0 0.0
  %7055 = vmatprep.subr.mxu0 0.0
  %7056 = vmatpush1.msra.mxu0 0.0
  %7057 = vmatprep.subr.mxu0 0.0
  %7058 = vmatpush1.msra.mxu0 0.0
  %7059 = vmatprep.subr.mxu0 0.0
  %7060 = vmatpush1.msra.mxu0 0.0
  %7061 = vmatprep.subr.mxu0 0.0
  %7062 = vmatpush1.msra.mxu0 0.0
  %7063 = vmatprep.subr.mxu0 0.0
  %7064 = vmatpush1.msra.mxu0 0.0
  %7065 = vmatprep.subr.mxu0 0.0
  %7066 = vmatpush1.msra.mxu0 0.0
  %7067 = vmatprep.subr.mxu0 0.0
  %7068 = vmatpush1.msra.mxu0 0.0
  %7069 = vmatprep.subr.mxu0 0.0
  %7070 = vmatpush1.msra.mxu0 0.0
  %7071 = vmatprep.mubr.f32.mxu0 0.0
  %v7072 = vand.u32 %v6591, 4294901760
  %7073 = vmatmul.mubr.f32.gmra.mrb[0].mxu0 %v7072
  %v7074 = vpop.f32.mrb[0].mxu0
  %v7075 = vadd.f32 %v7000, %v7074
  %v7076 = vpop.f32.mrb[0].mxu0
  %7077 = vdwg.mxu0
  %v7078 = vtanh.pop %v7075
  %v7080 = vsel %vm857, %v7078, 0
  %7082 = vmatprep.subr.mxu0 0.0
  %v7083 = vand.u32 %v5607, 4294901760
  %7084 = vmatpush1.msra.mxu0 %v7083
  %7085 = vmatprep.subr.mxu0 0.0
  %v7086 = vand.u32 %v5608, 4294901760
  %7087 = vmatpush1.msra.mxu0 %v7086
  %7088 = vmatprep.subr.mxu0 0.0
  %v7089 = vand.u32 %v5609, 4294901760
  %7090 = vmatpush1.msra.mxu0 %v7089
  %7091 = vmatprep.subr.mxu0 0.0
  %v7092 = vand.u32 %v5610, 4294901760
  %7093 = vmatpush1.msra.mxu0 %v7092
  %7094 = vmatprep.subr.mxu0 0.0
  %7095 = vmatpush1.msra.mxu0 0.0
  %7096 = vmatprep.subr.mxu0 0.0
  %7097 = vmatpush1.msra.mxu0 0.0
  %7098 = vmatprep.subr.mxu0 0.0
  %7099 = vmatpush1.msra.mxu0 0.0
  %7100 = vmatprep.subr.mxu0 0.0
  %7101 = vmatpush1.msra.mxu0 0.0
  %7102 = vmatprep.subr.mxu0 0.0
  %7103 = vmatpush1.msra.mxu0 0.0
  %7104 = vmatprep.subr.mxu0 0.0
  %7105 = vmatpush1.msra.mxu0 0.0
  %7106 = vmatprep.subr.mxu0 0.0
  %7107 = vmatpush1.msra.mxu0 0.0
  %7108 = vmatprep.subr.mxu0 0.0
  %7109 = vmatpush1.msra.mxu0 0.0
  %7110 = vmatprep.subr.mxu0 0.0
  %7111 = vmatpush1.msra.mxu0 0.0
  %7112 = vmatprep.subr.mxu0 0.0
  %7113 = vmatpush1.msra.mxu0 0.0
  %7114 = vmatprep.subr.mxu0 0.0
  %7115 = vmatpush1.msra.mxu0 0.0
  %7116 = vmatprep.subr.mxu0 0.0
  %7117 = vmatpush1.msra.mxu0 0.0
  %7118 = vmatprep.subr.mxu0 0.0
  %7119 = vmatpush1.msra.mxu0 0.0
  %7120 = vmatprep.subr.mxu0 0.0
  %7121 = vmatpush1.msra.mxu0 0.0
  %7122 = vmatprep.subr.mxu0 0.0
  %7123 = vmatpush1.msra.mxu0 0.0
  %7124 = vmatprep.subr.mxu0 0.0
  %7125 = vmatpush1.msra.mxu0 0.0
  %7126 = vmatprep.subr.mxu0 0.0
  %7127 = vmatpush1.msra.mxu0 0.0
  %7128 = vmatprep.subr.mxu0 0.0
  %7129 = vmatpush1.msra.mxu0 0.0
  %7130 = vmatprep.subr.mxu0 0.0
  %7131 = vmatpush1.msra.mxu0 0.0
  %7132 = vmatprep.subr.mxu0 0.0
  %7133 = vmatpush1.msra.mxu0 0.0
  %7134 = vmatprep.subr.mxu0 0.0
  %7135 = vmatpush1.msra.mxu0 0.0
  %7136 = vmatprep.subr.mxu0 0.0
  %7137 = vmatpush1.msra.mxu0 0.0
  %7138 = vmatprep.subr.mxu0 0.0
  %7139 = vmatpush1.msra.mxu0 0.0
  %7140 = vmatprep.subr.mxu0 0.0
  %7141 = vmatpush1.msra.mxu0 0.0
  %7142 = vmatprep.subr.mxu0 0.0
  %7143 = vmatpush1.msra.mxu0 0.0
  %7144 = vmatprep.subr.mxu0 0.0
  %7145 = vmatpush1.msra.mxu0 0.0
  %7146 = vmatprep.subr.mxu0 0.0
  %7147 = vmatpush1.msra.mxu0 0.0
  %7148 = vmatprep.subr.mxu0 0.0
  %7149 = vmatpush1.msra.mxu0 0.0
  %7150 = vmatprep.mubr.f32.mxu0 0.0
  %v7151 = vand.u32 %v7080, 4294901760
  %v7152 = vsub.f32 %v7080, %v7151
  %v7153 = vand.u32 %v7152, 4294901760
  %v7154 = vsub.f32 %v7152, %v7153
  %v7155 = vand.u32 %v7154, 4294901760
  %7156 = vmatmul.mubr.f32.gmra.mrb[0].mxu0 %v7155
  %v7157 = vpop.f32.mrb[0].mxu0
  %v7158 = vadd.f32 %v5580, %v7157
  %v7159 = vpop.f32.mrb[0].mxu0
  %7160 = vdwg.mxu0
  %7161 = vmatprep.subr.mxu0 0.0
  %v7162 = vand.u32 %v5607, 4294901760
  %v7163 = vsub.f32 %v5607, %v7162
  %v7164 = vand.u32 %v7163, 4294901760
  %v7165 = vsub.f32 %v7163, %v7164
  %v7166 = vand.u32 %v7165, 4294901760
  %7167 = vmatpush1.msra.mxu0 %v7166
  %7168 = vmatprep.subr.mxu0 0.0
  %v7169 = vand.u32 %v5608, 4294901760
  %v7170 = vsub.f32 %v5608, %v7169
  %v7171 = vand.u32 %v7170, 4294901760
  %v7172 = vsub.f32 %v7170, %v7171
  %v7173 = vand.u32 %v7172, 4294901760
  %7174 = vmatpush1.msra.mxu0 %v7173
  %7175 = vmatprep.subr.mxu0 0.0
  %v7176 = vand.u32 %v5609, 4294901760
  %v7177 = vsub.f32 %v5609, %v7176
  %v7178 = vand.u32 %v7177, 4294901760
  %v7179 = vsub.f32 %v7177, %v7178
  %v7180 = vand.u32 %v7179, 4294901760
  %7181 = vmatpush1.msra.mxu0 %v7180
  %7182 = vmatprep.subr.mxu0 0.0
  %v7183 = vand.u32 %v5610, 4294901760
  %v7184 = vsub.f32 %v5610, %v7183
  %v7185 = vand.u32 %v7184, 4294901760
  %v7186 = vsub.f32 %v7184, %v7185
  %v7187 = vand.u32 %v7186, 4294901760
  %7188 = vmatpush1.msra.mxu0 %v7187
  %7189 = vmatprep.subr.mxu0 0.0
  %7190 = vmatpush1.msra.mxu0 0.0
  %7191 = vmatprep.subr.mxu0 0.0
  %7192 = vmatpush1.msra.mxu0 0.0
  %7193 = vmatprep.subr.mxu0 0.0
  %7194 = vmatpush1.msra.mxu0 0.0
  %7195 = vmatprep.subr.mxu0 0.0
  %7196 = vmatpush1.msra.mxu0 0.0
  %7197 = vmatprep.subr.mxu0 0.0
  %7198 = vmatpush1.msra.mxu0 0.0
  %7199 = vmatprep.subr.mxu0 0.0
  %7200 = vmatpush1.msra.mxu0 0.0
  %7201 = vmatprep.subr.mxu0 0.0
  %7202 = vmatpush1.msra.mxu0 0.0
  %7203 = vmatprep.subr.mxu0 0.0
  %7204 = vmatpush1.msra.mxu0 0.0
  %7205 = vmatprep.subr.mxu0 0.0
  %7206 = vmatpush1.msra.mxu0 0.0
  %7207 = vmatprep.subr.mxu0 0.0
  %7208 = vmatpush1.msra.mxu0 0.0
  %7209 = vmatprep.subr.mxu0 0.0
  %7210 = vmatpush1.msra.mxu0 0.0
  %7211 = vmatprep.subr.mxu0 0.0
  %7212 = vmatpush1.msra.mxu0 0.0
  %7213 = vmatprep.subr.mxu0 0.0
  %7214 = vmatpush1.msra.mxu0 0.0
  %7215 = vmatprep.subr.mxu0 0.0
  %7216 = vmatpush1.msra.mxu0 0.0
  %7217 = vmatprep.subr.mxu0 0.0
  %7218 = vmatpush1.msra.mxu0 0.0
  %7219 = vmatprep.subr.mxu0 0.0
  %7220 = vmatpush1.msra.mxu0 0.0
  %7221 = vmatprep.subr.mxu0 0.0
  %7222 = vmatpush1.msra.mxu0 0.0
  %7223 = vmatprep.subr.mxu0 0.0
  %7224 = vmatpush1.msra.mxu0 0.0
  %7225 = vmatprep.subr.mxu0 0.0
  %7226 = vmatpush1.msra.mxu0 0.0
  %7227 = vmatprep.subr.mxu0 0.0
  %7228 = vmatpush1.msra.mxu0 0.0
  %7229 = vmatprep.subr.mxu0 0.0
  %7230 = vmatpush1.msra.mxu0 0.0
  %7231 = vmatprep.subr.mxu0 0.0
  %7232 = vmatpush1.msra.mxu0 0.0
  %7233 = vmatprep.subr.mxu0 0.0
  %7234 = vmatpush1.msra.mxu0 0.0
  %7235 = vmatprep.subr.mxu0 0.0
  %7236 = vmatpush1.msra.mxu0 0.0
  %7237 = vmatprep.subr.mxu0 0.0
  %7238 = vmatpush1.msra.mxu0 0.0
  %7239 = vmatprep.subr.mxu0 0.0
  %7240 = vmatpush1.msra.mxu0 0.0
  %7241 = vmatprep.subr.mxu0 0.0
  %7242 = vmatpush1.msra.mxu0 0.0
  %7243 = vmatprep.subr.mxu0 0.0
  %7244 = vmatpush1.msra.mxu0 0.0
  %7245 = vmatprep.mubr.f32.mxu0 0.0
  %v7246 = vand.u32 %v7080, 4294901760
  %7247 = vmatmul.mubr.f32.gmra.mrb[0].mxu0 %v7246
  %v7248 = vpop.f32.mrb[0].mxu0
  %v7249 = vadd.f32 %v7158, %v7248
  %v7250 = vpop.f32.mrb[0].mxu0
  %7251 = vdwg.mxu0
  %7252 = vmatprep.subr.mxu0 0.0
  %v7253 = vand.u32 %v5607, 4294901760
  %v7254 = vsub.f32 %v5607, %v7253
  %7255 = vmatpush1.msra.mxu0 %v7254
  %7256 = vmatprep.subr.mxu0 0.0
  %v7257 = vand.u32 %v5608, 4294901760
  %v7258 = vsub.f32 %v5608, %v7257
  %7259 = vmatpush1.msra.mxu0 %v7258
  %7260 = vmatprep.subr.mxu0 0.0
  %v7261 = vand.u32 %v5609, 4294901760
  %v7262 = vsub.f32 %v5609, %v7261
  %7263 = vmatpush1.msra.mxu0 %v7262
  %7264 = vmatprep.subr.mxu0 0.0
  %v7265 = vand.u32 %v5610, 4294901760
  %v7266 = vsub.f32 %v5610, %v7265
  %7267 = vmatpush1.msra.mxu0 %v7266
  %7268 = vmatprep.subr.mxu0 0.0
  %7269 = vmatpush1.msra.mxu0 0.0
  %7270 = vmatprep.subr.mxu0 0.0
  %7271 = vmatpush1.msra.mxu0 0.0
  %7272 = vmatprep.subr.mxu0 0.0
  %7273 = vmatpush1.msra.mxu0 0.0
  %7274 = vmatprep.subr.mxu0 0.0
  %7275 = vmatpush1.msra.mxu0 0.0
  %7276 = vmatprep.subr.mxu0 0.0
  %7277 = vmatpush1.msra.mxu0 0.0
  %7278 = vmatprep.subr.mxu0 0.0
  %7279 = vmatpush1.msra.mxu0 0.0
  %7280 = vmatprep.subr.mxu0 0.0
  %7281 = vmatpush1.msra.mxu0 0.0
  %7282 = vmatprep.subr.mxu0 0.0
  %7283 = vmatpush1.msra.mxu0 0.0
  %7284 = vmatprep.subr.mxu0 0.0
  %7285 = vmatpush1.msra.mxu0 0.0
  %7286 = vmatprep.subr.mxu0 0.0
  %7287 = vmatpush1.msra.mxu0 0.0
  %7288 = vmatprep.subr.mxu0 0.0
  %7289 = vmatpush1.msra.mxu0 0.0
  %7290 = vmatprep.subr.mxu0 0.0
  %7291 = vmatpush1.msra.mxu0 0.0
  %7292 = vmatprep.subr.mxu0 0.0
  %7293 = vmatpush1.msra.mxu0 0.0
  %7294 = vmatprep.subr.mxu0 0.0
  %7295 = vmatpush1.msra.mxu0 0.0
  %7296 = vmatprep.subr.mxu0 0.0
  %7297 = vmatpush1.msra.mxu0 0.0
  %7298 = vmatprep.subr.mxu0 0.0
  %7299 = vmatpush1.msra.mxu0 0.0
  %7300 = vmatprep.subr.mxu0 0.0
  %7301 = vmatpush1.msra.mxu0 0.0
  %7302 = vmatprep.subr.mxu0 0.0
  %7303 = vmatpush1.msra.mxu0 0.0
  %7304 = vmatprep.subr.mxu0 0.0
  %7305 = vmatpush1.msra.mxu0 0.0
  %7306 = vmatprep.subr.mxu0 0.0
  %7307 = vmatpush1.msra.mxu0 0.0
  %7308 = vmatprep.subr.mxu0 0.0
  %7309 = vmatpush1.msra.mxu0 0.0
  %7310 = vmatprep.subr.mxu0 0.0
  %7311 = vmatpush1.msra.mxu0 0.0
  %7312 = vmatprep.subr.mxu0 0.0
  %7313 = vmatpush1.msra.mxu0 0.0
  %7314 = vmatprep.subr.mxu0 0.0
  %7315 = vmatpush1.msra.mxu0 0.0
  %7316 = vmatprep.subr.mxu0 0.0
  %7317 = vmatpush1.msra.mxu0 0.0
  %7318 = vmatprep.subr.mxu0 0.0
  %7319 = vmatpush1.msra.mxu0 0.0
  %7320 = vmatprep.subr.mxu0 0.0
  %7321 = vmatpush1.msra.mxu0 0.0
  %7322 = vmatprep.subr.mxu0 0.0
  %7323 = vmatpush1.msra.mxu0 0.0
  %7324 = vmatprep.mubr.f32.mxu0 0.0
  %v7325 = vand.u32 %v7080, 4294901760
  %v7326 = vsub.f32 %v7080, %v7325
  %7327 = vmatmul.mubr.f32.gmra.mrb[0].mxu0 %v7326
  %v7328 = vpop.f32.mrb[0].mxu0
  %v7329 = vadd.f32 %v7249, %v7328
  %v7330 = vpop.f32.mrb[0].mxu0
  %7331 = vdwg.mxu0
  %7332 = vmatprep.subr.mxu0 0.0
  %v7333 = vand.u32 %v5607, 4294901760
  %7334 = vmatpush1.msra.mxu0 %v7333
  %7335 = vmatprep.subr.mxu0 0.0
  %v7336 = vand.u32 %v5608, 4294901760
  %7337 = vmatpush1.msra.mxu0 %v7336
  %7338 = vmatprep.subr.mxu0 0.0
  %v7339 = vand.u32 %v5609, 4294901760
  %7340 = vmatpush1.msra.mxu0 %v7339
  %7341 = vmatprep.subr.mxu0 0.0
  %v7342 = vand.u32 %v5610, 4294901760
  %7343 = vmatpush1.msra.mxu0 %v7342
  %7344 = vmatprep.subr.mxu0 0.0
  %7345 = vmatpush1.msra.mxu0 0.0
  %7346 = vmatprep.subr.mxu0 0.0
  %7347 = vmatpush1.msra.mxu0 0.0
  %7348 = vmatprep.subr.mxu0 0.0
  %7349 = vmatpush1.msra.mxu0 0.0
  %7350 = vmatprep.subr.mxu0 0.0
  %7351 = vmatpush1.msra.mxu0 0.0
  %7352 = vmatprep.subr.mxu0 0.0
  %7353 = vmatpush1.msra.mxu0 0.0
  %7354 = vmatprep.subr.mxu0 0.0
  %7355 = vmatpush1.msra.mxu0 0.0
  %7356 = vmatprep.subr.mxu0 0.0
  %7357 = vmatpush1.msra.mxu0 0.0
  %7358 = vmatprep.subr.mxu0 0.0
  %7359 = vmatpush1.msra.mxu0 0.0
  %7360 = vmatprep.subr.mxu0 0.0
  %7361 = vmatpush1.msra.mxu0 0.0
  %7362 = vmatprep.subr.mxu0 0.0
  %7363 = vmatpush1.msra.mxu0 0.0
  %7364 = vmatprep.subr.mxu0 0.0
  %7365 = vmatpush1.msra.mxu0 0.0
  %7366 = vmatprep.subr.mxu0 0.0
  %7367 = vmatpush1.msra.mxu0 0.0
  %7368 = vmatprep.subr.mxu0 0.0
  %7369 = vmatpush1.msra.mxu0 0.0
  %7370 = vmatprep.subr.mxu0 0.0
  %7371 = vmatpush1.msra.mxu0 0.0
  %7372 = vmatprep.subr.mxu0 0.0
  %7373 = vmatpush1.msra.mxu0 0.0
  %7374 = vmatprep.subr.mxu0 0.0
  %7375 = vmatpush1.msra.mxu0 0.0
  %7376 = vmatprep.subr.mxu0 0.0
  %7377 = vmatpush1.msra.mxu0 0.0
  %7378 = vmatprep.subr.mxu0 0.0
  %7379 = vmatpush1.msra.mxu0 0.0
  %7380 = vmatprep.subr.mxu0 0.0
  %7381 = vmatpush1.msra.mxu0 0.0
  %7382 = vmatprep.subr.mxu0 0.0
  %7383 = vmatpush1.msra.mxu0 0.0
  %7384 = vmatprep.subr.mxu0 0.0
  %7385 = vmatpush1.msra.mxu0 0.0
  %7386 = vmatprep.subr.mxu0 0.0
  %7387 = vmatpush1.msra.mxu0 0.0
  %7388 = vmatprep.subr.mxu0 0.0
  %7389 = vmatpush1.msra.mxu0 0.0
  %7390 = vmatprep.subr.mxu0 0.0
  %7391 = vmatpush1.msra.mxu0 0.0
  %7392 = vmatprep.subr.mxu0 0.0
  %7393 = vmatpush1.msra.mxu0 0.0
  %7394 = vmatprep.subr.mxu0 0.0
  %7395 = vmatpush1.msra.mxu0 0.0
  %7396 = vmatprep.subr.mxu0 0.0
  %7397 = vmatpush1.msra.mxu0 0.0
  %7398 = vmatprep.subr.mxu0 0.0
  %7399 = vmatpush1.msra.mxu0 0.0
  %7400 = vmatprep.mubr.f32.mxu0 0.0
  %v7401 = vand.u32 %v7080, 4294901760
  %v7402 = vsub.f32 %v7080, %v7401
  %v7403 = vand.u32 %v7402, 4294901760
  %7404 = vmatmul.mubr.f32.gmra.mrb[0].mxu0 %v7403
  %v7405 = vpop.f32.mrb[0].mxu0
  %v7406 = vadd.f32 %v7329, %v7405
  %v7407 = vpop.f32.mrb[0].mxu0
  %7408 = vdwg.mxu0
  %7409 = vmatprep.subr.mxu0 0.0
  %v7410 = vand.u32 %v5607, 4294901760
  %v7411 = vsub.f32 %v5607, %v7410
  %v7412 = vand.u32 %v7411, 4294901760
  %7413 = vmatpush1.msra.mxu0 %v7412
  %7414 = vmatprep.subr.mxu0 0.0
  %v7415 = vand.u32 %v5608, 4294901760
  %v7416 = vsub.f32 %v5608, %v7415
  %v7417 = vand.u32 %v7416, 4294901760
  %7418 = vmatpush1.msra.mxu0 %v7417
  %7419 = vmatprep.subr.mxu0 0.0
  %v7420 = vand.u32 %v5609, 4294901760
  %v7421 = vsub.f32 %v5609, %v7420
  %v7422 = vand.u32 %v7421, 4294901760
  %7423 = vmatpush1.msra.mxu0 %v7422
  %7424 = vmatprep.subr.mxu0 0.0
  %v7425 = vand.u32 %v5610, 4294901760
  %v7426 = vsub.f32 %v5610, %v7425
  %v7427 = vand.u32 %v7426, 4294901760
  %7428 = vmatpush1.msra.mxu0 %v7427
  %7429 = vmatprep.subr.mxu0 0.0
  %7430 = vmatpush1.msra.mxu0 0.0
  %7431 = vmatprep.subr.mxu0 0.0
  %7432 = vmatpush1.msra.mxu0 0.0
  %7433 = vmatprep.subr.mxu0 0.0
  %7434 = vmatpush1.msra.mxu0 0.0
  %7435 = vmatprep.subr.mxu0 0.0
  %7436 = vmatpush1.msra.mxu0 0.0
  %7437 = vmatprep.subr.mxu0 0.0
  %7438 = vmatpush1.msra.mxu0 0.0
  %7439 = vmatprep.subr.mxu0 0.0
  %7440 = vmatpush1.msra.mxu0 0.0
  %7441 = vmatprep.subr.mxu0 0.0
  %7442 = vmatpush1.msra.mxu0 0.0
  %7443 = vmatprep.subr.mxu0 0.0
  %7444 = vmatpush1.msra.mxu0 0.0
  %7445 = vmatprep.subr.mxu0 0.0
  %7446 = vmatpush1.msra.mxu0 0.0
  %7447 = vmatprep.subr.mxu0 0.0
  %7448 = vmatpush1.msra.mxu0 0.0
  %7449 = vmatprep.subr.mxu0 0.0
  %7450 = vmatpush1.msra.mxu0 0.0
  %7451 = vmatprep.subr.mxu0 0.0
  %7452 = vmatpush1.msra.mxu0 0.0
  %7453 = vmatprep.subr.mxu0 0.0
  %7454 = vmatpush1.msra.mxu0 0.0
  %7455 = vmatprep.subr.mxu0 0.0
  %7456 = vmatpush1.msra.mxu0 0.0
  %7457 = vmatprep.subr.mxu0 0.0
  %7458 = vmatpush1.msra.mxu0 0.0
  %7459 = vmatprep.subr.mxu0 0.0
  %7460 = vmatpush1.msra.mxu0 0.0
  %7461 = vmatprep.subr.mxu0 0.0
  %7462 = vmatpush1.msra.mxu0 0.0
  %7463 = vmatprep.subr.mxu0 0.0
  %7464 = vmatpush1.msra.mxu0 0.0
  %7465 = vmatprep.subr.mxu0 0.0
  %7466 = vmatpush1.msra.mxu0 0.0
  %7467 = vmatprep.subr.mxu0 0.0
  %7468 = vmatpush1.msra.mxu0 0.0
  %7469 = vmatprep.subr.mxu0 0.0
  %7470 = vmatpush1.msra.mxu0 0.0
  %7471 = vmatprep.subr.mxu0 0.0
  %7472 = vmatpush1.msra.mxu0 0.0
  %7473 = vmatprep.subr.mxu0 0.0
  %7474 = vmatpush1.msra.mxu0 0.0
  %7475 = vmatprep.subr.mxu0 0.0
  %7476 = vmatpush1.msra.mxu0 0.0
  %7477 = vmatprep.subr.mxu0 0.0
  %7478 = vmatpush1.msra.mxu0 0.0
  %7479 = vmatprep.subr.mxu0 0.0
  %7480 = vmatpush1.msra.mxu0 0.0
  %7481 = vmatprep.subr.mxu0 0.0
  %7482 = vmatpush1.msra.mxu0 0.0
  %7483 = vmatprep.subr.mxu0 0.0
  %7484 = vmatpush1.msra.mxu0 0.0
  %7485 = vmatprep.mubr.f32.mxu0 0.0
  %v7486 = vand.u32 %v7080, 4294901760
  %7487 = vmatmul.mubr.f32.gmra.mrb[0].mxu0 %v7486
  %v7488 = vpop.f32.mrb[0].mxu0
  %v7489 = vadd.f32 %v7406, %v7488
  %v7490 = vpop.f32.mrb[0].mxu0
  %7491 = vdwg.mxu0
  %7492 = vmatprep.subr.mxu0 0.0
  %v7493 = vand.u32 %v5607, 4294901760
  %7494 = vmatpush1.msra.mxu0 %v7493
  %7495 = vmatprep.subr.mxu0 0.0
  %v7496 = vand.u32 %v5608, 4294901760
  %7497 = vmatpush1.msra.mxu0 %v7496
  %7498 = vmatprep.subr.mxu0 0.0
  %v7499 = vand.u32 %v5609, 4294901760
  %7500 = vmatpush1.msra.mxu0 %v7499
  %7501 = vmatprep.subr.mxu0 0.0
  %v7502 = vand.u32 %v5610, 4294901760
  %7503 = vmatpush1.msra.mxu0 %v7502
  %7504 = vmatprep.subr.mxu0 0.0
  %7505 = vmatpush1.msra.mxu0 0.0
  %7506 = vmatprep.subr.mxu0 0.0
  %7507 = vmatpush1.msra.mxu0 0.0
  %7508 = vmatprep.subr.mxu0 0.0
  %7509 = vmatpush1.msra.mxu0 0.0
  %7510 = vmatprep.subr.mxu0 0.0
  %7511 = vmatpush1.msra.mxu0 0.0
  %7512 = vmatprep.subr.mxu0 0.0
  %7513 = vmatpush1.msra.mxu0 0.0
  %7514 = vmatprep.subr.mxu0 0.0
  %7515 = vmatpush1.msra.mxu0 0.0
  %7516 = vmatprep.subr.mxu0 0.0
  %7517 = vmatpush1.msra.mxu0 0.0
  %7518 = vmatprep.subr.mxu0 0.0
  %7519 = vmatpush1.msra.mxu0 0.0
  %7520 = vmatprep.subr.mxu0 0.0
  %7521 = vmatpush1.msra.mxu0 0.0
  %7522 = vmatprep.subr.mxu0 0.0
  %7523 = vmatpush1.msra.mxu0 0.0
  %7524 = vmatprep.subr.mxu0 0.0
  %7525 = vmatpush1.msra.mxu0 0.0
  %7526 = vmatprep.subr.mxu0 0.0
  %7527 = vmatpush1.msra.mxu0 0.0
  %7528 = vmatprep.subr.mxu0 0.0
  %7529 = vmatpush1.msra.mxu0 0.0
  %7530 = vmatprep.subr.mxu0 0.0
  %7531 = vmatpush1.msra.mxu0 0.0
  %7532 = vmatprep.subr.mxu0 0.0
  %7533 = vmatpush1.msra.mxu0 0.0
  %7534 = vmatprep.subr.mxu0 0.0
  %7535 = vmatpush1.msra.mxu0 0.0
  %7536 = vmatprep.subr.mxu0 0.0
  %7537 = vmatpush1.msra.mxu0 0.0
  %7538 = vmatprep.subr.mxu0 0.0
  %7539 = vmatpush1.msra.mxu0 0.0
  %7540 = vmatprep.subr.mxu0 0.0
  %7541 = vmatpush1.msra.mxu0 0.0
  %7542 = vmatprep.subr.mxu0 0.0
  %7543 = vmatpush1.msra.mxu0 0.0
  %7544 = vmatprep.subr.mxu0 0.0
  %7545 = vmatpush1.msra.mxu0 0.0
  %7546 = vmatprep.subr.mxu0 0.0
  %7547 = vmatpush1.msra.mxu0 0.0
  %7548 = vmatprep.subr.mxu0 0.0
  %7549 = vmatpush1.msra.mxu0 0.0
  %7550 = vmatprep.subr.mxu0 0.0
  %7551 = vmatpush1.msra.mxu0 0.0
  %7552 = vmatprep.subr.mxu0 0.0
  %7553 = vmatpush1.msra.mxu0 0.0
  %7554 = vmatprep.subr.mxu0 0.0
  %7555 = vmatpush1.msra.mxu0 0.0
  %7556 = vmatprep.subr.mxu0 0.0
  %7557 = vmatpush1.msra.mxu0 0.0
  %7558 = vmatprep.subr.mxu0 0.0
  %7559 = vmatpush1.msra.mxu0 0.0
  %7560 = vmatprep.mubr.f32.mxu0 0.0
  %v7561 = vand.u32 %v7080, 4294901760
  %7562 = vmatmul.mubr.f32.gmra.mrb[0].mxu0 %v7561
  %v7563 = vpop.f32.mrb[0].mxu0
  %v7564 = vadd.f32 %v7489, %v7563
  %v7565 = vpop.f32.mrb[0].mxu0
  %7566 = vdwg.mxu0
  %v7567 = vtanh.pop %v7564
  %v7569 = vsel %vm857, %v7567, 0
  %7571 = vmatprep.subr.mxu0 0.0
  %v7572 = vand.u32 %v5607, 4294901760
  %7573 = vmatpush1.msra.mxu0 %v7572
  %7574 = vmatprep.subr.mxu0 0.0
  %v7575 = vand.u32 %v5608, 4294901760
  %7576 = vmatpush1.msra.mxu0 %v7575
  %7577 = vmatprep.subr.mxu0 0.0
  %v7578 = vand.u32 %v5609, 4294901760
  %7579 = vmatpush1.msra.mxu0 %v7578
  %7580 = vmatprep.subr.mxu0 0.0
  %v7581 = vand.u32 %v5610, 4294901760
  %7582 = vmatpush1.msra.mxu0 %v7581
  %7583 = vmatprep.subr.mxu0 0.0
  %7584 = vmatpush1.msra.mxu0 0.0
  %7585 = vmatprep.subr.mxu0 0.0
  %7586 = vmatpush1.msra.mxu0 0.0
  %7587 = vmatprep.subr.mxu0 0.0
  %7588 = vmatpush1.msra.mxu0 0.0
  %7589 = vmatprep.subr.mxu0 0.0
  %7590 = vmatpush1.msra.mxu0 0.0
  %7591 = vmatprep.subr.mxu0 0.0
  %7592 = vmatpush1.msra.mxu0 0.0
  %7593 = vmatprep.subr.mxu0 0.0
  %7594 = vmatpush1.msra.mxu0 0.0
  %7595 = vmatprep.subr.mxu0 0.0
  %7596 = vmatpush1.msra.mxu0 0.0
  %7597 = vmatprep.subr.mxu0 0.0
  %7598 = vmatpush1.msra.mxu0 0.0
  %7599 = vmatprep.subr.mxu0 0.0
  %7600 = vmatpush1.msra.mxu0 0.0
  %7601 = vmatprep.subr.mxu0 0.0
  %7602 = vmatpush1.msra.mxu0 0.0
  %7603 = vmatprep.subr.mxu0 0.0
  %7604 = vmatpush1.msra.mxu0 0.0
  %7605 = vmatprep.subr.mxu0 0.0
  %7606 = vmatpush1.msra.mxu0 0.0
  %7607 = vmatprep.subr.mxu0 0.0
  %7608 = vmatpush1.msra.mxu0 0.0
  %7609 = vmatprep.subr.mxu0 0.0
  %7610 = vmatpush1.msra.mxu0 0.0
  %7611 = vmatprep.subr.mxu0 0.0
  %7612 = vmatpush1.msra.mxu0 0.0
  %7613 = vmatprep.subr.mxu0 0.0
  %7614 = vmatpush1.msra.mxu0 0.0
  %7615 = vmatprep.subr.mxu0 0.0
  %7616 = vmatpush1.msra.mxu0 0.0
  %7617 = vmatprep.subr.mxu0 0.0
  %7618 = vmatpush1.msra.mxu0 0.0
  %7619 = vmatprep.subr.mxu0 0.0
  %7620 = vmatpush1.msra.mxu0 0.0
  %7621 = vmatprep.subr.mxu0 0.0
  %7622 = vmatpush1.msra.mxu0 0.0
  %7623 = vmatprep.subr.mxu0 0.0
  %7624 = vmatpush1.msra.mxu0 0.0
  %7625 = vmatprep.subr.mxu0 0.0
  %7626 = vmatpush1.msra.mxu0 0.0
  %7627 = vmatprep.subr.mxu0 0.0
  %7628 = vmatpush1.msra.mxu0 0.0
  %7629 = vmatprep.subr.mxu0 0.0
  %7630 = vmatpush1.msra.mxu0 0.0
  %7631 = vmatprep.subr.mxu0 0.0
  %7632 = vmatpush1.msra.mxu0 0.0
  %7633 = vmatprep.subr.mxu0 0.0
  %7634 = vmatpush1.msra.mxu0 0.0
  %7635 = vmatprep.subr.mxu0 0.0
  %7636 = vmatpush1.msra.mxu0 0.0
  %7637 = vmatprep.subr.mxu0 0.0
  %7638 = vmatpush1.msra.mxu0 0.0
  %7639 = vmatprep.mubr.f32.mxu0 0.0
  %v7640 = vand.u32 %v7569, 4294901760
  %v7641 = vsub.f32 %v7569, %v7640
  %v7642 = vand.u32 %v7641, 4294901760
  %v7643 = vsub.f32 %v7641, %v7642
  %v7644 = vand.u32 %v7643, 4294901760
  %7645 = vmatmul.mubr.f32.gmra.mrb[0].mxu0 %v7644
  %v7646 = vpop.f32.mrb[0].mxu0
  %v7647 = vadd.f32 %v5586, %v7646
  %v7648 = vpop.f32.mrb[0].mxu0
  %7649 = vdwg.mxu0
  %7650 = vmatprep.subr.mxu0 0.0
  %v7651 = vand.u32 %v5607, 4294901760
  %v7652 = vsub.f32 %v5607, %v7651
  %v7653 = vand.u32 %v7652, 4294901760
  %v7654 = vsub.f32 %v7652, %v7653
  %v7655 = vand.u32 %v7654, 4294901760
  %7656 = vmatpush1.msra.mxu0 %v7655
  %7657 = vmatprep.subr.mxu0 0.0
  %v7658 = vand.u32 %v5608, 4294901760
  %v7659 = vsub.f32 %v5608, %v7658
  %v7660 = vand.u32 %v7659, 4294901760
  %v7661 = vsub.f32 %v7659, %v7660
  %v7662 = vand.u32 %v7661, 4294901760
  %7663 = vmatpush1.msra.mxu0 %v7662
  %7664 = vmatprep.subr.mxu0 0.0
  %v7665 = vand.u32 %v5609, 4294901760
  %v7666 = vsub.f32 %v5609, %v7665
  %v7667 = vand.u32 %v7666, 4294901760
  %v7668 = vsub.f32 %v7666, %v7667
  %v7669 = vand.u32 %v7668, 4294901760
  %7670 = vmatpush1.msra.mxu0 %v7669
  %7671 = vmatprep.subr.mxu0 0.0
  %v7672 = vand.u32 %v5610, 4294901760
  %v7673 = vsub.f32 %v5610, %v7672
  %v7674 = vand.u32 %v7673, 4294901760
  %v7675 = vsub.f32 %v7673, %v7674
  %v7676 = vand.u32 %v7675, 4294901760
  %7677 = vmatpush1.msra.mxu0 %v7676
  %7678 = vmatprep.subr.mxu0 0.0
  %7679 = vmatpush1.msra.mxu0 0.0
  %7680 = vmatprep.subr.mxu0 0.0
  %7681 = vmatpush1.msra.mxu0 0.0
  %7682 = vmatprep.subr.mxu0 0.0
  %7683 = vmatpush1.msra.mxu0 0.0
  %7684 = vmatprep.subr.mxu0 0.0
  %7685 = vmatpush1.msra.mxu0 0.0
  %7686 = vmatprep.subr.mxu0 0.0
  %7687 = vmatpush1.msra.mxu0 0.0
  %7688 = vmatprep.subr.mxu0 0.0
  %7689 = vmatpush1.msra.mxu0 0.0
  %7690 = vmatprep.subr.mxu0 0.0
  %7691 = vmatpush1.msra.mxu0 0.0
  %7692 = vmatprep.subr.mxu0 0.0
  %7693 = vmatpush1.msra.mxu0 0.0
  %7694 = vmatprep.subr.mxu0 0.0
  %7695 = vmatpush1.msra.mxu0 0.0
  %7696 = vmatprep.subr.mxu0 0.0
  %7697 = vmatpush1.msra.mxu0 0.0
  %7698 = vmatprep.subr.mxu0 0.0
  %7699 = vmatpush1.msra.mxu0 0.0
  %7700 = vmatprep.subr.mxu0 0.0
  %7701 = vmatpush1.msra.mxu0 0.0
  %7702 = vmatprep.subr.mxu0 0.0
  %7703 = vmatpush1.msra.mxu0 0.0
  %7704 = vmatprep.subr.mxu0 0.0
  %7705 = vmatpush1.msra.mxu0 0.0
  %7706 = vmatprep.subr.mxu0 0.0
  %7707 = vmatpush1.msra.mxu0 0.0
  %7708 = vmatprep.subr.mxu0 0.0
  %7709 = vmatpush1.msra.mxu0 0.0
  %7710 = vmatprep.subr.mxu0 0.0
  %7711 = vmatpush1.msra.mxu0 0.0
  %7712 = vmatprep.subr.mxu0 0.0
  %7713 = vmatpush1.msra.mxu0 0.0
  %7714 = vmatprep.subr.mxu0 0.0
  %7715 = vmatpush1.msra.mxu0 0.0
  %7716 = vmatprep.subr.mxu0 0.0
  %7717 = vmatpush1.msra.mxu0 0.0
  %7718 = vmatprep.subr.mxu0 0.0
  %7719 = vmatpush1.msra.mxu0 0.0
  %7720 = vmatprep.subr.mxu0 0.0
  %7721 = vmatpush1.msra.mxu0 0.0
  %7722 = vmatprep.subr.mxu0 0.0
  %7723 = vmatpush1.msra.mxu0 0.0
  %7724 = vmatprep.subr.mxu0 0.0
  %7725 = vmatpush1.msra.mxu0 0.0
  %7726 = vmatprep.subr.mxu0 0.0
  %7727 = vmatpush1.msra.mxu0 0.0
  %7728 = vmatprep.subr.mxu0 0.0
  %7729 = vmatpush1.msra.mxu0 0.0
  %7730 = vmatprep.subr.mxu0 0.0
  %7731 = vmatpush1.msra.mxu0 0.0
  %7732 = vmatprep.subr.mxu0 0.0
  %7733 = vmatpush1.msra.mxu0 0.0
  %7734 = vmatprep.mubr.f32.mxu0 0.0
  %v7735 = vand.u32 %v7569, 4294901760
  %7736 = vmatmul.mubr.f32.gmra.mrb[0].mxu0 %v7735
  %v7737 = vpop.f32.mrb[0].mxu0
  %v7738 = vadd.f32 %v7647, %v7737
  %v7739 = vpop.f32.mrb[0].mxu0
  %7740 = vdwg.mxu0
  %7741 = vmatprep.subr.mxu0 0.0
  %v7742 = vand.u32 %v5607, 4294901760
  %v7743 = vsub.f32 %v5607, %v7742
  %7744 = vmatpush1.msra.mxu0 %v7743
  %7745 = vmatprep.subr.mxu0 0.0
  %v7746 = vand.u32 %v5608, 4294901760
  %v7747 = vsub.f32 %v5608, %v7746
  %7748 = vmatpush1.msra.mxu0 %v7747
  %7749 = vmatprep.subr.mxu0 0.0
  %v7750 = vand.u32 %v5609, 4294901760
  %v7751 = vsub.f32 %v5609, %v7750
  %7752 = vmatpush1.msra.mxu0 %v7751
  %7753 = vmatprep.subr.mxu0 0.0
  %v7754 = vand.u32 %v5610, 4294901760
  %v7755 = vsub.f32 %v5610, %v7754
  %7756 = vmatpush1.msra.mxu0 %v7755
  %7757 = vmatprep.subr.mxu0 0.0
  %7758 = vmatpush1.msra.mxu0 0.0
  %7759 = vmatprep.subr.mxu0 0.0
  %7760 = vmatpush1.msra.mxu0 0.0
  %7761 = vmatprep.subr.mxu0 0.0
  %7762 = vmatpush1.msra.mxu0 0.0
  %7763 = vmatprep.subr.mxu0 0.0
  %7764 = vmatpush1.msra.mxu0 0.0
  %7765 = vmatprep.subr.mxu0 0.0
  %7766 = vmatpush1.msra.mxu0 0.0
  %7767 = vmatprep.subr.mxu0 0.0
  %7768 = vmatpush1.msra.mxu0 0.0
  %7769 = vmatprep.subr.mxu0 0.0
  %7770 = vmatpush1.msra.mxu0 0.0
  %7771 = vmatprep.subr.mxu0 0.0
  %7772 = vmatpush1.msra.mxu0 0.0
  %7773 = vmatprep.subr.mxu0 0.0
  %7774 = vmatpush1.msra.mxu0 0.0
  %7775 = vmatprep.subr.mxu0 0.0
  %7776 = vmatpush1.msra.mxu0 0.0
  %7777 = vmatprep.subr.mxu0 0.0
  %7778 = vmatpush1.msra.mxu0 0.0
  %7779 = vmatprep.subr.mxu0 0.0
  %7780 = vmatpush1.msra.mxu0 0.0
  %7781 = vmatprep.subr.mxu0 0.0
  %7782 = vmatpush1.msra.mxu0 0.0
  %7783 = vmatprep.subr.mxu0 0.0
  %7784 = vmatpush1.msra.mxu0 0.0
  %7785 = vmatprep.subr.mxu0 0.0
  %7786 = vmatpush1.msra.mxu0 0.0
  %7787 = vmatprep.subr.mxu0 0.0
  %7788 = vmatpush1.msra.mxu0 0.0
  %7789 = vmatprep.subr.mxu0 0.0
  %7790 = vmatpush1.msra.mxu0 0.0
  %7791 = vmatprep.subr.mxu0 0.0
  %7792 = vmatpush1.msra.mxu0 0.0
  %7793 = vmatprep.subr.mxu0 0.0
  %7794 = vmatpush1.msra.mxu0 0.0
  %7795 = vmatprep.subr.mxu0 0.0
  %7796 = vmatpush1.msra.mxu0 0.0
  %7797 = vmatprep.subr.mxu0 0.0
  %7798 = vmatpush1.msra.mxu0 0.0
  %7799 = vmatprep.subr.mxu0 0.0
  %7800 = vmatpush1.msra.mxu0 0.0
  %7801 = vmatprep.subr.mxu0 0.0
  %7802 = vmatpush1.msra.mxu0 0.0
  %7803 = vmatprep.subr.mxu0 0.0
  %7804 = vmatpush1.msra.mxu0 0.0
  %7805 = vmatprep.subr.mxu0 0.0
  %7806 = vmatpush1.msra.mxu0 0.0
  %7807 = vmatprep.subr.mxu0 0.0
  %7808 = vmatpush1.msra.mxu0 0.0
  %7809 = vmatprep.subr.mxu0 0.0
  %7810 = vmatpush1.msra.mxu0 0.0
  %7811 = vmatprep.subr.mxu0 0.0
  %7812 = vmatpush1.msra.mxu0 0.0
  %7813 = vmatprep.mubr.f32.mxu0 0.0
  %v7814 = vand.u32 %v7569, 4294901760
  %v7815 = vsub.f32 %v7569, %v7814
  %7816 = vmatmul.mubr.f32.gmra.mrb[0].mxu0 %v7815
  %v7817 = vpop.f32.mrb[0].mxu0
  %v7818 = vadd.f32 %v7738, %v7817
  %v7819 = vpop.f32.mrb[0].mxu0
  %7820 = vdwg.mxu0
  %7821 = vmatprep.subr.mxu0 0.0
  %v7822 = vand.u32 %v5607, 4294901760
  %7823 = vmatpush1.msra.mxu0 %v7822
  %7824 = vmatprep.subr.mxu0 0.0
  %v7825 = vand.u32 %v5608, 4294901760
  %7826 = vmatpush1.msra.mxu0 %v7825
  %7827 = vmatprep.subr.mxu0 0.0
  %v7828 = vand.u32 %v5609, 4294901760
  %7829 = vmatpush1.msra.mxu0 %v7828
  %7830 = vmatprep.subr.mxu0 0.0
  %v7831 = vand.u32 %v5610, 4294901760
  %7832 = vmatpush1.msra.mxu0 %v7831
  %7833 = vmatprep.subr.mxu0 0.0
  %7834 = vmatpush1.msra.mxu0 0.0
  %7835 = vmatprep.subr.mxu0 0.0
  %7836 = vmatpush1.msra.mxu0 0.0
  %7837 = vmatprep.subr.mxu0 0.0
  %7838 = vmatpush1.msra.mxu0 0.0
  %7839 = vmatprep.subr.mxu0 0.0
  %7840 = vmatpush1.msra.mxu0 0.0
  %7841 = vmatprep.subr.mxu0 0.0
  %7842 = vmatpush1.msra.mxu0 0.0
  %7843 = vmatprep.subr.mxu0 0.0
  %7844 = vmatpush1.msra.mxu0 0.0
  %7845 = vmatprep.subr.mxu0 0.0
  %7846 = vmatpush1.msra.mxu0 0.0
  %7847 = vmatprep.subr.mxu0 0.0
  %7848 = vmatpush1.msra.mxu0 0.0
  %7849 = vmatprep.subr.mxu0 0.0
  %7850 = vmatpush1.msra.mxu0 0.0
  %7851 = vmatprep.subr.mxu0 0.0
  %7852 = vmatpush1.msra.mxu0 0.0
  %7853 = vmatprep.subr.mxu0 0.0
  %7854 = vmatpush1.msra.mxu0 0.0
  %7855 = vmatprep.subr.mxu0 0.0
  %7856 = vmatpush1.msra.mxu0 0.0
  %7857 = vmatprep.subr.mxu0 0.0
  %7858 = vmatpush1.msra.mxu0 0.0
  %7859 = vmatprep.subr.mxu0 0.0
  %7860 = vmatpush1.msra.mxu0 0.0
  %7861 = vmatprep.subr.mxu0 0.0
  %7862 = vmatpush1.msra.mxu0 0.0
  %7863 = vmatprep.subr.mxu0 0.0
  %7864 = vmatpush1.msra.mxu0 0.0
  %7865 = vmatprep.subr.mxu0 0.0
  %7866 = vmatpush1.msra.mxu0 0.0
  %7867 = vmatprep.subr.mxu0 0.0
  %7868 = vmatpush1.msra.mxu0 0.0
  %7869 = vmatprep.subr.mxu0 0.0
  %7870 = vmatpush1.msra.mxu0 0.0
  %7871 = vmatprep.subr.mxu0 0.0
  %7872 = vmatpush1.msra.mxu0 0.0
  %7873 = vmatprep.subr.mxu0 0.0
  %7874 = vmatpush1.msra.mxu0 0.0
  %7875 = vmatprep.subr.mxu0 0.0
  %7876 = vmatpush1.msra.mxu0 0.0
  %7877 = vmatprep.subr.mxu0 0.0
  %7878 = vmatpush1.msra.mxu0 0.0
  %7879 = vmatprep.subr.mxu0 0.0
  %7880 = vmatpush1.msra.mxu0 0.0
  %7881 = vmatprep.subr.mxu0 0.0
  %7882 = vmatpush1.msra.mxu0 0.0
  %7883 = vmatprep.subr.mxu0 0.0
  %7884 = vmatpush1.msra.mxu0 0.0
  %7885 = vmatprep.subr.mxu0 0.0
  %7886 = vmatpush1.msra.mxu0 0.0
  %7887 = vmatprep.subr.mxu0 0.0
  %7888 = vmatpush1.msra.mxu0 0.0
  %7889 = vmatprep.mubr.f32.mxu0 0.0
  %v7890 = vand.u32 %v7569, 4294901760
  %v7891 = vsub.f32 %v7569, %v7890
  %v7892 = vand.u32 %v7891, 4294901760
  %7893 = vmatmul.mubr.f32.gmra.mrb[0].mxu0 %v7892
  %v7894 = vpop.f32.mrb[0].mxu0
  %v7895 = vadd.f32 %v7818, %v7894
  %v7896 = vpop.f32.mrb[0].mxu0
  %7897 = vdwg.mxu0
  %7898 = vmatprep.subr.mxu0 0.0
  %v7899 = vand.u32 %v5607, 4294901760
  %v7900 = vsub.f32 %v5607, %v7899
  %v7901 = vand.u32 %v7900, 4294901760
  %7902 = vmatpush1.msra.mxu0 %v7901
  %7903 = vmatprep.subr.mxu0 0.0
  %v7904 = vand.u32 %v5608, 4294901760
  %v7905 = vsub.f32 %v5608, %v7904
  %v7906 = vand.u32 %v7905, 4294901760
  %7907 = vmatpush1.msra.mxu0 %v7906
  %7908 = vmatprep.subr.mxu0 0.0
  %v7909 = vand.u32 %v5609, 4294901760
  %v7910 = vsub.f32 %v5609, %v7909
  %v7911 = vand.u32 %v7910, 4294901760
  %7912 = vmatpush1.msra.mxu0 %v7911
  %7913 = vmatprep.subr.mxu0 0.0
  %v7914 = vand.u32 %v5610, 4294901760
  %v7915 = vsub.f32 %v5610, %v7914
  %v7916 = vand.u32 %v7915, 4294901760
  %7917 = vmatpush1.msra.mxu0 %v7916
  %7918 = vmatprep.subr.mxu0 0.0
  %7919 = vmatpush1.msra.mxu0 0.0
  %7920 = vmatprep.subr.mxu0 0.0
  %7921 = vmatpush1.msra.mxu0 0.0
  %7922 = vmatprep.subr.mxu0 0.0
  %7923 = vmatpush1.msra.mxu0 0.0
  %7924 = vmatprep.subr.mxu0 0.0
  %7925 = vmatpush1.msra.mxu0 0.0
  %7926 = vmatprep.subr.mxu0 0.0
  %7927 = vmatpush1.msra.mxu0 0.0
  %7928 = vmatprep.subr.mxu0 0.0
  %7929 = vmatpush1.msra.mxu0 0.0
  %7930 = vmatprep.subr.mxu0 0.0
  %7931 = vmatpush1.msra.mxu0 0.0
  %7932 = vmatprep.subr.mxu0 0.0
  %7933 = vmatpush1.msra.mxu0 0.0
  %7934 = vmatprep.subr.mxu0 0.0
  %7935 = vmatpush1.msra.mxu0 0.0
  %7936 = vmatprep.subr.mxu0 0.0
  %7937 = vmatpush1.msra.mxu0 0.0
  %7938 = vmatprep.subr.mxu0 0.0
  %7939 = vmatpush1.msra.mxu0 0.0
  %7940 = vmatprep.subr.mxu0 0.0
  %7941 = vmatpush1.msra.mxu0 0.0
  %7942 = vmatprep.subr.mxu0 0.0
  %7943 = vmatpush1.msra.mxu0 0.0
  %7944 = vmatprep.subr.mxu0 0.0
  %7945 = vmatpush1.msra.mxu0 0.0
  %7946 = vmatprep.subr.mxu0 0.0
  %7947 = vmatpush1.msra.mxu0 0.0
  %7948 = vmatprep.subr.mxu0 0.0
  %7949 = vmatpush1.msra.mxu0 0.0
  %7950 = vmatprep.subr.mxu0 0.0
  %7951 = vmatpush1.msra.mxu0 0.0
  %7952 = vmatprep.subr.mxu0 0.0
  %7953 = vmatpush1.msra.mxu0 0.0
  %7954 = vmatprep.subr.mxu0 0.0
  %7955 = vmatpush1.msra.mxu0 0.0
  %7956 = vmatprep.subr.mxu0 0.0
  %7957 = vmatpush1.msra.mxu0 0.0
  %7958 = vmatprep.subr.mxu0 0.0
  %7959 = vmatpush1.msra.mxu0 0.0
  %7960 = vmatprep.subr.mxu0 0.0
  %7961 = vmatpush1.msra.mxu0 0.0
  %7962 = vmatprep.subr.mxu0 0.0
  %7963 = vmatpush1.msra.mxu0 0.0
  %7964 = vmatprep.subr.mxu0 0.0
  %7965 = vmatpush1.msra.mxu0 0.0
  %7966 = vmatprep.subr.mxu0 0.0
  %7967 = vmatpush1.msra.mxu0 0.0
  %7968 = vmatprep.subr.mxu0 0.0
  %7969 = vmatpush1.msra.mxu0 0.0
  %7970 = vmatprep.subr.mxu0 0.0
  %7971 = vmatpush1.msra.mxu0 0.0
  %7972 = vmatprep.subr.mxu0 0.0
  %7973 = vmatpush1.msra.mxu0 0.0
  %7974 = vmatprep.mubr.f32.mxu0 0.0
  %v7975 = vand.u32 %v7569, 4294901760
  %7976 = vmatmul.mubr.f32.gmra.mrb[0].mxu0 %v7975
  %v7977 = vpop.f32.mrb[0].mxu0
  %v7978 = vadd.f32 %v7895, %v7977
  %v7979 = vpop.f32.mrb[0].mxu0
  %7980 = vdwg.mxu0
  %7981 = vmatprep.subr.mxu0 0.0
  %v7982 = vand.u32 %v5607, 4294901760
  %7983 = vmatpush1.msra.mxu0 %v7982
  %7984 = vmatprep.subr.mxu0 0.0
  %v7985 = vand.u32 %v5608, 4294901760
  %7986 = vmatpush1.msra.mxu0 %v7985
  %7987 = vmatprep.subr.mxu0 0.0
  %v7988 = vand.u32 %v5609, 4294901760
  %7989 = vmatpush1.msra.mxu0 %v7988
  %7990 = vmatprep.subr.mxu0 0.0
  %v7991 = vand.u32 %v5610, 4294901760
  %7992 = vmatpush1.msra.mxu0 %v7991
  %7993 = vmatprep.subr.mxu0 0.0
  %7994 = vmatpush1.msra.mxu0 0.0
  %7995 = vmatprep.subr.mxu0 0.0
  %7996 = vmatpush1.msra.mxu0 0.0
  %7997 = vmatprep.subr.mxu0 0.0
  %7998 = vmatpush1.msra.mxu0 0.0
  %7999 = vmatprep.subr.mxu0 0.0
  %8000 = vmatpush1.msra.mxu0 0.0
  %8001 = vmatprep.subr.mxu0 0.0
  %8002 = vmatpush1.msra.mxu0 0.0
  %8003 = vmatprep.subr.mxu0 0.0
  %8004 = vmatpush1.msra.mxu0 0.0
  %8005 = vmatprep.subr.mxu0 0.0
  %8006 = vmatpush1.msra.mxu0 0.0
  %8007 = vmatprep.subr.mxu0 0.0
  %8008 = vmatpush1.msra.mxu0 0.0
  %8009 = vmatprep.subr.mxu0 0.0
  %8010 = vmatpush1.msra.mxu0 0.0
  %8011 = vmatprep.subr.mxu0 0.0
  %8012 = vmatpush1.msra.mxu0 0.0
  %8013 = vmatprep.subr.mxu0 0.0
  %8014 = vmatpush1.msra.mxu0 0.0
  %8015 = vmatprep.subr.mxu0 0.0
  %8016 = vmatpush1.msra.mxu0 0.0
  %8017 = vmatprep.subr.mxu0 0.0
  %8018 = vmatpush1.msra.mxu0 0.0
  %8019 = vmatprep.subr.mxu0 0.0
  %8020 = vmatpush1.msra.mxu0 0.0
  %8021 = vmatprep.subr.mxu0 0.0
  %8022 = vmatpush1.msra.mxu0 0.0
  %8023 = vmatprep.subr.mxu0 0.0
  %8024 = vmatpush1.msra.mxu0 0.0
  %8025 = vmatprep.subr.mxu0 0.0
  %8026 = vmatpush1.msra.mxu0 0.0
  %8027 = vmatprep.subr.mxu0 0.0
  %8028 = vmatpush1.msra.mxu0 0.0
  %8029 = vmatprep.subr.mxu0 0.0
  %8030 = vmatpush1.msra.mxu0 0.0
  %8031 = vmatprep.subr.mxu0 0.0
  %8032 = vmatpush1.msra.mxu0 0.0
  %8033 = vmatprep.subr.mxu0 0.0
  %8034 = vmatpush1.msra.mxu0 0.0
  %8035 = vmatprep.subr.mxu0 0.0
  %8036 = vmatpush1.msra.mxu0 0.0
  %8037 = vmatprep.subr.mxu0 0.0
  %8038 = vmatpush1.msra.mxu0 0.0
  %8039 = vmatprep.subr.mxu0 0.0
  %8040 = vmatpush1.msra.mxu0 0.0
  %8041 = vmatprep.subr.mxu0 0.0
  %8042 = vmatpush1.msra.mxu0 0.0
  %8043 = vmatprep.subr.mxu0 0.0
  %8044 = vmatpush1.msra.mxu0 0.0
  %8045 = vmatprep.subr.mxu0 0.0
  %8046 = vmatpush1.msra.mxu0 0.0
  %8047 = vmatprep.subr.mxu0 0.0
  %8048 = vmatpush1.msra.mxu0 0.0
  %8049 = vmatprep.mubr.f32.mxu0 0.0
  %v8050 = vand.u32 %v7569, 4294901760
  %8051 = vmatmul.mubr.f32.gmra.mrb[0].mxu0 %v8050
  %v8052 = vpop.f32.mrb[0].mxu0
  %v8053 = vadd.f32 %v7978, %v8052
  %v8054 = vpop.f32.mrb[0].mxu0
  %8055 = vdwg.mxu0
  %v8056 = vtanh.pop %v8053
  %v8058 = vsel %vm857, %v8056, 0
  %8060 = vmatprep.subr.mxu0 0.0
  %v8061 = vand.u32 %v5607, 4294901760
  %8062 = vmatpush1.msra.mxu0 %v8061
  %8063 = vmatprep.subr.mxu0 0.0
  %v8064 = vand.u32 %v5608, 4294901760
  %8065 = vmatpush1.msra.mxu0 %v8064
  %8066 = vmatprep.subr.mxu0 0.0
  %v8067 = vand.u32 %v5609, 4294901760
  %8068 = vmatpush1.msra.mxu0 %v8067
  %8069 = vmatprep.subr.mxu0 0.0
  %v8070 = vand.u32 %v5610, 4294901760
  %8071 = vmatpush1.msra.mxu0 %v8070
  %8072 = vmatprep.subr.mxu0 0.0
  %8073 = vmatpush1.msra.mxu0 0.0
  %8074 = vmatprep.subr.mxu0 0.0
  %8075 = vmatpush1.msra.mxu0 0.0
  %8076 = vmatprep.subr.mxu0 0.0
  %8077 = vmatpush1.msra.mxu0 0.0
  %8078 = vmatprep.subr.mxu0 0.0
  %8079 = vmatpush1.msra.mxu0 0.0
  %8080 = vmatprep.subr.mxu0 0.0
  %8081 = vmatpush1.msra.mxu0 0.0
  %8082 = vmatprep.subr.mxu0 0.0
  %8083 = vmatpush1.msra.mxu0 0.0
  %8084 = vmatprep.subr.mxu0 0.0
  %8085 = vmatpush1.msra.mxu0 0.0
  %8086 = vmatprep.subr.mxu0 0.0
  %8087 = vmatpush1.msra.mxu0 0.0
  %8088 = vmatprep.subr.mxu0 0.0
  %8089 = vmatpush1.msra.mxu0 0.0
  %8090 = vmatprep.subr.mxu0 0.0
  %8091 = vmatpush1.msra.mxu0 0.0
  %8092 = vmatprep.subr.mxu0 0.0
  %8093 = vmatpush1.msra.mxu0 0.0
  %8094 = vmatprep.subr.mxu0 0.0
  %8095 = vmatpush1.msra.mxu0 0.0
  %8096 = vmatprep.subr.mxu0 0.0
  %8097 = vmatpush1.msra.mxu0 0.0
  %8098 = vmatprep.subr.mxu0 0.0
  %8099 = vmatpush1.msra.mxu0 0.0
  %8100 = vmatprep.subr.mxu0 0.0
  %8101 = vmatpush1.msra.mxu0 0.0
  %8102 = vmatprep.subr.mxu0 0.0
  %8103 = vmatpush1.msra.mxu0 0.0
  %8104 = vmatprep.subr.mxu0 0.0
  %8105 = vmatpush1.msra.mxu0 0.0
  %8106 = vmatprep.subr.mxu0 0.0
  %8107 = vmatpush1.msra.mxu0 0.0
  %8108 = vmatprep.subr.mxu0 0.0
  %8109 = vmatpush1.msra.mxu0 0.0
  %8110 = vmatprep.subr.mxu0 0.0
  %8111 = vmatpush1.msra.mxu0 0.0
  %8112 = vmatprep.subr.mxu0 0.0
  %8113 = vmatpush1.msra.mxu0 0.0
  %8114 = vmatprep.subr.mxu0 0.0
  %8115 = vmatpush1.msra.mxu0 0.0
  %8116 = vmatprep.subr.mxu0 0.0
  %8117 = vmatpush1.msra.mxu0 0.0
  %8118 = vmatprep.subr.mxu0 0.0
  %8119 = vmatpush1.msra.mxu0 0.0
  %8120 = vmatprep.subr.mxu0 0.0
  %8121 = vmatpush1.msra.mxu0 0.0
  %8122 = vmatprep.subr.mxu0 0.0
  %8123 = vmatpush1.msra.mxu0 0.0
  %8124 = vmatprep.subr.mxu0 0.0
  %8125 = vmatpush1.msra.mxu0 0.0
  %8126 = vmatprep.subr.mxu0 0.0
  %8127 = vmatpush1.msra.mxu0 0.0
  %8128 = vmatprep.mubr.f32.mxu0 0.0
  %v8129 = vand.u32 %v8058, 4294901760
  %v8130 = vsub.f32 %v8058, %v8129
  %v8131 = vand.u32 %v8130, 4294901760
  %v8132 = vsub.f32 %v8130, %v8131
  %v8133 = vand.u32 %v8132, 4294901760
  %8134 = vmatmul.mubr.f32.gmra.mrb[0].mxu0 %v8133
  %v8135 = vpop.f32.mrb[0].mxu0
  %v8136 = vadd.f32 %v5592, %v8135
  %v8137 = vpop.f32.mrb[0].mxu0
  %8138 = vdwg.mxu0
  %8139 = vmatprep.subr.mxu0 0.0
  %v8140 = vand.u32 %v5607, 4294901760
  %v8141 = vsub.f32 %v5607, %v8140
  %v8142 = vand.u32 %v8141, 4294901760
  %v8143 = vsub.f32 %v8141, %v8142
  %v8144 = vand.u32 %v8143, 4294901760
  %8145 = vmatpush1.msra.mxu0 %v8144
  %8146 = vmatprep.subr.mxu0 0.0
  %v8147 = vand.u32 %v5608, 4294901760
  %v8148 = vsub.f32 %v5608, %v8147
  %v8149 = vand.u32 %v8148, 4294901760
  %v8150 = vsub.f32 %v8148, %v8149
  %v8151 = vand.u32 %v8150, 4294901760
  %8152 = vmatpush1.msra.mxu0 %v8151
  %8153 = vmatprep.subr.mxu0 0.0
  %v8154 = vand.u32 %v5609, 4294901760
  %v8155 = vsub.f32 %v5609, %v8154
  %v8156 = vand.u32 %v8155, 4294901760
  %v8157 = vsub.f32 %v8155, %v8156
  %v8158 = vand.u32 %v8157, 4294901760
  %8159 = vmatpush1.msra.mxu0 %v8158
  %8160 = vmatprep.subr.mxu0 0.0
  %v8161 = vand.u32 %v5610, 4294901760
  %v8162 = vsub.f32 %v5610, %v8161
  %v8163 = vand.u32 %v8162, 4294901760
  %v8164 = vsub.f32 %v8162, %v8163
  %v8165 = vand.u32 %v8164, 4294901760
  %8166 = vmatpush1.msra.mxu0 %v8165
  %8167 = vmatprep.subr.mxu0 0.0
  %8168 = vmatpush1.msra.mxu0 0.0
  %8169 = vmatprep.subr.mxu0 0.0
  %8170 = vmatpush1.msra.mxu0 0.0
  %8171 = vmatprep.subr.mxu0 0.0
  %8172 = vmatpush1.msra.mxu0 0.0
  %8173 = vmatprep.subr.mxu0 0.0
  %8174 = vmatpush1.msra.mxu0 0.0
  %8175 = vmatprep.subr.mxu0 0.0
  %8176 = vmatpush1.msra.mxu0 0.0
  %8177 = vmatprep.subr.mxu0 0.0
  %8178 = vmatpush1.msra.mxu0 0.0
  %8179 = vmatprep.subr.mxu0 0.0
  %8180 = vmatpush1.msra.mxu0 0.0
  %8181 = vmatprep.subr.mxu0 0.0
  %8182 = vmatpush1.msra.mxu0 0.0
  %8183 = vmatprep.subr.mxu0 0.0
  %8184 = vmatpush1.msra.mxu0 0.0
  %8185 = vmatprep.subr.mxu0 0.0
  %8186 = vmatpush1.msra.mxu0 0.0
  %8187 = vmatprep.subr.mxu0 0.0
  %8188 = vmatpush1.msra.mxu0 0.0
  %8189 = vmatprep.subr.mxu0 0.0
  %8190 = vmatpush1.msra.mxu0 0.0
  %8191 = vmatprep.subr.mxu0 0.0
  %8192 = vmatpush1.msra.mxu0 0.0
  %8193 = vmatprep.subr.mxu0 0.0
  %8194 = vmatpush1.msra.mxu0 0.0
  %8195 = vmatprep.subr.mxu0 0.0
  %8196 = vmatpush1.msra.mxu0 0.0
  %8197 = vmatprep.subr.mxu0 0.0
  %8198 = vmatpush1.msra.mxu0 0.0
  %8199 = vmatprep.subr.mxu0 0.0
  %8200 = vmatpush1.msra.mxu0 0.0
  %8201 = vmatprep.subr.mxu0 0.0
  %8202 = vmatpush1.msra.mxu0 0.0
  %8203 = vmatprep.subr.mxu0 0.0
  %8204 = vmatpush1.msra.mxu0 0.0
  %8205 = vmatprep.subr.mxu0 0.0
  %8206 = vmatpush1.msra.mxu0 0.0
  %8207 = vmatprep.subr.mxu0 0.0
  %8208 = vmatpush1.msra.mxu0 0.0
  %8209 = vmatprep.subr.mxu0 0.0
  %8210 = vmatpush1.msra.mxu0 0.0
  %8211 = vmatprep.subr.mxu0 0.0
  %8212 = vmatpush1.msra.mxu0 0.0
  %8213 = vmatprep.subr.mxu0 0.0
  %8214 = vmatpush1.msra.mxu0 0.0
  %8215 = vmatprep.subr.mxu0 0.0
  %8216 = vmatpush1.msra.mxu0 0.0
  %8217 = vmatprep.subr.mxu0 0.0
  %8218 = vmatpush1.msra.mxu0 0.0
  %8219 = vmatprep.subr.mxu0 0.0
  %8220 = vmatpush1.msra.mxu0 0.0
  %8221 = vmatprep.subr.mxu0 0.0
  %8222 = vmatpush1.msra.mxu0 0.0
  %8223 = vmatprep.mubr.f32.mxu0 0.0
  %v8224 = vand.u32 %v8058, 4294901760
  %8225 = vmatmul.mubr.f32.gmra.mrb[0].mxu0 %v8224
  %v8226 = vpop.f32.mrb[0].mxu0
  %v8227 = vadd.f32 %v8136, %v8226
  %v8228 = vpop.f32.mrb[0].mxu0
  %8229 = vdwg.mxu0
  %8230 = vmatprep.subr.mxu0 0.0
  %v8231 = vand.u32 %v5607, 4294901760
  %v8232 = vsub.f32 %v5607, %v8231
  %8233 = vmatpush1.msra.mxu0 %v8232
  %8234 = vmatprep.subr.mxu0 0.0
  %v8235 = vand.u32 %v5608, 4294901760
  %v8236 = vsub.f32 %v5608, %v8235
  %8237 = vmatpush1.msra.mxu0 %v8236
  %8238 = vmatprep.subr.mxu0 0.0
  %v8239 = vand.u32 %v5609, 4294901760
  %v8240 = vsub.f32 %v5609, %v8239
  %8241 = vmatpush1.msra.mxu0 %v8240
  %8242 = vmatprep.subr.mxu0 0.0
  %v8243 = vand.u32 %v5610, 4294901760
  %v8244 = vsub.f32 %v5610, %v8243
  %8245 = vmatpush1.msra.mxu0 %v8244
  %8246 = vmatprep.subr.mxu0 0.0
  %8247 = vmatpush1.msra.mxu0 0.0
  %8248 = vmatprep.subr.mxu0 0.0
  %8249 = vmatpush1.msra.mxu0 0.0
  %8250 = vmatprep.subr.mxu0 0.0
  %8251 = vmatpush1.msra.mxu0 0.0
  %8252 = vmatprep.subr.mxu0 0.0
  %8253 = vmatpush1.msra.mxu0 0.0
  %8254 = vmatprep.subr.mxu0 0.0
  %8255 = vmatpush1.msra.mxu0 0.0
  %8256 = vmatprep.subr.mxu0 0.0
  %8257 = vmatpush1.msra.mxu0 0.0
  %8258 = vmatprep.subr.mxu0 0.0
  %8259 = vmatpush1.msra.mxu0 0.0
  %8260 = vmatprep.subr.mxu0 0.0
  %8261 = vmatpush1.msra.mxu0 0.0
  %8262 = vmatprep.subr.mxu0 0.0
  %8263 = vmatpush1.msra.mxu0 0.0
  %8264 = vmatprep.subr.mxu0 0.0
  %8265 = vmatpush1.msra.mxu0 0.0
  %8266 = vmatprep.subr.mxu0 0.0
  %8267 = vmatpush1.msra.mxu0 0.0
  %8268 = vmatprep.subr.mxu0 0.0
  %8269 = vmatpush1.msra.mxu0 0.0
  %8270 = vmatprep.subr.mxu0 0.0
  %8271 = vmatpush1.msra.mxu0 0.0
  %8272 = vmatprep.subr.mxu0 0.0
  %8273 = vmatpush1.msra.mxu0 0.0
  %8274 = vmatprep.subr.mxu0 0.0
  %8275 = vmatpush1.msra.mxu0 0.0
  %8276 = vmatprep.subr.mxu0 0.0
  %8277 = vmatpush1.msra.mxu0 0.0
  %8278 = vmatprep.subr.mxu0 0.0
  %8279 = vmatpush1.msra.mxu0 0.0
  %8280 = vmatprep.subr.mxu0 0.0
  %8281 = vmatpush1.msra.mxu0 0.0
  %8282 = vmatprep.subr.mxu0 0.0
  %8283 = vmatpush1.msra.mxu0 0.0
  %8284 = vmatprep.subr.mxu0 0.0
  %8285 = vmatpush1.msra.mxu0 0.0
  %8286 = vmatprep.subr.mxu0 0.0
  %8287 = vmatpush1.msra.mxu0 0.0
  %8288 = vmatprep.subr.mxu0 0.0
  %8289 = vmatpush1.msra.mxu0 0.0
  %8290 = vmatprep.subr.mxu0 0.0
  %8291 = vmatpush1.msra.mxu0 0.0
  %8292 = vmatprep.subr.mxu0 0.0
  %8293 = vmatpush1.msra.mxu0 0.0
  %8294 = vmatprep.subr.mxu0 0.0
  %8295 = vmatpush1.msra.mxu0 0.0
  %8296 = vmatprep.subr.mxu0 0.0
  %8297 = vmatpush1.msra.mxu0 0.0
  %8298 = vmatprep.subr.mxu0 0.0
  %8299 = vmatpush1.msra.mxu0 0.0
  %8300 = vmatprep.subr.mxu0 0.0
  %8301 = vmatpush1.msra.mxu0 0.0
  %8302 = vmatprep.mubr.f32.mxu0 0.0
  %v8303 = vand.u32 %v8058, 4294901760
  %v8304 = vsub.f32 %v8058, %v8303
  %8305 = vmatmul.mubr.f32.gmra.mrb[0].mxu0 %v8304
  %v8306 = vpop.f32.mrb[0].mxu0
  %v8307 = vadd.f32 %v8227, %v8306
  %v8308 = vpop.f32.mrb[0].mxu0
  %8309 = vdwg.mxu0
  %8310 = vmatprep.subr.mxu0 0.0
  %v8311 = vand.u32 %v5607, 4294901760
  %8312 = vmatpush1.msra.mxu0 %v8311
  %8313 = vmatprep.subr.mxu0 0.0
  %v8314 = vand.u32 %v5608, 4294901760
  %8315 = vmatpush1.msra.mxu0 %v8314
  %8316 = vmatprep.subr.mxu0 0.0
  %v8317 = vand.u32 %v5609, 4294901760
  %8318 = vmatpush1.msra.mxu0 %v8317
  %8319 = vmatprep.subr.mxu0 0.0
  %v8320 = vand.u32 %v5610, 4294901760
  %8321 = vmatpush1.msra.mxu0 %v8320
  %8322 = vmatprep.subr.mxu0 0.0
  %8323 = vmatpush1.msra.mxu0 0.0
  %8324 = vmatprep.subr.mxu0 0.0
  %8325 = vmatpush1.msra.mxu0 0.0
  %8326 = vmatprep.subr.mxu0 0.0
  %8327 = vmatpush1.msra.mxu0 0.0
  %8328 = vmatprep.subr.mxu0 0.0
  %8329 = vmatpush1.msra.mxu0 0.0
  %8330 = vmatprep.subr.mxu0 0.0
  %8331 = vmatpush1.msra.mxu0 0.0
  %8332 = vmatprep.subr.mxu0 0.0
  %8333 = vmatpush1.msra.mxu0 0.0
  %8334 = vmatprep.subr.mxu0 0.0
  %8335 = vmatpush1.msra.mxu0 0.0
  %8336 = vmatprep.subr.mxu0 0.0
  %8337 = vmatpush1.msra.mxu0 0.0
  %8338 = vmatprep.subr.mxu0 0.0
  %8339 = vmatpush1.msra.mxu0 0.0
  %8340 = vmatprep.subr.mxu0 0.0
  %8341 = vmatpush1.msra.mxu0 0.0
  %8342 = vmatprep.subr.mxu0 0.0
  %8343 = vmatpush1.msra.mxu0 0.0
  %8344 = vmatprep.subr.mxu0 0.0
  %8345 = vmatpush1.msra.mxu0 0.0
  %8346 = vmatprep.subr.mxu0 0.0
  %8347 = vmatpush1.msra.mxu0 0.0
  %8348 = vmatprep.subr.mxu0 0.0
  %8349 = vmatpush1.msra.mxu0 0.0
  %8350 = vmatprep.subr.mxu0 0.0
  %8351 = vmatpush1.msra.mxu0 0.0
  %8352 = vmatprep.subr.mxu0 0.0
  %8353 = vmatpush1.msra.mxu0 0.0
  %8354 = vmatprep.subr.mxu0 0.0
  %8355 = vmatpush1.msra.mxu0 0.0
  %8356 = vmatprep.subr.mxu0 0.0
  %8357 = vmatpush1.msra.mxu0 0.0
  %8358 = vmatprep.subr.mxu0 0.0
  %8359 = vmatpush1.msra.mxu0 0.0
  %8360 = vmatprep.subr.mxu0 0.0
  %8361 = vmatpush1.msra.mxu0 0.0
  %8362 = vmatprep.subr.mxu0 0.0
  %8363 = vmatpush1.msra.mxu0 0.0
  %8364 = vmatprep.subr.mxu0 0.0
  %8365 = vmatpush1.msra.mxu0 0.0
  %8366 = vmatprep.subr.mxu0 0.0
  %8367 = vmatpush1.msra.mxu0 0.0
  %8368 = vmatprep.subr.mxu0 0.0
  %8369 = vmatpush1.msra.mxu0 0.0
  %8370 = vmatprep.subr.mxu0 0.0
  %8371 = vmatpush1.msra.mxu0 0.0
  %8372 = vmatprep.subr.mxu0 0.0
  %8373 = vmatpush1.msra.mxu0 0.0
  %8374 = vmatprep.subr.mxu0 0.0
  %8375 = vmatpush1.msra.mxu0 0.0
  %8376 = vmatprep.subr.mxu0 0.0
  %8377 = vmatpush1.msra.mxu0 0.0
  %8378 = vmatprep.mubr.f32.mxu0 0.0
  %v8379 = vand.u32 %v8058, 4294901760
  %v8380 = vsub.f32 %v8058, %v8379
  %v8381 = vand.u32 %v8380, 4294901760
  %8382 = vmatmul.mubr.f32.gmra.mrb[0].mxu0 %v8381
  %v8383 = vpop.f32.mrb[0].mxu0
  %v8384 = vadd.f32 %v8307, %v8383
  %v8385 = vpop.f32.mrb[0].mxu0
  %8386 = vdwg.mxu0
  %8387 = vmatprep.subr.mxu0 0.0
  %v8388 = vand.u32 %v5607, 4294901760
  %v8389 = vsub.f32 %v5607, %v8388
  %v8390 = vand.u32 %v8389, 4294901760
  %8391 = vmatpush1.msra.mxu0 %v8390
  %8392 = vmatprep.subr.mxu0 0.0
  %v8393 = vand.u32 %v5608, 4294901760
  %v8394 = vsub.f32 %v5608, %v8393
  %v8395 = vand.u32 %v8394, 4294901760
  %8396 = vmatpush1.msra.mxu0 %v8395
  %8397 = vmatprep.subr.mxu0 0.0
  %v8398 = vand.u32 %v5609, 4294901760
  %v8399 = vsub.f32 %v5609, %v8398
  %v8400 = vand.u32 %v8399, 4294901760
  %8401 = vmatpush1.msra.mxu0 %v8400
  %8402 = vmatprep.subr.mxu0 0.0
  %v8403 = vand.u32 %v5610, 4294901760
  %v8404 = vsub.f32 %v5610, %v8403
  %v8405 = vand.u32 %v8404, 4294901760
  %8406 = vmatpush1.msra.mxu0 %v8405
  %8407 = vmatprep.subr.mxu0 0.0
  %8408 = vmatpush1.msra.mxu0 0.0
  %8409 = vmatprep.subr.mxu0 0.0
  %8410 = vmatpush1.msra.mxu0 0.0
  %8411 = vmatprep.subr.mxu0 0.0
  %8412 = vmatpush1.msra.mxu0 0.0
  %8413 = vmatprep.subr.mxu0 0.0
  %8414 = vmatpush1.msra.mxu0 0.0
  %8415 = vmatprep.subr.mxu0 0.0
  %8416 = vmatpush1.msra.mxu0 0.0
  %8417 = vmatprep.subr.mxu0 0.0
  %8418 = vmatpush1.msra.mxu0 0.0
  %8419 = vmatprep.subr.mxu0 0.0
  %8420 = vmatpush1.msra.mxu0 0.0
  %8421 = vmatprep.subr.mxu0 0.0
  %8422 = vmatpush1.msra.mxu0 0.0
  %8423 = vmatprep.subr.mxu0 0.0
  %8424 = vmatpush1.msra.mxu0 0.0
  %8425 = vmatprep.subr.mxu0 0.0
  %8426 = vmatpush1.msra.mxu0 0.0
  %8427 = vmatprep.subr.mxu0 0.0
  %8428 = vmatpush1.msra.mxu0 0.0
  %8429 = vmatprep.subr.mxu0 0.0
  %8430 = vmatpush1.msra.mxu0 0.0
  %8431 = vmatprep.subr.mxu0 0.0
  %8432 = vmatpush1.msra.mxu0 0.0
  %8433 = vmatprep.subr.mxu0 0.0
  %8434 = vmatpush1.msra.mxu0 0.0
  %8435 = vmatprep.subr.mxu0 0.0
  %8436 = vmatpush1.msra.mxu0 0.0
  %8437 = vmatprep.subr.mxu0 0.0
  %8438 = vmatpush1.msra.mxu0 0.0
  %8439 = vmatprep.subr.mxu0 0.0
  %8440 = vmatpush1.msra.mxu0 0.0
  %8441 = vmatprep.subr.mxu0 0.0
  %8442 = vmatpush1.msra.mxu0 0.0
  %8443 = vmatprep.subr.mxu0 0.0
  %8444 = vmatpush1.msra.mxu0 0.0
  %8445 = vmatprep.subr.mxu0 0.0
  %8446 = vmatpush1.msra.mxu0 0.0
  %8447 = vmatprep.subr.mxu0 0.0
  %8448 = vmatpush1.msra.mxu0 0.0
  %8449 = vmatprep.subr.mxu0 0.0
  %8450 = vmatpush1.msra.mxu0 0.0
  %8451 = vmatprep.subr.mxu0 0.0
  %8452 = vmatpush1.msra.mxu0 0.0
  %8453 = vmatprep.subr.mxu0 0.0
  %8454 = vmatpush1.msra.mxu0 0.0
  %8455 = vmatprep.subr.mxu0 0.0
  %8456 = vmatpush1.msra.mxu0 0.0
  %8457 = vmatprep.subr.mxu0 0.0
  %8458 = vmatpush1.msra.mxu0 0.0
  %8459 = vmatprep.subr.mxu0 0.0
  %8460 = vmatpush1.msra.mxu0 0.0
  %8461 = vmatprep.subr.mxu0 0.0
  %8462 = vmatpush1.msra.mxu0 0.0
  %8463 = vmatprep.mubr.f32.mxu0 0.0
  %v8464 = vand.u32 %v8058, 4294901760
  %8465 = vmatmul.mubr.f32.gmra.mrb[0].mxu0 %v8464
  %v8466 = vpop.f32.mrb[0].mxu0
  %v8467 = vadd.f32 %v8384, %v8466
  %v8468 = vpop.f32.mrb[0].mxu0
  %8469 = vdwg.mxu0
  %8470 = vmatprep.subr.mxu0 0.0
  %v8471 = vand.u32 %v5607, 4294901760
  %8472 = vmatpush1.msra.mxu0 %v8471
  %8473 = vmatprep.subr.mxu0 0.0
  %v8474 = vand.u32 %v5608, 4294901760
  %8475 = vmatpush1.msra.mxu0 %v8474
  %8476 = vmatprep.subr.mxu0 0.0
  %v8477 = vand.u32 %v5609, 4294901760
  %8478 = vmatpush1.msra.mxu0 %v8477
  %8479 = vmatprep.subr.mxu0 0.0
  %v8480 = vand.u32 %v5610, 4294901760
  %8481 = vmatpush1.msra.mxu0 %v8480
  %8482 = vmatprep.subr.mxu0 0.0
  %8483 = vmatpush1.msra.mxu0 0.0
  %8484 = vmatprep.subr.mxu0 0.0
  %8485 = vmatpush1.msra.mxu0 0.0
  %8486 = vmatprep.subr.mxu0 0.0
  %8487 = vmatpush1.msra.mxu0 0.0
  %8488 = vmatprep.subr.mxu0 0.0
  %8489 = vmatpush1.msra.mxu0 0.0
  %8490 = vmatprep.subr.mxu0 0.0
  %8491 = vmatpush1.msra.mxu0 0.0
  %8492 = vmatprep.subr.mxu0 0.0
  %8493 = vmatpush1.msra.mxu0 0.0
  %8494 = vmatprep.subr.mxu0 0.0
  %8495 = vmatpush1.msra.mxu0 0.0
  %8496 = vmatprep.subr.mxu0 0.0
  %8497 = vmatpush1.msra.mxu0 0.0
  %8498 = vmatprep.subr.mxu0 0.0
  %8499 = vmatpush1.msra.mxu0 0.0
  %8500 = vmatprep.subr.mxu0 0.0
  %8501 = vmatpush1.msra.mxu0 0.0
  %8502 = vmatprep.subr.mxu0 0.0
  %8503 = vmatpush1.msra.mxu0 0.0
  %8504 = vmatprep.subr.mxu0 0.0
  %8505 = vmatpush1.msra.mxu0 0.0
  %8506 = vmatprep.subr.mxu0 0.0
  %8507 = vmatpush1.msra.mxu0 0.0
  %8508 = vmatprep.subr.mxu0 0.0
  %8509 = vmatpush1.msra.mxu0 0.0
  %8510 = vmatprep.subr.mxu0 0.0
  %8511 = vmatpush1.msra.mxu0 0.0
  %8512 = vmatprep.subr.mxu0 0.0
  %8513 = vmatpush1.msra.mxu0 0.0
  %8514 = vmatprep.subr.mxu0 0.0
  %8515 = vmatpush1.msra.mxu0 0.0
  %8516 = vmatprep.subr.mxu0 0.0
  %8517 = vmatpush1.msra.mxu0 0.0
  %8518 = vmatprep.subr.mxu0 0.0
  %8519 = vmatpush1.msra.mxu0 0.0
  %8520 = vmatprep.subr.mxu0 0.0
  %8521 = vmatpush1.msra.mxu0 0.0
  %8522 = vmatprep.subr.mxu0 0.0
  %8523 = vmatpush1.msra.mxu0 0.0
  %8524 = vmatprep.subr.mxu0 0.0
  %8525 = vmatpush1.msra.mxu0 0.0
  %8526 = vmatprep.subr.mxu0 0.0
  %8527 = vmatpush1.msra.mxu0 0.0
  %8528 = vmatprep.subr.mxu0 0.0
  %8529 = vmatpush1.msra.mxu0 0.0
  %8530 = vmatprep.subr.mxu0 0.0
  %8531 = vmatpush1.msra.mxu0 0.0
  %8532 = vmatprep.subr.mxu0 0.0
  %8533 = vmatpush1.msra.mxu0 0.0
  %8534 = vmatprep.subr.mxu0 0.0
  %8535 = vmatpush1.msra.mxu0 0.0
  %8536 = vmatprep.subr.mxu0 0.0
  %8537 = vmatpush1.msra.mxu0 0.0
  %8538 = vmatprep.mubr.f32.mxu0 0.0
  %v8539 = vand.u32 %v8058, 4294901760
  %8540 = vmatmul.mubr.f32.gmra.mrb[0].mxu0 %v8539
  %v8541 = vpop.f32.mrb[0].mxu0
  %v8542 = vadd.f32 %v8467, %v8541
  %v8543 = vpop.f32.mrb[0].mxu0
  %8544 = vdwg.mxu0
  %v8545 = vtanh.pop %v8542
  %v8547 = vsel %vm857, %v8545, 0
  %8549 = vmatprep.subr.mxu0 0.0
  %v8550 = vand.u32 %v5607, 4294901760
  %8551 = vmatpush1.msra.mxu0 %v8550
  %8552 = vmatprep.subr.mxu0 0.0
  %v8553 = vand.u32 %v5608, 4294901760
  %8554 = vmatpush1.msra.mxu0 %v8553
  %8555 = vmatprep.subr.mxu0 0.0
  %v8556 = vand.u32 %v5609, 4294901760
  %8557 = vmatpush1.msra.mxu0 %v8556
  %8558 = vmatprep.subr.mxu0 0.0
  %v8559 = vand.u32 %v5610, 4294901760
  %8560 = vmatpush1.msra.mxu0 %v8559
  %8561 = vmatprep.subr.mxu0 0.0
  %8562 = vmatpush1.msra.mxu0 0.0
  %8563 = vmatprep.subr.mxu0 0.0
  %8564 = vmatpush1.msra.mxu0 0.0
  %8565 = vmatprep.subr.mxu0 0.0
  %8566 = vmatpush1.msra.mxu0 0.0
  %8567 = vmatprep.subr.mxu0 0.0
  %8568 = vmatpush1.msra.mxu0 0.0
  %8569 = vmatprep.subr.mxu0 0.0
  %8570 = vmatpush1.msra.mxu0 0.0
  %8571 = vmatprep.subr.mxu0 0.0
  %8572 = vmatpush1.msra.mxu0 0.0
  %8573 = vmatprep.subr.mxu0 0.0
  %8574 = vmatpush1.msra.mxu0 0.0
  %8575 = vmatprep.subr.mxu0 0.0
  %8576 = vmatpush1.msra.mxu0 0.0
  %8577 = vmatprep.subr.mxu0 0.0
  %8578 = vmatpush1.msra.mxu0 0.0
  %8579 = vmatprep.subr.mxu0 0.0
  %8580 = vmatpush1.msra.mxu0 0.0
  %8581 = vmatprep.subr.mxu0 0.0
  %8582 = vmatpush1.msra.mxu0 0.0
  %8583 = vmatprep.subr.mxu0 0.0
  %8584 = vmatpush1.msra.mxu0 0.0
  %8585 = vmatprep.subr.mxu0 0.0
  %8586 = vmatpush1.msra.mxu0 0.0
  %8587 = vmatprep.subr.mxu0 0.0
  %8588 = vmatpush1.msra.mxu0 0.0
  %8589 = vmatprep.subr.mxu0 0.0
  %8590 = vmatpush1.msra.mxu0 0.0
  %8591 = vmatprep.subr.mxu0 0.0
  %8592 = vmatpush1.msra.mxu0 0.0
  %8593 = vmatprep.subr.mxu0 0.0
  %8594 = vmatpush1.msra.mxu0 0.0
  %8595 = vmatprep.subr.mxu0 0.0
  %8596 = vmatpush1.msra.mxu0 0.0
  %8597 = vmatprep.subr.mxu0 0.0
  %8598 = vmatpush1.msra.mxu0 0.0
  %8599 = vmatprep.subr.mxu0 0.0
  %8600 = vmatpush1.msra.mxu0 0.0
  %8601 = vmatprep.subr.mxu0 0.0
  %8602 = vmatpush1.msra.mxu0 0.0
  %8603 = vmatprep.subr.mxu0 0.0
  %8604 = vmatpush1.msra.mxu0 0.0
  %8605 = vmatprep.subr.mxu0 0.0
  %8606 = vmatpush1.msra.mxu0 0.0
  %8607 = vmatprep.subr.mxu0 0.0
  %8608 = vmatpush1.msra.mxu0 0.0
  %8609 = vmatprep.subr.mxu0 0.0
  %8610 = vmatpush1.msra.mxu0 0.0
  %8611 = vmatprep.subr.mxu0 0.0
  %8612 = vmatpush1.msra.mxu0 0.0
  %8613 = vmatprep.subr.mxu0 0.0
  %8614 = vmatpush1.msra.mxu0 0.0
  %8615 = vmatprep.subr.mxu0 0.0
  %8616 = vmatpush1.msra.mxu0 0.0
  %8617 = vmatprep.mubr.f32.mxu0 0.0
  %v8618 = vand.u32 %v8547, 4294901760
  %v8619 = vsub.f32 %v8547, %v8618
  %v8620 = vand.u32 %v8619, 4294901760
  %v8621 = vsub.f32 %v8619, %v8620
  %v8622 = vand.u32 %v8621, 4294901760
  %8623 = vmatmul.mubr.f32.gmra.mrb[0].mxu0 %v8622
  %v8624 = vpop.f32.mrb[0].mxu0
  %v8625 = vadd.f32 %v5598, %v8624
  %v8626 = vpop.f32.mrb[0].mxu0
  %8627 = vdwg.mxu0
  %8628 = vmatprep.subr.mxu0 0.0
  %v8629 = vand.u32 %v5607, 4294901760
  %v8630 = vsub.f32 %v5607, %v8629
  %v8631 = vand.u32 %v8630, 4294901760
  %v8632 = vsub.f32 %v8630, %v8631
  %v8633 = vand.u32 %v8632, 4294901760
  %8634 = vmatpush1.msra.mxu0 %v8633
  %8635 = vmatprep.subr.mxu0 0.0
  %v8636 = vand.u32 %v5608, 4294901760
  %v8637 = vsub.f32 %v5608, %v8636
  %v8638 = vand.u32 %v8637, 4294901760
  %v8639 = vsub.f32 %v8637, %v8638
  %v8640 = vand.u32 %v8639, 4294901760
  %8641 = vmatpush1.msra.mxu0 %v8640
  %8642 = vmatprep.subr.mxu0 0.0
  %v8643 = vand.u32 %v5609, 4294901760
  %v8644 = vsub.f32 %v5609, %v8643
  %v8645 = vand.u32 %v8644, 4294901760
  %v8646 = vsub.f32 %v8644, %v8645
  %v8647 = vand.u32 %v8646, 4294901760
  %8648 = vmatpush1.msra.mxu0 %v8647
  %8649 = vmatprep.subr.mxu0 0.0
  %v8650 = vand.u32 %v5610, 4294901760
  %v8651 = vsub.f32 %v5610, %v8650
  %v8652 = vand.u32 %v8651, 4294901760
  %v8653 = vsub.f32 %v8651, %v8652
  %v8654 = vand.u32 %v8653, 4294901760
  %8655 = vmatpush1.msra.mxu0 %v8654
  %8656 = vmatprep.subr.mxu0 0.0
  %8657 = vmatpush1.msra.mxu0 0.0
  %8658 = vmatprep.subr.mxu0 0.0
  %8659 = vmatpush1.msra.mxu0 0.0
  %8660 = vmatprep.subr.mxu0 0.0
  %8661 = vmatpush1.msra.mxu0 0.0
  %8662 = vmatprep.subr.mxu0 0.0
  %8663 = vmatpush1.msra.mxu0 0.0
  %8664 = vmatprep.subr.mxu0 0.0
  %8665 = vmatpush1.msra.mxu0 0.0
  %8666 = vmatprep.subr.mxu0 0.0
  %8667 = vmatpush1.msra.mxu0 0.0
  %8668 = vmatprep.subr.mxu0 0.0
  %8669 = vmatpush1.msra.mxu0 0.0
  %8670 = vmatprep.subr.mxu0 0.0
  %8671 = vmatpush1.msra.mxu0 0.0
  %8672 = vmatprep.subr.mxu0 0.0
  %8673 = vmatpush1.msra.mxu0 0.0
  %8674 = vmatprep.subr.mxu0 0.0
  %8675 = vmatpush1.msra.mxu0 0.0
  %8676 = vmatprep.subr.mxu0 0.0
  %8677 = vmatpush1.msra.mxu0 0.0
  %8678 = vmatprep.subr.mxu0 0.0
  %8679 = vmatpush1.msra.mxu0 0.0
  %8680 = vmatprep.subr.mxu0 0.0
  %8681 = vmatpush1.msra.mxu0 0.0
  %8682 = vmatprep.subr.mxu0 0.0
  %8683 = vmatpush1.msra.mxu0 0.0
  %8684 = vmatprep.subr.mxu0 0.0
  %8685 = vmatpush1.msra.mxu0 0.0
  %8686 = vmatprep.subr.mxu0 0.0
  %8687 = vmatpush1.msra.mxu0 0.0
  %8688 = vmatprep.subr.mxu0 0.0
  %8689 = vmatpush1.msra.mxu0 0.0
  %8690 = vmatprep.subr.mxu0 0.0
  %8691 = vmatpush1.msra.mxu0 0.0
  %8692 = vmatprep.subr.mxu0 0.0
  %8693 = vmatpush1.msra.mxu0 0.0
  %8694 = vmatprep.subr.mxu0 0.0
  %8695 = vmatpush1.msra.mxu0 0.0
  %8696 = vmatprep.subr.mxu0 0.0
  %8697 = vmatpush1.msra.mxu0 0.0
  %8698 = vmatprep.subr.mxu0 0.0
  %8699 = vmatpush1.msra.mxu0 0.0
  %8700 = vmatprep.subr.mxu0 0.0
  %8701 = vmatpush1.msra.mxu0 0.0
  %8702 = vmatprep.subr.mxu0 0.0
  %8703 = vmatpush1.msra.mxu0 0.0
  %8704 = vmatprep.subr.mxu0 0.0
  %8705 = vmatpush1.msra.mxu0 0.0
  %8706 = vmatprep.subr.mxu0 0.0
  %8707 = vmatpush1.msra.mxu0 0.0
  %8708 = vmatprep.subr.mxu0 0.0
  %8709 = vmatpush1.msra.mxu0 0.0
  %8710 = vmatprep.subr.mxu0 0.0
  %8711 = vmatpush1.msra.mxu0 0.0
  %8712 = vmatprep.mubr.f32.mxu0 0.0
  %v8713 = vand.u32 %v8547, 4294901760
  %8714 = vmatmul.mubr.f32.gmra.mrb[0].mxu0 %v8713
  %v8715 = vpop.f32.mrb[0].mxu0
  %v8716 = vadd.f32 %v8625, %v8715
  %v8717 = vpop.f32.mrb[0].mxu0
  %8718 = vdwg.mxu0
  %8719 = vmatprep.subr.mxu0 0.0
  %v8720 = vand.u32 %v5607, 4294901760
  %v8721 = vsub.f32 %v5607, %v8720
  %8722 = vmatpush1.msra.mxu0 %v8721
  %8723 = vmatprep.subr.mxu0 0.0
  %v8724 = vand.u32 %v5608, 4294901760
  %v8725 = vsub.f32 %v5608, %v8724
  %8726 = vmatpush1.msra.mxu0 %v8725
  %8727 = vmatprep.subr.mxu0 0.0
  %v8728 = vand.u32 %v5609, 4294901760
  %v8729 = vsub.f32 %v5609, %v8728
  %8730 = vmatpush1.msra.mxu0 %v8729
  %8731 = vmatprep.subr.mxu0 0.0
  %v8732 = vand.u32 %v5610, 4294901760
  %v8733 = vsub.f32 %v5610, %v8732
  %8734 = vmatpush1.msra.mxu0 %v8733
  %8735 = vmatprep.subr.mxu0 0.0
  %8736 = vmatpush1.msra.mxu0 0.0
  %8737 = vmatprep.subr.mxu0 0.0
  %8738 = vmatpush1.msra.mxu0 0.0
  %8739 = vmatprep.subr.mxu0 0.0
  %8740 = vmatpush1.msra.mxu0 0.0
  %8741 = vmatprep.subr.mxu0 0.0
  %8742 = vmatpush1.msra.mxu0 0.0
  %8743 = vmatprep.subr.mxu0 0.0
  %8744 = vmatpush1.msra.mxu0 0.0
  %8745 = vmatprep.subr.mxu0 0.0
  %8746 = vmatpush1.msra.mxu0 0.0
  %8747 = vmatprep.subr.mxu0 0.0
  %8748 = vmatpush1.msra.mxu0 0.0
  %8749 = vmatprep.subr.mxu0 0.0
  %8750 = vmatpush1.msra.mxu0 0.0
  %8751 = vmatprep.subr.mxu0 0.0
  %8752 = vmatpush1.msra.mxu0 0.0
  %8753 = vmatprep.subr.mxu0 0.0
  %8754 = vmatpush1.msra.mxu0 0.0
  %8755 = vmatprep.subr.mxu0 0.0
  %8756 = vmatpush1.msra.mxu0 0.0
  %8757 = vmatprep.subr.mxu0 0.0
  %8758 = vmatpush1.msra.mxu0 0.0
  %8759 = vmatprep.subr.mxu0 0.0
  %8760 = vmatpush1.msra.mxu0 0.0
  %8761 = vmatprep.subr.mxu0 0.0
  %8762 = vmatpush1.msra.mxu0 0.0
  %8763 = vmatprep.subr.mxu0 0.0
  %8764 = vmatpush1.msra.mxu0 0.0
  %8765 = vmatprep.subr.mxu0 0.0
  %8766 = vmatpush1.msra.mxu0 0.0
  %8767 = vmatprep.subr.mxu0 0.0
  %8768 = vmatpush1.msra.mxu0 0.0
  %8769 = vmatprep.subr.mxu0 0.0
  %8770 = vmatpush1.msra.mxu0 0.0
  %8771 = vmatprep.subr.mxu0 0.0
  %8772 = vmatpush1.msra.mxu0 0.0
  %8773 = vmatprep.subr.mxu0 0.0
  %8774 = vmatpush1.msra.mxu0 0.0
  %8775 = vmatprep.subr.mxu0 0.0
  %8776 = vmatpush1.msra.mxu0 0.0
  %8777 = vmatprep.subr.mxu0 0.0
  %8778 = vmatpush1.msra.mxu0 0.0
  %8779 = vmatprep.subr.mxu0 0.0
  %8780 = vmatpush1.msra.mxu0 0.0
  %8781 = vmatprep.subr.mxu0 0.0
  %8782 = vmatpush1.msra.mxu0 0.0
  %8783 = vmatprep.subr.mxu0 0.0
  %8784 = vmatpush1.msra.mxu0 0.0
  %8785 = vmatprep.subr.mxu0 0.0
  %8786 = vmatpush1.msra.mxu0 0.0
  %8787 = vmatprep.subr.mxu0 0.0
  %8788 = vmatpush1.msra.mxu0 0.0
  %8789 = vmatprep.subr.mxu0 0.0
  %8790 = vmatpush1.msra.mxu0 0.0
  %8791 = vmatprep.mubr.f32.mxu0 0.0
  %v8792 = vand.u32 %v8547, 4294901760
  %v8793 = vsub.f32 %v8547, %v8792
  %8794 = vmatmul.mubr.f32.gmra.mrb[0].mxu0 %v8793
  %v8795 = vpop.f32.mrb[0].mxu0
  %v8796 = vadd.f32 %v8716, %v8795
  %v8797 = vpop.f32.mrb[0].mxu0
  %8798 = vdwg.mxu0
  %8799 = vmatprep.subr.mxu0 0.0
  %v8800 = vand.u32 %v5607, 4294901760
  %8801 = vmatpush1.msra.mxu0 %v8800
  %8802 = vmatprep.subr.mxu0 0.0
  %v8803 = vand.u32 %v5608, 4294901760
  %8804 = vmatpush1.msra.mxu0 %v8803
  %8805 = vmatprep.subr.mxu0 0.0
  %v8806 = vand.u32 %v5609, 4294901760
  %8807 = vmatpush1.msra.mxu0 %v8806
  %8808 = vmatprep.subr.mxu0 0.0
  %v8809 = vand.u32 %v5610, 4294901760
  %8810 = vmatpush1.msra.mxu0 %v8809
  %8811 = vmatprep.subr.mxu0 0.0
  %8812 = vmatpush1.msra.mxu0 0.0
  %8813 = vmatprep.subr.mxu0 0.0
  %8814 = vmatpush1.msra.mxu0 0.0
  %8815 = vmatprep.subr.mxu0 0.0
  %8816 = vmatpush1.msra.mxu0 0.0
  %8817 = vmatprep.subr.mxu0 0.0
  %8818 = vmatpush1.msra.mxu0 0.0
  %8819 = vmatprep.subr.mxu0 0.0
  %8820 = vmatpush1.msra.mxu0 0.0
  %8821 = vmatprep.subr.mxu0 0.0
  %8822 = vmatpush1.msra.mxu0 0.0
  %8823 = vmatprep.subr.mxu0 0.0
  %8824 = vmatpush1.msra.mxu0 0.0
  %8825 = vmatprep.subr.mxu0 0.0
  %8826 = vmatpush1.msra.mxu0 0.0
  %8827 = vmatprep.subr.mxu0 0.0
  %8828 = vmatpush1.msra.mxu0 0.0
  %8829 = vmatprep.subr.mxu0 0.0
  %8830 = vmatpush1.msra.mxu0 0.0
  %8831 = vmatprep.subr.mxu0 0.0
  %8832 = vmatpush1.msra.mxu0 0.0
  %8833 = vmatprep.subr.mxu0 0.0
  %8834 = vmatpush1.msra.mxu0 0.0
  %8835 = vmatprep.subr.mxu0 0.0
  %8836 = vmatpush1.msra.mxu0 0.0
  %8837 = vmatprep.subr.mxu0 0.0
  %8838 = vmatpush1.msra.mxu0 0.0
  %8839 = vmatprep.subr.mxu0 0.0
  %8840 = vmatpush1.msra.mxu0 0.0
  %8841 = vmatprep.subr.mxu0 0.0
  %8842 = vmatpush1.msra.mxu0 0.0
  %8843 = vmatprep.subr.mxu0 0.0
  %8844 = vmatpush1.msra.mxu0 0.0
  %8845 = vmatprep.subr.mxu0 0.0
  %8846 = vmatpush1.msra.mxu0 0.0
  %8847 = vmatprep.subr.mxu0 0.0
  %8848 = vmatpush1.msra.mxu0 0.0
  %8849 = vmatprep.subr.mxu0 0.0
  %8850 = vmatpush1.msra.mxu0 0.0
  %8851 = vmatprep.subr.mxu0 0.0
  %8852 = vmatpush1.msra.mxu0 0.0
  %8853 = vmatprep.subr.mxu0 0.0
  %8854 = vmatpush1.msra.mxu0 0.0
  %8855 = vmatprep.subr.mxu0 0.0
  %8856 = vmatpush1.msra.mxu0 0.0
  %8857 = vmatprep.subr.mxu0 0.0
  %8858 = vmatpush1.msra.mxu0 0.0
  %8859 = vmatprep.subr.mxu0 0.0
  %8860 = vmatpush1.msra.mxu0 0.0
  %8861 = vmatprep.subr.mxu0 0.0
  %8862 = vmatpush1.msra.mxu0 0.0
  %8863 = vmatprep.subr.mxu0 0.0
  %8864 = vmatpush1.msra.mxu0 0.0
  %8865 = vmatprep.subr.mxu0 0.0
  %8866 = vmatpush1.msra.mxu0 0.0
  %8867 = vmatprep.mubr.f32.mxu0 0.0
  %v8868 = vand.u32 %v8547, 4294901760
  %v8869 = vsub.f32 %v8547, %v8868
  %v8870 = vand.u32 %v8869, 4294901760
  %8871 = vmatmul.mubr.f32.gmra.mrb[0].mxu0 %v8870
  %v8872 = vpop.f32.mrb[0].mxu0
  %v8873 = vadd.f32 %v8796, %v8872
  %v8874 = vpop.f32.mrb[0].mxu0
  %8875 = vdwg.mxu0
  %8876 = vmatprep.subr.mxu0 0.0
  %v8877 = vand.u32 %v5607, 4294901760
  %v8878 = vsub.f32 %v5607, %v8877
  %v8879 = vand.u32 %v8878, 4294901760
  %8880 = vmatpush1.msra.mxu0 %v8879
  %8881 = vmatprep.subr.mxu0 0.0
  %v8882 = vand.u32 %v5608, 4294901760
  %v8883 = vsub.f32 %v5608, %v8882
  %v8884 = vand.u32 %v8883, 4294901760
  %8885 = vmatpush1.msra.mxu0 %v8884
  %8886 = vmatprep.subr.mxu0 0.0
  %v8887 = vand.u32 %v5609, 4294901760
  %v8888 = vsub.f32 %v5609, %v8887
  %v8889 = vand.u32 %v8888, 4294901760
  %8890 = vmatpush1.msra.mxu0 %v8889
  %8891 = vmatprep.subr.mxu0 0.0
  %v8892 = vand.u32 %v5610, 4294901760
  %v8893 = vsub.f32 %v5610, %v8892
  %v8894 = vand.u32 %v8893, 4294901760
  %8895 = vmatpush1.msra.mxu0 %v8894
  %8896 = vmatprep.subr.mxu0 0.0
  %8897 = vmatpush1.msra.mxu0 0.0
  %8898 = vmatprep.subr.mxu0 0.0
  %8899 = vmatpush1.msra.mxu0 0.0
  %8900 = vmatprep.subr.mxu0 0.0
  %8901 = vmatpush1.msra.mxu0 0.0
  %8902 = vmatprep.subr.mxu0 0.0
  %8903 = vmatpush1.msra.mxu0 0.0
  %8904 = vmatprep.subr.mxu0 0.0
  %8905 = vmatpush1.msra.mxu0 0.0
  %8906 = vmatprep.subr.mxu0 0.0
  %8907 = vmatpush1.msra.mxu0 0.0
  %8908 = vmatprep.subr.mxu0 0.0
  %8909 = vmatpush1.msra.mxu0 0.0
  %8910 = vmatprep.subr.mxu0 0.0
  %8911 = vmatpush1.msra.mxu0 0.0
  %8912 = vmatprep.subr.mxu0 0.0
  %8913 = vmatpush1.msra.mxu0 0.0
  %8914 = vmatprep.subr.mxu0 0.0
  %8915 = vmatpush1.msra.mxu0 0.0
  %8916 = vmatprep.subr.mxu0 0.0
  %8917 = vmatpush1.msra.mxu0 0.0
  %8918 = vmatprep.subr.mxu0 0.0
  %8919 = vmatpush1.msra.mxu0 0.0
  %8920 = vmatprep.subr.mxu0 0.0
  %8921 = vmatpush1.msra.mxu0 0.0
  %8922 = vmatprep.subr.mxu0 0.0
  %8923 = vmatpush1.msra.mxu0 0.0
  %8924 = vmatprep.subr.mxu0 0.0
  %8925 = vmatpush1.msra.mxu0 0.0
  %8926 = vmatprep.subr.mxu0 0.0
  %8927 = vmatpush1.msra.mxu0 0.0
  %8928 = vmatprep.subr.mxu0 0.0
  %8929 = vmatpush1.msra.mxu0 0.0
  %8930 = vmatprep.subr.mxu0 0.0
  %8931 = vmatpush1.msra.mxu0 0.0
  %8932 = vmatprep.subr.mxu0 0.0
  %8933 = vmatpush1.msra.mxu0 0.0
  %8934 = vmatprep.subr.mxu0 0.0
  %8935 = vmatpush1.msra.mxu0 0.0
  %8936 = vmatprep.subr.mxu0 0.0
  %8937 = vmatpush1.msra.mxu0 0.0
  %8938 = vmatprep.subr.mxu0 0.0
  %8939 = vmatpush1.msra.mxu0 0.0
  %8940 = vmatprep.subr.mxu0 0.0
  %8941 = vmatpush1.msra.mxu0 0.0
  %8942 = vmatprep.subr.mxu0 0.0
  %8943 = vmatpush1.msra.mxu0 0.0
  %8944 = vmatprep.subr.mxu0 0.0
  %8945 = vmatpush1.msra.mxu0 0.0
  %8946 = vmatprep.subr.mxu0 0.0
  %8947 = vmatpush1.msra.mxu0 0.0
  %8948 = vmatprep.subr.mxu0 0.0
  %8949 = vmatpush1.msra.mxu0 0.0
  %8950 = vmatprep.subr.mxu0 0.0
  %8951 = vmatpush1.msra.mxu0 0.0
  %8952 = vmatprep.mubr.f32.mxu0 0.0
  %v8953 = vand.u32 %v8547, 4294901760
  %8954 = vmatmul.mubr.f32.gmra.mrb[0].mxu0 %v8953
  %v8955 = vpop.f32.mrb[0].mxu0
  %v8956 = vadd.f32 %v8873, %v8955
  %v8957 = vpop.f32.mrb[0].mxu0
  %8958 = vdwg.mxu0
  %8959 = vmatprep.subr.mxu0 0.0
  %v8960 = vand.u32 %v5607, 4294901760
  %8961 = vmatpush1.msra.mxu0 %v8960
  %8962 = vmatprep.subr.mxu0 0.0
  %v8963 = vand.u32 %v5608, 4294901760
  %8964 = vmatpush1.msra.mxu0 %v8963
  %8965 = vmatprep.subr.mxu0 0.0
  %v8966 = vand.u32 %v5609, 4294901760
  %8967 = vmatpush1.msra.mxu0 %v8966
  %8968 = vmatprep.subr.mxu0 0.0
  %v8969 = vand.u32 %v5610, 4294901760
  %8970 = vmatpush1.msra.mxu0 %v8969
  %8971 = vmatprep.subr.mxu0 0.0
  %8972 = vmatpush1.msra.mxu0 0.0
  %8973 = vmatprep.subr.mxu0 0.0
  %8974 = vmatpush1.msra.mxu0 0.0
  %8975 = vmatprep.subr.mxu0 0.0
  %8976 = vmatpush1.msra.mxu0 0.0
  %8977 = vmatprep.subr.mxu0 0.0
  %8978 = vmatpush1.msra.mxu0 0.0
  %8979 = vmatprep.subr.mxu0 0.0
  %8980 = vmatpush1.msra.mxu0 0.0
  %8981 = vmatprep.subr.mxu0 0.0
  %8982 = vmatpush1.msra.mxu0 0.0
  %8983 = vmatprep.subr.mxu0 0.0
  %8984 = vmatpush1.msra.mxu0 0.0
  %8985 = vmatprep.subr.mxu0 0.0
  %8986 = vmatpush1.msra.mxu0 0.0
  %8987 = vmatprep.subr.mxu0 0.0
  %8988 = vmatpush1.msra.mxu0 0.0
  %8989 = vmatprep.subr.mxu0 0.0
  %8990 = vmatpush1.msra.mxu0 0.0
  %8991 = vmatprep.subr.mxu0 0.0
  %8992 = vmatpush1.msra.mxu0 0.0
  %8993 = vmatprep.subr.mxu0 0.0
  %8994 = vmatpush1.msra.mxu0 0.0
  %8995 = vmatprep.subr.mxu0 0.0
  %8996 = vmatpush1.msra.mxu0 0.0
  %8997 = vmatprep.subr.mxu0 0.0
  %8998 = vmatpush1.msra.mxu0 0.0
  %8999 = vmatprep.subr.mxu0 0.0
  %9000 = vmatpush1.msra.mxu0 0.0
  %9001 = vmatprep.subr.mxu0 0.0
  %9002 = vmatpush1.msra.mxu0 0.0
  %9003 = vmatprep.subr.mxu0 0.0
  %9004 = vmatpush1.msra.mxu0 0.0
  %9005 = vmatprep.subr.mxu0 0.0
  %9006 = vmatpush1.msra.mxu0 0.0
  %9007 = vmatprep.subr.mxu0 0.0
  %9008 = vmatpush1.msra.mxu0 0.0
  %9009 = vmatprep.subr.mxu0 0.0
  %9010 = vmatpush1.msra.mxu0 0.0
  %9011 = vmatprep.subr.mxu0 0.0
  %9012 = vmatpush1.msra.mxu0 0.0
  %9013 = vmatprep.subr.mxu0 0.0
  %9014 = vmatpush1.msra.mxu0 0.0
  %9015 = vmatprep.subr.mxu0 0.0
  %9016 = vmatpush1.msra.mxu0 0.0
  %9017 = vmatprep.subr.mxu0 0.0
  %9018 = vmatpush1.msra.mxu0 0.0
  %9019 = vmatprep.subr.mxu0 0.0
  %9020 = vmatpush1.msra.mxu0 0.0
  %9021 = vmatprep.subr.mxu0 0.0
  %9022 = vmatpush1.msra.mxu0 0.0
  %9023 = vmatprep.subr.mxu0 0.0
  %9024 = vmatpush1.msra.mxu0 0.0
  %9025 = vmatprep.subr.mxu0 0.0
  %9026 = vmatpush1.msra.mxu0 0.0
  %9027 = vmatprep.mubr.f32.mxu0 0.0
  %v9028 = vand.u32 %v8547, 4294901760
  %9029 = vmatmul.mubr.f32.gmra.mrb[0].mxu0 %v9028
  %v9030 = vpop.f32.mrb[0].mxu0
  %v9031 = vadd.f32 %v8956, %v9030
  %v9032 = vpop.f32.mrb[0].mxu0
  %9033 = vdwg.mxu0
  %v9034 = vtanh.pop %v9031
  %v9036 = vsel %vm857, %v9034, 0
  %9038 = vmatprep.subr.mxu0 0.0
  %v9039 = vand.u32 %v5607, 4294901760
  %9040 = vmatpush1.msra.mxu0 %v9039
  %9041 = vmatprep.subr.mxu0 0.0
  %v9042 = vand.u32 %v5608, 4294901760
  %9043 = vmatpush1.msra.mxu0 %v9042
  %9044 = vmatprep.subr.mxu0 0.0
  %v9045 = vand.u32 %v5609, 4294901760
  %9046 = vmatpush1.msra.mxu0 %v9045
  %9047 = vmatprep.subr.mxu0 0.0
  %v9048 = vand.u32 %v5610, 4294901760
  %9049 = vmatpush1.msra.mxu0 %v9048
  %9050 = vmatprep.subr.mxu0 0.0
  %9051 = vmatpush1.msra.mxu0 0.0
  %9052 = vmatprep.subr.mxu0 0.0
  %9053 = vmatpush1.msra.mxu0 0.0
  %9054 = vmatprep.subr.mxu0 0.0
  %9055 = vmatpush1.msra.mxu0 0.0
  %9056 = vmatprep.subr.mxu0 0.0
  %9057 = vmatpush1.msra.mxu0 0.0
  %9058 = vmatprep.subr.mxu0 0.0
  %9059 = vmatpush1.msra.mxu0 0.0
  %9060 = vmatprep.subr.mxu0 0.0
  %9061 = vmatpush1.msra.mxu0 0.0
  %9062 = vmatprep.subr.mxu0 0.0
  %9063 = vmatpush1.msra.mxu0 0.0
  %9064 = vmatprep.subr.mxu0 0.0
  %9065 = vmatpush1.msra.mxu0 0.0
  %9066 = vmatprep.subr.mxu0 0.0
  %9067 = vmatpush1.msra.mxu0 0.0
  %9068 = vmatprep.subr.mxu0 0.0
  %9069 = vmatpush1.msra.mxu0 0.0
  %9070 = vmatprep.subr.mxu0 0.0
  %9071 = vmatpush1.msra.mxu0 0.0
  %9072 = vmatprep.subr.mxu0 0.0
  %9073 = vmatpush1.msra.mxu0 0.0
  %9074 = vmatprep.subr.mxu0 0.0
  %9075 = vmatpush1.msra.mxu0 0.0
  %9076 = vmatprep.subr.mxu0 0.0
  %9077 = vmatpush1.msra.mxu0 0.0
  %9078 = vmatprep.subr.mxu0 0.0
  %9079 = vmatpush1.msra.mxu0 0.0
  %9080 = vmatprep.subr.mxu0 0.0
  %9081 = vmatpush1.msra.mxu0 0.0
  %9082 = vmatprep.subr.mxu0 0.0
  %9083 = vmatpush1.msra.mxu0 0.0
  %9084 = vmatprep.subr.mxu0 0.0
  %9085 = vmatpush1.msra.mxu0 0.0
  %9086 = vmatprep.subr.mxu0 0.0
  %9087 = vmatpush1.msra.mxu0 0.0
  %9088 = vmatprep.subr.mxu0 0.0
  %9089 = vmatpush1.msra.mxu0 0.0
  %9090 = vmatprep.subr.mxu0 0.0
  %9091 = vmatpush1.msra.mxu0 0.0
  %9092 = vmatprep.subr.mxu0 0.0
  %9093 = vmatpush1.msra.mxu0 0.0
  %9094 = vmatprep.subr.mxu0 0.0
  %9095 = vmatpush1.msra.mxu0 0.0
  %9096 = vmatprep.subr.mxu0 0.0
  %9097 = vmatpush1.msra.mxu0 0.0
  %9098 = vmatprep.subr.mxu0 0.0
  %9099 = vmatpush1.msra.mxu0 0.0
  %9100 = vmatprep.subr.mxu0 0.0
  %9101 = vmatpush1.msra.mxu0 0.0
  %9102 = vmatprep.subr.mxu0 0.0
  %9103 = vmatpush1.msra.mxu0 0.0
  %9104 = vmatprep.subr.mxu0 0.0
  %9105 = vmatpush1.msra.mxu0 0.0
  %9106 = vmatprep.mubr.f32.mxu0 0.0
  %v9107 = vand.u32 %v9036, 4294901760
  %v9108 = vsub.f32 %v9036, %v9107
  %v9109 = vand.u32 %v9108, 4294901760
  %v9110 = vsub.f32 %v9108, %v9109
  %v9111 = vand.u32 %v9110, 4294901760
  %9112 = vmatmul.mubr.f32.gmra.mrb[0].mxu0 %v9111
  %v9113 = vpop.f32.mrb[0].mxu0
  %v9114 = vadd.f32 %v5604, %v9113
  %v9115 = vpop.f32.mrb[0].mxu0
  %9116 = vdwg.mxu0
  %9117 = vmatprep.subr.mxu0 0.0
  %v9118 = vand.u32 %v5607, 4294901760
  %v9119 = vsub.f32 %v5607, %v9118
  %v9120 = vand.u32 %v9119, 4294901760
  %v9121 = vsub.f32 %v9119, %v9120
  %v9122 = vand.u32 %v9121, 4294901760
  %9123 = vmatpush1.msra.mxu0 %v9122
  %9124 = vmatprep.subr.mxu0 0.0
  %v9125 = vand.u32 %v5608, 4294901760
  %v9126 = vsub.f32 %v5608, %v9125
  %v9127 = vand.u32 %v9126, 4294901760
  %v9128 = vsub.f32 %v9126, %v9127
  %v9129 = vand.u32 %v9128, 4294901760
  %9130 = vmatpush1.msra.mxu0 %v9129
  %9131 = vmatprep.subr.mxu0 0.0
  %v9132 = vand.u32 %v5609, 4294901760
  %v9133 = vsub.f32 %v5609, %v9132
  %v9134 = vand.u32 %v9133, 4294901760
  %v9135 = vsub.f32 %v9133, %v9134
  %v9136 = vand.u32 %v9135, 4294901760
  %9137 = vmatpush1.msra.mxu0 %v9136
  %9138 = vmatprep.subr.mxu0 0.0
  %v9139 = vand.u32 %v5610, 4294901760
  %v9140 = vsub.f32 %v5610, %v9139
  %v9141 = vand.u32 %v9140, 4294901760
  %v9142 = vsub.f32 %v9140, %v9141
  %v9143 = vand.u32 %v9142, 4294901760
  %9144 = vmatpush1.msra.mxu0 %v9143
  %9145 = vmatprep.subr.mxu0 0.0
  %9146 = vmatpush1.msra.mxu0 0.0
  %9147 = vmatprep.subr.mxu0 0.0
  %9148 = vmatpush1.msra.mxu0 0.0
  %9149 = vmatprep.subr.mxu0 0.0
  %9150 = vmatpush1.msra.mxu0 0.0
  %9151 = vmatprep.subr.mxu0 0.0
  %9152 = vmatpush1.msra.mxu0 0.0
  %9153 = vmatprep.subr.mxu0 0.0
  %9154 = vmatpush1.msra.mxu0 0.0
  %9155 = vmatprep.subr.mxu0 0.0
  %9156 = vmatpush1.msra.mxu0 0.0
  %9157 = vmatprep.subr.mxu0 0.0
  %9158 = vmatpush1.msra.mxu0 0.0
  %9159 = vmatprep.subr.mxu0 0.0
  %9160 = vmatpush1.msra.mxu0 0.0
  %9161 = vmatprep.subr.mxu0 0.0
  %9162 = vmatpush1.msra.mxu0 0.0
  %9163 = vmatprep.subr.mxu0 0.0
  %9164 = vmatpush1.msra.mxu0 0.0
  %9165 = vmatprep.subr.mxu0 0.0
  %9166 = vmatpush1.msra.mxu0 0.0
  %9167 = vmatprep.subr.mxu0 0.0
  %9168 = vmatpush1.msra.mxu0 0.0
  %9169 = vmatprep.subr.mxu0 0.0
  %9170 = vmatpush1.msra.mxu0 0.0
  %9171 = vmatprep.subr.mxu0 0.0
  %9172 = vmatpush1.msra.mxu0 0.0
  %9173 = vmatprep.subr.mxu0 0.0
  %9174 = vmatpush1.msra.mxu0 0.0
  %9175 = vmatprep.subr.mxu0 0.0
  %9176 = vmatpush1.msra.mxu0 0.0
  %9177 = vmatprep.subr.mxu0 0.0
  %9178 = vmatpush1.msra.mxu0 0.0
  %9179 = vmatprep.subr.mxu0 0.0
  %9180 = vmatpush1.msra.mxu0 0.0
  %9181 = vmatprep.subr.mxu0 0.0
  %9182 = vmatpush1.msra.mxu0 0.0
  %9183 = vmatprep.subr.mxu0 0.0
  %9184 = vmatpush1.msra.mxu0 0.0
  %9185 = vmatprep.subr.mxu0 0.0
  %9186 = vmatpush1.msra.mxu0 0.0
  %9187 = vmatprep.subr.mxu0 0.0
  %9188 = vmatpush1.msra.mxu0 0.0
  %9189 = vmatprep.subr.mxu0 0.0
  %9190 = vmatpush1.msra.mxu0 0.0
  %9191 = vmatprep.subr.mxu0 0.0
  %9192 = vmatpush1.msra.mxu0 0.0
  %9193 = vmatprep.subr.mxu0 0.0
  %9194 = vmatpush1.msra.mxu0 0.0
  %9195 = vmatprep.subr.mxu0 0.0
  %9196 = vmatpush1.msra.mxu0 0.0
  %9197 = vmatprep.subr.mxu0 0.0
  %9198 = vmatpush1.msra.mxu0 0.0
  %9199 = vmatprep.subr.mxu0 0.0
  %9200 = vmatpush1.msra.mxu0 0.0
  %9201 = vmatprep.mubr.f32.mxu0 0.0
  %v9202 = vand.u32 %v9036, 4294901760
  %9203 = vmatmul.mubr.f32.gmra.mrb[0].mxu0 %v9202
  %v9204 = vpop.f32.mrb[0].mxu0
  %v9205 = vadd.f32 %v9114, %v9204
  %v9206 = vpop.f32.mrb[0].mxu0
  %9207 = vdwg.mxu0
  %9208 = vmatprep.subr.mxu0 0.0
  %v9209 = vand.u32 %v5607, 4294901760
  %v9210 = vsub.f32 %v5607, %v9209
  %9211 = vmatpush1.msra.mxu0 %v9210
  %9212 = vmatprep.subr.mxu0 0.0
  %v9213 = vand.u32 %v5608, 4294901760
  %v9214 = vsub.f32 %v5608, %v9213
  %9215 = vmatpush1.msra.mxu0 %v9214
  %9216 = vmatprep.subr.mxu0 0.0
  %v9217 = vand.u32 %v5609, 4294901760
  %v9218 = vsub.f32 %v5609, %v9217
  %9219 = vmatpush1.msra.mxu0 %v9218
  %9220 = vmatprep.subr.mxu0 0.0
  %v9221 = vand.u32 %v5610, 4294901760
  %v9222 = vsub.f32 %v5610, %v9221
  %9223 = vmatpush1.msra.mxu0 %v9222
  %9224 = vmatprep.subr.mxu0 0.0
  %9225 = vmatpush1.msra.mxu0 0.0
  %9226 = vmatprep.subr.mxu0 0.0
  %9227 = vmatpush1.msra.mxu0 0.0
  %9228 = vmatprep.subr.mxu0 0.0
  %9229 = vmatpush1.msra.mxu0 0.0
  %9230 = vmatprep.subr.mxu0 0.0
  %9231 = vmatpush1.msra.mxu0 0.0
  %9232 = vmatprep.subr.mxu0 0.0
  %9233 = vmatpush1.msra.mxu0 0.0
  %9234 = vmatprep.subr.mxu0 0.0
  %9235 = vmatpush1.msra.mxu0 0.0
  %9236 = vmatprep.subr.mxu0 0.0
  %9237 = vmatpush1.msra.mxu0 0.0
  %9238 = vmatprep.subr.mxu0 0.0
  %9239 = vmatpush1.msra.mxu0 0.0
  %9240 = vmatprep.subr.mxu0 0.0
  %9241 = vmatpush1.msra.mxu0 0.0
  %9242 = vmatprep.subr.mxu0 0.0
  %9243 = vmatpush1.msra.mxu0 0.0
  %9244 = vmatprep.subr.mxu0 0.0
  %9245 = vmatpush1.msra.mxu0 0.0
  %9246 = vmatprep.subr.mxu0 0.0
  %9247 = vmatpush1.msra.mxu0 0.0
  %9248 = vmatprep.subr.mxu0 0.0
  %9249 = vmatpush1.msra.mxu0 0.0
  %9250 = vmatprep.subr.mxu0 0.0
  %9251 = vmatpush1.msra.mxu0 0.0
  %9252 = vmatprep.subr.mxu0 0.0
  %9253 = vmatpush1.msra.mxu0 0.0
  %9254 = vmatprep.subr.mxu0 0.0
  %9255 = vmatpush1.msra.mxu0 0.0
  %9256 = vmatprep.subr.mxu0 0.0
  %9257 = vmatpush1.msra.mxu0 0.0
  %9258 = vmatprep.subr.mxu0 0.0
  %9259 = vmatpush1.msra.mxu0 0.0
  %9260 = vmatprep.subr.mxu0 0.0
  %9261 = vmatpush1.msra.mxu0 0.0
  %9262 = vmatprep.subr.mxu0 0.0
  %9263 = vmatpush1.msra.mxu0 0.0
  %9264 = vmatprep.subr.mxu0 0.0
  %9265 = vmatpush1.msra.mxu0 0.0
  %9266 = vmatprep.subr.mxu0 0.0
  %9267 = vmatpush1.msra.mxu0 0.0
  %9268 = vmatprep.subr.mxu0 0.0
  %9269 = vmatpush1.msra.mxu0 0.0
  %9270 = vmatprep.subr.mxu0 0.0
  %9271 = vmatpush1.msra.mxu0 0.0
  %9272 = vmatprep.subr.mxu0 0.0
  %9273 = vmatpush1.msra.mxu0 0.0
  %9274 = vmatprep.subr.mxu0 0.0
  %9275 = vmatpush1.msra.mxu0 0.0
  %9276 = vmatprep.subr.mxu0 0.0
  %9277 = vmatpush1.msra.mxu0 0.0
  %9278 = vmatprep.subr.mxu0 0.0
  %9279 = vmatpush1.msra.mxu0 0.0
  %9280 = vmatprep.mubr.f32.mxu0 0.0
  %v9281 = vand.u32 %v9036, 4294901760
  %v9282 = vsub.f32 %v9036, %v9281
  %9283 = vmatmul.mubr.f32.gmra.mrb[0].mxu0 %v9282
  %v9284 = vpop.f32.mrb[0].mxu0
  %v9285 = vadd.f32 %v9205, %v9284
  %v9286 = vpop.f32.mrb[0].mxu0
  %9287 = vdwg.mxu0
  %9288 = vmatprep.subr.mxu0 0.0
  %v9289 = vand.u32 %v5607, 4294901760
  %9290 = vmatpush1.msra.mxu0 %v9289
  %9291 = vmatprep.subr.mxu0 0.0
  %v9292 = vand.u32 %v5608, 4294901760
  %9293 = vmatpush1.msra.mxu0 %v9292
  %9294 = vmatprep.subr.mxu0 0.0
  %v9295 = vand.u32 %v5609, 4294901760
  %9296 = vmatpush1.msra.mxu0 %v9295
  %9297 = vmatprep.subr.mxu0 0.0
  %v9298 = vand.u32 %v5610, 4294901760
  %9299 = vmatpush1.msra.mxu0 %v9298
  %9300 = vmatprep.subr.mxu0 0.0
  %9301 = vmatpush1.msra.mxu0 0.0
  %9302 = vmatprep.subr.mxu0 0.0
  %9303 = vmatpush1.msra.mxu0 0.0
  %9304 = vmatprep.subr.mxu0 0.0
  %9305 = vmatpush1.msra.mxu0 0.0
  %9306 = vmatprep.subr.mxu0 0.0
  %9307 = vmatpush1.msra.mxu0 0.0
  %9308 = vmatprep.subr.mxu0 0.0
  %9309 = vmatpush1.msra.mxu0 0.0
  %9310 = vmatprep.subr.mxu0 0.0
  %9311 = vmatpush1.msra.mxu0 0.0
  %9312 = vmatprep.subr.mxu0 0.0
  %9313 = vmatpush1.msra.mxu0 0.0
  %9314 = vmatprep.subr.mxu0 0.0
  %9315 = vmatpush1.msra.mxu0 0.0
  %9316 = vmatprep.subr.mxu0 0.0
  %9317 = vmatpush1.msra.mxu0 0.0
  %9318 = vmatprep.subr.mxu0 0.0
  %9319 = vmatpush1.msra.mxu0 0.0
  %9320 = vmatprep.subr.mxu0 0.0
  %9321 = vmatpush1.msra.mxu0 0.0
  %9322 = vmatprep.subr.mxu0 0.0
  %9323 = vmatpush1.msra.mxu0 0.0
  %9324 = vmatprep.subr.mxu0 0.0
  %9325 = vmatpush1.msra.mxu0 0.0
  %9326 = vmatprep.subr.mxu0 0.0
  %9327 = vmatpush1.msra.mxu0 0.0
  %9328 = vmatprep.subr.mxu0 0.0
  %9329 = vmatpush1.msra.mxu0 0.0
  %9330 = vmatprep.subr.mxu0 0.0
  %9331 = vmatpush1.msra.mxu0 0.0
  %9332 = vmatprep.subr.mxu0 0.0
  %9333 = vmatpush1.msra.mxu0 0.0
  %9334 = vmatprep.subr.mxu0 0.0
  %9335 = vmatpush1.msra.mxu0 0.0
  %9336 = vmatprep.subr.mxu0 0.0
  %9337 = vmatpush1.msra.mxu0 0.0
  %9338 = vmatprep.subr.mxu0 0.0
  %9339 = vmatpush1.msra.mxu0 0.0
  %9340 = vmatprep.subr.mxu0 0.0
  %9341 = vmatpush1.msra.mxu0 0.0
  %9342 = vmatprep.subr.mxu0 0.0
  %9343 = vmatpush1.msra.mxu0 0.0
  %9344 = vmatprep.subr.mxu0 0.0
  %9345 = vmatpush1.msra.mxu0 0.0
  %9346 = vmatprep.subr.mxu0 0.0
  %9347 = vmatpush1.msra.mxu0 0.0
  %9348 = vmatprep.subr.mxu0 0.0
  %9349 = vmatpush1.msra.mxu0 0.0
  %9350 = vmatprep.subr.mxu0 0.0
  %9351 = vmatpush1.msra.mxu0 0.0
  %9352 = vmatprep.subr.mxu0 0.0
  %9353 = vmatpush1.msra.mxu0 0.0
  %9354 = vmatprep.subr.mxu0 0.0
  %9355 = vmatpush1.msra.mxu0 0.0
  %9356 = vmatprep.mubr.f32.mxu0 0.0
  %v9357 = vand.u32 %v9036, 4294901760
  %v9358 = vsub.f32 %v9036, %v9357
  %v9359 = vand.u32 %v9358, 4294901760
  %9360 = vmatmul.mubr.f32.gmra.mrb[0].mxu0 %v9359
  %v9361 = vpop.f32.mrb[0].mxu0
  %v9362 = vadd.f32 %v9285, %v9361
  %v9363 = vpop.f32.mrb[0].mxu0
  %9364 = vdwg.mxu0
  %9365 = vmatprep.subr.mxu0 0.0
  %v9366 = vand.u32 %v5607, 4294901760
  %v9367 = vsub.f32 %v5607, %v9366
  %v9368 = vand.u32 %v9367, 4294901760
  %9369 = vmatpush1.msra.mxu0 %v9368
  %9370 = vmatprep.subr.mxu0 0.0
  %v9371 = vand.u32 %v5608, 4294901760
  %v9372 = vsub.f32 %v5608, %v9371
  %v9373 = vand.u32 %v9372, 4294901760
  %9374 = vmatpush1.msra.mxu0 %v9373
  %9375 = vmatprep.subr.mxu0 0.0
  %v9376 = vand.u32 %v5609, 4294901760
  %v9377 = vsub.f32 %v5609, %v9376
  %v9378 = vand.u32 %v9377, 4294901760
  %9379 = vmatpush1.msra.mxu0 %v9378
  %9380 = vmatprep.subr.mxu0 0.0
  %v9381 = vand.u32 %v5610, 4294901760
  %v9382 = vsub.f32 %v5610, %v9381
  %v9383 = vand.u32 %v9382, 4294901760
  %9384 = vmatpush1.msra.mxu0 %v9383
  %9385 = vmatprep.subr.mxu0 0.0
  %9386 = vmatpush1.msra.mxu0 0.0
  %9387 = vmatprep.subr.mxu0 0.0
  %9388 = vmatpush1.msra.mxu0 0.0
  %9389 = vmatprep.subr.mxu0 0.0
  %9390 = vmatpush1.msra.mxu0 0.0
  %9391 = vmatprep.subr.mxu0 0.0
  %9392 = vmatpush1.msra.mxu0 0.0
  %9393 = vmatprep.subr.mxu0 0.0
  %9394 = vmatpush1.msra.mxu0 0.0
  %9395 = vmatprep.subr.mxu0 0.0
  %9396 = vmatpush1.msra.mxu0 0.0
  %9397 = vmatprep.subr.mxu0 0.0
  %9398 = vmatpush1.msra.mxu0 0.0
  %9399 = vmatprep.subr.mxu0 0.0
  %9400 = vmatpush1.msra.mxu0 0.0
  %9401 = vmatprep.subr.mxu0 0.0
  %9402 = vmatpush1.msra.mxu0 0.0
  %9403 = vmatprep.subr.mxu0 0.0
  %9404 = vmatpush1.msra.mxu0 0.0
  %9405 = vmatprep.subr.mxu0 0.0
  %9406 = vmatpush1.msra.mxu0 0.0
  %9407 = vmatprep.subr.mxu0 0.0
  %9408 = vmatpush1.msra.mxu0 0.0
  %9409 = vmatprep.subr.mxu0 0.0
  %9410 = vmatpush1.msra.mxu0 0.0
  %9411 = vmatprep.subr.mxu0 0.0
  %9412 = vmatpush1.msra.mxu0 0.0
  %9413 = vmatprep.subr.mxu0 0.0
  %9414 = vmatpush1.msra.mxu0 0.0
  %9415 = vmatprep.subr.mxu0 0.0
  %9416 = vmatpush1.msra.mxu0 0.0
  %9417 = vmatprep.subr.mxu0 0.0
  %9418 = vmatpush1.msra.mxu0 0.0
  %9419 = vmatprep.subr.mxu0 0.0
  %9420 = vmatpush1.msra.mxu0 0.0
  %9421 = vmatprep.subr.mxu0 0.0
  %9422 = vmatpush1.msra.mxu0 0.0
  %9423 = vmatprep.subr.mxu0 0.0
  %9424 = vmatpush1.msra.mxu0 0.0
  %9425 = vmatprep.subr.mxu0 0.0
  %9426 = vmatpush1.msra.mxu0 0.0
  %9427 = vmatprep.subr.mxu0 0.0
  %9428 = vmatpush1.msra.mxu0 0.0
  %9429 = vmatprep.subr.mxu0 0.0
  %9430 = vmatpush1.msra.mxu0 0.0
  %9431 = vmatprep.subr.mxu0 0.0
  %9432 = vmatpush1.msra.mxu0 0.0
  %9433 = vmatprep.subr.mxu0 0.0
  %9434 = vmatpush1.msra.mxu0 0.0
  %9435 = vmatprep.subr.mxu0 0.0
  %9436 = vmatpush1.msra.mxu0 0.0
  %9437 = vmatprep.subr.mxu0 0.0
  %9438 = vmatpush1.msra.mxu0 0.0
  %9439 = vmatprep.subr.mxu0 0.0
  %9440 = vmatpush1.msra.mxu0 0.0
  %9441 = vmatprep.mubr.f32.mxu0 0.0
  %v9442 = vand.u32 %v9036, 4294901760
  %9443 = vmatmul.mubr.f32.gmra.mrb[0].mxu0 %v9442
  %v9444 = vpop.f32.mrb[0].mxu0
  %v9445 = vadd.f32 %v9362, %v9444
  %v9446 = vpop.f32.mrb[0].mxu0
  %9447 = vdwg.mxu0
  %9448 = vmatprep.subr.mxu0 0.0
  %v9449 = vand.u32 %v5607, 4294901760
  %9450 = vmatpush1.msra.mxu0 %v9449
  %9451 = vmatprep.subr.mxu0 0.0
  %v9452 = vand.u32 %v5608, 4294901760
  %9453 = vmatpush1.msra.mxu0 %v9452
  %9454 = vmatprep.subr.mxu0 0.0
  %v9455 = vand.u32 %v5609, 4294901760
  %9456 = vmatpush1.msra.mxu0 %v9455
  %9457 = vmatprep.subr.mxu0 0.0
  %v9458 = vand.u32 %v5610, 4294901760
  %9459 = vmatpush1.msra.mxu0 %v9458
  %9460 = vmatprep.subr.mxu0 0.0
  %9461 = vmatpush1.msra.mxu0 0.0
  %9462 = vmatprep.subr.mxu0 0.0
  %9463 = vmatpush1.msra.mxu0 0.0
  %9464 = vmatprep.subr.mxu0 0.0
  %9465 = vmatpush1.msra.mxu0 0.0
  %9466 = vmatprep.subr.mxu0 0.0
  %9467 = vmatpush1.msra.mxu0 0.0
  %9468 = vmatprep.subr.mxu0 0.0
  %9469 = vmatpush1.msra.mxu0 0.0
  %9470 = vmatprep.subr.mxu0 0.0
  %9471 = vmatpush1.msra.mxu0 0.0
  %9472 = vmatprep.subr.mxu0 0.0
  %9473 = vmatpush1.msra.mxu0 0.0
  %9474 = vmatprep.subr.mxu0 0.0
  %9475 = vmatpush1.msra.mxu0 0.0
  %9476 = vmatprep.subr.mxu0 0.0
  %9477 = vmatpush1.msra.mxu0 0.0
  %9478 = vmatprep.subr.mxu0 0.0
  %9479 = vmatpush1.msra.mxu0 0.0
  %9480 = vmatprep.subr.mxu0 0.0
  %9481 = vmatpush1.msra.mxu0 0.0
  %9482 = vmatprep.subr.mxu0 0.0
  %9483 = vmatpush1.msra.mxu0 0.0
  %9484 = vmatprep.subr.mxu0 0.0
  %9485 = vmatpush1.msra.mxu0 0.0
  %9486 = vmatprep.subr.mxu0 0.0
  %9487 = vmatpush1.msra.mxu0 0.0
  %9488 = vmatprep.subr.mxu0 0.0
  %9489 = vmatpush1.msra.mxu0 0.0
  %9490 = vmatprep.subr.mxu0 0.0
  %9491 = vmatpush1.msra.mxu0 0.0
  %9492 = vmatprep.subr.mxu0 0.0
  %9493 = vmatpush1.msra.mxu0 0.0
  %9494 = vmatprep.subr.mxu0 0.0
  %9495 = vmatpush1.msra.mxu0 0.0
  %9496 = vmatprep.subr.mxu0 0.0
  %9497 = vmatpush1.msra.mxu0 0.0
  %9498 = vmatprep.subr.mxu0 0.0
  %9499 = vmatpush1.msra.mxu0 0.0
  %9500 = vmatprep.subr.mxu0 0.0
  %9501 = vmatpush1.msra.mxu0 0.0
  %9502 = vmatprep.subr.mxu0 0.0
  %9503 = vmatpush1.msra.mxu0 0.0
  %9504 = vmatprep.subr.mxu0 0.0
  %9505 = vmatpush1.msra.mxu0 0.0
  %9506 = vmatprep.subr.mxu0 0.0
  %9507 = vmatpush1.msra.mxu0 0.0
  %9508 = vmatprep.subr.mxu0 0.0
  %9509 = vmatpush1.msra.mxu0 0.0
  %9510 = vmatprep.subr.mxu0 0.0
  %9511 = vmatpush1.msra.mxu0 0.0
  %9512 = vmatprep.subr.mxu0 0.0
  %9513 = vmatpush1.msra.mxu0 0.0
  %9514 = vmatprep.subr.mxu0 0.0
  %9515 = vmatpush1.msra.mxu0 0.0
  %9516 = vmatprep.mubr.f32.mxu0 0.0
  %v9517 = vand.u32 %v9036, 4294901760
  %9518 = vmatmul.mubr.f32.gmra.mrb[0].mxu0 %v9517
  %v9519 = vpop.f32.mrb[0].mxu0
  %v9520 = vadd.f32 %v9445, %v9519
  %v9521 = vpop.f32.mrb[0].mxu0
  %9522 = vdwg.mxu0
  %v9523 = vtanh.pop %v9520
  %v9524 = vld [vmem:[%s9] sm:$0xff]
  %v9525 = vld [vmem:[%s9 + $0x8] sm:$0xff]
  %v9526 = vld [vmem:[%s9 + $0x10] sm:$0xff]
  %v9527 = vld [vmem:[%s9 + $0x18] sm:$0xff]
  %v9528 = vld [vmem:[%s10] sm:$0x1]
  %v9530 = vlaneseq
  %v9531 = vshrl.u32 %v9530, 7
  %v9532 = vsub.s32 0, %v9531
  %v9533 = vrot.slane %v9528, %v9532
  %v9536 = vsel %vm857, %v9523, 0
  %9538 = vmatprep.subr.mxu0 0.0
  %v9539 = vand.u32 %v9524, 4294901760
  %9540 = vmatpush1.msra.mxu0 %v9539
  %9541 = vmatprep.subr.mxu0 0.0
  %v9542 = vand.u32 %v9525, 4294901760
  %9543 = vmatpush1.msra.mxu0 %v9542
  %9544 = vmatprep.subr.mxu0 0.0
  %v9545 = vand.u32 %v9526, 4294901760
  %9546 = vmatpush1.msra.mxu0 %v9545
  %9547 = vmatprep.subr.mxu0 0.0
  %v9548 = vand.u32 %v9527, 4294901760
  %9549 = vmatpush1.msra.mxu0 %v9548
  %9550 = vmatprep.subr.mxu0 0.0
  %9551 = vmatpush1.msra.mxu0 0.0
  %9552 = vmatprep.subr.mxu0 0.0
  %9553 = vmatpush1.msra.mxu0 0.0
  %9554 = vmatprep.subr.mxu0 0.0
  %9555 = vmatpush1.msra.mxu0 0.0
  %9556 = vmatprep.subr.mxu0 0.0
  %9557 = vmatpush1.msra.mxu0 0.0
  %9558 = vmatprep.subr.mxu0 0.0
  %9559 = vmatpush1.msra.mxu0 0.0
  %9560 = vmatprep.subr.mxu0 0.0
  %9561 = vmatpush1.msra.mxu0 0.0
  %9562 = vmatprep.subr.mxu0 0.0
  %9563 = vmatpush1.msra.mxu0 0.0
  %9564 = vmatprep.subr.mxu0 0.0
  %9565 = vmatpush1.msra.mxu0 0.0
  %9566 = vmatprep.subr.mxu0 0.0
  %9567 = vmatpush1.msra.mxu0 0.0
  %9568 = vmatprep.subr.mxu0 0.0
  %9569 = vmatpush1.msra.mxu0 0.0
  %9570 = vmatprep.subr.mxu0 0.0
  %9571 = vmatpush1.msra.mxu0 0.0
  %9572 = vmatprep.subr.mxu0 0.0
  %9573 = vmatpush1.msra.mxu0 0.0
  %9574 = vmatprep.subr.mxu0 0.0
  %9575 = vmatpush1.msra.mxu0 0.0
  %9576 = vmatprep.subr.mxu0 0.0
  %9577 = vmatpush1.msra.mxu0 0.0
  %9578 = vmatprep.subr.mxu0 0.0
  %9579 = vmatpush1.msra.mxu0 0.0
  %9580 = vmatprep.subr.mxu0 0.0
  %9581 = vmatpush1.msra.mxu0 0.0
  %9582 = vmatprep.subr.mxu0 0.0
  %9583 = vmatpush1.msra.mxu0 0.0
  %9584 = vmatprep.subr.mxu0 0.0
  %9585 = vmatpush1.msra.mxu0 0.0
  %9586 = vmatprep.subr.mxu0 0.0
  %9587 = vmatpush1.msra.mxu0 0.0
  %9588 = vmatprep.subr.mxu0 0.0
  %9589 = vmatpush1.msra.mxu0 0.0
  %9590 = vmatprep.subr.mxu0 0.0
  %9591 = vmatpush1.msra.mxu0 0.0
  %9592 = vmatprep.subr.mxu0 0.0
  %9593 = vmatpush1.msra.mxu0 0.0
  %9594 = vmatprep.subr.mxu0 0.0
  %9595 = vmatpush1.msra.mxu0 0.0
  %9596 = vmatprep.subr.mxu0 0.0
  %9597 = vmatpush1.msra.mxu0 0.0
  %9598 = vmatprep.subr.mxu0 0.0
  %9599 = vmatpush1.msra.mxu0 0.0
  %9600 = vmatprep.subr.mxu0 0.0
  %9601 = vmatpush1.msra.mxu0 0.0
  %9602 = vmatprep.subr.mxu0 0.0
  %9603 = vmatpush1.msra.mxu0 0.0
  %9604 = vmatprep.subr.mxu0 0.0
  %9605 = vmatpush1.msra.mxu0 0.0
  %9606 = vmatprep.mubr.f32.mxu0 0.0
  %v9607 = vand.u32 %v9536, 4294901760
  %v9608 = vsub.f32 %v9536, %v9607
  %v9609 = vand.u32 %v9608, 4294901760
  %v9610 = vsub.f32 %v9608, %v9609
  %v9611 = vand.u32 %v9610, 4294901760
  %9612 = vmatmul.mubr.f32.gmra.mrb[0].mxu0 %v9611
  %v9613 = vpop.f32.mrb[0].mxu0
  %v9614 = vadd.f32 %v9533, %v9613
  %v9615 = vpop.f32.mrb[0].mxu0
  %9616 = vdwg.mxu0
  %9617 = vmatprep.subr.mxu0 0.0
  %v9618 = vand.u32 %v9524, 4294901760
  %v9619 = vsub.f32 %v9524, %v9618
  %v9620 = vand.u32 %v9619, 4294901760
  %v9621 = vsub.f32 %v9619, %v9620
  %v9622 = vand.u32 %v9621, 4294901760
  %9623 = vmatpush1.msra.mxu0 %v9622
  %9624 = vmatprep.subr.mxu0 0.0
  %v9625 = vand.u32 %v9525, 4294901760
  %v9626 = vsub.f32 %v9525, %v9625
  %v9627 = vand.u32 %v9626, 4294901760
  %v9628 = vsub.f32 %v9626, %v9627
  %v9629 = vand.u32 %v9628, 4294901760
  %9630 = vmatpush1.msra.mxu0 %v9629
  %9631 = vmatprep.subr.mxu0 0.0
  %v9632 = vand.u32 %v9526, 4294901760
  %v9633 = vsub.f32 %v9526, %v9632
  %v9634 = vand.u32 %v9633, 4294901760
  %v9635 = vsub.f32 %v9633, %v9634
  %v9636 = vand.u32 %v9635, 4294901760
  %9637 = vmatpush1.msra.mxu0 %v9636
  %9638 = vmatprep.subr.mxu0 0.0
  %v9639 = vand.u32 %v9527, 4294901760
  %v9640 = vsub.f32 %v9527, %v9639
  %v9641 = vand.u32 %v9640, 4294901760
  %v9642 = vsub.f32 %v9640, %v9641
  %v9643 = vand.u32 %v9642, 4294901760
  %9644 = vmatpush1.msra.mxu0 %v9643
  %9645 = vmatprep.subr.mxu0 0.0
  %9646 = vmatpush1.msra.mxu0 0.0
  %9647 = vmatprep.subr.mxu0 0.0
  %9648 = vmatpush1.msra.mxu0 0.0
  %9649 = vmatprep.subr.mxu0 0.0
  %9650 = vmatpush1.msra.mxu0 0.0
  %9651 = vmatprep.subr.mxu0 0.0
  %9652 = vmatpush1.msra.mxu0 0.0
  %9653 = vmatprep.subr.mxu0 0.0
  %9654 = vmatpush1.msra.mxu0 0.0
  %9655 = vmatprep.subr.mxu0 0.0
  %9656 = vmatpush1.msra.mxu0 0.0
  %9657 = vmatprep.subr.mxu0 0.0
  %9658 = vmatpush1.msra.mxu0 0.0
  %9659 = vmatprep.subr.mxu0 0.0
  %9660 = vmatpush1.msra.mxu0 0.0
  %9661 = vmatprep.subr.mxu0 0.0
  %9662 = vmatpush1.msra.mxu0 0.0
  %9663 = vmatprep.subr.mxu0 0.0
  %9664 = vmatpush1.msra.mxu0 0.0
  %9665 = vmatprep.subr.mxu0 0.0
  %9666 = vmatpush1.msra.mxu0 0.0
  %9667 = vmatprep.subr.mxu0 0.0
  %9668 = vmatpush1.msra.mxu0 0.0
  %9669 = vmatprep.subr.mxu0 0.0
  %9670 = vmatpush1.msra.mxu0 0.0
  %9671 = vmatprep.subr.mxu0 0.0
  %9672 = vmatpush1.msra.mxu0 0.0
  %9673 = vmatprep.subr.mxu0 0.0
  %9674 = vmatpush1.msra.mxu0 0.0
  %9675 = vmatprep.subr.mxu0 0.0
  %9676 = vmatpush1.msra.mxu0 0.0
  %9677 = vmatprep.subr.mxu0 0.0
  %9678 = vmatpush1.msra.mxu0 0.0
  %9679 = vmatprep.subr.mxu0 0.0
  %9680 = vmatpush1.msra.mxu0 0.0
  %9681 = vmatprep.subr.mxu0 0.0
  %9682 = vmatpush1.msra.mxu0 0.0
  %9683 = vmatprep.subr.mxu0 0.0
  %9684 = vmatpush1.msra.mxu0 0.0
  %9685 = vmatprep.subr.mxu0 0.0
  %9686 = vmatpush1.msra.mxu0 0.0
  %9687 = vmatprep.subr.mxu0 0.0
  %9688 = vmatpush1.msra.mxu0 0.0
  %9689 = vmatprep.subr.mxu0 0.0
  %9690 = vmatpush1.msra.mxu0 0.0
  %9691 = vmatprep.subr.mxu0 0.0
  %9692 = vmatpush1.msra.mxu0 0.0
  %9693 = vmatprep.subr.mxu0 0.0
  %9694 = vmatpush1.msra.mxu0 0.0
  %9695 = vmatprep.subr.mxu0 0.0
  %9696 = vmatpush1.msra.mxu0 0.0
  %9697 = vmatprep.subr.mxu0 0.0
  %9698 = vmatpush1.msra.mxu0 0.0
  %9699 = vmatprep.subr.mxu0 0.0
  %9700 = vmatpush1.msra.mxu0 0.0
  %9701 = vmatprep.mubr.f32.mxu0 0.0
  %v9702 = vand.u32 %v9536, 4294901760
  %9703 = vmatmul.mubr.f32.gmra.mrb[0].mxu0 %v9702
  %v9704 = vpop.f32.mrb[0].mxu0
  %v9705 = vadd.f32 %v9614, %v9704
  %v9706 = vpop.f32.mrb[0].mxu0
  %9707 = vdwg.mxu0
  %9708 = vmatprep.subr.mxu0 0.0
  %v9709 = vand.u32 %v9524, 4294901760
  %v9710 = vsub.f32 %v9524, %v9709
  %9711 = vmatpush1.msra.mxu0 %v9710
  %9712 = vmatprep.subr.mxu0 0.0
  %v9713 = vand.u32 %v9525, 4294901760
  %v9714 = vsub.f32 %v9525, %v9713
  %9715 = vmatpush1.msra.mxu0 %v9714
  %9716 = vmatprep.subr.mxu0 0.0
  %v9717 = vand.u32 %v9526, 4294901760
  %v9718 = vsub.f32 %v9526, %v9717
  %9719 = vmatpush1.msra.mxu0 %v9718
  %9720 = vmatprep.subr.mxu0 0.0
  %v9721 = vand.u32 %v9527, 4294901760
  %v9722 = vsub.f32 %v9527, %v9721
  %9723 = vmatpush1.msra.mxu0 %v9722
  %9724 = vmatprep.subr.mxu0 0.0
  %9725 = vmatpush1.msra.mxu0 0.0
  %9726 = vmatprep.subr.mxu0 0.0
  %9727 = vmatpush1.msra.mxu0 0.0
  %9728 = vmatprep.subr.mxu0 0.0
  %9729 = vmatpush1.msra.mxu0 0.0
  %9730 = vmatprep.subr.mxu0 0.0
  %9731 = vmatpush1.msra.mxu0 0.0
  %9732 = vmatprep.subr.mxu0 0.0
  %9733 = vmatpush1.msra.mxu0 0.0
  %9734 = vmatprep.subr.mxu0 0.0
  %9735 = vmatpush1.msra.mxu0 0.0
  %9736 = vmatprep.subr.mxu0 0.0
  %9737 = vmatpush1.msra.mxu0 0.0
  %9738 = vmatprep.subr.mxu0 0.0
  %9739 = vmatpush1.msra.mxu0 0.0
  %9740 = vmatprep.subr.mxu0 0.0
  %9741 = vmatpush1.msra.mxu0 0.0
  %9742 = vmatprep.subr.mxu0 0.0
  %9743 = vmatpush1.msra.mxu0 0.0
  %9744 = vmatprep.subr.mxu0 0.0
  %9745 = vmatpush1.msra.mxu0 0.0
  %9746 = vmatprep.subr.mxu0 0.0
  %9747 = vmatpush1.msra.mxu0 0.0
  %9748 = vmatprep.subr.mxu0 0.0
  %9749 = vmatpush1.msra.mxu0 0.0
  %9750 = vmatprep.subr.mxu0 0.0
  %9751 = vmatpush1.msra.mxu0 0.0
  %9752 = vmatprep.subr.mxu0 0.0
  %9753 = vmatpush1.msra.mxu0 0.0
  %9754 = vmatprep.subr.mxu0 0.0
  %9755 = vmatpush1.msra.mxu0 0.0
  %9756 = vmatprep.subr.mxu0 0.0
  %9757 = vmatpush1.msra.mxu0 0.0
  %9758 = vmatprep.subr.mxu0 0.0
  %9759 = vmatpush1.msra.mxu0 0.0
  %9760 = vmatprep.subr.mxu0 0.0
  %9761 = vmatpush1.msra.mxu0 0.0
  %9762 = vmatprep.subr.mxu0 0.0
  %9763 = vmatpush1.msra.mxu0 0.0
  %9764 = vmatprep.subr.mxu0 0.0
  %9765 = vmatpush1.msra.mxu0 0.0
  %9766 = vmatprep.subr.mxu0 0.0
  %9767 = vmatpush1.msra.mxu0 0.0
  %9768 = vmatprep.subr.mxu0 0.0
  %9769 = vmatpush1.msra.mxu0 0.0
  %9770 = vmatprep.subr.mxu0 0.0
  %9771 = vmatpush1.msra.mxu0 0.0
  %9772 = vmatprep.subr.mxu0 0.0
  %9773 = vmatpush1.msra.mxu0 0.0
  %9774 = vmatprep.subr.mxu0 0.0
  %9775 = vmatpush1.msra.mxu0 0.0
  %9776 = vmatprep.subr.mxu0 0.0
  %9777 = vmatpush1.msra.mxu0 0.0
  %9778 = vmatprep.subr.mxu0 0.0
  %9779 = vmatpush1.msra.mxu0 0.0
  %9780 = vmatprep.mubr.f32.mxu0 0.0
  %v9781 = vand.u32 %v9536, 4294901760
  %v9782 = vsub.f32 %v9536, %v9781
  %9783 = vmatmul.mubr.f32.gmra.mrb[0].mxu0 %v9782
  %v9784 = vpop.f32.mrb[0].mxu0
  %v9785 = vadd.f32 %v9705, %v9784
  %v9786 = vpop.f32.mrb[0].mxu0
  %9787 = vdwg.mxu0
  %9788 = vmatprep.subr.mxu0 0.0
  %v9789 = vand.u32 %v9524, 4294901760
  %9790 = vmatpush1.msra.mxu0 %v9789
  %9791 = vmatprep.subr.mxu0 0.0
  %v9792 = vand.u32 %v9525, 4294901760
  %9793 = vmatpush1.msra.mxu0 %v9792
  %9794 = vmatprep.subr.mxu0 0.0
  %v9795 = vand.u32 %v9526, 4294901760
  %9796 = vmatpush1.msra.mxu0 %v9795
  %9797 = vmatprep.subr.mxu0 0.0
  %v9798 = vand.u32 %v9527, 4294901760
  %9799 = vmatpush1.msra.mxu0 %v9798
  %9800 = vmatprep.subr.mxu0 0.0
  %9801 = vmatpush1.msra.mxu0 0.0
  %9802 = vmatprep.subr.mxu0 0.0
  %9803 = vmatpush1.msra.mxu0 0.0
  %9804 = vmatprep.subr.mxu0 0.0
  %9805 = vmatpush1.msra.mxu0 0.0
  %9806 = vmatprep.subr.mxu0 0.0
  %9807 = vmatpush1.msra.mxu0 0.0
  %9808 = vmatprep.subr.mxu0 0.0
  %9809 = vmatpush1.msra.mxu0 0.0
  %9810 = vmatprep.subr.mxu0 0.0
  %9811 = vmatpush1.msra.mxu0 0.0
  %9812 = vmatprep.subr.mxu0 0.0
  %9813 = vmatpush1.msra.mxu0 0.0
  %9814 = vmatprep.subr.mxu0 0.0
  %9815 = vmatpush1.msra.mxu0 0.0
  %9816 = vmatprep.subr.mxu0 0.0
  %9817 = vmatpush1.msra.mxu0 0.0
  %9818 = vmatprep.subr.mxu0 0.0
  %9819 = vmatpush1.msra.mxu0 0.0
  %9820 = vmatprep.subr.mxu0 0.0
  %9821 = vmatpush1.msra.mxu0 0.0
  %9822 = vmatprep.subr.mxu0 0.0
  %9823 = vmatpush1.msra.mxu0 0.0
  %9824 = vmatprep.subr.mxu0 0.0
  %9825 = vmatpush1.msra.mxu0 0.0
  %9826 = vmatprep.subr.mxu0 0.0
  %9827 = vmatpush1.msra.mxu0 0.0
  %9828 = vmatprep.subr.mxu0 0.0
  %9829 = vmatpush1.msra.mxu0 0.0
  %9830 = vmatprep.subr.mxu0 0.0
  %9831 = vmatpush1.msra.mxu0 0.0
  %9832 = vmatprep.subr.mxu0 0.0
  %9833 = vmatpush1.msra.mxu0 0.0
  %9834 = vmatprep.subr.mxu0 0.0
  %9835 = vmatpush1.msra.mxu0 0.0
  %9836 = vmatprep.subr.mxu0 0.0
  %9837 = vmatpush1.msra.mxu0 0.0
  %9838 = vmatprep.subr.mxu0 0.0
  %9839 = vmatpush1.msra.mxu0 0.0
  %9840 = vmatprep.subr.mxu0 0.0
  %9841 = vmatpush1.msra.mxu0 0.0
  %9842 = vmatprep.subr.mxu0 0.0
  %9843 = vmatpush1.msra.mxu0 0.0
  %9844 = vmatprep.subr.mxu0 0.0
  %9845 = vmatpush1.msra.mxu0 0.0
  %9846 = vmatprep.subr.mxu0 0.0
  %9847 = vmatpush1.msra.mxu0 0.0
  %9848 = vmatprep.subr.mxu0 0.0
  %9849 = vmatpush1.msra.mxu0 0.0
  %9850 = vmatprep.subr.mxu0 0.0
  %9851 = vmatpush1.msra.mxu0 0.0
  %9852 = vmatprep.subr.mxu0 0.0
  %9853 = vmatpush1.msra.mxu0 0.0
  %9854 = vmatprep.subr.mxu0 0.0
  %9855 = vmatpush1.msra.mxu0 0.0
  %9856 = vmatprep.mubr.f32.mxu0 0.0
  %v9857 = vand.u32 %v9536, 4294901760
  %v9858 = vsub.f32 %v9536, %v9857
  %v9859 = vand.u32 %v9858, 4294901760
  %9860 = vmatmul.mubr.f32.gmra.mrb[0].mxu0 %v9859
  %v9861 = vpop.f32.mrb[0].mxu0
  %v9862 = vadd.f32 %v9785, %v9861
  %v9863 = vpop.f32.mrb[0].mxu0
  %9864 = vdwg.mxu0
  %9865 = vmatprep.subr.mxu0 0.0
  %v9866 = vand.u32 %v9524, 4294901760
  %v9867 = vsub.f32 %v9524, %v9866
  %v9868 = vand.u32 %v9867, 4294901760
  %9869 = vmatpush1.msra.mxu0 %v9868
  %9870 = vmatprep.subr.mxu0 0.0
  %v9871 = vand.u32 %v9525, 4294901760
  %v9872 = vsub.f32 %v9525, %v9871
  %v9873 = vand.u32 %v9872, 4294901760
  %9874 = vmatpush1.msra.mxu0 %v9873
  %9875 = vmatprep.subr.mxu0 0.0
  %v9876 = vand.u32 %v9526, 4294901760
  %v9877 = vsub.f32 %v9526, %v9876
  %v9878 = vand.u32 %v9877, 4294901760
  %9879 = vmatpush1.msra.mxu0 %v9878
  %9880 = vmatprep.subr.mxu0 0.0
  %v9881 = vand.u32 %v9527, 4294901760
  %v9882 = vsub.f32 %v9527, %v9881
  %v9883 = vand.u32 %v9882, 4294901760
  %9884 = vmatpush1.msra.mxu0 %v9883
  %9885 = vmatprep.subr.mxu0 0.0
  %9886 = vmatpush1.msra.mxu0 0.0
  %9887 = vmatprep.subr.mxu0 0.0
  %9888 = vmatpush1.msra.mxu0 0.0
  %9889 = vmatprep.subr.mxu0 0.0
  %9890 = vmatpush1.msra.mxu0 0.0
  %9891 = vmatprep.subr.mxu0 0.0
  %9892 = vmatpush1.msra.mxu0 0.0
  %9893 = vmatprep.subr.mxu0 0.0
  %9894 = vmatpush1.msra.mxu0 0.0
  %9895 = vmatprep.subr.mxu0 0.0
  %9896 = vmatpush1.msra.mxu0 0.0
  %9897 = vmatprep.subr.mxu0 0.0
  %9898 = vmatpush1.msra.mxu0 0.0
  %9899 = vmatprep.subr.mxu0 0.0
  %9900 = vmatpush1.msra.mxu0 0.0
  %9901 = vmatprep.subr.mxu0 0.0
  %9902 = vmatpush1.msra.mxu0 0.0
  %9903 = vmatprep.subr.mxu0 0.0
  %9904 = vmatpush1.msra.mxu0 0.0
  %9905 = vmatprep.subr.mxu0 0.0
  %9906 = vmatpush1.msra.mxu0 0.0
  %9907 = vmatprep.subr.mxu0 0.0
  %9908 = vmatpush1.msra.mxu0 0.0
  %9909 = vmatprep.subr.mxu0 0.0
  %9910 = vmatpush1.msra.mxu0 0.0
  %9911 = vmatprep.subr.mxu0 0.0
  %9912 = vmatpush1.msra.mxu0 0.0
  %9913 = vmatprep.subr.mxu0 0.0
  %9914 = vmatpush1.msra.mxu0 0.0
  %9915 = vmatprep.subr.mxu0 0.0
  %9916 = vmatpush1.msra.mxu0 0.0
  %9917 = vmatprep.subr.mxu0 0.0
  %9918 = vmatpush1.msra.mxu0 0.0
  %9919 = vmatprep.subr.mxu0 0.0
  %9920 = vmatpush1.msra.mxu0 0.0
  %9921 = vmatprep.subr.mxu0 0.0
  %9922 = vmatpush1.msra.mxu0 0.0
  %9923 = vmatprep.subr.mxu0 0.0
  %9924 = vmatpush1.msra.mxu0 0.0
  %9925 = vmatprep.subr.mxu0 0.0
  %9926 = vmatpush1.msra.mxu0 0.0
  %9927 = vmatprep.subr.mxu0 0.0
  %9928 = vmatpush1.msra.mxu0 0.0
  %9929 = vmatprep.subr.mxu0 0.0
  %9930 = vmatpush1.msra.mxu0 0.0
  %9931 = vmatprep.subr.mxu0 0.0
  %9932 = vmatpush1.msra.mxu0 0.0
  %9933 = vmatprep.subr.mxu0 0.0
  %9934 = vmatpush1.msra.mxu0 0.0
  %9935 = vmatprep.subr.mxu0 0.0
  %9936 = vmatpush1.msra.mxu0 0.0
  %9937 = vmatprep.subr.mxu0 0.0
  %9938 = vmatpush1.msra.mxu0 0.0
  %9939 = vmatprep.subr.mxu0 0.0
  %9940 = vmatpush1.msra.mxu0 0.0
  %9941 = vmatprep.mubr.f32.mxu0 0.0
  %v9942 = vand.u32 %v9536, 4294901760
  %9943 = vmatmul.mubr.f32.gmra.mrb[0].mxu0 %v9942
  %v9944 = vpop.f32.mrb[0].mxu0
  %v9945 = vadd.f32 %v9862, %v9944
  %v9946 = vpop.f32.mrb[0].mxu0
  %9947 = vdwg.mxu0
  %9948 = vmatprep.subr.mxu0 0.0
  %v9949 = vand.u32 %v9524, 4294901760
  %9950 = vmatpush1.msra.mxu0 %v9949
  %9951 = vmatprep.subr.mxu0 0.0
  %v9952 = vand.u32 %v9525, 4294901760
  %9953 = vmatpush1.msra.mxu0 %v9952
  %9954 = vmatprep.subr.mxu0 0.0
  %v9955 = vand.u32 %v9526, 4294901760
  %9956 = vmatpush1.msra.mxu0 %v9955
  %9957 = vmatprep.subr.mxu0 0.0
  %v9958 = vand.u32 %v9527, 4294901760
  %9959 = vmatpush1.msra.mxu0 %v9958
  %9960 = vmatprep.subr.mxu0 0.0
  %9961 = vmatpush1.msra.mxu0 0.0
  %9962 = vmatprep.subr.mxu0 0.0
  %9963 = vmatpush1.msra.mxu0 0.0
  %9964 = vmatprep.subr.mxu0 0.0
  %9965 = vmatpush1.msra.mxu0 0.0
  %9966 = vmatprep.subr.mxu0 0.0
  %9967 = vmatpush1.msra.mxu0 0.0
  %9968 = vmatprep.subr.mxu0 0.0
  %9969 = vmatpush1.msra.mxu0 0.0
  %9970 = vmatprep.subr.mxu0 0.0
  %9971 = vmatpush1.msra.mxu0 0.0
  %9972 = vmatprep.subr.mxu0 0.0
  %9973 = vmatpush1.msra.mxu0 0.0
  %9974 = vmatprep.subr.mxu0 0.0
  %9975 = vmatpush1.msra.mxu0 0.0
  %9976 = vmatprep.subr.mxu0 0.0
  %9977 = vmatpush1.msra.mxu0 0.0
  %9978 = vmatprep.subr.mxu0 0.0
  %9979 = vmatpush1.msra.mxu0 0.0
  %9980 = vmatprep.subr.mxu0 0.0
  %9981 = vmatpush1.msra.mxu0 0.0
  %9982 = vmatprep.subr.mxu0 0.0
  %9983 = vmatpush1.msra.mxu0 0.0
  %9984 = vmatprep.subr.mxu0 0.0
  %9985 = vmatpush1.msra.mxu0 0.0
  %9986 = vmatprep.subr.mxu0 0.0
  %9987 = vmatpush1.msra.mxu0 0.0
  %9988 = vmatprep.subr.mxu0 0.0
  %9989 = vmatpush1.msra.mxu0 0.0
  %9990 = vmatprep.subr.mxu0 0.0
  %9991 = vmatpush1.msra.mxu0 0.0
  %9992 = vmatprep.subr.mxu0 0.0
  %9993 = vmatpush1.msra.mxu0 0.0
  %9994 = vmatprep.subr.mxu0 0.0
  %9995 = vmatpush1.msra.mxu0 0.0
  %9996 = vmatprep.subr.mxu0 0.0
  %9997 = vmatpush1.msra.mxu0 0.0
  %9998 = vmatprep.subr.mxu0 0.0
  %9999 = vmatpush1.msra.mxu0 0.0
  %10000 = vmatprep.subr.mxu0 0.0
  %10001 = vmatpush1.msra.mxu0 0.0
  %10002 = vmatprep.subr.mxu0 0.0
  %10003 = vmatpush1.msra.mxu0 0.0
  %10004 = vmatprep.subr.mxu0 0.0
  %10005 = vmatpush1.msra.mxu0 0.0
  %10006 = vmatprep.subr.mxu0 0.0
  %10007 = vmatpush1.msra.mxu0 0.0
  %10008 = vmatprep.subr.mxu0 0.0
  %10009 = vmatpush1.msra.mxu0 0.0
  %10010 = vmatprep.subr.mxu0 0.0
  %10011 = vmatpush1.msra.mxu0 0.0
  %10012 = vmatprep.subr.mxu0 0.0
  %10013 = vmatpush1.msra.mxu0 0.0
  %10014 = vmatprep.subr.mxu0 0.0
  %10015 = vmatpush1.msra.mxu0 0.0
  %10016 = vmatprep.mubr.f32.mxu0 0.0
  %v10017 = vand.u32 %v9536, 4294901760
  %10018 = vmatmul.mubr.f32.gmra.mrb[0].mxu0 %v10017
  %v10019 = vpop.f32.mrb[0].mxu0
  %v10020 = vadd.f32 %v9945, %v10019
  %v10021 = vpop.f32.mrb[0].mxu0
  %10022 = vdwg.mxu0
  %v10023 = vld [vmem:[%s11] sm:$0xff]
  %v10024 = vld [vmem:[%s11 + $0x8] sm:$0xff]
  %v10025 = vld [vmem:[%s12] sm:$0x1]
  %v10027 = vlaneseq
  %v10028 = vshrl.u32 %v10027, 7
  %v10029 = vsub.s32 0, %v10028
  %v10030 = vrot.slane %v10025, %v10029
  %v10033 = vsel %vm67, %v10020, 0
  %10035 = vmatprep.subr.mxu0 0.0
  %v10036 = vand.u32 %v10023, 4294901760
  %10037 = vmatpush1.msra.mxu0 %v10036
  %10038 = vmatprep.subr.mxu0 0.0
  %v10039 = vand.u32 %v10024, 4294901760
  %10040 = vmatpush1.msra.mxu0 %v10039
  %10041 = vmatprep.subr.mxu0 0.0
  %10042 = vmatpush1.msra.mxu0 0.0
  %10043 = vmatprep.subr.mxu0 0.0
  %10044 = vmatpush1.msra.mxu0 0.0
  %10045 = vmatprep.subr.mxu0 0.0
  %10046 = vmatpush1.msra.mxu0 0.0
  %10047 = vmatprep.subr.mxu0 0.0
  %10048 = vmatpush1.msra.mxu0 0.0
  %10049 = vmatprep.subr.mxu0 0.0
  %10050 = vmatpush1.msra.mxu0 0.0
  %10051 = vmatprep.subr.mxu0 0.0
  %10052 = vmatpush1.msra.mxu0 0.0
  %10053 = vmatprep.subr.mxu0 0.0
  %10054 = vmatpush1.msra.mxu0 0.0
  %10055 = vmatprep.subr.mxu0 0.0
  %10056 = vmatpush1.msra.mxu0 0.0
  %10057 = vmatprep.subr.mxu0 0.0
  %10058 = vmatpush1.msra.mxu0 0.0
  %10059 = vmatprep.subr.mxu0 0.0
  %10060 = vmatpush1.msra.mxu0 0.0
  %10061 = vmatprep.subr.mxu0 0.0
  %10062 = vmatpush1.msra.mxu0 0.0
  %10063 = vmatprep.subr.mxu0 0.0
  %10064 = vmatpush1.msra.mxu0 0.0
  %10065 = vmatprep.subr.mxu0 0.0
  %10066 = vmatpush1.msra.mxu0 0.0
  %10067 = vmatprep.subr.mxu0 0.0
  %10068 = vmatpush1.msra.mxu0 0.0
  %10069 = vmatprep.subr.mxu0 0.0
  %10070 = vmatpush1.msra.mxu0 0.0
  %10071 = vmatprep.subr.mxu0 0.0
  %10072 = vmatpush1.msra.mxu0 0.0
  %10073 = vmatprep.subr.mxu0 0.0
  %10074 = vmatpush1.msra.mxu0 0.0
  %10075 = vmatprep.subr.mxu0 0.0
  %10076 = vmatpush1.msra.mxu0 0.0
  %10077 = vmatprep.subr.mxu0 0.0
  %10078 = vmatpush1.msra.mxu0 0.0
  %10079 = vmatprep.subr.mxu0 0.0
  %10080 = vmatpush1.msra.mxu0 0.0
  %10081 = vmatprep.subr.mxu0 0.0
  %10082 = vmatpush1.msra.mxu0 0.0
  %10083 = vmatprep.subr.mxu0 0.0
  %10084 = vmatpush1.msra.mxu0 0.0
  %10085 = vmatprep.subr.mxu0 0.0
  %10086 = vmatpush1.msra.mxu0 0.0
  %10087 = vmatprep.subr.mxu0 0.0
  %10088 = vmatpush1.msra.mxu0 0.0
  %10089 = vmatprep.subr.mxu0 0.0
  %10090 = vmatpush1.msra.mxu0 0.0
  %10091 = vmatprep.subr.mxu0 0.0
  %10092 = vmatpush1.msra.mxu0 0.0
  %10093 = vmatprep.subr.mxu0 0.0
  %10094 = vmatpush1.msra.mxu0 0.0
  %10095 = vmatprep.subr.mxu0 0.0
  %10096 = vmatpush1.msra.mxu0 0.0
  %10097 = vmatprep.subr.mxu0 0.0
  %10098 = vmatpush1.msra.mxu0 0.0
  %10099 = vmatprep.subr.mxu0 0.0
  %10100 = vmatpush1.msra.mxu0 0.0
  %10101 = vmatprep.mubr.f32.mxu0 0.0
  %v10102 = vand.u32 %v10033, 4294901760
  %v10103 = vsub.f32 %v10033, %v10102
  %v10104 = vand.u32 %v10103, 4294901760
  %v10105 = vsub.f32 %v10103, %v10104
  %v10106 = vand.u32 %v10105, 4294901760
  %10107 = vmatmul.mubr.f32.gmra.mrb[0].mxu0 %v10106
  %v10108 = vpop.f32.mrb[0].mxu0
  %v10109 = vadd.f32 %v10030, %v10108
  %v10110 = vpop.f32.mrb[0].mxu0
  %10111 = vdwg.mxu0
  %10112 = vmatprep.subr.mxu0 0.0
  %v10113 = vand.u32 %v10023, 4294901760
  %v10114 = vsub.f32 %v10023, %v10113
  %v10115 = vand.u32 %v10114, 4294901760
  %v10116 = vsub.f32 %v10114, %v10115
  %v10117 = vand.u32 %v10116, 4294901760
  %10118 = vmatpush1.msra.mxu0 %v10117
  %10119 = vmatprep.subr.mxu0 0.0
  %v10120 = vand.u32 %v10024, 4294901760
  %v10121 = vsub.f32 %v10024, %v10120
  %v10122 = vand.u32 %v10121, 4294901760
  %v10123 = vsub.f32 %v10121, %v10122
  %v10124 = vand.u32 %v10123, 4294901760
  %10125 = vmatpush1.msra.mxu0 %v10124
  %10126 = vmatprep.subr.mxu0 0.0
  %10127 = vmatpush1.msra.mxu0 0.0
  %10128 = vmatprep.subr.mxu0 0.0
  %10129 = vmatpush1.msra.mxu0 0.0
  %10130 = vmatprep.subr.mxu0 0.0
  %10131 = vmatpush1.msra.mxu0 0.0
  %10132 = vmatprep.subr.mxu0 0.0
  %10133 = vmatpush1.msra.mxu0 0.0
  %10134 = vmatprep.subr.mxu0 0.0
  %10135 = vmatpush1.msra.mxu0 0.0
  %10136 = vmatprep.subr.mxu0 0.0
  %10137 = vmatpush1.msra.mxu0 0.0
  %10138 = vmatprep.subr.mxu0 0.0
  %10139 = vmatpush1.msra.mxu0 0.0
  %10140 = vmatprep.subr.mxu0 0.0
  %10141 = vmatpush1.msra.mxu0 0.0
  %10142 = vmatprep.subr.mxu0 0.0
  %10143 = vmatpush1.msra.mxu0 0.0
  %10144 = vmatprep.subr.mxu0 0.0
  %10145 = vmatpush1.msra.mxu0 0.0
  %10146 = vmatprep.subr.mxu0 0.0
  %10147 = vmatpush1.msra.mxu0 0.0
  %10148 = vmatprep.subr.mxu0 0.0
  %10149 = vmatpush1.msra.mxu0 0.0
  %10150 = vmatprep.subr.mxu0 0.0
  %10151 = vmatpush1.msra.mxu0 0.0
  %10152 = vmatprep.subr.mxu0 0.0
  %10153 = vmatpush1.msra.mxu0 0.0
  %10154 = vmatprep.subr.mxu0 0.0
  %10155 = vmatpush1.msra.mxu0 0.0
  %10156 = vmatprep.subr.mxu0 0.0
  %10157 = vmatpush1.msra.mxu0 0.0
  %10158 = vmatprep.subr.mxu0 0.0
  %10159 = vmatpush1.msra.mxu0 0.0
  %10160 = vmatprep.subr.mxu0 0.0
  %10161 = vmatpush1.msra.mxu0 0.0
  %10162 = vmatprep.subr.mxu0 0.0
  %10163 = vmatpush1.msra.mxu0 0.0
  %10164 = vmatprep.subr.mxu0 0.0
  %10165 = vmatpush1.msra.mxu0 0.0
  %10166 = vmatprep.subr.mxu0 0.0
  %10167 = vmatpush1.msra.mxu0 0.0
  %10168 = vmatprep.subr.mxu0 0.0
  %10169 = vmatpush1.msra.mxu0 0.0
  %10170 = vmatprep.subr.mxu0 0.0
  %10171 = vmatpush1.msra.mxu0 0.0
  %10172 = vmatprep.subr.mxu0 0.0
  %10173 = vmatpush1.msra.mxu0 0.0
  %10174 = vmatprep.subr.mxu0 0.0
  %10175 = vmatpush1.msra.mxu0 0.0
  %10176 = vmatprep.subr.mxu0 0.0
  %10177 = vmatpush1.msra.mxu0 0.0
  %10178 = vmatprep.subr.mxu0 0.0
  %10179 = vmatpush1.msra.mxu0 0.0
  %10180 = vmatprep.subr.mxu0 0.0
  %10181 = vmatpush1.msra.mxu0 0.0
  %10182 = vmatprep.subr.mxu0 0.0
  %10183 = vmatpush1.msra.mxu0 0.0
  %10184 = vmatprep.subr.mxu0 0.0
  %10185 = vmatpush1.msra.mxu0 0.0
  %10186 = vmatprep.mubr.f32.mxu0 0.0
  %v10187 = vand.u32 %v10033, 4294901760
  %10188 = vmatmul.mubr.f32.gmra.mrb[0].mxu0 %v10187
  %v10189 = vpop.f32.mrb[0].mxu0
  %v10190 = vadd.f32 %v10109, %v10189
  %v10191 = vpop.f32.mrb[0].mxu0
  %10192 = vdwg.mxu0
  %10193 = vmatprep.subr.mxu0 0.0
  %v10194 = vand.u32 %v10023, 4294901760
  %v10195 = vsub.f32 %v10023, %v10194
  %10196 = vmatpush1.msra.mxu0 %v10195
  %10197 = vmatprep.subr.mxu0 0.0
  %v10198 = vand.u32 %v10024, 4294901760
  %v10199 = vsub.f32 %v10024, %v10198
  %10200 = vmatpush1.msra.mxu0 %v10199
  %10201 = vmatprep.subr.mxu0 0.0
  %10202 = vmatpush1.msra.mxu0 0.0
  %10203 = vmatprep.subr.mxu0 0.0
  %10204 = vmatpush1.msra.mxu0 0.0
  %10205 = vmatprep.subr.mxu0 0.0
  %10206 = vmatpush1.msra.mxu0 0.0
  %10207 = vmatprep.subr.mxu0 0.0
  %10208 = vmatpush1.msra.mxu0 0.0
  %10209 = vmatprep.subr.mxu0 0.0
  %10210 = vmatpush1.msra.mxu0 0.0
  %10211 = vmatprep.subr.mxu0 0.0
  %10212 = vmatpush1.msra.mxu0 0.0
  %10213 = vmatprep.subr.mxu0 0.0
  %10214 = vmatpush1.msra.mxu0 0.0
  %10215 = vmatprep.subr.mxu0 0.0
  %10216 = vmatpush1.msra.mxu0 0.0
  %10217 = vmatprep.subr.mxu0 0.0
  %10218 = vmatpush1.msra.mxu0 0.0
  %10219 = vmatprep.subr.mxu0 0.0
  %10220 = vmatpush1.msra.mxu0 0.0
  %10221 = vmatprep.subr.mxu0 0.0
  %10222 = vmatpush1.msra.mxu0 0.0
  %10223 = vmatprep.subr.mxu0 0.0
  %10224 = vmatpush1.msra.mxu0 0.0
  %10225 = vmatprep.subr.mxu0 0.0
  %10226 = vmatpush1.msra.mxu0 0.0
  %10227 = vmatprep.subr.mxu0 0.0
  %10228 = vmatpush1.msra.mxu0 0.0
  %10229 = vmatprep.subr.mxu0 0.0
  %10230 = vmatpush1.msra.mxu0 0.0
  %10231 = vmatprep.subr.mxu0 0.0
  %10232 = vmatpush1.msra.mxu0 0.0
  %10233 = vmatprep.subr.mxu0 0.0
  %10234 = vmatpush1.msra.mxu0 0.0
  %10235 = vmatprep.subr.mxu0 0.0
  %10236 = vmatpush1.msra.mxu0 0.0
  %10237 = vmatprep.subr.mxu0 0.0
  %10238 = vmatpush1.msra.mxu0 0.0
  %10239 = vmatprep.subr.mxu0 0.0
  %10240 = vmatpush1.msra.mxu0 0.0
  %10241 = vmatprep.subr.mxu0 0.0
  %10242 = vmatpush1.msra.mxu0 0.0
  %10243 = vmatprep.subr.mxu0 0.0
  %10244 = vmatpush1.msra.mxu0 0.0
  %10245 = vmatprep.subr.mxu0 0.0
  %10246 = vmatpush1.msra.mxu0 0.0
  %10247 = vmatprep.subr.mxu0 0.0
  %10248 = vmatpush1.msra.mxu0 0.0
  %10249 = vmatprep.subr.mxu0 0.0
  %10250 = vmatpush1.msra.mxu0 0.0
  %10251 = vmatprep.subr.mxu0 0.0
  %10252 = vmatpush1.msra.mxu0 0.0
  %10253 = vmatprep.subr.mxu0 0.0
  %10254 = vmatpush1.msra.mxu0 0.0
  %10255 = vmatprep.subr.mxu0 0.0
  %10256 = vmatpush1.msra.mxu0 0.0
  %10257 = vmatprep.subr.mxu0 0.0
  %10258 = vmatpush1.msra.mxu0 0.0
  %10259 = vmatprep.subr.mxu0 0.0
  %10260 = vmatpush1.msra.mxu0 0.0
  %10261 = vmatprep.mubr.f32.mxu0 0.0
  %v10262 = vand.u32 %v10033, 4294901760
  %v10263 = vsub.f32 %v10033, %v10262
  %10264 = vmatmul.mubr.f32.gmra.mrb[0].mxu0 %v10263
  %v10265 = vpop.f32.mrb[0].mxu0
  %v10266 = vadd.f32 %v10190, %v10265
  %v10267 = vpop.f32.mrb[0].mxu0
  %10268 = vdwg.mxu0
  %10269 = vmatprep.subr.mxu0 0.0
  %v10270 = vand.u32 %v10023, 4294901760
  %10271 = vmatpush1.msra.mxu0 %v10270
  %10272 = vmatprep.subr.mxu0 0.0
  %v10273 = vand.u32 %v10024, 4294901760
  %10274 = vmatpush1.msra.mxu0 %v10273
  %10275 = vmatprep.subr.mxu0 0.0
  %10276 = vmatpush1.msra.mxu0 0.0
  %10277 = vmatprep.subr.mxu0 0.0
  %10278 = vmatpush1.msra.mxu0 0.0
  %10279 = vmatprep.subr.mxu0 0.0
  %10280 = vmatpush1.msra.mxu0 0.0
  %10281 = vmatprep.subr.mxu0 0.0
  %10282 = vmatpush1.msra.mxu0 0.0
  %10283 = vmatprep.subr.mxu0 0.0
  %10284 = vmatpush1.msra.mxu0 0.0
  %10285 = vmatprep.subr.mxu0 0.0
  %10286 = vmatpush1.msra.mxu0 0.0
  %10287 = vmatprep.subr.mxu0 0.0
  %10288 = vmatpush1.msra.mxu0 0.0
  %10289 = vmatprep.subr.mxu0 0.0
  %10290 = vmatpush1.msra.mxu0 0.0
  %10291 = vmatprep.subr.mxu0 0.0
  %10292 = vmatpush1.msra.mxu0 0.0
  %10293 = vmatprep.subr.mxu0 0.0
  %10294 = vmatpush1.msra.mxu0 0.0
  %10295 = vmatprep.subr.mxu0 0.0
  %10296 = vmatpush1.msra.mxu0 0.0
  %10297 = vmatprep.subr.mxu0 0.0
  %10298 = vmatpush1.msra.mxu0 0.0
  %10299 = vmatprep.subr.mxu0 0.0
  %10300 = vmatpush1.msra.mxu0 0.0
  %10301 = vmatprep.subr.mxu0 0.0
  %10302 = vmatpush1.msra.mxu0 0.0
  %10303 = vmatprep.subr.mxu0 0.0
  %10304 = vmatpush1.msra.mxu0 0.0
  %10305 = vmatprep.subr.mxu0 0.0
  %10306 = vmatpush1.msra.mxu0 0.0
  %10307 = vmatprep.subr.mxu0 0.0
  %10308 = vmatpush1.msra.mxu0 0.0
  %10309 = vmatprep.subr.mxu0 0.0
  %10310 = vmatpush1.msra.mxu0 0.0
  %10311 = vmatprep.subr.mxu0 0.0
  %10312 = vmatpush1.msra.mxu0 0.0
  %10313 = vmatprep.subr.mxu0 0.0
  %10314 = vmatpush1.msra.mxu0 0.0
  %10315 = vmatprep.subr.mxu0 0.0
  %10316 = vmatpush1.msra.mxu0 0.0
  %10317 = vmatprep.subr.mxu0 0.0
  %10318 = vmatpush1.msra.mxu0 0.0
  %10319 = vmatprep.subr.mxu0 0.0
  %10320 = vmatpush1.msra.mxu0 0.0
  %10321 = vmatprep.subr.mxu0 0.0
  %10322 = vmatpush1.msra.mxu0 0.0
  %10323 = vmatprep.subr.mxu0 0.0
  %10324 = vmatpush1.msra.mxu0 0.0
  %10325 = vmatprep.subr.mxu0 0.0
  %10326 = vmatpush1.msra.mxu0 0.0
  %10327 = vmatprep.subr.mxu0 0.0
  %10328 = vmatpush1.msra.mxu0 0.0
  %10329 = vmatprep.subr.mxu0 0.0
  %10330 = vmatpush1.msra.mxu0 0.0
  %10331 = vmatprep.subr.mxu0 0.0
  %10332 = vmatpush1.msra.mxu0 0.0
  %10333 = vmatprep.subr.mxu0 0.0
  %10334 = vmatpush1.msra.mxu0 0.0
  %10335 = vmatprep.mubr.f32.mxu0 0.0
  %v10336 = vand.u32 %v10033, 4294901760
  %v10337 = vsub.f32 %v10033, %v10336
  %v10338 = vand.u32 %v10337, 4294901760
  %10339 = vmatmul.mubr.f32.gmra.mrb[0].mxu0 %v10338
  %v10340 = vpop.f32.mrb[0].mxu0
  %v10341 = vadd.f32 %v10266, %v10340
  %v10342 = vpop.f32.mrb[0].mxu0
  %10343 = vdwg.mxu0
  %10344 = vmatprep.subr.mxu0 0.0
  %v10345 = vand.u32 %v10023, 4294901760
  %v10346 = vsub.f32 %v10023, %v10345
  %v10347 = vand.u32 %v10346, 4294901760
  %10348 = vmatpush1.msra.mxu0 %v10347
  %10349 = vmatprep.subr.mxu0 0.0
  %v10350 = vand.u32 %v10024, 4294901760
  %v10351 = vsub.f32 %v10024, %v10350
  %v10352 = vand.u32 %v10351, 4294901760
  %10353 = vmatpush1.msra.mxu0 %v10352
  %10354 = vmatprep.subr.mxu0 0.0
  %10355 = vmatpush1.msra.mxu0 0.0
  %10356 = vmatprep.subr.mxu0 0.0
  %10357 = vmatpush1.msra.mxu0 0.0
  %10358 = vmatprep.subr.mxu0 0.0
  %10359 = vmatpush1.msra.mxu0 0.0
  %10360 = vmatprep.subr.mxu0 0.0
  %10361 = vmatpush1.msra.mxu0 0.0
  %10362 = vmatprep.subr.mxu0 0.0
  %10363 = vmatpush1.msra.mxu0 0.0
  %10364 = vmatprep.subr.mxu0 0.0
  %10365 = vmatpush1.msra.mxu0 0.0
  %10366 = vmatprep.subr.mxu0 0.0
  %10367 = vmatpush1.msra.mxu0 0.0
  %10368 = vmatprep.subr.mxu0 0.0
  %10369 = vmatpush1.msra.mxu0 0.0
  %10370 = vmatprep.subr.mxu0 0.0
  %10371 = vmatpush1.msra.mxu0 0.0
  %10372 = vmatprep.subr.mxu0 0.0
  %10373 = vmatpush1.msra.mxu0 0.0
  %10374 = vmatprep.subr.mxu0 0.0
  %10375 = vmatpush1.msra.mxu0 0.0
  %10376 = vmatprep.subr.mxu0 0.0
  %10377 = vmatpush1.msra.mxu0 0.0
  %10378 = vmatprep.subr.mxu0 0.0
  %10379 = vmatpush1.msra.mxu0 0.0
  %10380 = vmatprep.subr.mxu0 0.0
  %10381 = vmatpush1.msra.mxu0 0.0
  %10382 = vmatprep.subr.mxu0 0.0
  %10383 = vmatpush1.msra.mxu0 0.0
  %10384 = vmatprep.subr.mxu0 0.0
  %10385 = vmatpush1.msra.mxu0 0.0
  %10386 = vmatprep.subr.mxu0 0.0
  %10387 = vmatpush1.msra.mxu0 0.0
  %10388 = vmatprep.subr.mxu0 0.0
  %10389 = vmatpush1.msra.mxu0 0.0
  %10390 = vmatprep.subr.mxu0 0.0
  %10391 = vmatpush1.msra.mxu0 0.0
  %10392 = vmatprep.subr.mxu0 0.0
  %10393 = vmatpush1.msra.mxu0 0.0
  %10394 = vmatprep.subr.mxu0 0.0
  %10395 = vmatpush1.msra.mxu0 0.0
  %10396 = vmatprep.subr.mxu0 0.0
  %10397 = vmatpush1.msra.mxu0 0.0
  %10398 = vmatprep.subr.mxu0 0.0
  %10399 = vmatpush1.msra.mxu0 0.0
  %10400 = vmatprep.subr.mxu0 0.0
  %10401 = vmatpush1.msra.mxu0 0.0
  %10402 = vmatprep.subr.mxu0 0.0
  %10403 = vmatpush1.msra.mxu0 0.0
  %10404 = vmatprep.subr.mxu0 0.0
  %10405 = vmatpush1.msra.mxu0 0.0
  %10406 = vmatprep.subr.mxu0 0.0
  %10407 = vmatpush1.msra.mxu0 0.0
  %10408 = vmatprep.subr.mxu0 0.0
  %10409 = vmatpush1.msra.mxu0 0.0
  %10410 = vmatprep.subr.mxu0 0.0
  %10411 = vmatpush1.msra.mxu0 0.0
  %10412 = vmatprep.subr.mxu0 0.0
  %10413 = vmatpush1.msra.mxu0 0.0
  %10414 = vmatprep.mubr.f32.mxu0 0.0
  %v10415 = vand.u32 %v10033, 4294901760
  %10416 = vmatmul.mubr.f32.gmra.mrb[0].mxu0 %v10415
  %v10417 = vpop.f32.mrb[0].mxu0
  %v10418 = vadd.f32 %v10341, %v10417
  %v10419 = vpop.f32.mrb[0].mxu0
  %10420 = vdwg.mxu0
  %10421 = vmatprep.subr.mxu0 0.0
  %v10422 = vand.u32 %v10023, 4294901760
  %10423 = vmatpush1.msra.mxu0 %v10422
  %10424 = vmatprep.subr.mxu0 0.0
  %v10425 = vand.u32 %v10024, 4294901760
  %10426 = vmatpush1.msra.mxu0 %v10425
  %10427 = vmatprep.subr.mxu0 0.0
  %10428 = vmatpush1.msra.mxu0 0.0
  %10429 = vmatprep.subr.mxu0 0.0
  %10430 = vmatpush1.msra.mxu0 0.0
  %10431 = vmatprep.subr.mxu0 0.0
  %10432 = vmatpush1.msra.mxu0 0.0
  %10433 = vmatprep.subr.mxu0 0.0
  %10434 = vmatpush1.msra.mxu0 0.0
  %10435 = vmatprep.subr.mxu0 0.0
  %10436 = vmatpush1.msra.mxu0 0.0
  %10437 = vmatprep.subr.mxu0 0.0
  %10438 = vmatpush1.msra.mxu0 0.0
  %10439 = vmatprep.subr.mxu0 0.0
  %10440 = vmatpush1.msra.mxu0 0.0
  %10441 = vmatprep.subr.mxu0 0.0
  %10442 = vmatpush1.msra.mxu0 0.0
  %10443 = vmatprep.subr.mxu0 0.0
  %10444 = vmatpush1.msra.mxu0 0.0
  %10445 = vmatprep.subr.mxu0 0.0
  %10446 = vmatpush1.msra.mxu0 0.0
  %10447 = vmatprep.subr.mxu0 0.0
  %10448 = vmatpush1.msra.mxu0 0.0
  %10449 = vmatprep.subr.mxu0 0.0
  %10450 = vmatpush1.msra.mxu0 0.0
  %10451 = vmatprep.subr.mxu0 0.0
  %10452 = vmatpush1.msra.mxu0 0.0
  %10453 = vmatprep.subr.mxu0 0.0
  %10454 = vmatpush1.msra.mxu0 0.0
  %10455 = vmatprep.subr.mxu0 0.0
  %10456 = vmatpush1.msra.mxu0 0.0
  %10457 = vmatprep.subr.mxu0 0.0
  %10458 = vmatpush1.msra.mxu0 0.0
  %10459 = vmatprep.subr.mxu0 0.0
  %10460 = vmatpush1.msra.mxu0 0.0
  %10461 = vmatprep.subr.mxu0 0.0
  %10462 = vmatpush1.msra.mxu0 0.0
  %10463 = vmatprep.subr.mxu0 0.0
  %10464 = vmatpush1.msra.mxu0 0.0
  %10465 = vmatprep.subr.mxu0 0.0
  %10466 = vmatpush1.msra.mxu0 0.0
  %10467 = vmatprep.subr.mxu0 0.0
  %10468 = vmatpush1.msra.mxu0 0.0
  %10469 = vmatprep.subr.mxu0 0.0
  %10470 = vmatpush1.msra.mxu0 0.0
  %10471 = vmatprep.subr.mxu0 0.0
  %10472 = vmatpush1.msra.mxu0 0.0
  %10473 = vmatprep.subr.mxu0 0.0
  %10474 = vmatpush1.msra.mxu0 0.0
  %10475 = vmatprep.subr.mxu0 0.0
  %10476 = vmatpush1.msra.mxu0 0.0
  %10477 = vmatprep.subr.mxu0 0.0
  %10478 = vmatpush1.msra.mxu0 0.0
  %10479 = vmatprep.subr.mxu0 0.0
  %10480 = vmatpush1.msra.mxu0 0.0
  %10481 = vmatprep.subr.mxu0 0.0
  %10482 = vmatpush1.msra.mxu0 0.0
  %10483 = vmatprep.subr.mxu0 0.0
  %10484 = vmatpush1.msra.mxu0 0.0
  %10485 = vmatprep.subr.mxu0 0.0
  %10486 = vmatpush1.msra.mxu0 0.0
  %10487 = vmatprep.mubr.f32.mxu0 0.0
  %v10488 = vand.u32 %v10033, 4294901760
  %10489 = vmatmul.mubr.f32.gmra.mrb[0].mxu0 %v10488
  %v10490 = vpop.f32.mrb[0].mxu0
  %v10491 = vadd.f32 %v10418, %v10490
  %v10492 = vpop.f32.mrb[0].mxu0
  %10493 = vdwg.mxu0
  %v10494 = vmax.f32 %v10491, 0.0
  %v10495 = vld [vmem:[%s13] sm:$0xff]
  %v10496 = vld [vmem:[%s13 + $0x8] sm:$0xff]
  %v10497 = vld [vmem:[%s13 + $0x10] sm:$0xff]
  %v10498 = vld [vmem:[%s13 + $0x18] sm:$0xff]
  %v10499 = vld [vmem:[%s14] sm:$0x1]
  %v10501 = vlaneseq
  %v10502 = vshrl.u32 %v10501, 7
  %v10503 = vsub.s32 0, %v10502
  %v10504 = vrot.slane %v10499, %v10503
  %v10507 = vsel %vm857, %v10494, 0
  %10509 = vmatprep.subr.mxu0 0.0
  %v10510 = vand.u32 %v10495, 4294901760
  %10511 = vmatpush1.msra.mxu0 %v10510
  %10512 = vmatprep.subr.mxu0 0.0
  %v10513 = vand.u32 %v10496, 4294901760
  %10514 = vmatpush1.msra.mxu0 %v10513
  %10515 = vmatprep.subr.mxu0 0.0
  %v10516 = vand.u32 %v10497, 4294901760
  %10517 = vmatpush1.msra.mxu0 %v10516
  %10518 = vmatprep.subr.mxu0 0.0
  %v10519 = vand.u32 %v10498, 4294901760
  %10520 = vmatpush1.msra.mxu0 %v10519
  %10521 = vmatprep.subr.mxu0 0.0
  %10522 = vmatpush1.msra.mxu0 0.0
  %10523 = vmatprep.subr.mxu0 0.0
  %10524 = vmatpush1.msra.mxu0 0.0
  %10525 = vmatprep.subr.mxu0 0.0
  %10526 = vmatpush1.msra.mxu0 0.0
  %10527 = vmatprep.subr.mxu0 0.0
  %10528 = vmatpush1.msra.mxu0 0.0
  %10529 = vmatprep.subr.mxu0 0.0
  %10530 = vmatpush1.msra.mxu0 0.0
  %10531 = vmatprep.subr.mxu0 0.0
  %10532 = vmatpush1.msra.mxu0 0.0
  %10533 = vmatprep.subr.mxu0 0.0
  %10534 = vmatpush1.msra.mxu0 0.0
  %10535 = vmatprep.subr.mxu0 0.0
  %10536 = vmatpush1.msra.mxu0 0.0
  %10537 = vmatprep.subr.mxu0 0.0
  %10538 = vmatpush1.msra.mxu0 0.0
  %10539 = vmatprep.subr.mxu0 0.0
  %10540 = vmatpush1.msra.mxu0 0.0
  %10541 = vmatprep.subr.mxu0 0.0
  %10542 = vmatpush1.msra.mxu0 0.0
  %10543 = vmatprep.subr.mxu0 0.0
  %10544 = vmatpush1.msra.mxu0 0.0
  %10545 = vmatprep.subr.mxu0 0.0
  %10546 = vmatpush1.msra.mxu0 0.0
  %10547 = vmatprep.subr.mxu0 0.0
  %10548 = vmatpush1.msra.mxu0 0.0
  %10549 = vmatprep.subr.mxu0 0.0
  %10550 = vmatpush1.msra.mxu0 0.0
  %10551 = vmatprep.subr.mxu0 0.0
  %10552 = vmatpush1.msra.mxu0 0.0
  %10553 = vmatprep.subr.mxu0 0.0
  %10554 = vmatpush1.msra.mxu0 0.0
  %10555 = vmatprep.subr.mxu0 0.0
  %10556 = vmatpush1.msra.mxu0 0.0
  %10557 = vmatprep.subr.mxu0 0.0
  %10558 = vmatpush1.msra.mxu0 0.0
  %10559 = vmatprep.subr.mxu0 0.0
  %10560 = vmatpush1.msra.mxu0 0.0
  %10561 = vmatprep.subr.mxu0 0.0
  %10562 = vmatpush1.msra.mxu0 0.0
  %10563 = vmatprep.subr.mxu0 0.0
  %10564 = vmatpush1.msra.mxu0 0.0
  %10565 = vmatprep.subr.mxu0 0.0
  %10566 = vmatpush1.msra.mxu0 0.0
  %10567 = vmatprep.subr.mxu0 0.0
  %10568 = vmatpush1.msra.mxu0 0.0
  %10569 = vmatprep.subr.mxu0 0.0
  %10570 = vmatpush1.msra.mxu0 0.0
  %10571 = vmatprep.subr.mxu0 0.0
  %10572 = vmatpush1.msra.mxu0 0.0
  %10573 = vmatprep.subr.mxu0 0.0
  %10574 = vmatpush1.msra.mxu0 0.0
  %10575 = vmatprep.subr.mxu0 0.0
  %10576 = vmatpush1.msra.mxu0 0.0
  %10577 = vmatprep.mubr.f32.mxu0 0.0
  %v10578 = vand.u32 %v10507, 4294901760
  %v10579 = vsub.f32 %v10507, %v10578
  %v10580 = vand.u32 %v10579, 4294901760
  %v10581 = vsub.f32 %v10579, %v10580
  %v10582 = vand.u32 %v10581, 4294901760
  %10583 = vmatmul.mubr.f32.gmra.mrb[0].mxu0 %v10582
  %v10584 = vpop.f32.mrb[0].mxu0
  %v10585 = vadd.f32 %v10504, %v10584
  %v10586 = vpop.f32.mrb[0].mxu0
  %10587 = vdwg.mxu0
  %10588 = vmatprep.subr.mxu0 0.0
  %v10589 = vand.u32 %v10495, 4294901760
  %v10590 = vsub.f32 %v10495, %v10589
  %v10591 = vand.u32 %v10590, 4294901760
  %v10592 = vsub.f32 %v10590, %v10591
  %v10593 = vand.u32 %v10592, 4294901760
  %10594 = vmatpush1.msra.mxu0 %v10593
  %10595 = vmatprep.subr.mxu0 0.0
  %v10596 = vand.u32 %v10496, 4294901760
  %v10597 = vsub.f32 %v10496, %v10596
  %v10598 = vand.u32 %v10597, 4294901760
  %v10599 = vsub.f32 %v10597, %v10598
  %v10600 = vand.u32 %v10599, 4294901760
  %10601 = vmatpush1.msra.mxu0 %v10600
  %10602 = vmatprep.subr.mxu0 0.0
  %v10603 = vand.u32 %v10497, 4294901760
  %v10604 = vsub.f32 %v10497, %v10603
  %v10605 = vand.u32 %v10604, 4294901760
  %v10606 = vsub.f32 %v10604, %v10605
  %v10607 = vand.u32 %v10606, 4294901760
  %10608 = vmatpush1.msra.mxu0 %v10607
  %10609 = vmatprep.subr.mxu0 0.0
  %v10610 = vand.u32 %v10498, 4294901760
  %v10611 = vsub.f32 %v10498, %v10610
  %v10612 = vand.u32 %v10611, 4294901760
  %v10613 = vsub.f32 %v10611, %v10612
  %v10614 = vand.u32 %v10613, 4294901760
  %10615 = vmatpush1.msra.mxu0 %v10614
  %10616 = vmatprep.subr.mxu0 0.0
  %10617 = vmatpush1.msra.mxu0 0.0
  %10618 = vmatprep.subr.mxu0 0.0
  %10619 = vmatpush1.msra.mxu0 0.0
  %10620 = vmatprep.subr.mxu0 0.0
  %10621 = vmatpush1.msra.mxu0 0.0
  %10622 = vmatprep.subr.mxu0 0.0
  %10623 = vmatpush1.msra.mxu0 0.0
  %10624 = vmatprep.subr.mxu0 0.0
  %10625 = vmatpush1.msra.mxu0 0.0
  %10626 = vmatprep.subr.mxu0 0.0
  %10627 = vmatpush1.msra.mxu0 0.0
  %10628 = vmatprep.subr.mxu0 0.0
  %10629 = vmatpush1.msra.mxu0 0.0
  %10630 = vmatprep.subr.mxu0 0.0
  %10631 = vmatpush1.msra.mxu0 0.0
  %10632 = vmatprep.subr.mxu0 0.0
  %10633 = vmatpush1.msra.mxu0 0.0
  %10634 = vmatprep.subr.mxu0 0.0
  %10635 = vmatpush1.msra.mxu0 0.0
  %10636 = vmatprep.subr.mxu0 0.0
  %10637 = vmatpush1.msra.mxu0 0.0
  %10638 = vmatprep.subr.mxu0 0.0
  %10639 = vmatpush1.msra.mxu0 0.0
  %10640 = vmatprep.subr.mxu0 0.0
  %10641 = vmatpush1.msra.mxu0 0.0
  %10642 = vmatprep.subr.mxu0 0.0
  %10643 = vmatpush1.msra.mxu0 0.0
  %10644 = vmatprep.subr.mxu0 0.0
  %10645 = vmatpush1.msra.mxu0 0.0
  %10646 = vmatprep.subr.mxu0 0.0
  %10647 = vmatpush1.msra.mxu0 0.0
  %10648 = vmatprep.subr.mxu0 0.0
  %10649 = vmatpush1.msra.mxu0 0.0
  %10650 = vmatprep.subr.mxu0 0.0
  %10651 = vmatpush1.msra.mxu0 0.0
  %10652 = vmatprep.subr.mxu0 0.0
  %10653 = vmatpush1.msra.mxu0 0.0
  %10654 = vmatprep.subr.mxu0 0.0
  %10655 = vmatpush1.msra.mxu0 0.0
  %10656 = vmatprep.subr.mxu0 0.0
  %10657 = vmatpush1.msra.mxu0 0.0
  %10658 = vmatprep.subr.mxu0 0.0
  %10659 = vmatpush1.msra.mxu0 0.0
  %10660 = vmatprep.subr.mxu0 0.0
  %10661 = vmatpush1.msra.mxu0 0.0
  %10662 = vmatprep.subr.mxu0 0.0
  %10663 = vmatpush1.msra.mxu0 0.0
  %10664 = vmatprep.subr.mxu0 0.0
  %10665 = vmatpush1.msra.mxu0 0.0
  %10666 = vmatprep.subr.mxu0 0.0
  %10667 = vmatpush1.msra.mxu0 0.0
  %10668 = vmatprep.subr.mxu0 0.0
  %10669 = vmatpush1.msra.mxu0 0.0
  %10670 = vmatprep.subr.mxu0 0.0
  %10671 = vmatpush1.msra.mxu0 0.0
  %10672 = vmatprep.mubr.f32.mxu0 0.0
  %v10673 = vand.u32 %v10507, 4294901760
  %10674 = vmatmul.mubr.f32.gmra.mrb[0].mxu0 %v10673
  %v10675 = vpop.f32.mrb[0].mxu0
  %v10676 = vadd.f32 %v10585, %v10675
  %v10677 = vpop.f32.mrb[0].mxu0
  %10678 = vdwg.mxu0
  %10679 = vmatprep.subr.mxu0 0.0
  %v10680 = vand.u32 %v10495, 4294901760
  %v10681 = vsub.f32 %v10495, %v10680
  %10682 = vmatpush1.msra.mxu0 %v10681
  %10683 = vmatprep.subr.mxu0 0.0
  %v10684 = vand.u32 %v10496, 4294901760
  %v10685 = vsub.f32 %v10496, %v10684
  %10686 = vmatpush1.msra.mxu0 %v10685
  %10687 = vmatprep.subr.mxu0 0.0
  %v10688 = vand.u32 %v10497, 4294901760
  %v10689 = vsub.f32 %v10497, %v10688
  %10690 = vmatpush1.msra.mxu0 %v10689
  %10691 = vmatprep.subr.mxu0 0.0
  %v10692 = vand.u32 %v10498, 4294901760
  %v10693 = vsub.f32 %v10498, %v10692
  %10694 = vmatpush1.msra.mxu0 %v10693
  %10695 = vmatprep.subr.mxu0 0.0
  %10696 = vmatpush1.msra.mxu0 0.0
  %10697 = vmatprep.subr.mxu0 0.0
  %10698 = vmatpush1.msra.mxu0 0.0
  %10699 = vmatprep.subr.mxu0 0.0
  %10700 = vmatpush1.msra.mxu0 0.0
  %10701 = vmatprep.subr.mxu0 0.0
  %10702 = vmatpush1.msra.mxu0 0.0
  %10703 = vmatprep.subr.mxu0 0.0
  %10704 = vmatpush1.msra.mxu0 0.0
  %10705 = vmatprep.subr.mxu0 0.0
  %10706 = vmatpush1.msra.mxu0 0.0
  %10707 = vmatprep.subr.mxu0 0.0
  %10708 = vmatpush1.msra.mxu0 0.0
  %10709 = vmatprep.subr.mxu0 0.0
  %10710 = vmatpush1.msra.mxu0 0.0
  %10711 = vmatprep.subr.mxu0 0.0
  %10712 = vmatpush1.msra.mxu0 0.0
  %10713 = vmatprep.subr.mxu0 0.0
  %10714 = vmatpush1.msra.mxu0 0.0
  %10715 = vmatprep.subr.mxu0 0.0
  %10716 = vmatpush1.msra.mxu0 0.0
  %10717 = vmatprep.subr.mxu0 0.0
  %10718 = vmatpush1.msra.mxu0 0.0
  %10719 = vmatprep.subr.mxu0 0.0
  %10720 = vmatpush1.msra.mxu0 0.0
  %10721 = vmatprep.subr.mxu0 0.0
  %10722 = vmatpush1.msra.mxu0 0.0
  %10723 = vmatprep.subr.mxu0 0.0
  %10724 = vmatpush1.msra.mxu0 0.0
  %10725 = vmatprep.subr.mxu0 0.0
  %10726 = vmatpush1.msra.mxu0 0.0
  %10727 = vmatprep.subr.mxu0 0.0
  %10728 = vmatpush1.msra.mxu0 0.0
  %10729 = vmatprep.subr.mxu0 0.0
  %10730 = vmatpush1.msra.mxu0 0.0
  %10731 = vmatprep.subr.mxu0 0.0
  %10732 = vmatpush1.msra.mxu0 0.0
  %10733 = vmatprep.subr.mxu0 0.0
  %10734 = vmatpush1.msra.mxu0 0.0
  %10735 = vmatprep.subr.mxu0 0.0
  %10736 = vmatpush1.msra.mxu0 0.0
  %10737 = vmatprep.subr.mxu0 0.0
  %10738 = vmatpush1.msra.mxu0 0.0
  %10739 = vmatprep.subr.mxu0 0.0
  %10740 = vmatpush1.msra.mxu0 0.0
  %10741 = vmatprep.subr.mxu0 0.0
  %10742 = vmatpush1.msra.mxu0 0.0
  %10743 = vmatprep.subr.mxu0 0.0
  %10744 = vmatpush1.msra.mxu0 0.0
  %10745 = vmatprep.subr.mxu0 0.0
  %10746 = vmatpush1.msra.mxu0 0.0
  %10747 = vmatprep.subr.mxu0 0.0
  %10748 = vmatpush1.msra.mxu0 0.0
  %10749 = vmatprep.subr.mxu0 0.0
  %10750 = vmatpush1.msra.mxu0 0.0
  %10751 = vmatprep.mubr.f32.mxu0 0.0
  %v10752 = vand.u32 %v10507, 4294901760
  %v10753 = vsub.f32 %v10507, %v10752
  %10754 = vmatmul.mubr.f32.gmra.mrb[0].mxu0 %v10753
  %v10755 = vpop.f32.mrb[0].mxu0
  %v10756 = vadd.f32 %v10676, %v10755
  %v10757 = vpop.f32.mrb[0].mxu0
  %10758 = vdwg.mxu0
  %10759 = vmatprep.subr.mxu0 0.0
  %v10760 = vand.u32 %v10495, 4294901760
  %10761 = vmatpush1.msra.mxu0 %v10760
  %10762 = vmatprep.subr.mxu0 0.0
  %v10763 = vand.u32 %v10496, 4294901760
  %10764 = vmatpush1.msra.mxu0 %v10763
  %10765 = vmatprep.subr.mxu0 0.0
  %v10766 = vand.u32 %v10497, 4294901760
  %10767 = vmatpush1.msra.mxu0 %v10766
  %10768 = vmatprep.subr.mxu0 0.0
  %v10769 = vand.u32 %v10498, 4294901760
  %10770 = vmatpush1.msra.mxu0 %v10769
  %10771 = vmatprep.subr.mxu0 0.0
  %10772 = vmatpush1.msra.mxu0 0.0
  %10773 = vmatprep.subr.mxu0 0.0
  %10774 = vmatpush1.msra.mxu0 0.0
  %10775 = vmatprep.subr.mxu0 0.0
  %10776 = vmatpush1.msra.mxu0 0.0
  %10777 = vmatprep.subr.mxu0 0.0
  %10778 = vmatpush1.msra.mxu0 0.0
  %10779 = vmatprep.subr.mxu0 0.0
  %10780 = vmatpush1.msra.mxu0 0.0
  %10781 = vmatprep.subr.mxu0 0.0
  %10782 = vmatpush1.msra.mxu0 0.0
  %10783 = vmatprep.subr.mxu0 0.0
  %10784 = vmatpush1.msra.mxu0 0.0
  %10785 = vmatprep.subr.mxu0 0.0
  %10786 = vmatpush1.msra.mxu0 0.0
  %10787 = vmatprep.subr.mxu0 0.0
  %10788 = vmatpush1.msra.mxu0 0.0
  %10789 = vmatprep.subr.mxu0 0.0
  %10790 = vmatpush1.msra.mxu0 0.0
  %10791 = vmatprep.subr.mxu0 0.0
  %10792 = vmatpush1.msra.mxu0 0.0
  %10793 = vmatprep.subr.mxu0 0.0
  %10794 = vmatpush1.msra.mxu0 0.0
  %10795 = vmatprep.subr.mxu0 0.0
  %10796 = vmatpush1.msra.mxu0 0.0
  %10797 = vmatprep.subr.mxu0 0.0
  %10798 = vmatpush1.msra.mxu0 0.0
  %10799 = vmatprep.subr.mxu0 0.0
  %10800 = vmatpush1.msra.mxu0 0.0
  %10801 = vmatprep.subr.mxu0 0.0
  %10802 = vmatpush1.msra.mxu0 0.0
  %10803 = vmatprep.subr.mxu0 0.0
  %10804 = vmatpush1.msra.mxu0 0.0
  %10805 = vmatprep.subr.mxu0 0.0
  %10806 = vmatpush1.msra.mxu0 0.0
  %10807 = vmatprep.subr.mxu0 0.0
  %10808 = vmatpush1.msra.mxu0 0.0
  %10809 = vmatprep.subr.mxu0 0.0
  %10810 = vmatpush1.msra.mxu0 0.0
  %10811 = vmatprep.subr.mxu0 0.0
  %10812 = vmatpush1.msra.mxu0 0.0
  %10813 = vmatprep.subr.mxu0 0.0
  %10814 = vmatpush1.msra.mxu0 0.0
  %10815 = vmatprep.subr.mxu0 0.0
  %10816 = vmatpush1.msra.mxu0 0.0
  %10817 = vmatprep.subr.mxu0 0.0
  %10818 = vmatpush1.msra.mxu0 0.0
  %10819 = vmatprep.subr.mxu0 0.0
  %10820 = vmatpush1.msra.mxu0 0.0
  %10821 = vmatprep.subr.mxu0 0.0
  %10822 = vmatpush1.msra.mxu0 0.0
  %10823 = vmatprep.subr.mxu0 0.0
  %10824 = vmatpush1.msra.mxu0 0.0
  %10825 = vmatprep.subr.mxu0 0.0
  %10826 = vmatpush1.msra.mxu0 0.0
  %10827 = vmatprep.mubr.f32.mxu0 0.0
  %v10828 = vand.u32 %v10507, 4294901760
  %v10829 = vsub.f32 %v10507, %v10828
  %v10830 = vand.u32 %v10829, 4294901760
  %10831 = vmatmul.mubr.f32.gmra.mrb[0].mxu0 %v10830
  %v10832 = vpop.f32.mrb[0].mxu0
  %v10833 = vadd.f32 %v10756, %v10832
  %v10834 = vpop.f32.mrb[0].mxu0
  %10835 = vdwg.mxu0
  %10836 = vmatprep.subr.mxu0 0.0
  %v10837 = vand.u32 %v10495, 4294901760
  %v10838 = vsub.f32 %v10495, %v10837
  %v10839 = vand.u32 %v10838, 4294901760
  %10840 = vmatpush1.msra.mxu0 %v10839
  %10841 = vmatprep.subr.mxu0 0.0
  %v10842 = vand.u32 %v10496, 4294901760
  %v10843 = vsub.f32 %v10496, %v10842
  %v10844 = vand.u32 %v10843, 4294901760
  %10845 = vmatpush1.msra.mxu0 %v10844
  %10846 = vmatprep.subr.mxu0 0.0
  %v10847 = vand.u32 %v10497, 4294901760
  %v10848 = vsub.f32 %v10497, %v10847
  %v10849 = vand.u32 %v10848, 4294901760
  %10850 = vmatpush1.msra.mxu0 %v10849
  %10851 = vmatprep.subr.mxu0 0.0
  %v10852 = vand.u32 %v10498, 4294901760
  %v10853 = vsub.f32 %v10498, %v10852
  %v10854 = vand.u32 %v10853, 4294901760
  %10855 = vmatpush1.msra.mxu0 %v10854
  %10856 = vmatprep.subr.mxu0 0.0
  %10857 = vmatpush1.msra.mxu0 0.0
  %10858 = vmatprep.subr.mxu0 0.0
  %10859 = vmatpush1.msra.mxu0 0.0
  %10860 = vmatprep.subr.mxu0 0.0
  %10861 = vmatpush1.msra.mxu0 0.0
  %10862 = vmatprep.subr.mxu0 0.0
  %10863 = vmatpush1.msra.mxu0 0.0
  %10864 = vmatprep.subr.mxu0 0.0
  %10865 = vmatpush1.msra.mxu0 0.0
  %10866 = vmatprep.subr.mxu0 0.0
  %10867 = vmatpush1.msra.mxu0 0.0
  %10868 = vmatprep.subr.mxu0 0.0
  %10869 = vmatpush1.msra.mxu0 0.0
  %10870 = vmatprep.subr.mxu0 0.0
  %10871 = vmatpush1.msra.mxu0 0.0
  %10872 = vmatprep.subr.mxu0 0.0
  %10873 = vmatpush1.msra.mxu0 0.0
  %10874 = vmatprep.subr.mxu0 0.0
  %10875 = vmatpush1.msra.mxu0 0.0
  %10876 = vmatprep.subr.mxu0 0.0
  %10877 = vmatpush1.msra.mxu0 0.0
  %10878 = vmatprep.subr.mxu0 0.0
  %10879 = vmatpush1.msra.mxu0 0.0
  %10880 = vmatprep.subr.mxu0 0.0
  %10881 = vmatpush1.msra.mxu0 0.0
  %10882 = vmatprep.subr.mxu0 0.0
  %10883 = vmatpush1.msra.mxu0 0.0
  %10884 = vmatprep.subr.mxu0 0.0
  %10885 = vmatpush1.msra.mxu0 0.0
  %10886 = vmatprep.subr.mxu0 0.0
  %10887 = vmatpush1.msra.mxu0 0.0
  %10888 = vmatprep.subr.mxu0 0.0
  %10889 = vmatpush1.msra.mxu0 0.0
  %10890 = vmatprep.subr.mxu0 0.0
  %10891 = vmatpush1.msra.mxu0 0.0
  %10892 = vmatprep.subr.mxu0 0.0
  %10893 = vmatpush1.msra.mxu0 0.0
  %10894 = vmatprep.subr.mxu0 0.0
  %10895 = vmatpush1.msra.mxu0 0.0
  %10896 = vmatprep.subr.mxu0 0.0
  %10897 = vmatpush1.msra.mxu0 0.0
  %10898 = vmatprep.subr.mxu0 0.0
  %10899 = vmatpush1.msra.mxu0 0.0
  %10900 = vmatprep.subr.mxu0 0.0
  %10901 = vmatpush1.msra.mxu0 0.0
  %10902 = vmatprep.subr.mxu0 0.0
  %10903 = vmatpush1.msra.mxu0 0.0
  %10904 = vmatprep.subr.mxu0 0.0
  %10905 = vmatpush1.msra.mxu0 0.0
  %10906 = vmatprep.subr.mxu0 0.0
  %10907 = vmatpush1.msra.mxu0 0.0
  %10908 = vmatprep.subr.mxu0 0.0
  %10909 = vmatpush1.msra.mxu0 0.0
  %10910 = vmatprep.subr.mxu0 0.0
  %10911 = vmatpush1.msra.mxu0 0.0
  %10912 = vmatprep.mubr.f32.mxu0 0.0
  %v10913 = vand.u32 %v10507, 4294901760
  %10914 = vmatmul.mubr.f32.gmra.mrb[0].mxu0 %v10913
  %v10915 = vpop.f32.mrb[0].mxu0
  %v10916 = vadd.f32 %v10833, %v10915
  %v10917 = vpop.f32.mrb[0].mxu0
  %10918 = vdwg.mxu0
  %10919 = vmatprep.subr.mxu0 0.0
  %v10920 = vand.u32 %v10495, 4294901760
  %10921 = vmatpush1.msra.mxu0 %v10920
  %10922 = vmatprep.subr.mxu0 0.0
  %v10923 = vand.u32 %v10496, 4294901760
  %10924 = vmatpush1.msra.mxu0 %v10923
  %10925 = vmatprep.subr.mxu0 0.0
  %v10926 = vand.u32 %v10497, 4294901760
  %10927 = vmatpush1.msra.mxu0 %v10926
  %10928 = vmatprep.subr.mxu0 0.0
  %v10929 = vand.u32 %v10498, 4294901760
  %10930 = vmatpush1.msra.mxu0 %v10929
  %10931 = vmatprep.subr.mxu0 0.0
  %10932 = vmatpush1.msra.mxu0 0.0
  %10933 = vmatprep.subr.mxu0 0.0
  %10934 = vmatpush1.msra.mxu0 0.0
  %10935 = vmatprep.subr.mxu0 0.0
  %10936 = vmatpush1.msra.mxu0 0.0
  %10937 = vmatprep.subr.mxu0 0.0
  %10938 = vmatpush1.msra.mxu0 0.0
  %10939 = vmatprep.subr.mxu0 0.0
  %10940 = vmatpush1.msra.mxu0 0.0
  %10941 = vmatprep.subr.mxu0 0.0
  %10942 = vmatpush1.msra.mxu0 0.0
  %10943 = vmatprep.subr.mxu0 0.0
  %10944 = vmatpush1.msra.mxu0 0.0
  %10945 = vmatprep.subr.mxu0 0.0
  %10946 = vmatpush1.msra.mxu0 0.0
  %10947 = vmatprep.subr.mxu0 0.0
  %10948 = vmatpush1.msra.mxu0 0.0
  %10949 = vmatprep.subr.mxu0 0.0
  %10950 = vmatpush1.msra.mxu0 0.0
  %10951 = vmatprep.subr.mxu0 0.0
  %10952 = vmatpush1.msra.mxu0 0.0
  %10953 = vmatprep.subr.mxu0 0.0
  %10954 = vmatpush1.msra.mxu0 0.0
  %10955 = vmatprep.subr.mxu0 0.0
  %10956 = vmatpush1.msra.mxu0 0.0
  %10957 = vmatprep.subr.mxu0 0.0
  %10958 = vmatpush1.msra.mxu0 0.0
  %10959 = vmatprep.subr.mxu0 0.0
  %10960 = vmatpush1.msra.mxu0 0.0
  %10961 = vmatprep.subr.mxu0 0.0
  %10962 = vmatpush1.msra.mxu0 0.0
  %10963 = vmatprep.subr.mxu0 0.0
  %10964 = vmatpush1.msra.mxu0 0.0
  %10965 = vmatprep.subr.mxu0 0.0
  %10966 = vmatpush1.msra.mxu0 0.0
  %10967 = vmatprep.subr.mxu0 0.0
  %10968 = vmatpush1.msra.mxu0 0.0
  %10969 = vmatprep.subr.mxu0 0.0
  %10970 = vmatpush1.msra.mxu0 0.0
  %10971 = vmatprep.subr.mxu0 0.0
  %10972 = vmatpush1.msra.mxu0 0.0
  %10973 = vmatprep.subr.mxu0 0.0
  %10974 = vmatpush1.msra.mxu0 0.0
  %10975 = vmatprep.subr.mxu0 0.0
  %10976 = vmatpush1.msra.mxu0 0.0
  %10977 = vmatprep.subr.mxu0 0.0
  %10978 = vmatpush1.msra.mxu0 0.0
  %10979 = vmatprep.subr.mxu0 0.0
  %10980 = vmatpush1.msra.mxu0 0.0
  %10981 = vmatprep.subr.mxu0 0.0
  %10982 = vmatpush1.msra.mxu0 0.0
  %10983 = vmatprep.subr.mxu0 0.0
  %10984 = vmatpush1.msra.mxu0 0.0
  %10985 = vmatprep.subr.mxu0 0.0
  %10986 = vmatpush1.msra.mxu0 0.0
  %10987 = vmatprep.mubr.f32.mxu0 0.0
  %v10988 = vand.u32 %v10507, 4294901760
  %10989 = vmatmul.mubr.f32.gmra.mrb[0].mxu0 %v10988
  %v10990 = vpop.f32.mrb[0].mxu0
  %v10991 = vadd.f32 %v10916, %v10990
  %v10992 = vpop.f32.mrb[0].mxu0
  %10993 = vdwg.mxu0
  %vm10994 = vcmask 31744
  %10995 = vst.msk [vmem:[%s15] sm:$0xff] %vm10994, %v10991
  // Predicated region
  $region62: #{rnn_model_forward.1} parent=0 // pred_check
    _
  $region63: #{rnn_model_forward.1} parent=0 // pred_check_branch
    %10997 = sbr.rel (0) target = $region65
  $region64: #{rnn_model_forward.1} parent=0 // pred_region
    _
  $region65: #{rnn_model_forward.1} parent=0 // pred_fallthru
    _
  // Predicated region
  $region66: #{rnn_model_forward.1} parent=0 // pred_check
    _
  $region67: #{rnn_model_forward.1} parent=0 // pred_check_branch
    %10999 = sbr.rel (0) target = $region69
  $region68: #{rnn_model_forward.1} parent=0 // pred_region
    _
  $region69: #{rnn_model_forward.1} parent=0 // pred_fallthru
    _

</llo_original>
